<compile_context>
chip_gen: v6e
topology: v6e:2x2x1
jax: 0.10.0
libtpu: 0.0.40
codegen_flags: <defaults>
</compile_context>

<pallas_src>
import functools

import jax
import jax.numpy as jnp
from jax import lax
from jax.experimental import pallas as pl
from jax.experimental.pallas import tpu as pltpu


def make_basenet_kernel(H, W, C0P, C1, C2, b_tile, row_chunk):
    """Fused two-block backbone kernel; processes `b_tile` images per grid step."""
    H1, W1 = H // 2, W // 2          # after block-1 pool
    H2, W2 = H1 // 2, W1 // 2        # after block-2 pool
    S2 = H2 * W2                     # spatial positions per output channel
    F = C2 * S2                      # flattened feature length
    f32 = jnp.float32

    def conv3x3_relu(src, b, r0, rows, width, cin, w_ref, bias_ref):
        # 9 accumulating tap matmuls (packed K = cin per tap, no im2col buffer).
        acc = None
        for t in range(9):
            dy, dx = divmod(t, 3)
            tap = src[b, r0 + dy:r0 + dy + rows, dx:dx + width, :].reshape(rows * width, cin)
            part = jnp.dot(tap, w_ref[t], preferred_element_type=f32)
            acc = part if acc is None else acc + part
        return jnp.maximum(acc + bias_ref[...], 0.0)

    def pool2x2(y, rows, width, ch):
        y = y.reshape(rows, width, ch)
        y = jnp.max(y.reshape(rows // 2, 2, width, ch), axis=1)
        y = jnp.max(y.reshape(rows // 2, width // 2, 2, ch), axis=2)
        return y                                             # (rows//2, width//2, ch)

    def kernel(x_ref, w1_ref, b1_ref, w2_ref, b2_ref, exp_ref, sel_ref,
               o_ref, pad1, act2, flat2):
        # Small halo scratch; zeroed every step (scratch is per-core under
        # "parallel" on v7x, so a first-step-only init would be unsafe).
        pad1[...] = jnp.zeros_like(pad1)
        act2[...] = jnp.zeros_like(act2)
        for b in range(b_tile):
            pad1[b, 1:H + 1, 1:W + 1, :] = x_ref[b]

        for b in range(b_tile):
            # ----- block 1: conv3x3 -> folded-BN bias -> ReLU -> maxpool2 -----
            # Chunked over image rows to bound live vregs around the matmul.
            for r0 in range(0, H, row_chunk):
                y = conv3x3_relu(pad1, b, r0, row_chunk, W, C0P, w1_ref, b1_ref)
                y = pool2x2(y, row_chunk, W, C1)
                act2[b, 1 + r0 // 2: 1 + r0 // 2 + row_chunk // 2, 1:W1 + 1, :] = y

            # ----- block 2 (activation stays resident in VMEM) -----
            y = conv3x3_relu(act2, b, 0, H1, W1, C1, w2_ref, b2_ref)
            y = pool2x2(y, H1, W1, C2)                        # (H2, W2, C2)

            # ----- fused NHWC -> NCHW flatten, lane-dense (1, F) output -----
            # flat2[s, c] = y[h, w, c], s = h*W2 + w  (tiny staging store).
            for h in range(H2):
                flat2[h * W2:(h + 1) * W2, :] = y[h]
            # out[c*S2 + s] = flat2[s, c]: host-precomputed selector matmul + mask.
            z = jnp.dot(flat2[...], exp_ref[...], preferred_element_type=f32)   # (S2, F)
            o_ref[b] = jnp.sum(z * sel_ref[...], axis=0, keepdims=True)         # (1, F)

    return kernel


def _pick_b_tile(batch):
    """Largest per-step image tile that still leaves a grid of >= 2 steps."""
    for bt in (8, 4, 2):
        if batch % bt == 0 and batch // bt >= 2:
            return bt
    return 1


def base_net_forward(params, x_nchw, b_tile=None):
    """BaseNet.forward(x) == feature.forward(x), as one fused Pallas kernel."""
    B, C, H, W = x_nchw.shape
    assert H % 4 == 0 and W % 4 == 0, "two 2x2 max-pools require spatial dims % 4 == 0"
    (w1, b1), (w2, b2) = params["blocks"]
    c0p = params["cin_pad"]
    c1, c2 = params["channels"]
    s2 = (H // 4) * (W // 4)
    feat = c2 * s2

    if b_tile is None:
        b_tile = _pick_b_tile(B)
    assert B % b_tile == 0
    grid = B // b_tile
    row_chunk = 8 if H % 8 == 0 else H

    # NCHW -> NHWC, pad channels to an aligned sublane width (aligned stores).
    x = jnp.transpose(x_nchw, (0, 2, 3, 1)).astype(jnp.float32)
    if C < c0p:
        x = jnp.pad(x, ((0, 0), (0, 0), (0, 0), (0, c0p - C)))

    # Host-precomputed flatten selectors (loop-invariant; VMEM-resident constants).
    f_idx = jnp.arange(feat)[None, :]
    expand = (f_idx // s2 == jnp.arange(c2)[:, None]).astype(jnp.float32)   # (C2, F)
    sel = (f_idx % s2 == jnp.arange(s2)[:, None]).astype(jnp.float32)       # (S2, F)

    kernel = make_basenet_kernel(H, W, c0p, c1, c2, b_tile, row_chunk)
    out = pl.pallas_call(
        kernel,
        out_shape=jax.ShapeDtypeStruct((B, 1, feat), jnp.float32),
        grid_spec=pltpu.PrefetchScalarGridSpec(
            num_scalar_prefetch=0,
            grid=(grid,),
            in_specs=[
                pl.BlockSpec((b_tile, H, W, c0p), lambda i: (i, 0, 0, 0)),
                pl.BlockSpec(w1.shape, lambda i: (0, 0, 0)),
                pl.BlockSpec(b1.shape, lambda i: (0, 0)),
                pl.BlockSpec(w2.shape, lambda i: (0, 0, 0)),
                pl.BlockSpec(b2.shape, lambda i: (0, 0)),
                pl.BlockSpec(expand.shape, lambda i: (0, 0)),
                pl.BlockSpec(sel.shape, lambda i: (0, 0)),
            ],
            out_specs=pl.BlockSpec((b_tile, 1, feat), lambda i: (i, 0, 0)),
            scratch_shapes=[
                pltpu.VMEM((b_tile, H + 2, W + 2, c0p), jnp.float32),            # block-1 halo
                pltpu.VMEM((b_tile, H // 2 + 2, W // 2 + 2, c1), jnp.float32),   # block-2 halo
                pltpu.VMEM((s2, c2), jnp.float32),                               # flat pooled map
            ],
        ),
        compiler_params=pltpu.CompilerParams(
            dimension_semantics=("parallel",)),
    )(x, w1, b1, w2, b2, expand, sel)
    return out.reshape(B, feat)


def init_raw_params(key, cin, channels=(8, 16)):
    """Synthetic conv + eval-mode BatchNorm parameters for the backbone."""
    blocks = []
    c_prev = cin
    for c in channels:
        key, k1, k2, k3, k4, k5 = jax.random.split(key, 6)
        fan_in = 9 * c_prev
        blocks.append(dict(
            w=jax.random.normal(k1, (3, 3, c_prev, c), jnp.float32) * (2.0 / fan_in) ** 0.5,
            gamma=1.0 + 0.1 * jax.random.normal(k2, (c,), jnp.float32),
            beta=0.1 * jax.random.normal(k3, (c,), jnp.float32),
            mean=0.1 * jax.random.normal(k4, (c,), jnp.float32),
            var=jnp.abs(jax.random.normal(k5, (c,), jnp.float32)) + 0.5,
        ))
        c_prev = c
    return blocks


def prepare_kernel_params(raw_blocks, cin, eps=1e-5):
    """Fold eval-mode BN into conv weights; pack as per-tap (9, Cin_pad, Cout) f32."""
    cin_pad = ((cin + 7) // 8) * 8
    blocks, channels = [], []
    c_prev, c_prev_pad = cin, cin_pad
    for p in raw_blocks:
        kh, kw, c_in, c_out = p["w"].shape
        assert c_in == c_prev
        scale = p["gamma"] / jnp.sqrt(p["var"] + eps)
        bias = p["beta"] - p["mean"] * scale
        w_fold = (p["w"] * scale).reshape(kh * kw, c_in, c_out)          # BN scale folded in
        w = jnp.zeros((kh * kw, c_prev_pad, c_out), jnp.float32).at[:, :c_in, :].set(w_fold)
        b = bias.reshape(1, c_out).astype(jnp.float32)
        blocks.append((w, b))
        channels.append(c_out)
        c_prev, c_prev_pad = c_out, c_out
    return {"blocks": blocks, "channels": tuple(channels), "cin_pad": cin_pad}


def reference_forward(raw_blocks, x_nchw, eps=1e-5):
    """Pure-JAX reference mirroring the PyTorch Conv->BN->ReLU->MaxPool blocks."""
    x = jnp.transpose(x_nchw, (0, 2, 3, 1)).astype(jnp.float32)
    for p in raw_blocks:
        scale = p["gamma"] / jnp.sqrt(p["var"] + eps)
        bias = p["beta"] - p["mean"] * scale
        y = lax.conv_general_dilated(
            x, p["w"], window_strides=(1, 1), padding=((1, 1), (1, 1)),
            dimension_numbers=("NHWC", "HWIO", "NHWC"))
        y = jnp.maximum(y * scale + bias, 0.0)
        y = lax.reduce_window(y, -jnp.inf, lax.max,
                              (1, 2, 2, 1), (1, 2, 2, 1), "VALID")
        x = y
    x = jnp.transpose(x, (0, 3, 1, 2))
    return x.reshape(x.shape[0], -1)


if __name__ == "__main__":
    key = jax.random.PRNGKey(0)
    kp, kx = jax.random.split(key)

    # Small shapes consistent with the forward pass: NCHW image batch.
    B, C, H, W = 2, 4, 16, 16
    x = jax.random.normal(kx, (B, C, H, W), jnp.float32)
    raw_params = init_raw_params(kp, cin=C, channels=(8, 16))
    params = prepare_kernel_params(raw_params, cin=C)

    fwd = jax.jit(functools.partial(base_net_forward, params))
    out = fwd(x)
    jax.block_until_ready(out)

    ref = reference_forward(raw_params, x)
    assert out.shape == (B, 16 * (H // 4) * (W // 4)), out.shape          # (2, 256)
    max_diff = float(jnp.max(jnp.abs(out - ref)))
    assert jnp.allclose(out, ref, rtol=1e-3, atol=1e-3), max_diff

    print("KERNEL_OK")
</pallas_src>

<mosaic_0001>
module attributes {stable_mosaic.version = 11 : i64} {
  func.func @kernel(%arg0: i32, %arg1: memref<1x16x16x8xf32, #tpu.memory_space<vmem>>, %arg2: memref<9x8x8xf32, #tpu.memory_space<vmem>>, %arg3: memref<1x8xf32, #tpu.memory_space<vmem>>, %arg4: memref<9x8x16xf32, #tpu.memory_space<vmem>>, %arg5: memref<1x16xf32, #tpu.memory_space<vmem>>, %arg6: memref<16x256xf32, #tpu.memory_space<vmem>>, %arg7: memref<16x256xf32, #tpu.memory_space<vmem>>, %arg8: memref<1x1x256xf32, #tpu.memory_space<vmem>>, %arg9: memref<1x18x18x8xf32, #tpu.memory_space<vmem>>, %arg10: memref<1x10x10x8xf32, #tpu.memory_space<vmem>>, %arg11: memref<16x16xf32, #tpu.memory_space<vmem>>) attributes {dimension_semantics = [#tpu.dimension_semantics<parallel>], iteration_bounds = array<i64: 2>, scalar_prefetch = 0 : i64, scratch_operands = 3 : i64, tpu.core_type = #tpu.core_type<tc>, window_params = [{transform_indices = @transform_0, window_bounds = array<i64: 1, 16, 16, 8>}, {pipeline_mode = #tpu.pipeline_mode<synchronous>, transform_indices = @transform_1, window_bounds = array<i64: 9, 8, 8>}, {pipeline_mode = #tpu.pipeline_mode<synchronous>, transform_indices = @transform_2, window_bounds = array<i64: 1, 8>}, {pipeline_mode = #tpu.pipeline_mode<synchronous>, transform_indices = @transform_3, window_bounds = array<i64: 9, 8, 16>}, {pipeline_mode = #tpu.pipeline_mode<synchronous>, transform_indices = @transform_4, window_bounds = array<i64: 1, 16>}, {pipeline_mode = #tpu.pipeline_mode<synchronous>, transform_indices = @transform_5, window_bounds = array<i64: 16, 256>}, {pipeline_mode = #tpu.pipeline_mode<synchronous>, transform_indices = @transform_6, window_bounds = array<i64: 16, 256>}, {transform_indices = @transform_7, window_bounds = array<i64: 1, 1, 256>}]} {
    %cst = arith.constant 0.000000e+00 : f32
    %0 = vector.broadcast %cst : f32 to vector<1x18x18x8xf32>
    %c0 = arith.constant 0 : index
    %c0_0 = arith.constant 0 : index
    %c0_1 = arith.constant 0 : index
    %c0_2 = arith.constant 0 : index
    %1 = vector.load %arg9[%c0, %c0_0, %c0_1, %c0_2] : memref<1x18x18x8xf32, #tpu.memory_space<vmem>>, vector<1x18x18x8xf32>
    tpu.vector_store %arg9[%c0, %c0_0, %c0_1, %c0_2], %0 {strides = array<i32>} : memref<1x18x18x8xf32, #tpu.memory_space<vmem>>, vector<1x18x18x8xf32>,
    %cst_3 = arith.constant 0.000000e+00 : f32
    %2 = vector.broadcast %cst_3 : f32 to vector<1x10x10x8xf32>
    %c0_4 = arith.constant 0 : index
    %c0_5 = arith.constant 0 : index
    %c0_6 = arith.constant 0 : index
    %c0_7 = arith.constant 0 : index
    %3 = vector.load %arg10[%c0_4, %c0_5, %c0_6, %c0_7] : memref<1x10x10x8xf32, #tpu.memory_space<vmem>>, vector<1x10x10x8xf32>
    tpu.vector_store %arg10[%c0_4, %c0_5, %c0_6, %c0_7], %2 {strides = array<i32>} : memref<1x10x10x8xf32, #tpu.memory_space<vmem>>, vector<1x10x10x8xf32>,
    %c0_8 = arith.constant 0 : index
    %c0_9 = arith.constant 0 : index
    %c0_10 = arith.constant 0 : index
    %c0_11 = arith.constant 0 : index
    %4 = vector.load %arg1[%c0_8, %c0_9, %c0_10, %c0_11] : memref<1x16x16x8xf32, #tpu.memory_space<vmem>>, vector<1x16x16x8xf32>
    %5 = vector.shape_cast %4 : vector<1x16x16x8xf32> to vector<16x16x8xf32>
    %c0_12 = arith.constant 0 : index
    %c1 = arith.constant 1 : index
    %c1_13 = arith.constant 1 : index
    %c0_14 = arith.constant 0 : index
    %6 = vector.load %arg9[%c0_12, %c1, %c1_13, %c0_14] : memref<1x18x18x8xf32, #tpu.memory_space<vmem>>, vector<1x16x16x8xf32>
    %7 = vector.shape_cast %6 : vector<1x16x16x8xf32> to vector<16x16x8xf32>
    %8 = vector.shape_cast %5 : vector<16x16x8xf32> to vector<1x16x16x8xf32>
    tpu.vector_store %arg9[%c0_12, %c1, %c1_13, %c0_14], %8 {strides = array<i32>} : memref<1x18x18x8xf32, #tpu.memory_space<vmem>>, vector<1x16x16x8xf32>,
    %c0_15 = arith.constant 0 : index
    %c0_16 = arith.constant 0 : index
    %c0_17 = arith.constant 0 : index
    %c0_18 = arith.constant 0 : index
    %9 = vector.load %arg9[%c0_15, %c0_16, %c0_17, %c0_18] : memref<1x18x18x8xf32, #tpu.memory_space<vmem>>, vector<1x8x16x8xf32>
    %10 = vector.shape_cast %9 : vector<1x8x16x8xf32> to vector<8x16x8xf32>
    %11 = vector.shape_cast %10 : vector<8x16x8xf32> to vector<128x8xf32>
    %c0_19 = arith.constant 0 : index
    %c0_20 = arith.constant 0 : index
    %c0_21 = arith.constant 0 : index
    %12 = vector.load %arg2[%c0_19, %c0_20, %c0_21] : memref<9x8x8xf32, #tpu.memory_space<vmem>>, vector<1x8x8xf32>
    %13 = vector.shape_cast %12 : vector<1x8x8xf32> to vector<8x8xf32>
    %cst_22 = arith.constant dense<0.000000e+00> : vector<128x8xf32>
    %14 = tpu.matmul %11, %13, %cst_22 {dimension_numbers = #tpu.dot_dimension_numbers<[1], [0], [0], [1], [0, 0, 1, 1], [], []>} : vector<128x8xf32>, vector<8x8xf32>, vector<128x8xf32> -> vector<128x8xf32>
    %c0_23 = arith.constant 0 : index
    %c0_24 = arith.constant 0 : index
    %c1_25 = arith.constant 1 : index
    %c0_26 = arith.constant 0 : index
    %15 = vector.load %arg9[%c0_23, %c0_24, %c1_25, %c0_26] : memref<1x18x18x8xf32, #tpu.memory_space<vmem>>, vector<1x8x16x8xf32>
    %16 = vector.shape_cast %15 : vector<1x8x16x8xf32> to vector<8x16x8xf32>
    %17 = vector.shape_cast %16 : vector<8x16x8xf32> to vector<128x8xf32>
    %c1_27 = arith.constant 1 : index
    %c0_28 = arith.constant 0 : index
    %c0_29 = arith.constant 0 : index
    %18 = vector.load %arg2[%c1_27, %c0_28, %c0_29] : memref<9x8x8xf32, #tpu.memory_space<vmem>>, vector<1x8x8xf32>
    %19 = vector.shape_cast %18 : vector<1x8x8xf32> to vector<8x8xf32>
    %cst_30 = arith.constant dense<0.000000e+00> : vector<128x8xf32>
    %20 = tpu.matmul %17, %19, %cst_30 {dimension_numbers = #tpu.dot_dimension_numbers<[1], [0], [0], [1], [0, 0, 1, 1], [], []>} : vector<128x8xf32>, vector<8x8xf32>, vector<128x8xf32> -> vector<128x8xf32>
    %21 = arith.addf %14, %20 : vector<128x8xf32>
    %c0_31 = arith.constant 0 : index
    %c0_32 = arith.constant 0 : index
    %c2 = arith.constant 2 : index
    %c0_33 = arith.constant 0 : index
    %22 = vector.load %arg9[%c0_31, %c0_32, %c2, %c0_33] : memref<1x18x18x8xf32, #tpu.memory_space<vmem>>, vector<1x8x16x8xf32>
    %23 = vector.shape_cast %22 : vector<1x8x16x8xf32> to vector<8x16x8xf32>
    %24 = vector.shape_cast %23 : vector<8x16x8xf32> to vector<128x8xf32>
    %c2_34 = arith.constant 2 : index
    %c0_35 = arith.constant 0 : index
    %c0_36 = arith.constant 0 : index
    %25 = vector.load %arg2[%c2_34, %c0_35, %c0_36] : memref<9x8x8xf32, #tpu.memory_space<vmem>>, vector<1x8x8xf32>
    %26 = vector.shape_cast %25 : vector<1x8x8xf32> to vector<8x8xf32>
    %cst_37 = arith.constant dense<0.000000e+00> : vector<128x8xf32>
    %27 = tpu.matmul %24, %26, %cst_37 {dimension_numbers = #tpu.dot_dimension_numbers<[1], [0], [0], [1], [0, 0, 1, 1], [], []>} : vector<128x8xf32>, vector<8x8xf32>, vector<128x8xf32> -> vector<128x8xf32>
    %28 = arith.addf %21, %27 : vector<128x8xf32>
    %c0_38 = arith.constant 0 : index
    %c1_39 = arith.constant 1 : index
    %c0_40 = arith.constant 0 : index
    %c0_41 = arith.constant 0 : index
    %29 = vector.load %arg9[%c0_38, %c1_39, %c0_40, %c0_41] : memref<1x18x18x8xf32, #tpu.memory_space<vmem>>, vector<1x8x16x8xf32>
    %30 = vector.shape_cast %29 : vector<1x8x16x8xf32> to vector<8x16x8xf32>
    %31 = vector.shape_cast %30 : vector<8x16x8xf32> to vector<128x8xf32>
    %c3 = arith.constant 3 : index
    %c0_42 = arith.constant 0 : index
    %c0_43 = arith.constant 0 : index
    %32 = vector.load %arg2[%c3, %c0_42, %c0_43] : memref<9x8x8xf32, #tpu.memory_space<vmem>>, vector<1x8x8xf32>
    %33 = vector.shape_cast %32 : vector<1x8x8xf32> to vector<8x8xf32>
    %cst_44 = arith.constant dense<0.000000e+00> : vector<128x8xf32>
    %34 = tpu.matmul %31, %33, %cst_44 {dimension_numbers = #tpu.dot_dimension_numbers<[1], [0], [0], [1], [0, 0, 1, 1], [], []>} : vector<128x8xf32>, vector<8x8xf32>, vector<128x8xf32> -> vector<128x8xf32>
    %35 = arith.addf %28, %34 : vector<128x8xf32>
    %c0_45 = arith.constant 0 : index
    %c1_46 = arith.constant 1 : index
    %c1_47 = arith.constant 1 : index
    %c0_48 = arith.constant 0 : index
    %36 = vector.load %arg9[%c0_45, %c1_46, %c1_47, %c0_48] : memref<1x18x18x8xf32, #tpu.memory_space<vmem>>, vector<1x8x16x8xf32>
    %37 = vector.shape_cast %36 : vector<1x8x16x8xf32> to vector<8x16x8xf32>
    %38 = vector.shape_cast %37 : vector<8x16x8xf32> to vector<128x8xf32>
    %c4 = arith.constant 4 : index
    %c0_49 = arith.constant 0 : index
    %c0_50 = arith.constant 0 : index
    %39 = vector.load %arg2[%c4, %c0_49, %c0_50] : memref<9x8x8xf32, #tpu.memory_space<vmem>>, vector<1x8x8xf32>
    %40 = vector.shape_cast %39 : vector<1x8x8xf32> to vector<8x8xf32>
    %cst_51 = arith.constant dense<0.000000e+00> : vector<128x8xf32>
    %41 = tpu.matmul %38, %40, %cst_51 {dimension_numbers = #tpu.dot_dimension_numbers<[1], [0], [0], [1], [0, 0, 1, 1], [], []>} : vector<128x8xf32>, vector<8x8xf32>, vector<128x8xf32> -> vector<128x8xf32>
    %42 = arith.addf %35, %41 : vector<128x8xf32>
    %c0_52 = arith.constant 0 : index
    %c1_53 = arith.constant 1 : index
    %c2_54 = arith.constant 2 : index
    %c0_55 = arith.constant 0 : index
    %43 = vector.load %arg9[%c0_52, %c1_53, %c2_54, %c0_55] : memref<1x18x18x8xf32, #tpu.memory_space<vmem>>, vector<1x8x16x8xf32>
    %44 = vector.shape_cast %43 : vector<1x8x16x8xf32> to vector<8x16x8xf32>
    %45 = vector.shape_cast %44 : vector<8x16x8xf32> to vector<128x8xf32>
    %c5 = arith.constant 5 : index
    %c0_56 = arith.constant 0 : index
    %c0_57 = arith.constant 0 : index
    %46 = vector.load %arg2[%c5, %c0_56, %c0_57] : memref<9x8x8xf32, #tpu.memory_space<vmem>>, vector<1x8x8xf32>
    %47 = vector.shape_cast %46 : vector<1x8x8xf32> to vector<8x8xf32>
    %cst_58 = arith.constant dense<0.000000e+00> : vector<128x8xf32>
    %48 = tpu.matmul %45, %47, %cst_58 {dimension_numbers = #tpu.dot_dimension_numbers<[1], [0], [0], [1], [0, 0, 1, 1], [], []>} : vector<128x8xf32>, vector<8x8xf32>, vector<128x8xf32> -> vector<128x8xf32>
    %49 = arith.addf %42, %48 : vector<128x8xf32>
    %c0_59 = arith.constant 0 : index
    %c2_60 = arith.constant 2 : index
    %c0_61 = arith.constant 0 : index
    %c0_62 = arith.constant 0 : index
    %50 = vector.load %arg9[%c0_59, %c2_60, %c0_61, %c0_62] : memref<1x18x18x8xf32, #tpu.memory_space<vmem>>, vector<1x8x16x8xf32>
    %51 = vector.shape_cast %50 : vector<1x8x16x8xf32> to vector<8x16x8xf32>
    %52 = vector.shape_cast %51 : vector<8x16x8xf32> to vector<128x8xf32>
    %c6 = arith.constant 6 : index
    %c0_63 = arith.constant 0 : index
    %c0_64 = arith.constant 0 : index
    %53 = vector.load %arg2[%c6, %c0_63, %c0_64] : memref<9x8x8xf32, #tpu.memory_space<vmem>>, vector<1x8x8xf32>
    %54 = vector.shape_cast %53 : vector<1x8x8xf32> to vector<8x8xf32>
    %cst_65 = arith.constant dense<0.000000e+00> : vector<128x8xf32>
    %55 = tpu.matmul %52, %54, %cst_65 {dimension_numbers = #tpu.dot_dimension_numbers<[1], [0], [0], [1], [0, 0, 1, 1], [], []>} : vector<128x8xf32>, vector<8x8xf32>, vector<128x8xf32> -> vector<128x8xf32>
    %56 = arith.addf %49, %55 : vector<128x8xf32>
    %c0_66 = arith.constant 0 : index
    %c2_67 = arith.constant 2 : index
    %c1_68 = arith.constant 1 : index
    %c0_69 = arith.constant 0 : index
    %57 = vector.load %arg9[%c0_66, %c2_67, %c1_68, %c0_69] : memref<1x18x18x8xf32, #tpu.memory_space<vmem>>, vector<1x8x16x8xf32>
    %58 = vector.shape_cast %57 : vector<1x8x16x8xf32> to vector<8x16x8xf32>
    %59 = vector.shape_cast %58 : vector<8x16x8xf32> to vector<128x8xf32>
    %c7 = arith.constant 7 : index
    %c0_70 = arith.constant 0 : index
    %c0_71 = arith.constant 0 : index
    %60 = vector.load %arg2[%c7, %c0_70, %c0_71] : memref<9x8x8xf32, #tpu.memory_space<vmem>>, vector<1x8x8xf32>
    %61 = vector.shape_cast %60 : vector<1x8x8xf32> to vector<8x8xf32>
    %cst_72 = arith.constant dense<0.000000e+00> : vector<128x8xf32>
    %62 = tpu.matmul %59, %61, %cst_72 {dimension_numbers = #tpu.dot_dimension_numbers<[1], [0], [0], [1], [0, 0, 1, 1], [], []>} : vector<128x8xf32>, vector<8x8xf32>, vector<128x8xf32> -> vector<128x8xf32>
    %63 = arith.addf %56, %62 : vector<128x8xf32>
    %c0_73 = arith.constant 0 : index
    %c2_74 = arith.constant 2 : index
    %c2_75 = arith.constant 2 : index
    %c0_76 = arith.constant 0 : index
    %64 = vector.load %arg9[%c0_73, %c2_74, %c2_75, %c0_76] : memref<1x18x18x8xf32, #tpu.memory_space<vmem>>, vector<1x8x16x8xf32>
    %65 = vector.shape_cast %64 : vector<1x8x16x8xf32> to vector<8x16x8xf32>
    %66 = vector.shape_cast %65 : vector<8x16x8xf32> to vector<128x8xf32>
    %c8 = arith.constant 8 : index
    %c0_77 = arith.constant 0 : index
    %c0_78 = arith.constant 0 : index
    %67 = vector.load %arg2[%c8, %c0_77, %c0_78] : memref<9x8x8xf32, #tpu.memory_space<vmem>>, vector<1x8x8xf32>
    %68 = vector.shape_cast %67 : vector<1x8x8xf32> to vector<8x8xf32>
    %cst_79 = arith.constant dense<0.000000e+00> : vector<128x8xf32>
    %69 = tpu.matmul %66, %68, %cst_79 {dimension_numbers = #tpu.dot_dimension_numbers<[1], [0], [0], [1], [0, 0, 1, 1], [], []>} : vector<128x8xf32>, vector<8x8xf32>, vector<128x8xf32> -> vector<128x8xf32>
    %70 = arith.addf %63, %69 : vector<128x8xf32>
    %c0_80 = arith.constant 0 : index
    %c0_81 = arith.constant 0 : index
    %71 = vector.load %arg3[%c0_80, %c0_81] : memref<1x8xf32, #tpu.memory_space<vmem>>, vector<1x8xf32>
    %72 = vector.broadcast %71 : vector<1x8xf32> to vector<128x8xf32>
    %73 = arith.addf %70, %72 : vector<128x8xf32>
    %cst_82 = arith.constant 0.000000e+00 : f32
    %74 = vector.broadcast %cst_82 : f32 to vector<128x8xf32>
    %75 = arith.maximumf %73, %74 : vector<128x8xf32>
    %76 = vector.shape_cast %75 : vector<128x8xf32> to vector<8x16x8xf32>
    %77 = vector.shape_cast %76 : vector<8x16x8xf32> to vector<4x2x16x8xf32>
    %cst_83 = arith.constant dense<0xFF800000> : vector<4x16x8xf32>
    %78 = vector.multi_reduction <maximumf>, %77, %cst_83 [1] : vector<4x2x16x8xf32> to vector<4x16x8xf32>
    %79 = vector.shape_cast %78 : vector<4x16x8xf32> to vector<4x8x2x8xf32>
    %cst_84 = arith.constant dense<0xFF800000> : vector<4x8x8xf32>
    %80 = vector.multi_reduction <maximumf>, %79, %cst_84 [2] : vector<4x8x2x8xf32> to vector<4x8x8xf32>
    %c0_85 = arith.constant 0 : index
    %c1_86 = arith.constant 1 : index
    %c1_87 = arith.constant 1 : index
    %c0_88 = arith.constant 0 : index
    %81 = vector.load %arg10[%c0_85, %c1_86, %c1_87, %c0_88] : memref<1x10x10x8xf32, #tpu.memory_space<vmem>>, vector<1x4x8x8xf32>
    %82 = vector.shape_cast %81 : vector<1x4x8x8xf32> to vector<4x8x8xf32>
    %83 = vector.shape_cast %80 : vector<4x8x8xf32> to vector<1x4x8x8xf32>
    tpu.vector_store %arg10[%c0_85, %c1_86, %c1_87, %c0_88], %83 {strides = array<i32>} : memref<1x10x10x8xf32, #tpu.memory_space<vmem>>, vector<1x4x8x8xf32>,
    %c0_89 = arith.constant 0 : index
    %c8_90 = arith.constant 8 : index
    %c0_91 = arith.constant 0 : index
    %c0_92 = arith.constant 0 : index
    %84 = vector.load %arg9[%c0_89, %c8_90, %c0_91, %c0_92] : memref<1x18x18x8xf32, #tpu.memory_space<vmem>>, vector<1x8x16x8xf32>
    %85 = vector.shape_cast %84 : vector<1x8x16x8xf32> to vector<8x16x8xf32>
    %86 = vector.shape_cast %85 : vector<8x16x8xf32> to vector<128x8xf32>
    %c0_93 = arith.constant 0 : index
    %c0_94 = arith.constant 0 : index
    %c0_95 = arith.constant 0 : index
    %87 = vector.load %arg2[%c0_93, %c0_94, %c0_95] : memref<9x8x8xf32, #tpu.memory_space<vmem>>, vector<1x8x8xf32>
    %88 = vector.shape_cast %87 : vector<1x8x8xf32> to vector<8x8xf32>
    %cst_96 = arith.constant dense<0.000000e+00> : vector<128x8xf32>
    %89 = tpu.matmul %86, %88, %cst_96 {dimension_numbers = #tpu.dot_dimension_numbers<[1], [0], [0], [1], [0, 0, 1, 1], [], []>} : vector<128x8xf32>, vector<8x8xf32>, vector<128x8xf32> -> vector<128x8xf32>
    %c0_97 = arith.constant 0 : index
    %c8_98 = arith.constant 8 : index
    %c1_99 = arith.constant 1 : index
    %c0_100 = arith.constant 0 : index
    %90 = vector.load %arg9[%c0_97, %c8_98, %c1_99, %c0_100] : memref<1x18x18x8xf32, #tpu.memory_space<vmem>>, vector<1x8x16x8xf32>
    %91 = vector.shape_cast %90 : vector<1x8x16x8xf32> to vector<8x16x8xf32>
    %92 = vector.shape_cast %91 : vector<8x16x8xf32> to vector<128x8xf32>
    %c1_101 = arith.constant 1 : index
    %c0_102 = arith.constant 0 : index
    %c0_103 = arith.constant 0 : index
    %93 = vector.load %arg2[%c1_101, %c0_102, %c0_103] : memref<9x8x8xf32, #tpu.memory_space<vmem>>, vector<1x8x8xf32>
    %94 = vector.shape_cast %93 : vector<1x8x8xf32> to vector<8x8xf32>
    %cst_104 = arith.constant dense<0.000000e+00> : vector<128x8xf32>
    %95 = tpu.matmul %92, %94, %cst_104 {dimension_numbers = #tpu.dot_dimension_numbers<[1], [0], [0], [1], [0, 0, 1, 1], [], []>} : vector<128x8xf32>, vector<8x8xf32>, vector<128x8xf32> -> vector<128x8xf32>
    %96 = arith.addf %89, %95 : vector<128x8xf32>
    %c0_105 = arith.constant 0 : index
    %c8_106 = arith.constant 8 : index
    %c2_107 = arith.constant 2 : index
    %c0_108 = arith.constant 0 : index
    %97 = vector.load %arg9[%c0_105, %c8_106, %c2_107, %c0_108] : memref<1x18x18x8xf32, #tpu.memory_space<vmem>>, vector<1x8x16x8xf32>
    %98 = vector.shape_cast %97 : vector<1x8x16x8xf32> to vector<8x16x8xf32>
    %99 = vector.shape_cast %98 : vector<8x16x8xf32> to vector<128x8xf32>
    %c2_109 = arith.constant 2 : index
    %c0_110 = arith.constant 0 : index
    %c0_111 = arith.constant 0 : index
    %100 = vector.load %arg2[%c2_109, %c0_110, %c0_111] : memref<9x8x8xf32, #tpu.memory_space<vmem>>, vector<1x8x8xf32>
    %101 = vector.shape_cast %100 : vector<1x8x8xf32> to vector<8x8xf32>
    %cst_112 = arith.constant dense<0.000000e+00> : vector<128x8xf32>
    %102 = tpu.matmul %99, %101, %cst_112 {dimension_numbers = #tpu.dot_dimension_numbers<[1], [0], [0], [1], [0, 0, 1, 1], [], []>} : vector<128x8xf32>, vector<8x8xf32>, vector<128x8xf32> -> vector<128x8xf32>
    %103 = arith.addf %96, %102 : vector<128x8xf32>
    %c0_113 = arith.constant 0 : index
    %c9 = arith.constant 9 : index
    %c0_114 = arith.constant 0 : index
    %c0_115 = arith.constant 0 : index
    %104 = vector.load %arg9[%c0_113, %c9, %c0_114, %c0_115] : memref<1x18x18x8xf32, #tpu.memory_space<vmem>>, vector<1x8x16x8xf32>
    %105 = vector.shape_cast %104 : vector<1x8x16x8xf32> to vector<8x16x8xf32>
    %106 = vector.shape_cast %105 : vector<8x16x8xf32> to vector<128x8xf32>
    %c3_116 = arith.constant 3 : index
    %c0_117 = arith.constant 0 : index
    %c0_118 = arith.constant 0 : index
    %107 = vector.load %arg2[%c3_116, %c0_117, %c0_118] : memref<9x8x8xf32, #tpu.memory_space<vmem>>, vector<1x8x8xf32>
    %108 = vector.shape_cast %107 : vector<1x8x8xf32> to vector<8x8xf32>
    %cst_119 = arith.constant dense<0.000000e+00> : vector<128x8xf32>
    %109 = tpu.matmul %106, %108, %cst_119 {dimension_numbers = #tpu.dot_dimension_numbers<[1], [0], [0], [1], [0, 0, 1, 1], [], []>} : vector<128x8xf32>, vector<8x8xf32>, vector<128x8xf32> -> vector<128x8xf32>
    %110 = arith.addf %103, %109 : vector<128x8xf32>
    %c0_120 = arith.constant 0 : index
    %c9_121 = arith.constant 9 : index
    %c1_122 = arith.constant 1 : index
    %c0_123 = arith.constant 0 : index
    %111 = vector.load %arg9[%c0_120, %c9_121, %c1_122, %c0_123] : memref<1x18x18x8xf32, #tpu.memory_space<vmem>>, vector<1x8x16x8xf32>
    %112 = vector.shape_cast %111 : vector<1x8x16x8xf32> to vector<8x16x8xf32>
    %113 = vector.shape_cast %112 : vector<8x16x8xf32> to vector<128x8xf32>
    %c4_124 = arith.constant 4 : index
    %c0_125 = arith.constant 0 : index
    %c0_126 = arith.constant 0 : index
    %114 = vector.load %arg2[%c4_124, %c0_125, %c0_126] : memref<9x8x8xf32, #tpu.memory_space<vmem>>, vector<1x8x8xf32>
    %115 = vector.shape_cast %114 : vector<1x8x8xf32> to vector<8x8xf32>
    %cst_127 = arith.constant dense<0.000000e+00> : vector<128x8xf32>
    %116 = tpu.matmul %113, %115, %cst_127 {dimension_numbers = #tpu.dot_dimension_numbers<[1], [0], [0], [1], [0, 0, 1, 1], [], []>} : vector<128x8xf32>, vector<8x8xf32>, vector<128x8xf32> -> vector<128x8xf32>
    %117 = arith.addf %110, %116 : vector<128x8xf32>
    %c0_128 = arith.constant 0 : index
    %c9_129 = arith.constant 9 : index
    %c2_130 = arith.constant 2 : index
    %c0_131 = arith.constant 0 : index
    %118 = vector.load %arg9[%c0_128, %c9_129, %c2_130, %c0_131] : memref<1x18x18x8xf32, #tpu.memory_space<vmem>>, vector<1x8x16x8xf32>
    %119 = vector.shape_cast %118 : vector<1x8x16x8xf32> to vector<8x16x8xf32>
    %120 = vector.shape_cast %119 : vector<8x16x8xf32> to vector<128x8xf32>
    %c5_132 = arith.constant 5 : index
    %c0_133 = arith.constant 0 : index
    %c0_134 = arith.constant 0 : index
    %121 = vector.load %arg2[%c5_132, %c0_133, %c0_134] : memref<9x8x8xf32, #tpu.memory_space<vmem>>, vector<1x8x8xf32>
    %122 = vector.shape_cast %121 : vector<1x8x8xf32> to vector<8x8xf32>
    %cst_135 = arith.constant dense<0.000000e+00> : vector<128x8xf32>
    %123 = tpu.matmul %120, %122, %cst_135 {dimension_numbers = #tpu.dot_dimension_numbers<[1], [0], [0], [1], [0, 0, 1, 1], [], []>} : vector<128x8xf32>, vector<8x8xf32>, vector<128x8xf32> -> vector<128x8xf32>
    %124 = arith.addf %117, %123 : vector<128x8xf32>
    %c0_136 = arith.constant 0 : index
    %c10 = arith.constant 10 : index
    %c0_137 = arith.constant 0 : index
    %c0_138 = arith.constant 0 : index
    %125 = vector.load %arg9[%c0_136, %c10, %c0_137, %c0_138] : memref<1x18x18x8xf32, #tpu.memory_space<vmem>>, vector<1x8x16x8xf32>
    %126 = vector.shape_cast %125 : vector<1x8x16x8xf32> to vector<8x16x8xf32>
    %127 = vector.shape_cast %126 : vector<8x16x8xf32> to vector<128x8xf32>
    %c6_139 = arith.constant 6 : index
    %c0_140 = arith.constant 0 : index
    %c0_141 = arith.constant 0 : index
    %128 = vector.load %arg2[%c6_139, %c0_140, %c0_141] : memref<9x8x8xf32, #tpu.memory_space<vmem>>, vector<1x8x8xf32>
    %129 = vector.shape_cast %128 : vector<1x8x8xf32> to vector<8x8xf32>
    %cst_142 = arith.constant dense<0.000000e+00> : vector<128x8xf32>
    %130 = tpu.matmul %127, %129, %cst_142 {dimension_numbers = #tpu.dot_dimension_numbers<[1], [0], [0], [1], [0, 0, 1, 1], [], []>} : vector<128x8xf32>, vector<8x8xf32>, vector<128x8xf32> -> vector<128x8xf32>
    %131 = arith.addf %124, %130 : vector<128x8xf32>
    %c0_143 = arith.constant 0 : index
    %c10_144 = arith.constant 10 : index
    %c1_145 = arith.constant 1 : index
    %c0_146 = arith.constant 0 : index
    %132 = vector.load %arg9[%c0_143, %c10_144, %c1_145, %c0_146] : memref<1x18x18x8xf32, #tpu.memory_space<vmem>>, vector<1x8x16x8xf32>
    %133 = vector.shape_cast %132 : vector<1x8x16x8xf32> to vector<8x16x8xf32>
    %134 = vector.shape_cast %133 : vector<8x16x8xf32> to vector<128x8xf32>
    %c7_147 = arith.constant 7 : index
    %c0_148 = arith.constant 0 : index
    %c0_149 = arith.constant 0 : index
    %135 = vector.load %arg2[%c7_147, %c0_148, %c0_149] : memref<9x8x8xf32, #tpu.memory_space<vmem>>, vector<1x8x8xf32>
    %136 = vector.shape_cast %135 : vector<1x8x8xf32> to vector<8x8xf32>
    %cst_150 = arith.constant dense<0.000000e+00> : vector<128x8xf32>
    %137 = tpu.matmul %134, %136, %cst_150 {dimension_numbers = #tpu.dot_dimension_numbers<[1], [0], [0], [1], [0, 0, 1, 1], [], []>} : vector<128x8xf32>, vector<8x8xf32>, vector<128x8xf32> -> vector<128x8xf32>
    %138 = arith.addf %131, %137 : vector<128x8xf32>
    %c0_151 = arith.constant 0 : index
    %c10_152 = arith.constant 10 : index
    %c2_153 = arith.constant 2 : index
    %c0_154 = arith.constant 0 : index
    %139 = vector.load %arg9[%c0_151, %c10_152, %c2_153, %c0_154] : memref<1x18x18x8xf32, #tpu.memory_space<vmem>>, vector<1x8x16x8xf32>
    %140 = vector.shape_cast %139 : vector<1x8x16x8xf32> to vector<8x16x8xf32>
    %141 = vector.shape_cast %140 : vector<8x16x8xf32> to vector<128x8xf32>
    %c8_155 = arith.constant 8 : index
    %c0_156 = arith.constant 0 : index
    %c0_157 = arith.constant 0 : index
    %142 = vector.load %arg2[%c8_155, %c0_156, %c0_157] : memref<9x8x8xf32, #tpu.memory_space<vmem>>, vector<1x8x8xf32>
    %143 = vector.shape_cast %142 : vector<1x8x8xf32> to vector<8x8xf32>
    %cst_158 = arith.constant dense<0.000000e+00> : vector<128x8xf32>
    %144 = tpu.matmul %141, %143, %cst_158 {dimension_numbers = #tpu.dot_dimension_numbers<[1], [0], [0], [1], [0, 0, 1, 1], [], []>} : vector<128x8xf32>, vector<8x8xf32>, vector<128x8xf32> -> vector<128x8xf32>
    %145 = arith.addf %138, %144 : vector<128x8xf32>
    %c0_159 = arith.constant 0 : index
    %c0_160 = arith.constant 0 : index
    %146 = vector.load %arg3[%c0_159, %c0_160] : memref<1x8xf32, #tpu.memory_space<vmem>>, vector<1x8xf32>
    %147 = vector.broadcast %146 : vector<1x8xf32> to vector<128x8xf32>
    %148 = arith.addf %145, %147 : vector<128x8xf32>
    %cst_161 = arith.constant 0.000000e+00 : f32
    %149 = vector.broadcast %cst_161 : f32 to vector<128x8xf32>
    %150 = arith.maximumf %148, %149 : vector<128x8xf32>
    %151 = vector.shape_cast %150 : vector<128x8xf32> to vector<8x16x8xf32>
    %152 = vector.shape_cast %151 : vector<8x16x8xf32> to vector<4x2x16x8xf32>
    %cst_162 = arith.constant dense<0xFF800000> : vector<4x16x8xf32>
    %153 = vector.multi_reduction <maximumf>, %152, %cst_162 [1] : vector<4x2x16x8xf32> to vector<4x16x8xf32>
    %154 = vector.shape_cast %153 : vector<4x16x8xf32> to vector<4x8x2x8xf32>
    %cst_163 = arith.constant dense<0xFF800000> : vector<4x8x8xf32>
    %155 = vector.multi_reduction <maximumf>, %154, %cst_163 [2] : vector<4x8x2x8xf32> to vector<4x8x8xf32>
    %c0_164 = arith.constant 0 : index
    %c5_165 = arith.constant 5 : index
    %c1_166 = arith.constant 1 : index
    %c0_167 = arith.constant 0 : index
    %156 = vector.load %arg10[%c0_164, %c5_165, %c1_166, %c0_167] : memref<1x10x10x8xf32, #tpu.memory_space<vmem>>, vector<1x4x8x8xf32>
    %157 = vector.shape_cast %156 : vector<1x4x8x8xf32> to vector<4x8x8xf32>
    %158 = vector.shape_cast %155 : vector<4x8x8xf32> to vector<1x4x8x8xf32>
    tpu.vector_store %arg10[%c0_164, %c5_165, %c1_166, %c0_167], %158 {strides = array<i32>} : memref<1x10x10x8xf32, #tpu.memory_space<vmem>>, vector<1x4x8x8xf32>,
    %c0_168 = arith.constant 0 : index
    %c0_169 = arith.constant 0 : index
    %c0_170 = arith.constant 0 : index
    %c0_171 = arith.constant 0 : index
    %159 = vector.load %arg10[%c0_168, %c0_169, %c0_170, %c0_171] : memref<1x10x10x8xf32, #tpu.memory_space<vmem>>, vector<1x8x8x8xf32>
    %160 = vector.shape_cast %159 : vector<1x8x8x8xf32> to vector<8x8x8xf32>
    %161 = vector.shape_cast %160 : vector<8x8x8xf32> to vector<64x8xf32>
    %c0_172 = arith.constant 0 : index
    %c0_173 = arith.constant 0 : index
    %c0_174 = arith.constant 0 : index
    %162 = vector.load %arg4[%c0_172, %c0_173, %c0_174] : memref<9x8x16xf32, #tpu.memory_space<vmem>>, vector<1x8x16xf32>
    %163 = vector.shape_cast %162 : vector<1x8x16xf32> to vector<8x16xf32>
    %cst_175 = arith.constant dense<0.000000e+00> : vector<64x16xf32>
    %164 = tpu.matmul %161, %163, %cst_175 {dimension_numbers = #tpu.dot_dimension_numbers<[1], [0], [0], [1], [0, 0, 1, 1], [], []>} : vector<64x8xf32>, vector<8x16xf32>, vector<64x16xf32> -> vector<64x16xf32>
    %c0_176 = arith.constant 0 : index
    %c0_177 = arith.constant 0 : index
    %c1_178 = arith.constant 1 : index
    %c0_179 = arith.constant 0 : index
    %165 = vector.load %arg10[%c0_176, %c0_177, %c1_178, %c0_179] : memref<1x10x10x8xf32, #tpu.memory_space<vmem>>, vector<1x8x8x8xf32>
    %166 = vector.shape_cast %165 : vector<1x8x8x8xf32> to vector<8x8x8xf32>
    %167 = vector.shape_cast %166 : vector<8x8x8xf32> to vector<64x8xf32>
    %c1_180 = arith.constant 1 : index
    %c0_181 = arith.constant 0 : index
    %c0_182 = arith.constant 0 : index
    %168 = vector.load %arg4[%c1_180, %c0_181, %c0_182] : memref<9x8x16xf32, #tpu.memory_space<vmem>>, vector<1x8x16xf32>
    %169 = vector.shape_cast %168 : vector<1x8x16xf32> to vector<8x16xf32>
    %cst_183 = arith.constant dense<0.000000e+00> : vector<64x16xf32>
    %170 = tpu.matmul %167, %169, %cst_183 {dimension_numbers = #tpu.dot_dimension_numbers<[1], [0], [0], [1], [0, 0, 1, 1], [], []>} : vector<64x8xf32>, vector<8x16xf32>, vector<64x16xf32> -> vector<64x16xf32>
    %171 = arith.addf %164, %170 : vector<64x16xf32>
    %c0_184 = arith.constant 0 : index
    %c0_185 = arith.constant 0 : index
    %c2_186 = arith.constant 2 : index
    %c0_187 = arith.constant 0 : index
    %172 = vector.load %arg10[%c0_184, %c0_185, %c2_186, %c0_187] : memref<1x10x10x8xf32, #tpu.memory_space<vmem>>, vector<1x8x8x8xf32>
    %173 = vector.shape_cast %172 : vector<1x8x8x8xf32> to vector<8x8x8xf32>
    %174 = vector.shape_cast %173 : vector<8x8x8xf32> to vector<64x8xf32>
    %c2_188 = arith.constant 2 : index
    %c0_189 = arith.constant 0 : index
    %c0_190 = arith.constant 0 : index
    %175 = vector.load %arg4[%c2_188, %c0_189, %c0_190] : memref<9x8x16xf32, #tpu.memory_space<vmem>>, vector<1x8x16xf32>
    %176 = vector.shape_cast %175 : vector<1x8x16xf32> to vector<8x16xf32>
    %cst_191 = arith.constant dense<0.000000e+00> : vector<64x16xf32>
    %177 = tpu.matmul %174, %176, %cst_191 {dimension_numbers = #tpu.dot_dimension_numbers<[1], [0], [0], [1], [0, 0, 1, 1], [], []>} : vector<64x8xf32>, vector<8x16xf32>, vector<64x16xf32> -> vector<64x16xf32>
    %178 = arith.addf %171, %177 : vector<64x16xf32>
    %c0_192 = arith.constant 0 : index
    %c1_193 = arith.constant 1 : index
    %c0_194 = arith.constant 0 : index
    %c0_195 = arith.constant 0 : index
    %179 = vector.load %arg10[%c0_192, %c1_193, %c0_194, %c0_195] : memref<1x10x10x8xf32, #tpu.memory_space<vmem>>, vector<1x8x8x8xf32>
    %180 = vector.shape_cast %179 : vector<1x8x8x8xf32> to vector<8x8x8xf32>
    %181 = vector.shape_cast %180 : vector<8x8x8xf32> to vector<64x8xf32>
    %c3_196 = arith.constant 3 : index
    %c0_197 = arith.constant 0 : index
    %c0_198 = arith.constant 0 : index
    %182 = vector.load %arg4[%c3_196, %c0_197, %c0_198] : memref<9x8x16xf32, #tpu.memory_space<vmem>>, vector<1x8x16xf32>
    %183 = vector.shape_cast %182 : vector<1x8x16xf32> to vector<8x16xf32>
    %cst_199 = arith.constant dense<0.000000e+00> : vector<64x16xf32>
    %184 = tpu.matmul %181, %183, %cst_199 {dimension_numbers = #tpu.dot_dimension_numbers<[1], [0], [0], [1], [0, 0, 1, 1], [], []>} : vector<64x8xf32>, vector<8x16xf32>, vector<64x16xf32> -> vector<64x16xf32>
    %185 = arith.addf %178, %184 : vector<64x16xf32>
    %c0_200 = arith.constant 0 : index
    %c1_201 = arith.constant 1 : index
    %c1_202 = arith.constant 1 : index
    %c0_203 = arith.constant 0 : index
    %186 = vector.load %arg10[%c0_200, %c1_201, %c1_202, %c0_203] : memref<1x10x10x8xf32, #tpu.memory_space<vmem>>, vector<1x8x8x8xf32>
    %187 = vector.shape_cast %186 : vector<1x8x8x8xf32> to vector<8x8x8xf32>
    %188 = vector.shape_cast %187 : vector<8x8x8xf32> to vector<64x8xf32>
    %c4_204 = arith.constant 4 : index
    %c0_205 = arith.constant 0 : index
    %c0_206 = arith.constant 0 : index
    %189 = vector.load %arg4[%c4_204, %c0_205, %c0_206] : memref<9x8x16xf32, #tpu.memory_space<vmem>>, vector<1x8x16xf32>
    %190 = vector.shape_cast %189 : vector<1x8x16xf32> to vector<8x16xf32>
    %cst_207 = arith.constant dense<0.000000e+00> : vector<64x16xf32>
    %191 = tpu.matmul %188, %190, %cst_207 {dimension_numbers = #tpu.dot_dimension_numbers<[1], [0], [0], [1], [0, 0, 1, 1], [], []>} : vector<64x8xf32>, vector<8x16xf32>, vector<64x16xf32> -> vector<64x16xf32>
    %192 = arith.addf %185, %191 : vector<64x16xf32>
    %c0_208 = arith.constant 0 : index
    %c1_209 = arith.constant 1 : index
    %c2_210 = arith.constant 2 : index
    %c0_211 = arith.constant 0 : index
    %193 = vector.load %arg10[%c0_208, %c1_209, %c2_210, %c0_211] : memref<1x10x10x8xf32, #tpu.memory_space<vmem>>, vector<1x8x8x8xf32>
    %194 = vector.shape_cast %193 : vector<1x8x8x8xf32> to vector<8x8x8xf32>
    %195 = vector.shape_cast %194 : vector<8x8x8xf32> to vector<64x8xf32>
    %c5_212 = arith.constant 5 : index
    %c0_213 = arith.constant 0 : index
    %c0_214 = arith.constant 0 : index
    %196 = vector.load %arg4[%c5_212, %c0_213, %c0_214] : memref<9x8x16xf32, #tpu.memory_space<vmem>>, vector<1x8x16xf32>
    %197 = vector.shape_cast %196 : vector<1x8x16xf32> to vector<8x16xf32>
    %cst_215 = arith.constant dense<0.000000e+00> : vector<64x16xf32>
    %198 = tpu.matmul %195, %197, %cst_215 {dimension_numbers = #tpu.dot_dimension_numbers<[1], [0], [0], [1], [0, 0, 1, 1], [], []>} : vector<64x8xf32>, vector<8x16xf32>, vector<64x16xf32> -> vector<64x16xf32>
    %199 = arith.addf %192, %198 : vector<64x16xf32>
    %c0_216 = arith.constant 0 : index
    %c2_217 = arith.constant 2 : index
    %c0_218 = arith.constant 0 : index
    %c0_219 = arith.constant 0 : index
    %200 = vector.load %arg10[%c0_216, %c2_217, %c0_218, %c0_219] : memref<1x10x10x8xf32, #tpu.memory_space<vmem>>, vector<1x8x8x8xf32>
    %201 = vector.shape_cast %200 : vector<1x8x8x8xf32> to vector<8x8x8xf32>
    %202 = vector.shape_cast %201 : vector<8x8x8xf32> to vector<64x8xf32>
    %c6_220 = arith.constant 6 : index
    %c0_221 = arith.constant 0 : index
    %c0_222 = arith.constant 0 : index
    %203 = vector.load %arg4[%c6_220, %c0_221, %c0_222] : memref<9x8x16xf32, #tpu.memory_space<vmem>>, vector<1x8x16xf32>
    %204 = vector.shape_cast %203 : vector<1x8x16xf32> to vector<8x16xf32>
    %cst_223 = arith.constant dense<0.000000e+00> : vector<64x16xf32>
    %205 = tpu.matmul %202, %204, %cst_223 {dimension_numbers = #tpu.dot_dimension_numbers<[1], [0], [0], [1], [0, 0, 1, 1], [], []>} : vector<64x8xf32>, vector<8x16xf32>, vector<64x16xf32> -> vector<64x16xf32>
    %206 = arith.addf %199, %205 : vector<64x16xf32>
    %c0_224 = arith.constant 0 : index
    %c2_225 = arith.constant 2 : index
    %c1_226 = arith.constant 1 : index
    %c0_227 = arith.constant 0 : index
    %207 = vector.load %arg10[%c0_224, %c2_225, %c1_226, %c0_227] : memref<1x10x10x8xf32, #tpu.memory_space<vmem>>, vector<1x8x8x8xf32>
    %208 = vector.shape_cast %207 : vector<1x8x8x8xf32> to vector<8x8x8xf32>
    %209 = vector.shape_cast %208 : vector<8x8x8xf32> to vector<64x8xf32>
    %c7_228 = arith.constant 7 : index
    %c0_229 = arith.constant 0 : index
    %c0_230 = arith.constant 0 : index
    %210 = vector.load %arg4[%c7_228, %c0_229, %c0_230] : memref<9x8x16xf32, #tpu.memory_space<vmem>>, vector<1x8x16xf32>
    %211 = vector.shape_cast %210 : vector<1x8x16xf32> to vector<8x16xf32>
    %cst_231 = arith.constant dense<0.000000e+00> : vector<64x16xf32>
    %212 = tpu.matmul %209, %211, %cst_231 {dimension_numbers = #tpu.dot_dimension_numbers<[1], [0], [0], [1], [0, 0, 1, 1], [], []>} : vector<64x8xf32>, vector<8x16xf32>, vector<64x16xf32> -> vector<64x16xf32>
    %213 = arith.addf %206, %212 : vector<64x16xf32>
    %c0_232 = arith.constant 0 : index
    %c2_233 = arith.constant 2 : index
    %c2_234 = arith.constant 2 : index
    %c0_235 = arith.constant 0 : index
    %214 = vector.load %arg10[%c0_232, %c2_233, %c2_234, %c0_235] : memref<1x10x10x8xf32, #tpu.memory_space<vmem>>, vector<1x8x8x8xf32>
    %215 = vector.shape_cast %214 : vector<1x8x8x8xf32> to vector<8x8x8xf32>
    %216 = vector.shape_cast %215 : vector<8x8x8xf32> to vector<64x8xf32>
    %c8_236 = arith.constant 8 : index
    %c0_237 = arith.constant 0 : index
    %c0_238 = arith.constant 0 : index
    %217 = vector.load %arg4[%c8_236, %c0_237, %c0_238] : memref<9x8x16xf32, #tpu.memory_space<vmem>>, vector<1x8x16xf32>
    %218 = vector.shape_cast %217 : vector<1x8x16xf32> to vector<8x16xf32>
    %cst_239 = arith.constant dense<0.000000e+00> : vector<64x16xf32>
    %219 = tpu.matmul %216, %218, %cst_239 {dimension_numbers = #tpu.dot_dimension_numbers<[1], [0], [0], [1], [0, 0, 1, 1], [], []>} : vector<64x8xf32>, vector<8x16xf32>, vector<64x16xf32> -> vector<64x16xf32>
    %220 = arith.addf %213, %219 : vector<64x16xf32>
    %c0_240 = arith.constant 0 : index
    %c0_241 = arith.constant 0 : index
    %221 = vector.load %arg5[%c0_240, %c0_241] : memref<1x16xf32, #tpu.memory_space<vmem>>, vector<1x16xf32>
    %222 = vector.broadcast %221 : vector<1x16xf32> to vector<64x16xf32>
    %223 = arith.addf %220, %222 : vector<64x16xf32>
    %cst_242 = arith.constant 0.000000e+00 : f32
    %224 = vector.broadcast %cst_242 : f32 to vector<64x16xf32>
    %225 = arith.maximumf %223, %224 : vector<64x16xf32>
    %226 = vector.shape_cast %225 : vector<64x16xf32> to vector<8x8x16xf32>
    %227 = vector.shape_cast %226 : vector<8x8x16xf32> to vector<4x2x8x16xf32>
    %cst_243 = arith.constant dense<0xFF800000> : vector<4x8x16xf32>
    %228 = vector.multi_reduction <maximumf>, %227, %cst_243 [1] : vector<4x2x8x16xf32> to vector<4x8x16xf32>
    %229 = vector.shape_cast %228 : vector<4x8x16xf32> to vector<4x4x2x16xf32>
    %cst_244 = arith.constant dense<0xFF800000> : vector<4x4x16xf32>
    %230 = vector.multi_reduction <maximumf>, %229, %cst_244 [2] : vector<4x4x2x16xf32> to vector<4x4x16xf32>
    %231 = vector.extract_strided_slice %230 {offsets = [0, 0, 0], sizes = [1, 4, 16], strides = [1, 1, 1]} : vector<4x4x16xf32> to vector<1x4x16xf32>
    %232 = vector.shape_cast %231 : vector<1x4x16xf32> to vector<4x16xf32>
    %c0_245 = arith.constant 0 : index
    %c0_246 = arith.constant 0 : index
    %233 = vector.load %arg11[%c0_245, %c0_246] : memref<16x16xf32, #tpu.memory_space<vmem>>, vector<4x16xf32>
    tpu.vector_store %arg11[%c0_245, %c0_246], %232 {strides = array<i32>} : memref<16x16xf32, #tpu.memory_space<vmem>>, vector<4x16xf32>,
    %234 = vector.extract_strided_slice %230 {offsets = [1, 0, 0], sizes = [1, 4, 16], strides = [1, 1, 1]} : vector<4x4x16xf32> to vector<1x4x16xf32>
    %235 = vector.shape_cast %234 : vector<1x4x16xf32> to vector<4x16xf32>
    %c4_247 = arith.constant 4 : index
    %c0_248 = arith.constant 0 : index
    %236 = vector.load %arg11[%c4_247, %c0_248] : memref<16x16xf32, #tpu.memory_space<vmem>>, vector<4x16xf32>
    tpu.vector_store %arg11[%c4_247, %c0_248], %235 {strides = array<i32>} : memref<16x16xf32, #tpu.memory_space<vmem>>, vector<4x16xf32>,
    %237 = vector.extract_strided_slice %230 {offsets = [2, 0, 0], sizes = [1, 4, 16], strides = [1, 1, 1]} : vector<4x4x16xf32> to vector<1x4x16xf32>
    %238 = vector.shape_cast %237 : vector<1x4x16xf32> to vector<4x16xf32>
    %c8_249 = arith.constant 8 : index
    %c0_250 = arith.constant 0 : index
    %239 = vector.load %arg11[%c8_249, %c0_250] : memref<16x16xf32, #tpu.memory_space<vmem>>, vector<4x16xf32>
    tpu.vector_store %arg11[%c8_249, %c0_250], %238 {strides = array<i32>} : memref<16x16xf32, #tpu.memory_space<vmem>>, vector<4x16xf32>,
    %240 = vector.extract_strided_slice %230 {offsets = [3, 0, 0], sizes = [1, 4, 16], strides = [1, 1, 1]} : vector<4x4x16xf32> to vector<1x4x16xf32>
    %241 = vector.shape_cast %240 : vector<1x4x16xf32> to vector<4x16xf32>
    %c12 = arith.constant 12 : index
    %c0_251 = arith.constant 0 : index
    %242 = vector.load %arg11[%c12, %c0_251] : memref<16x16xf32, #tpu.memory_space<vmem>>, vector<4x16xf32>
    tpu.vector_store %arg11[%c12, %c0_251], %241 {strides = array<i32>} : memref<16x16xf32, #tpu.memory_space<vmem>>, vector<4x16xf32>,
    %c0_252 = arith.constant 0 : index
    %c0_253 = arith.constant 0 : index
    %243 = vector.load %arg11[%c0_252, %c0_253] : memref<16x16xf32, #tpu.memory_space<vmem>>, vector<16x16xf32>
    %c0_254 = arith.constant 0 : index
    %c0_255 = arith.constant 0 : index
    %244 = vector.load %arg6[%c0_254, %c0_255] : memref<16x256xf32, #tpu.memory_space<vmem>>, vector<16x256xf32>
    %cst_256 = arith.constant dense<0.000000e+00> : vector<16x256xf32>
    %245 = tpu.matmul %243, %244, %cst_256 {dimension_numbers = #tpu.dot_dimension_numbers<[1], [0], [0], [1], [0, 0, 1, 1], [], []>} : vector<16x16xf32>, vector<16x256xf32>, vector<16x256xf32> -> vector<16x256xf32>
    %c0_257 = arith.constant 0 : index
    %c0_258 = arith.constant 0 : index
    %246 = vector.load %arg7[%c0_257, %c0_258] : memref<16x256xf32, #tpu.memory_space<vmem>>, vector<16x256xf32>
    %247 = arith.mulf %245, %246 : vector<16x256xf32>
    %cst_259 = arith.constant dense<0.000000e+00> : vector<256xf32>
    %248 = vector.multi_reduction <add>, %247, %cst_259 [0] : vector<16x256xf32> to vector<256xf32>
    %249 = vector.shape_cast %248 : vector<256xf32> to vector<1x256xf32>
    %c0_260 = arith.constant 0 : index
    %c0_261 = arith.constant 0 : index
    %c0_262 = arith.constant 0 : index
    %250 = vector.load %arg8[%c0_260, %c0_261, %c0_262] : memref<1x1x256xf32, #tpu.memory_space<vmem>>, vector<1x1x256xf32>
    %251 = vector.shape_cast %250 : vector<1x1x256xf32> to vector<1x256xf32>
    %252 = vector.shape_cast %249 : vector<1x256xf32> to vector<1x1x256xf32>
    tpu.vector_store %arg8[%c0_260, %c0_261, %c0_262], %252 {strides = array<i32>} : memref<1x1x256xf32, #tpu.memory_space<vmem>>, vector<1x1x256xf32>,
    return
  }
  func.func @transform_0(%arg0: i32) -> (i32, i32, i32, i32) {
    %c0_i32 = arith.constant 0 : i32
    %c0_i32_0 = arith.constant 0 : i32
    %c0_i32_1 = arith.constant 0 : i32
    %c0_i32_2 = arith.constant 0 : i32
    return %arg0, %c0_i32, %c0_i32_0, %c0_i32_1 : i32, i32, i32, i32
  }
  func.func @transform_1(%arg0: i32) -> (i32, i32, i32) {
    %c0_i32 = arith.constant 0 : i32
    %c0_i32_0 = arith.constant 0 : i32
    %c0_i32_1 = arith.constant 0 : i32
    %c0_i32_2 = arith.constant 0 : i32
    return %c0_i32, %c0_i32_0, %c0_i32_1 : i32, i32, i32
  }
  func.func @transform_2(%arg0: i32) -> (i32, i32) {
    %c0_i32 = arith.constant 0 : i32
    %c0_i32_0 = arith.constant 0 : i32
    %c0_i32_1 = arith.constant 0 : i32
    return %c0_i32, %c0_i32_0 : i32, i32
  }
  func.func @transform_3(%arg0: i32) -> (i32, i32, i32) {
    %c0_i32 = arith.constant 0 : i32
    %c0_i32_0 = arith.constant 0 : i32
    %c0_i32_1 = arith.constant 0 : i32
    %c0_i32_2 = arith.constant 0 : i32
    return %c0_i32, %c0_i32_0, %c0_i32_1 : i32, i32, i32
  }
  func.func @transform_4(%arg0: i32) -> (i32, i32) {
    %c0_i32 = arith.constant 0 : i32
    %c0_i32_0 = arith.constant 0 : i32
    %c0_i32_1 = arith.constant 0 : i32
    return %c0_i32, %c0_i32_0 : i32, i32
  }
  func.func @transform_5(%arg0: i32) -> (i32, i32) {
    %c0_i32 = arith.constant 0 : i32
    %c0_i32_0 = arith.constant 0 : i32
    %c0_i32_1 = arith.constant 0 : i32
    return %c0_i32, %c0_i32_0 : i32, i32
  }
  func.func @transform_6(%arg0: i32) -> (i32, i32) {
    %c0_i32 = arith.constant 0 : i32
    %c0_i32_0 = arith.constant 0 : i32
    %c0_i32_1 = arith.constant 0 : i32
    return %c0_i32, %c0_i32_0 : i32, i32
  }
  func.func @transform_7(%arg0: i32) -> (i32, i32, i32) {
    %c0_i32 = arith.constant 0 : i32
    %c0_i32_0 = arith.constant 0 : i32
    %c0_i32_1 = arith.constant 0 : i32
    return %arg0, %c0_i32, %c0_i32_0 : i32, i32, i32
  }
}

</mosaic_0001>

<llo_original>
// kernel: base_net_forward.1
$region0: #{base_net_forward.1}
  #allocation0 [shape = 'u32[]', space=smem, size = 0x4, offset = 0x4, fixed_abs, tag = 'smem constant byte address 0x4 - core index']
  #allocation1 [shape = 'u32[144,128]{1,0:T(1,128)}', space=vmem, size = 0x12000, scoped, tag = 'internal scratch']
  #allocation2 [shape = 'f32[1,18,18,8]{3,2,1,0:T(8,128)}', space=vmem, size = 0x36000, scoped, tag = 'scratch operand']
  #allocation3 [shape = 'f32[1,10,10,8]{3,2,1,0:T(8,128)}', space=vmem, size = 0x14000, scoped, tag = 'scratch operand']
  #allocation4 [shape = 'f32[16,16]{1,0:T(8,128)}', space=vmem, size = 0x2000, scoped, tag = 'scratch operand']
  %s0 = inlined_call_operand.vmem [shape: f32[2,16,16,8], index: 0, kind: input, shape index: {}]
  %s1 = inlined_call_operand.vmem [shape: f32[9,8,8], index: 1, kind: input, shape index: {}]
  %s2 = inlined_call_operand.vmem [shape: f32[1,8], index: 2, kind: input, shape index: {}]
  %s3 = inlined_call_operand.vmem [shape: f32[9,8,16], index: 3, kind: input, shape index: {}]
  %s4 = inlined_call_operand.vmem [shape: f32[1,16], index: 4, kind: input, shape index: {}]
  %s5 = inlined_call_operand.vmem [shape: f32[16,256], index: 5, kind: input, shape index: {}]
  %s6 = inlined_call_operand.vmem [shape: f32[16,256], index: 6, kind: input, shape index: {}]
  %s7 = inlined_call_operand.vmem [shape: f32[2,1,256], index: 7, kind: output, shape index: {}]
  %s8 = sld [smem:[#allocation0]]
  $region61: #{base_net_forward.1} parent=0
    _
  %s10 = ssub.s32 1, %s8
  %s11 = scalar_select 0, %s10, %s8
  loop: start=0, step=1, limit=4
  $region2: #{base_net_forward.1} parent=0 // loop_pre_header
    _
  $region3: #{base_net_forward.1} parent=0 // loop_header
    %s13 = sphi 0, %s17
    %p14 = scmp.ge.s32.totalorder %s13, 4
    %s23 = sphi 0, %s25
    %s26 = sphi 0, %s23
    %s27 = sphi 0, %s26
    %s43 = sphi 0, %s27
    %s47 = sphi 0, %s47
    %s49 = sphi 0, %s47
    %s50 = sphi 0, %s49
    %s64 = sphi 0, %s50
    %s68 = sphi 0, %s68
    %s70 = sphi 0, %s68
    %s71 = sphi 0, %s70
    %s85 = sphi 0, %s71
    %s89 = sphi 0, %s89
    %s91 = sphi 0, %s89
    %s92 = sphi 0, %s91
    %s106 = sphi 0, %s92
    %s110 = sphi 0, %s110
    %s112 = sphi 0, %s110
    %s113 = sphi 0, %s112
    %s127 = sphi 0, %s113
    %s131 = sphi 0, %s131
    %s133 = sphi 0, %s131
    %s134 = sphi 0, %s133
    %s148 = sphi 0, %s134
    %s152 = sphi 0, %s152
    %s154 = sphi 0, %s152
    %s155 = sphi 0, %s154
    %s169 = sphi 0, %s155
    %s175 = sphi 0, %s177
    %s178 = sphi 0, %s175
    %s179 = sphi 0, %s178
    %s195 = sphi 0, %s179
  $region4: #{base_net_forward.1} parent=0 // loop_header_branch
    %16 = sbr.rel (%p14) target = $region8
  $region5: #{base_net_forward.1} parent=0 // loop_body
    %s18 = ssub.s32 %s13, 1
    %s19 = ssub.s32 %s13, 2
    %s20 = sadd.s32 %s13, 1
    %s21 = ssub.s32 %s13, %s20
    %p22 = scmp.eq.s32.totalorder %s21, 0
    %s24 = sadd.s32 %s23, 1
    %s25 = scalar_select %p22, %s23, %s24
    %p28 = pneg %p22
    %p29 = scmp.eq.s32.totalorder %s13, 1
    %p30 = por %p28, %p29
    %p31 = scmp.ne.s32.totalorder %s23, %s26
    %p32 = scmp.eq.s32.totalorder %s13, 0
    %p33 = por %p31, %p32
    %p34 = scmp.ne.s32.totalorder %s23, %s26
    %p35 = scmp.eq.s32.totalorder %s18, 1
    %p36 = por %p34, %p35
    %p37 = scmp.ne.s32.totalorder %s26, %s27
    %p38 = scmp.eq.s32.totalorder %s18, 0
    %p39 = por %p37, %p38
    %p40 = scmp.ne.s32.totalorder %s26, %s27
    %p41 = scmp.eq.s32.totalorder %s19, 1
    %p42 = por %p40, %p41
    %p44 = scmp.ne.s32.totalorder %s27, %s43
    %p45 = scmp.eq.s32.totalorder %s19, 0
    %p46 = por %p44, %p45
    %s48 = sadd.s32 %s47, 1
    %p51 = scmp.eq.s32.totalorder %s13, 1
    %p52 = scmp.ne.s32.totalorder %s47, %s49
    %p53 = scmp.eq.s32.totalorder %s13, 0
    %p54 = por %p52, %p53
    %p55 = scmp.ne.s32.totalorder %s47, %s49
    %p56 = scmp.eq.s32.totalorder %s18, 1
    %p57 = por %p55, %p56
    %p58 = scmp.ne.s32.totalorder %s49, %s50
    %p59 = scmp.eq.s32.totalorder %s18, 0
    %p60 = por %p58, %p59
    %p61 = scmp.ne.s32.totalorder %s49, %s50
    %p62 = scmp.eq.s32.totalorder %s19, 1
    %p63 = por %p61, %p62
    %p65 = scmp.ne.s32.totalorder %s50, %s64
    %p66 = scmp.eq.s32.totalorder %s19, 0
    %p67 = por %p65, %p66
    %s69 = sadd.s32 %s68, 1
    %p72 = scmp.eq.s32.totalorder %s13, 1
    %p73 = scmp.ne.s32.totalorder %s68, %s70
    %p74 = scmp.eq.s32.totalorder %s13, 0
    %p75 = por %p73, %p74
    %p76 = scmp.ne.s32.totalorder %s68, %s70
    %p77 = scmp.eq.s32.totalorder %s18, 1
    %p78 = por %p76, %p77
    %p79 = scmp.ne.s32.totalorder %s70, %s71
    %p80 = scmp.eq.s32.totalorder %s18, 0
    %p81 = por %p79, %p80
    %p82 = scmp.ne.s32.totalorder %s70, %s71
    %p83 = scmp.eq.s32.totalorder %s19, 1
    %p84 = por %p82, %p83
    %p86 = scmp.ne.s32.totalorder %s71, %s85
    %p87 = scmp.eq.s32.totalorder %s19, 0
    %p88 = por %p86, %p87
    %s90 = sadd.s32 %s89, 1
    %p93 = scmp.eq.s32.totalorder %s13, 1
    %p94 = scmp.ne.s32.totalorder %s89, %s91
    %p95 = scmp.eq.s32.totalorder %s13, 0
    %p96 = por %p94, %p95
    %p97 = scmp.ne.s32.totalorder %s89, %s91
    %p98 = scmp.eq.s32.totalorder %s18, 1
    %p99 = por %p97, %p98
    %p100 = scmp.ne.s32.totalorder %s91, %s92
    %p101 = scmp.eq.s32.totalorder %s18, 0
    %p102 = por %p100, %p101
    %p103 = scmp.ne.s32.totalorder %s91, %s92
    %p104 = scmp.eq.s32.totalorder %s19, 1
    %p105 = por %p103, %p104
    %p107 = scmp.ne.s32.totalorder %s92, %s106
    %p108 = scmp.eq.s32.totalorder %s19, 0
    %p109 = por %p107, %p108
    %s111 = sadd.s32 %s110, 1
    %p114 = scmp.eq.s32.totalorder %s13, 1
    %p115 = scmp.ne.s32.totalorder %s110, %s112
    %p116 = scmp.eq.s32.totalorder %s13, 0
    %p117 = por %p115, %p116
    %p118 = scmp.ne.s32.totalorder %s110, %s112
    %p119 = scmp.eq.s32.totalorder %s18, 1
    %p120 = por %p118, %p119
    %p121 = scmp.ne.s32.totalorder %s112, %s113
    %p122 = scmp.eq.s32.totalorder %s18, 0
    %p123 = por %p121, %p122
    %p124 = scmp.ne.s32.totalorder %s112, %s113
    %p125 = scmp.eq.s32.totalorder %s19, 1
    %p126 = por %p124, %p125
    %p128 = scmp.ne.s32.totalorder %s113, %s127
    %p129 = scmp.eq.s32.totalorder %s19, 0
    %p130 = por %p128, %p129
    %s132 = sadd.s32 %s131, 1
    %p135 = scmp.eq.s32.totalorder %s13, 1
    %p136 = scmp.ne.s32.totalorder %s131, %s133
    %p137 = scmp.eq.s32.totalorder %s13, 0
    %p138 = por %p136, %p137
    %p139 = scmp.ne.s32.totalorder %s131, %s133
    %p140 = scmp.eq.s32.totalorder %s18, 1
    %p141 = por %p139, %p140
    %p142 = scmp.ne.s32.totalorder %s133, %s134
    %p143 = scmp.eq.s32.totalorder %s18, 0
    %p144 = por %p142, %p143
    %p145 = scmp.ne.s32.totalorder %s133, %s134
    %p146 = scmp.eq.s32.totalorder %s19, 1
    %p147 = por %p145, %p146
    %p149 = scmp.ne.s32.totalorder %s134, %s148
    %p150 = scmp.eq.s32.totalorder %s19, 0
    %p151 = por %p149, %p150
    %s153 = sadd.s32 %s152, 1
    %p156 = scmp.eq.s32.totalorder %s13, 1
    %p157 = scmp.ne.s32.totalorder %s152, %s154
    %p158 = scmp.eq.s32.totalorder %s13, 0
    %p159 = por %p157, %p158
    %p160 = scmp.ne.s32.totalorder %s152, %s154
    %p161 = scmp.eq.s32.totalorder %s18, 1
    %p162 = por %p160, %p161
    %p163 = scmp.ne.s32.totalorder %s154, %s155
    %p164 = scmp.eq.s32.totalorder %s18, 0
    %p165 = por %p163, %p164
    %p166 = scmp.ne.s32.totalorder %s154, %s155
    %p167 = scmp.eq.s32.totalorder %s19, 1
    %p168 = por %p166, %p167
    %p170 = scmp.ne.s32.totalorder %s155, %s169
    %p171 = scmp.eq.s32.totalorder %s19, 0
    %p172 = por %p170, %p171
    %s173 = ssub.s32 %s13, %s20
    %p174 = scmp.eq.s32.totalorder %s173, 0
    %s176 = sadd.s32 %s175, 1
    %s177 = scalar_select %p174, %s175, %s176
    %p180 = pneg %p174
    %p181 = scmp.eq.s32.totalorder %s13, 1
    %p182 = por %p180, %p181
    %p183 = scmp.ne.s32.totalorder %s175, %s178
    %p184 = scmp.eq.s32.totalorder %s13, 0
    %p185 = por %p183, %p184
    %p186 = scmp.ne.s32.totalorder %s175, %s178
    %p187 = scmp.eq.s32.totalorder %s18, 1
    %p188 = por %p186, %p187
    %p189 = scmp.ne.s32.totalorder %s178, %s179
    %p190 = scmp.eq.s32.totalorder %s18, 0
    %p191 = por %p189, %p190
    %p192 = scmp.ne.s32.totalorder %s178, %s179
    %p193 = scmp.eq.s32.totalorder %s19, 1
    %p194 = por %p192, %p193
    %p196 = scmp.ne.s32.totalorder %s179, %s195
    %p197 = scmp.eq.s32.totalorder %s19, 0
    %p198 = por %p196, %p197
    %p199 = scmp.le.s32.totalorder 1, %s13
    %p200 = scmp.lt.s32.totalorder %s13, 3
    %p201 = pnand %p199, %p200
    %p202 = pneg %p201
    // Predicated region
    $region9: #{base_net_forward.1} parent=5 // pred_check
      _
    $region10: #{base_net_forward.1} parent=5 // pred_check_branch
      %204 = sbr.rel (%p201) target = $region12
    $region11: #{base_net_forward.1} parent=5 // pred_region
      %s205 = ssub.s32 %s13, 1
      // Predicated region
      $region13: #{base_net_forward.1} parent=11 // pred_check
        %p206 = pneg %p60
      $region14: #{base_net_forward.1} parent=11 // pred_check_branch
        %208 = sbr.rel (%p206) target = $region16
      $region15: #{base_net_forward.1} parent=11 // pred_region
        _
      $region16: #{base_net_forward.1} parent=11 // pred_fallthru
        _
      // Predicated region
      $region17: #{base_net_forward.1} parent=11 // pred_check
        %p209 = pneg %p81
      $region18: #{base_net_forward.1} parent=11 // pred_check_branch
        %211 = sbr.rel (%p209) target = $region20
      $region19: #{base_net_forward.1} parent=11 // pred_region
        _
      $region20: #{base_net_forward.1} parent=11 // pred_fallthru
        _
      // Predicated region
      $region21: #{base_net_forward.1} parent=11 // pred_check
        %p212 = pneg %p102
      $region22: #{base_net_forward.1} parent=11 // pred_check_branch
        %214 = sbr.rel (%p212) target = $region24
      $region23: #{base_net_forward.1} parent=11 // pred_region
        _
      $region24: #{base_net_forward.1} parent=11 // pred_fallthru
        _
      // Predicated region
      $region25: #{base_net_forward.1} parent=11 // pred_check
        %p215 = pneg %p123
      $region26: #{base_net_forward.1} parent=11 // pred_check_branch
        %217 = sbr.rel (%p215) target = $region28
      $region27: #{base_net_forward.1} parent=11 // pred_region
        _
      $region28: #{base_net_forward.1} parent=11 // pred_fallthru
        _
      // Predicated region
      $region29: #{base_net_forward.1} parent=11 // pred_check
        %p218 = pneg %p144
      $region30: #{base_net_forward.1} parent=11 // pred_check_branch
        %220 = sbr.rel (%p218) target = $region32
      $region31: #{base_net_forward.1} parent=11 // pred_region
        _
      $region32: #{base_net_forward.1} parent=11 // pred_fallthru
        _
      // Predicated region
      $region33: #{base_net_forward.1} parent=11 // pred_check
        %p221 = pneg %p165
      $region34: #{base_net_forward.1} parent=11 // pred_check_branch
        %223 = sbr.rel (%p221) target = $region36
      $region35: #{base_net_forward.1} parent=11 // pred_region
        _
      $region36: #{base_net_forward.1} parent=11 // pred_fallthru
        _
    $region12: #{base_net_forward.1} parent=5 // pred_fallthru
      _
    %p224 = scmp.lt.s32.totalorder %s13, 2
    // Predicated region
    $region37: #{base_net_forward.1} parent=5 // pred_check
      %p225 = pneg %p224
    $region38: #{base_net_forward.1} parent=5 // pred_check_branch
      %227 = sbr.rel (%p225) target = $region40
    $region39: #{base_net_forward.1} parent=5 // pred_region
      // Predicated region
      $region41: #{base_net_forward.1} parent=39 // pred_check
        %p228 = pneg %p33
      $region42: #{base_net_forward.1} parent=39 // pred_check_branch
        %230 = sbr.rel (%p228) target = $region44
      $region43: #{base_net_forward.1} parent=39 // pred_region
        %p231 = scmp.lt.s32.totalorder %s13, 1
        %s232 = scalar_select %p231, %s13, 1
        %s233 = smul.addr %s232, 32
        %s234 = smul.addr %s233, 8
        %s235 = scalar_lea.vmem %s0, %s234
      $region44: #{base_net_forward.1} parent=39 // pred_fallthru
        _
    $region40: #{base_net_forward.1} parent=5 // pred_fallthru
      _
    %p236 = scmp.le.s32.totalorder 1, %s13
    %p237 = scmp.lt.s32.totalorder %s13, 3
    %p238 = pnand %p236, %p237
    %p239 = pneg %p238
    // Predicated region
    $region45: #{base_net_forward.1} parent=5 // pred_check
      _
    $region46: #{base_net_forward.1} parent=5 // pred_check_branch
      %241 = sbr.rel (%p238) target = $region48
    $region47: #{base_net_forward.1} parent=5 // pred_region
      %s242 = ssub.s32 %s13, 1
      %p243 = scmp.lt.s32.totalorder %s18, 1
      %s244 = scalar_select %p243, %s18, 1
      %s245 = smul.addr %s244, 32
      %s246 = smul.addr %s245, 8
      %s247 = scalar_lea.vmem %s0, %s246
      %p248 = pneg %p39
      %p249 = pneg %p36
      %p250 = pneg %p60
      %p251 = pneg %p57
      %p252 = pneg %p81
      %p253 = pneg %p78
      %p254 = pneg %p102
      %p255 = pneg %p99
      %p256 = pneg %p123
      %p257 = pneg %p120
      %p258 = pneg %p144
      %p259 = pneg %p141
      %p260 = pneg %p165
      %p261 = pneg %p162
      %p262 = pneg %p191
      %p263 = pneg %p188
      %p264 = scmp.lt.s32.totalorder %s18, 1
      %s265 = scalar_select %p264, %s18, 1
      %s266 = smul.addr %s265, 2
      %s267 = scalar_lea.vmem %s7, %s266
      %p268 = scmp.lt.s32.totalorder %s18, 1
      %s269 = scalar_select %p268, %s18, 1
      %s270 = smul.addr %s269, 32
      %s271 = smul.addr %s270, 8
      %s272 = scalar_lea.vmem %s0, %s271
      %p273 = scmp.lt.s32.totalorder %s18, 1
      %s274 = scalar_select %p273, %s18, 1
      %s275 = smul.addr %s274, 2
      %s276 = scalar_lea.vmem %s7, %s275
      %vm277 = vcmask 64512
      %278 = vst.msk [vmem:[#allocation2] sm:$0xff] %vm277, 0.0
      %279 = vst.msk [vmem:[#allocation2 + $0x8] sm:$0xff] %vm277, 0.0
      %vm280 = vcmask 58368
      %281 = vst.msk [vmem:[#allocation2 + $0x10] sm:$0x3] %vm280, 0.0
      %282 = vst.msk [vmem:[#allocation2 + $0x18] sm:$0xff] %vm277, 0.0
      %283 = vst.msk [vmem:[#allocation2 + $0x20] sm:$0xff] %vm277, 0.0
      %284 = vst.msk [vmem:[#allocation2 + $0x28] sm:$0x3] %vm280, 0.0
      %285 = vst.msk [vmem:[#allocation2 + $0x30] sm:$0xff] %vm277, 0.0
      %286 = vst.msk [vmem:[#allocation2 + $0x38] sm:$0xff] %vm277, 0.0
      %287 = vst.msk [vmem:[#allocation2 + $0x40] sm:$0x3] %vm280, 0.0
      %288 = vst.msk [vmem:[#allocation2 + $0x48] sm:$0xff] %vm277, 0.0
      %289 = vst.msk [vmem:[#allocation2 + $0x50] sm:$0xff] %vm277, 0.0
      %290 = vst.msk [vmem:[#allocation2 + $0x58] sm:$0x3] %vm280, 0.0
      %291 = vst.msk [vmem:[#allocation2 + $0x60] sm:$0xff] %vm277, 0.0
      %292 = vst.msk [vmem:[#allocation2 + $0x68] sm:$0xff] %vm277, 0.0
      %293 = vst.msk [vmem:[#allocation2 + $0x70] sm:$0x3] %vm280, 0.0
      %294 = vst.msk [vmem:[#allocation2 + $0x78] sm:$0xff] %vm277, 0.0
      %295 = vst.msk [vmem:[#allocation2 + $0x80] sm:$0xff] %vm277, 0.0
      %296 = vst.msk [vmem:[#allocation2 + $0x88] sm:$0x3] %vm280, 0.0
      %297 = vst.msk [vmem:[#allocation2 + $0x90] sm:$0xff] %vm277, 0.0
      %298 = vst.msk [vmem:[#allocation2 + $0x98] sm:$0xff] %vm277, 0.0
      %299 = vst.msk [vmem:[#allocation2 + $0xa0] sm:$0x3] %vm280, 0.0
      %300 = vst.msk [vmem:[#allocation2 + $0xa8] sm:$0xff] %vm277, 0.0
      %301 = vst.msk [vmem:[#allocation2 + $0xb0] sm:$0xff] %vm277, 0.0
      %302 = vst.msk [vmem:[#allocation2 + $0xb8] sm:$0x3] %vm280, 0.0
      %303 = vst.msk [vmem:[#allocation2 + $0xc0] sm:$0xff] %vm277, 0.0
      %304 = vst.msk [vmem:[#allocation2 + $0xc8] sm:$0xff] %vm277, 0.0
      %305 = vst.msk [vmem:[#allocation2 + $0xd0] sm:$0x3] %vm280, 0.0
      %306 = vst.msk [vmem:[#allocation2 + $0xd8] sm:$0xff] %vm277, 0.0
      %307 = vst.msk [vmem:[#allocation2 + $0xe0] sm:$0xff] %vm277, 0.0
      %308 = vst.msk [vmem:[#allocation2 + $0xe8] sm:$0x3] %vm280, 0.0
      %309 = vst.msk [vmem:[#allocation2 + $0xf0] sm:$0xff] %vm277, 0.0
      %310 = vst.msk [vmem:[#allocation2 + $0xf8] sm:$0xff] %vm277, 0.0
      %311 = vst.msk [vmem:[#allocation2 + $0x100] sm:$0x3] %vm280, 0.0
      %312 = vst.msk [vmem:[#allocation2 + $0x108] sm:$0xff] %vm277, 0.0
      %313 = vst.msk [vmem:[#allocation2 + $0x110] sm:$0xff] %vm277, 0.0
      %314 = vst.msk [vmem:[#allocation2 + $0x118] sm:$0x3] %vm280, 0.0
      %315 = vst.msk [vmem:[#allocation2 + $0x120] sm:$0xff] %vm277, 0.0
      %316 = vst.msk [vmem:[#allocation2 + $0x128] sm:$0xff] %vm277, 0.0
      %317 = vst.msk [vmem:[#allocation2 + $0x130] sm:$0x3] %vm280, 0.0
      %318 = vst.msk [vmem:[#allocation2 + $0x138] sm:$0xff] %vm277, 0.0
      %319 = vst.msk [vmem:[#allocation2 + $0x140] sm:$0xff] %vm277, 0.0
      %320 = vst.msk [vmem:[#allocation2 + $0x148] sm:$0x3] %vm280, 0.0
      %321 = vst.msk [vmem:[#allocation2 + $0x150] sm:$0xff] %vm277, 0.0
      %322 = vst.msk [vmem:[#allocation2 + $0x158] sm:$0xff] %vm277, 0.0
      %323 = vst.msk [vmem:[#allocation2 + $0x160] sm:$0x3] %vm280, 0.0
      %324 = vst.msk [vmem:[#allocation2 + $0x168] sm:$0xff] %vm277, 0.0
      %325 = vst.msk [vmem:[#allocation2 + $0x170] sm:$0xff] %vm277, 0.0
      %326 = vst.msk [vmem:[#allocation2 + $0x178] sm:$0x3] %vm280, 0.0
      %327 = vst.msk [vmem:[#allocation2 + $0x180] sm:$0xff] %vm277, 0.0
      %328 = vst.msk [vmem:[#allocation2 + $0x188] sm:$0xff] %vm277, 0.0
      %329 = vst.msk [vmem:[#allocation2 + $0x190] sm:$0x3] %vm280, 0.0
      %330 = vst.msk [vmem:[#allocation2 + $0x198] sm:$0xff] %vm277, 0.0
      %331 = vst.msk [vmem:[#allocation2 + $0x1a0] sm:$0xff] %vm277, 0.0
      %332 = vst.msk [vmem:[#allocation2 + $0x1a8] sm:$0x3] %vm280, 0.0
      %333 = vst.msk [vmem:[#allocation3] sm:$0xff] %vm277, 0.0
      %334 = vst.msk [vmem:[#allocation3 + $0x8] sm:$0x3] %vm280, 0.0
      %335 = vst.msk [vmem:[#allocation3 + $0x10] sm:$0xff] %vm277, 0.0
      %336 = vst.msk [vmem:[#allocation3 + $0x18] sm:$0x3] %vm280, 0.0
      %337 = vst.msk [vmem:[#allocation3 + $0x20] sm:$0xff] %vm277, 0.0
      %338 = vst.msk [vmem:[#allocation3 + $0x28] sm:$0x3] %vm280, 0.0
      %339 = vst.msk [vmem:[#allocation3 + $0x30] sm:$0xff] %vm277, 0.0
      %340 = vst.msk [vmem:[#allocation3 + $0x38] sm:$0x3] %vm280, 0.0
      %341 = vst.msk [vmem:[#allocation3 + $0x40] sm:$0xff] %vm277, 0.0
      %342 = vst.msk [vmem:[#allocation3 + $0x48] sm:$0x3] %vm280, 0.0
      %343 = vst.msk [vmem:[#allocation3 + $0x50] sm:$0xff] %vm277, 0.0
      %344 = vst.msk [vmem:[#allocation3 + $0x58] sm:$0x3] %vm280, 0.0
      %345 = vst.msk [vmem:[#allocation3 + $0x60] sm:$0xff] %vm277, 0.0
      %346 = vst.msk [vmem:[#allocation3 + $0x68] sm:$0x3] %vm280, 0.0
      %347 = vst.msk [vmem:[#allocation3 + $0x70] sm:$0xff] %vm277, 0.0
      %348 = vst.msk [vmem:[#allocation3 + $0x78] sm:$0x3] %vm280, 0.0
      %349 = vst.msk [vmem:[#allocation3 + $0x80] sm:$0xff] %vm277, 0.0
      %350 = vst.msk [vmem:[#allocation3 + $0x88] sm:$0x3] %vm280, 0.0
      %351 = vst.msk [vmem:[#allocation3 + $0x90] sm:$0xff] %vm277, 0.0
      %352 = vst.msk [vmem:[#allocation3 + $0x98] sm:$0x3] %vm280, 0.0
      %v353 = vld [vmem:[%s272] sm:$0xff]
      %v354 = vld [vmem:[%s272 + $0x8] sm:$0xff]
      %v355 = vld [vmem:[%s272 + $0x10] sm:$0xff]
      %v356 = vld [vmem:[%s272 + $0x18] sm:$0xff]
      %v357 = vld [vmem:[%s272 + $0x20] sm:$0xff]
      %v358 = vld [vmem:[%s272 + $0x28] sm:$0xff]
      %v359 = vld [vmem:[%s272 + $0x30] sm:$0xff]
      %v360 = vld [vmem:[%s272 + $0x38] sm:$0xff]
      %v361 = vld [vmem:[%s272 + $0x40] sm:$0xff]
      %v362 = vld [vmem:[%s272 + $0x48] sm:$0xff]
      %v363 = vld [vmem:[%s272 + $0x50] sm:$0xff]
      %v364 = vld [vmem:[%s272 + $0x58] sm:$0xff]
      %v365 = vld [vmem:[%s272 + $0x60] sm:$0xff]
      %v366 = vld [vmem:[%s272 + $0x68] sm:$0xff]
      %v367 = vld [vmem:[%s272 + $0x70] sm:$0xff]
      %v368 = vld [vmem:[%s272 + $0x78] sm:$0xff]
      %v369 = vld [vmem:[%s272 + $0x80] sm:$0xff]
      %v370 = vld [vmem:[%s272 + $0x88] sm:$0xff]
      %v371 = vld [vmem:[%s272 + $0x90] sm:$0xff]
      %v372 = vld [vmem:[%s272 + $0x98] sm:$0xff]
      %v373 = vld [vmem:[%s272 + $0xa0] sm:$0xff]
      %v374 = vld [vmem:[%s272 + $0xa8] sm:$0xff]
      %v375 = vld [vmem:[%s272 + $0xb0] sm:$0xff]
      %v376 = vld [vmem:[%s272 + $0xb8] sm:$0xff]
      %v377 = vld [vmem:[%s272 + $0xc0] sm:$0xff]
      %v378 = vld [vmem:[%s272 + $0xc8] sm:$0xff]
      %v379 = vld [vmem:[%s272 + $0xd0] sm:$0xff]
      %v380 = vld [vmem:[%s272 + $0xd8] sm:$0xff]
      %v381 = vld [vmem:[%s272 + $0xe0] sm:$0xff]
      %v382 = vld [vmem:[%s272 + $0xe8] sm:$0xff]
      %v383 = vld [vmem:[%s272 + $0xf0] sm:$0xff]
      %v384 = vld [vmem:[%s272 + $0xf8] sm:$0xff]
      %s385 = scalar_lea.vmem [#allocation2], 24
      %386 = vst.msk [vmem:[%s385 + $0x1] sm:$0xff] %vm277, %v353
      %387 = vst.msk [vmem:[%s385 + $0x9] sm:$0xff] %vm277, %v354
      %388 = vst.msk [vmem:[%s385 + $0x19] sm:$0xff] %vm277, %v355
      %389 = vst.msk [vmem:[%s385 + $0x21] sm:$0xff] %vm277, %v356
      %390 = vst.msk [vmem:[%s385 + $0x31] sm:$0xff] %vm277, %v357
      %391 = vst.msk [vmem:[%s385 + $0x39] sm:$0xff] %vm277, %v358
      %392 = vst.msk [vmem:[%s385 + $0x49] sm:$0xff] %vm277, %v359
      %393 = vst.msk [vmem:[%s385 + $0x51] sm:$0xff] %vm277, %v360
      %394 = vst.msk [vmem:[%s385 + $0x61] sm:$0xff] %vm277, %v361
      %395 = vst.msk [vmem:[%s385 + $0x69] sm:$0xff] %vm277, %v362
      %396 = vst.msk [vmem:[%s385 + $0x79] sm:$0xff] %vm277, %v363
      %397 = vst.msk [vmem:[%s385 + $0x81] sm:$0xff] %vm277, %v364
      %398 = vst.msk [vmem:[%s385 + $0x91] sm:$0xff] %vm277, %v365
      %399 = vst.msk [vmem:[%s385 + $0x99] sm:$0xff] %vm277, %v366
      %400 = vst.msk [vmem:[%s385 + $0xa9] sm:$0xff] %vm277, %v367
      %401 = vst.msk [vmem:[%s385 + $0xb1] sm:$0xff] %vm277, %v368
      %402 = vst.msk [vmem:[%s385 + $0xc1] sm:$0xff] %vm277, %v369
      %403 = vst.msk [vmem:[%s385 + $0xc9] sm:$0xff] %vm277, %v370
      %404 = vst.msk [vmem:[%s385 + $0xd9] sm:$0xff] %vm277, %v371
      %405 = vst.msk [vmem:[%s385 + $0xe1] sm:$0xff] %vm277, %v372
      %406 = vst.msk [vmem:[%s385 + $0xf1] sm:$0xff] %vm277, %v373
      %407 = vst.msk [vmem:[%s385 + $0xf9] sm:$0xff] %vm277, %v374
      %408 = vst.msk [vmem:[%s385 + $0x109] sm:$0xff] %vm277, %v375
      %409 = vst.msk [vmem:[%s385 + $0x111] sm:$0xff] %vm277, %v376
      %410 = vst.msk [vmem:[%s385 + $0x121] sm:$0xff] %vm277, %v377
      %411 = vst.msk [vmem:[%s385 + $0x129] sm:$0xff] %vm277, %v378
      %412 = vst.msk [vmem:[%s385 + $0x139] sm:$0xff] %vm277, %v379
      %413 = vst.msk [vmem:[%s385 + $0x141] sm:$0xff] %vm277, %v380
      %414 = vst.msk [vmem:[%s385 + $0x151] sm:$0xff] %vm277, %v381
      %415 = vst.msk [vmem:[%s385 + $0x159] sm:$0xff] %vm277, %v382
      %416 = vst.msk [vmem:[%s385 + $0x169] sm:$0xff] %vm277, %v383
      %417 = vst.msk [vmem:[%s385 + $0x171] sm:$0xff] %vm277, %v384
      %v418 = vld [vmem:[#allocation2] sm:$0xff]
      %v419 = vld [vmem:[#allocation2 + $0x8] sm:$0xff]
      %v420 = vld [vmem:[#allocation2 + $0x18] sm:$0xff]
      %v421 = vld [vmem:[#allocation2 + $0x20] sm:$0xff]
      %v422 = vld [vmem:[#allocation2 + $0x30] sm:$0xff]
      %v423 = vld [vmem:[#allocation2 + $0x38] sm:$0xff]
      %v424 = vld [vmem:[#allocation2 + $0x48] sm:$0xff]
      %v425 = vld [vmem:[#allocation2 + $0x50] sm:$0xff]
      %v426 = vld [vmem:[#allocation2 + $0x60] sm:$0xff]
      %v427 = vld [vmem:[#allocation2 + $0x68] sm:$0xff]
      %v428 = vld [vmem:[#allocation2 + $0x78] sm:$0xff]
      %v429 = vld [vmem:[#allocation2 + $0x80] sm:$0xff]
      %v430 = vld [vmem:[#allocation2 + $0x90] sm:$0xff]
      %v431 = vld [vmem:[#allocation2 + $0x98] sm:$0xff]
      %v432 = vld [vmem:[#allocation2 + $0xa8] sm:$0xff]
      %v433 = vld [vmem:[#allocation2 + $0xb0] sm:$0xff]
      %v434 = vld [vmem:[%s1] sm:$0xff]
      %v435 = vld [vmem:[#allocation2 + $0x1] sm:$0xff]
      %v436 = vld [vmem:[#allocation2 + $0x9] sm:$0xff]
      %v437 = vld [vmem:[#allocation2 + $0x19] sm:$0xff]
      %v438 = vld [vmem:[#allocation2 + $0x21] sm:$0xff]
      %v439 = vld [vmem:[#allocation2 + $0x31] sm:$0xff]
      %v440 = vld [vmem:[#allocation2 + $0x39] sm:$0xff]
      %v441 = vld [vmem:[#allocation2 + $0x49] sm:$0xff]
      %v442 = vld [vmem:[#allocation2 + $0x51] sm:$0xff]
      %v443 = vld [vmem:[#allocation2 + $0x61] sm:$0xff]
      %v444 = vld [vmem:[#allocation2 + $0x69] sm:$0xff]
      %v445 = vld [vmem:[#allocation2 + $0x79] sm:$0xff]
      %v446 = vld [vmem:[#allocation2 + $0x81] sm:$0xff]
      %v447 = vld [vmem:[#allocation2 + $0x91] sm:$0xff]
      %v448 = vld [vmem:[#allocation2 + $0x99] sm:$0xff]
      %v449 = vld [vmem:[#allocation2 + $0xa9] sm:$0xff]
      %v450 = vld [vmem:[#allocation2 + $0xb1] sm:$0xff]
      %s451 = scalar_lea.vmem %s1, 8
      %v452 = vld [vmem:[%s451] sm:$0xff]
      %v454 = vsel %vm277, %v435, 0
      %v457 = vsel %vm277, %v436, 0
      %v460 = vsel %vm277, %v437, 0
      %v463 = vsel %vm277, %v438, 0
      %v466 = vsel %vm277, %v439, 0
      %v469 = vsel %vm277, %v440, 0
      %v472 = vsel %vm277, %v441, 0
      %v475 = vsel %vm277, %v442, 0
      %v478 = vsel %vm277, %v443, 0
      %v481 = vsel %vm277, %v444, 0
      %v484 = vsel %vm277, %v445, 0
      %v487 = vsel %vm277, %v446, 0
      %v490 = vsel %vm277, %v447, 0
      %v493 = vsel %vm277, %v448, 0
      %v496 = vsel %vm277, %v449, 0
      %v499 = vsel %vm277, %v450, 0
      %501 = vmatprep.subr.mxu0 0.0
      %502 = vmatpush1.msra.mxu0 0.0
      %503 = vmatprep.subr.mxu0 0.0
      %504 = vmatpush1.msra.mxu0 0.0
      %505 = vmatprep.subr.mxu0 0.0
      %506 = vmatpush1.msra.mxu0 0.0
      %507 = vmatprep.subr.mxu0 0.0
      %508 = vmatpush1.msra.mxu0 0.0
      %509 = vmatprep.subr.mxu0 0.0
      %510 = vmatpush1.msra.mxu0 0.0
      %511 = vmatprep.subr.mxu0 0.0
      %512 = vmatpush1.msra.mxu0 0.0
      %513 = vmatprep.subr.mxu0 0.0
      %514 = vmatpush1.msra.mxu0 0.0
      %515 = vmatprep.subr.mxu0 0.0
      %516 = vmatpush1.msra.mxu0 0.0
      %517 = vmatprep.subr.mxu0 0.0
      %518 = vmatpush1.msra.mxu0 0.0
      %519 = vmatprep.subr.mxu0 0.0
      %520 = vmatpush1.msra.mxu0 0.0
      %521 = vmatprep.subr.mxu0 0.0
      %522 = vmatpush1.msra.mxu0 0.0
      %523 = vmatprep.subr.mxu0 0.0
      %524 = vmatpush1.msra.mxu0 0.0
      %525 = vmatprep.subr.mxu0 0.0
      %526 = vmatpush1.msra.mxu0 0.0
      %527 = vmatprep.subr.mxu0 0.0
      %528 = vmatpush1.msra.mxu0 0.0
      %529 = vmatprep.subr.mxu0 0.0
      %530 = vmatpush1.msra.mxu0 0.0
      %531 = vmatprep.subr.mxu0 0.0
      %532 = vmatpush1.msra.mxu0 %v452
      %533 = vmatprep.subr.mxu0 0.0
      %534 = vmatpush2.msra.mxu0 0.0
      %535 = vmatprep.subr.mxu0 0.0
      %536 = vmatpush2.msra.mxu0 0.0
      %537 = vmatprep.subr.mxu0 0.0
      %538 = vmatpush2.msra.mxu0 0.0
      %539 = vmatprep.subr.mxu0 0.0
      %540 = vmatpush2.msra.mxu0 0.0
      %541 = vmatprep.subr.mxu0 0.0
      %542 = vmatpush2.msra.mxu0 0.0
      %543 = vmatprep.subr.mxu0 0.0
      %544 = vmatpush2.msra.mxu0 0.0
      %545 = vmatprep.subr.mxu0 0.0
      %546 = vmatpush2.msra.mxu0 0.0
      %547 = vmatprep.subr.mxu0 0.0
      %548 = vmatpush2.msra.mxu0 0.0
      %549 = vmatprep.subr.mxu0 0.0
      %550 = vmatpush2.msra.mxu0 0.0
      %551 = vmatprep.subr.mxu0 0.0
      %552 = vmatpush2.msra.mxu0 0.0
      %553 = vmatprep.subr.mxu0 0.0
      %554 = vmatpush2.msra.mxu0 0.0
      %555 = vmatprep.subr.mxu0 0.0
      %556 = vmatpush2.msra.mxu0 0.0
      %557 = vmatprep.subr.mxu0 0.0
      %558 = vmatpush2.msra.mxu0 0.0
      %559 = vmatprep.subr.mxu0 0.0
      %560 = vmatpush2.msra.mxu0 0.0
      %561 = vmatprep.subr.mxu0 0.0
      %562 = vmatpush2.msra.mxu0 0.0
      %563 = vmatprep.subr.mxu0 0.0
      %564 = vmatpush2.msra.mxu0 0.0
      %565 = vmatprep.mubr.f32.mxu0 0.0
      %566 = vmatmul.mubr.f32.gmra.mxu0 %v454
      %v567 = vpop.f32.mrf.mxu0
      %v568 = vadd.f32 0.0, %v567
      %v569 = vpop.f32.mrf.mxu0
      %570 = vmatprep.mubr.f32.mxu0 0.0
      %571 = vmatmul.mubr.f32.gmra.mxu0 %v457
      %v572 = vpop.f32.mrf.mxu0
      %v573 = vadd.f32 0.0, %v572
      %v574 = vpop.f32.mrf.mxu0
      %575 = vmatprep.mubr.f32.mxu0 0.0
      %576 = vmatmul.mubr.f32.gmra.mxu0 %v460
      %v577 = vpop.f32.mrf.mxu0
      %v578 = vadd.f32 0.0, %v577
      %v579 = vpop.f32.mrf.mxu0
      %580 = vmatprep.mubr.f32.mxu0 0.0
      %581 = vmatmul.mubr.f32.gmra.mxu0 %v463
      %v582 = vpop.f32.mrf.mxu0
      %v583 = vadd.f32 0.0, %v582
      %v584 = vpop.f32.mrf.mxu0
      %585 = vmatprep.mubr.f32.mxu0 0.0
      %586 = vmatmul.mubr.f32.gmra.mxu0 %v466
      %v587 = vpop.f32.mrf.mxu0
      %v588 = vadd.f32 0.0, %v587
      %v589 = vpop.f32.mrf.mxu0
      %590 = vmatprep.mubr.f32.mxu0 0.0
      %591 = vmatmul.mubr.f32.gmra.mxu0 %v469
      %v592 = vpop.f32.mrf.mxu0
      %v593 = vadd.f32 0.0, %v592
      %v594 = vpop.f32.mrf.mxu0
      %595 = vmatprep.mubr.f32.mxu0 0.0
      %596 = vmatmul.mubr.f32.gmra.mxu0 %v472
      %v597 = vpop.f32.mrf.mxu0
      %v598 = vadd.f32 0.0, %v597
      %v599 = vpop.f32.mrf.mxu0
      %600 = vmatprep.mubr.f32.mxu0 0.0
      %601 = vmatmul.mubr.f32.gmra.mxu0 %v475
      %v602 = vpop.f32.mrf.mxu0
      %v603 = vadd.f32 0.0, %v602
      %v604 = vpop.f32.mrf.mxu0
      %605 = vmatprep.mubr.f32.mxu0 0.0
      %606 = vmatmul.mubr.f32.gmra.mxu0 %v478
      %v607 = vpop.f32.mrf.mxu0
      %v608 = vadd.f32 0.0, %v607
      %v609 = vpop.f32.mrf.mxu0
      %610 = vmatprep.mubr.f32.mxu0 0.0
      %611 = vmatmul.mubr.f32.gmra.mxu0 %v481
      %v612 = vpop.f32.mrf.mxu0
      %v613 = vadd.f32 0.0, %v612
      %v614 = vpop.f32.mrf.mxu0
      %615 = vmatprep.mubr.f32.mxu0 0.0
      %616 = vmatmul.mubr.f32.gmra.mxu0 %v484
      %v617 = vpop.f32.mrf.mxu0
      %v618 = vadd.f32 0.0, %v617
      %v619 = vpop.f32.mrf.mxu0
      %620 = vmatprep.mubr.f32.mxu0 0.0
      %621 = vmatmul.mubr.f32.gmra.mxu0 %v487
      %v622 = vpop.f32.mrf.mxu0
      %v623 = vadd.f32 0.0, %v622
      %v624 = vpop.f32.mrf.mxu0
      %625 = vmatprep.mubr.f32.mxu0 0.0
      %626 = vmatmul.mubr.f32.gmra.mxu0 %v490
      %v627 = vpop.f32.mrf.mxu0
      %v628 = vadd.f32 0.0, %v627
      %v629 = vpop.f32.mrf.mxu0
      %630 = vmatprep.mubr.f32.mxu0 0.0
      %631 = vmatmul.mubr.f32.gmra.mxu0 %v493
      %v632 = vpop.f32.mrf.mxu0
      %v633 = vadd.f32 0.0, %v632
      %v634 = vpop.f32.mrf.mxu0
      %635 = vmatprep.mubr.f32.mxu0 0.0
      %636 = vmatmul.mubr.f32.gmra.mxu0 %v496
      %v637 = vpop.f32.mrf.mxu0
      %v638 = vadd.f32 0.0, %v637
      %v639 = vpop.f32.mrf.mxu0
      %640 = vmatprep.mubr.f32.mxu0 0.0
      %641 = vmatmul.mubr.f32.gmra.mxu0 %v499
      %v642 = vpop.f32.mrf.mxu0
      %v643 = vadd.f32 0.0, %v642
      %v644 = vpop.f32.mrf.mxu0
      %645 = vdwg.mxu0
      %v647 = vsel %vm277, %v418, 0
      %v650 = vsel %vm277, %v419, 0
      %v653 = vsel %vm277, %v420, 0
      %v656 = vsel %vm277, %v421, 0
      %v659 = vsel %vm277, %v422, 0
      %v662 = vsel %vm277, %v423, 0
      %v665 = vsel %vm277, %v424, 0
      %v668 = vsel %vm277, %v425, 0
      %v671 = vsel %vm277, %v426, 0
      %v674 = vsel %vm277, %v427, 0
      %v677 = vsel %vm277, %v428, 0
      %v680 = vsel %vm277, %v429, 0
      %v683 = vsel %vm277, %v430, 0
      %v686 = vsel %vm277, %v431, 0
      %v689 = vsel %vm277, %v432, 0
      %v692 = vsel %vm277, %v433, 0
      %694 = vmatprep.subr.mxu0 0.0
      %695 = vmatpush1.msra.mxu0 0.0
      %696 = vmatprep.subr.mxu0 0.0
      %697 = vmatpush1.msra.mxu0 0.0
      %698 = vmatprep.subr.mxu0 0.0
      %699 = vmatpush1.msra.mxu0 0.0
      %700 = vmatprep.subr.mxu0 0.0
      %701 = vmatpush1.msra.mxu0 0.0
      %702 = vmatprep.subr.mxu0 0.0
      %703 = vmatpush1.msra.mxu0 0.0
      %704 = vmatprep.subr.mxu0 0.0
      %705 = vmatpush1.msra.mxu0 0.0
      %706 = vmatprep.subr.mxu0 0.0
      %707 = vmatpush1.msra.mxu0 0.0
      %708 = vmatprep.subr.mxu0 0.0
      %709 = vmatpush1.msra.mxu0 0.0
      %710 = vmatprep.subr.mxu0 0.0
      %711 = vmatpush1.msra.mxu0 0.0
      %712 = vmatprep.subr.mxu0 0.0
      %713 = vmatpush1.msra.mxu0 0.0
      %714 = vmatprep.subr.mxu0 0.0
      %715 = vmatpush1.msra.mxu0 0.0
      %716 = vmatprep.subr.mxu0 0.0
      %717 = vmatpush1.msra.mxu0 0.0
      %718 = vmatprep.subr.mxu0 0.0
      %719 = vmatpush1.msra.mxu0 0.0
      %720 = vmatprep.subr.mxu0 0.0
      %721 = vmatpush1.msra.mxu0 0.0
      %722 = vmatprep.subr.mxu0 0.0
      %723 = vmatpush1.msra.mxu0 0.0
      %724 = vmatprep.subr.mxu0 0.0
      %725 = vmatpush1.msra.mxu0 %v434
      %726 = vmatprep.subr.mxu0 0.0
      %727 = vmatpush2.msra.mxu0 0.0
      %728 = vmatprep.subr.mxu0 0.0
      %729 = vmatpush2.msra.mxu0 0.0
      %730 = vmatprep.subr.mxu0 0.0
      %731 = vmatpush2.msra.mxu0 0.0
      %732 = vmatprep.subr.mxu0 0.0
      %733 = vmatpush2.msra.mxu0 0.0
      %734 = vmatprep.subr.mxu0 0.0
      %735 = vmatpush2.msra.mxu0 0.0
      %736 = vmatprep.subr.mxu0 0.0
      %737 = vmatpush2.msra.mxu0 0.0
      %738 = vmatprep.subr.mxu0 0.0
      %739 = vmatpush2.msra.mxu0 0.0
      %740 = vmatprep.subr.mxu0 0.0
      %741 = vmatpush2.msra.mxu0 0.0
      %742 = vmatprep.subr.mxu0 0.0
      %743 = vmatpush2.msra.mxu0 0.0
      %744 = vmatprep.subr.mxu0 0.0
      %745 = vmatpush2.msra.mxu0 0.0
      %746 = vmatprep.subr.mxu0 0.0
      %747 = vmatpush2.msra.mxu0 0.0
      %748 = vmatprep.subr.mxu0 0.0
      %749 = vmatpush2.msra.mxu0 0.0
      %750 = vmatprep.subr.mxu0 0.0
      %751 = vmatpush2.msra.mxu0 0.0
      %752 = vmatprep.subr.mxu0 0.0
      %753 = vmatpush2.msra.mxu0 0.0
      %754 = vmatprep.subr.mxu0 0.0
      %755 = vmatpush2.msra.mxu0 0.0
      %756 = vmatprep.subr.mxu0 0.0
      %757 = vmatpush2.msra.mxu0 0.0
      %758 = vmatprep.mubr.f32.mxu0 0.0
      %759 = vmatmul.mubr.f32.gmra.mxu0 %v647
      %v760 = vpop.f32.mrf.mxu0
      %v761 = vadd.f32 %v568, %v760
      %v762 = vpop.f32.mrf.mxu0
      %763 = vmatprep.mubr.f32.mxu0 0.0
      %764 = vmatmul.mubr.f32.gmra.mxu0 %v650
      %v765 = vpop.f32.mrf.mxu0
      %v766 = vadd.f32 %v573, %v765
      %v767 = vpop.f32.mrf.mxu0
      %768 = vmatprep.mubr.f32.mxu0 0.0
      %769 = vmatmul.mubr.f32.gmra.mxu0 %v653
      %v770 = vpop.f32.mrf.mxu0
      %v771 = vadd.f32 %v578, %v770
      %v772 = vpop.f32.mrf.mxu0
      %773 = vmatprep.mubr.f32.mxu0 0.0
      %774 = vmatmul.mubr.f32.gmra.mxu0 %v656
      %v775 = vpop.f32.mrf.mxu0
      %v776 = vadd.f32 %v583, %v775
      %v777 = vpop.f32.mrf.mxu0
      %778 = vmatprep.mubr.f32.mxu0 0.0
      %779 = vmatmul.mubr.f32.gmra.mxu0 %v659
      %v780 = vpop.f32.mrf.mxu0
      %v781 = vadd.f32 %v588, %v780
      %v782 = vpop.f32.mrf.mxu0
      %783 = vmatprep.mubr.f32.mxu0 0.0
      %784 = vmatmul.mubr.f32.gmra.mxu0 %v662
      %v785 = vpop.f32.mrf.mxu0
      %v786 = vadd.f32 %v593, %v785
      %v787 = vpop.f32.mrf.mxu0
      %788 = vmatprep.mubr.f32.mxu0 0.0
      %789 = vmatmul.mubr.f32.gmra.mxu0 %v665
      %v790 = vpop.f32.mrf.mxu0
      %v791 = vadd.f32 %v598, %v790
      %v792 = vpop.f32.mrf.mxu0
      %793 = vmatprep.mubr.f32.mxu0 0.0
      %794 = vmatmul.mubr.f32.gmra.mxu0 %v668
      %v795 = vpop.f32.mrf.mxu0
      %v796 = vadd.f32 %v603, %v795
      %v797 = vpop.f32.mrf.mxu0
      %798 = vmatprep.mubr.f32.mxu0 0.0
      %799 = vmatmul.mubr.f32.gmra.mxu0 %v671
      %v800 = vpop.f32.mrf.mxu0
      %v801 = vadd.f32 %v608, %v800
      %v802 = vpop.f32.mrf.mxu0
      %803 = vmatprep.mubr.f32.mxu0 0.0
      %804 = vmatmul.mubr.f32.gmra.mxu0 %v674
      %v805 = vpop.f32.mrf.mxu0
      %v806 = vadd.f32 %v613, %v805
      %v807 = vpop.f32.mrf.mxu0
      %808 = vmatprep.mubr.f32.mxu0 0.0
      %809 = vmatmul.mubr.f32.gmra.mxu0 %v677
      %v810 = vpop.f32.mrf.mxu0
      %v811 = vadd.f32 %v618, %v810
      %v812 = vpop.f32.mrf.mxu0
      %813 = vmatprep.mubr.f32.mxu0 0.0
      %814 = vmatmul.mubr.f32.gmra.mxu0 %v680
      %v815 = vpop.f32.mrf.mxu0
      %v816 = vadd.f32 %v623, %v815
      %v817 = vpop.f32.mrf.mxu0
      %818 = vmatprep.mubr.f32.mxu0 0.0
      %819 = vmatmul.mubr.f32.gmra.mxu0 %v683
      %v820 = vpop.f32.mrf.mxu0
      %v821 = vadd.f32 %v628, %v820
      %v822 = vpop.f32.mrf.mxu0
      %823 = vmatprep.mubr.f32.mxu0 0.0
      %824 = vmatmul.mubr.f32.gmra.mxu0 %v686
      %v825 = vpop.f32.mrf.mxu0
      %v826 = vadd.f32 %v633, %v825
      %v827 = vpop.f32.mrf.mxu0
      %828 = vmatprep.mubr.f32.mxu0 0.0
      %829 = vmatmul.mubr.f32.gmra.mxu0 %v689
      %v830 = vpop.f32.mrf.mxu0
      %v831 = vadd.f32 %v638, %v830
      %v832 = vpop.f32.mrf.mxu0
      %833 = vmatprep.mubr.f32.mxu0 0.0
      %834 = vmatmul.mubr.f32.gmra.mxu0 %v692
      %v835 = vpop.f32.mrf.mxu0
      %v836 = vadd.f32 %v643, %v835
      %v837 = vpop.f32.mrf.mxu0
      %838 = vdwg.mxu0
      %v839 = vld [vmem:[#allocation2 + $0x2] sm:$0xff]
      %v840 = vld [vmem:[#allocation2 + $0xa] sm:$0xff]
      %v841 = vld [vmem:[#allocation2 + $0x1a] sm:$0xff]
      %v842 = vld [vmem:[#allocation2 + $0x22] sm:$0xff]
      %v843 = vld [vmem:[#allocation2 + $0x32] sm:$0xff]
      %v844 = vld [vmem:[#allocation2 + $0x3a] sm:$0xff]
      %v845 = vld [vmem:[#allocation2 + $0x4a] sm:$0xff]
      %v846 = vld [vmem:[#allocation2 + $0x52] sm:$0xff]
      %v847 = vld [vmem:[#allocation2 + $0x62] sm:$0xff]
      %v848 = vld [vmem:[#allocation2 + $0x6a] sm:$0xff]
      %v849 = vld [vmem:[#allocation2 + $0x7a] sm:$0xff]
      %v850 = vld [vmem:[#allocation2 + $0x82] sm:$0xff]
      %v851 = vld [vmem:[#allocation2 + $0x92] sm:$0xff]
      %v852 = vld [vmem:[#allocation2 + $0x9a] sm:$0xff]
      %v853 = vld [vmem:[#allocation2 + $0xaa] sm:$0xff]
      %v854 = vld [vmem:[#allocation2 + $0xb2] sm:$0xff]
      %s855 = scalar_lea.vmem %s1, 16
      %v856 = vld [vmem:[%s855] sm:$0xff]
      %v858 = vsel %vm277, %v839, 0
      %v861 = vsel %vm277, %v840, 0
      %v864 = vsel %vm277, %v841, 0
      %v867 = vsel %vm277, %v842, 0
      %v870 = vsel %vm277, %v843, 0
      %v873 = vsel %vm277, %v844, 0
      %v876 = vsel %vm277, %v845, 0
      %v879 = vsel %vm277, %v846, 0
      %v882 = vsel %vm277, %v847, 0
      %v885 = vsel %vm277, %v848, 0
      %v888 = vsel %vm277, %v849, 0
      %v891 = vsel %vm277, %v850, 0
      %v894 = vsel %vm277, %v851, 0
      %v897 = vsel %vm277, %v852, 0
      %v900 = vsel %vm277, %v853, 0
      %v903 = vsel %vm277, %v854, 0
      %905 = vmatprep.subr.mxu0 0.0
      %906 = vmatpush1.msra.mxu0 0.0
      %907 = vmatprep.subr.mxu0 0.0
      %908 = vmatpush1.msra.mxu0 0.0
      %909 = vmatprep.subr.mxu0 0.0
      %910 = vmatpush1.msra.mxu0 0.0
      %911 = vmatprep.subr.mxu0 0.0
      %912 = vmatpush1.msra.mxu0 0.0
      %913 = vmatprep.subr.mxu0 0.0
      %914 = vmatpush1.msra.mxu0 0.0
      %915 = vmatprep.subr.mxu0 0.0
      %916 = vmatpush1.msra.mxu0 0.0
      %917 = vmatprep.subr.mxu0 0.0
      %918 = vmatpush1.msra.mxu0 0.0
      %919 = vmatprep.subr.mxu0 0.0
      %920 = vmatpush1.msra.mxu0 0.0
      %921 = vmatprep.subr.mxu0 0.0
      %922 = vmatpush1.msra.mxu0 0.0
      %923 = vmatprep.subr.mxu0 0.0
      %924 = vmatpush1.msra.mxu0 0.0
      %925 = vmatprep.subr.mxu0 0.0
      %926 = vmatpush1.msra.mxu0 0.0
      %927 = vmatprep.subr.mxu0 0.0
      %928 = vmatpush1.msra.mxu0 0.0
      %929 = vmatprep.subr.mxu0 0.0
      %930 = vmatpush1.msra.mxu0 0.0
      %931 = vmatprep.subr.mxu0 0.0
      %932 = vmatpush1.msra.mxu0 0.0
      %933 = vmatprep.subr.mxu0 0.0
      %934 = vmatpush1.msra.mxu0 0.0
      %935 = vmatprep.subr.mxu0 0.0
      %936 = vmatpush1.msra.mxu0 %v856
      %937 = vmatprep.subr.mxu0 0.0
      %938 = vmatpush2.msra.mxu0 0.0
      %939 = vmatprep.subr.mxu0 0.0
      %940 = vmatpush2.msra.mxu0 0.0
      %941 = vmatprep.subr.mxu0 0.0
      %942 = vmatpush2.msra.mxu0 0.0
      %943 = vmatprep.subr.mxu0 0.0
      %944 = vmatpush2.msra.mxu0 0.0
      %945 = vmatprep.subr.mxu0 0.0
      %946 = vmatpush2.msra.mxu0 0.0
      %947 = vmatprep.subr.mxu0 0.0
      %948 = vmatpush2.msra.mxu0 0.0
      %949 = vmatprep.subr.mxu0 0.0
      %950 = vmatpush2.msra.mxu0 0.0
      %951 = vmatprep.subr.mxu0 0.0
      %952 = vmatpush2.msra.mxu0 0.0
      %953 = vmatprep.subr.mxu0 0.0
      %954 = vmatpush2.msra.mxu0 0.0
      %955 = vmatprep.subr.mxu0 0.0
      %956 = vmatpush2.msra.mxu0 0.0
      %957 = vmatprep.subr.mxu0 0.0
      %958 = vmatpush2.msra.mxu0 0.0
      %959 = vmatprep.subr.mxu0 0.0
      %960 = vmatpush2.msra.mxu0 0.0
      %961 = vmatprep.subr.mxu0 0.0
      %962 = vmatpush2.msra.mxu0 0.0
      %963 = vmatprep.subr.mxu0 0.0
      %964 = vmatpush2.msra.mxu0 0.0
      %965 = vmatprep.subr.mxu0 0.0
      %966 = vmatpush2.msra.mxu0 0.0
      %967 = vmatprep.subr.mxu0 0.0
      %968 = vmatpush2.msra.mxu0 0.0
      %969 = vmatprep.mubr.f32.mxu0 0.0
      %970 = vmatmul.mubr.f32.gmra.mxu0 %v858
      %v971 = vpop.f32.mrf.mxu0
      %v972 = vadd.f32 0.0, %v971
      %v973 = vpop.f32.mrf.mxu0
      %974 = vmatprep.mubr.f32.mxu0 0.0
      %975 = vmatmul.mubr.f32.gmra.mxu0 %v861
      %v976 = vpop.f32.mrf.mxu0
      %v977 = vadd.f32 0.0, %v976
      %v978 = vpop.f32.mrf.mxu0
      %979 = vmatprep.mubr.f32.mxu0 0.0
      %980 = vmatmul.mubr.f32.gmra.mxu0 %v864
      %v981 = vpop.f32.mrf.mxu0
      %v982 = vadd.f32 0.0, %v981
      %v983 = vpop.f32.mrf.mxu0
      %984 = vmatprep.mubr.f32.mxu0 0.0
      %985 = vmatmul.mubr.f32.gmra.mxu0 %v867
      %v986 = vpop.f32.mrf.mxu0
      %v987 = vadd.f32 0.0, %v986
      %v988 = vpop.f32.mrf.mxu0
      %989 = vmatprep.mubr.f32.mxu0 0.0
      %990 = vmatmul.mubr.f32.gmra.mxu0 %v870
      %v991 = vpop.f32.mrf.mxu0
      %v992 = vadd.f32 0.0, %v991
      %v993 = vpop.f32.mrf.mxu0
      %994 = vmatprep.mubr.f32.mxu0 0.0
      %995 = vmatmul.mubr.f32.gmra.mxu0 %v873
      %v996 = vpop.f32.mrf.mxu0
      %v997 = vadd.f32 0.0, %v996
      %v998 = vpop.f32.mrf.mxu0
      %999 = vmatprep.mubr.f32.mxu0 0.0
      %1000 = vmatmul.mubr.f32.gmra.mxu0 %v876
      %v1001 = vpop.f32.mrf.mxu0
      %v1002 = vadd.f32 0.0, %v1001
      %v1003 = vpop.f32.mrf.mxu0
      %1004 = vmatprep.mubr.f32.mxu0 0.0
      %1005 = vmatmul.mubr.f32.gmra.mxu0 %v879
      %v1006 = vpop.f32.mrf.mxu0
      %v1007 = vadd.f32 0.0, %v1006
      %v1008 = vpop.f32.mrf.mxu0
      %1009 = vmatprep.mubr.f32.mxu0 0.0
      %1010 = vmatmul.mubr.f32.gmra.mxu0 %v882
      %v1011 = vpop.f32.mrf.mxu0
      %v1012 = vadd.f32 0.0, %v1011
      %v1013 = vpop.f32.mrf.mxu0
      %1014 = vmatprep.mubr.f32.mxu0 0.0
      %1015 = vmatmul.mubr.f32.gmra.mxu0 %v885
      %v1016 = vpop.f32.mrf.mxu0
      %v1017 = vadd.f32 0.0, %v1016
      %v1018 = vpop.f32.mrf.mxu0
      %1019 = vmatprep.mubr.f32.mxu0 0.0
      %1020 = vmatmul.mubr.f32.gmra.mxu0 %v888
      %v1021 = vpop.f32.mrf.mxu0
      %v1022 = vadd.f32 0.0, %v1021
      %v1023 = vpop.f32.mrf.mxu0
      %1024 = vmatprep.mubr.f32.mxu0 0.0
      %1025 = vmatmul.mubr.f32.gmra.mxu0 %v891
      %v1026 = vpop.f32.mrf.mxu0
      %v1027 = vadd.f32 0.0, %v1026
      %v1028 = vpop.f32.mrf.mxu0
      %1029 = vmatprep.mubr.f32.mxu0 0.0
      %1030 = vmatmul.mubr.f32.gmra.mxu0 %v894
      %v1031 = vpop.f32.mrf.mxu0
      %v1032 = vadd.f32 0.0, %v1031
      %v1033 = vpop.f32.mrf.mxu0
      %1034 = vmatprep.mubr.f32.mxu0 0.0
      %1035 = vmatmul.mubr.f32.gmra.mxu0 %v897
      %v1036 = vpop.f32.mrf.mxu0
      %v1037 = vadd.f32 0.0, %v1036
      %v1038 = vpop.f32.mrf.mxu0
      %1039 = vmatprep.mubr.f32.mxu0 0.0
      %1040 = vmatmul.mubr.f32.gmra.mxu0 %v900
      %v1041 = vpop.f32.mrf.mxu0
      %v1042 = vadd.f32 0.0, %v1041
      %v1043 = vpop.f32.mrf.mxu0
      %1044 = vmatprep.mubr.f32.mxu0 0.0
      %1045 = vmatmul.mubr.f32.gmra.mxu0 %v903
      %v1046 = vpop.f32.mrf.mxu0
      %v1047 = vadd.f32 0.0, %v1046
      %v1048 = vpop.f32.mrf.mxu0
      %1049 = vdwg.mxu0
      %v1050 = vadd.f32 %v761, %v972
      %v1051 = vadd.f32 %v766, %v977
      %v1052 = vadd.f32 %v771, %v982
      %v1053 = vadd.f32 %v776, %v987
      %v1054 = vadd.f32 %v781, %v992
      %v1055 = vadd.f32 %v786, %v997
      %v1056 = vadd.f32 %v791, %v1002
      %v1057 = vadd.f32 %v796, %v1007
      %v1058 = vadd.f32 %v801, %v1012
      %v1059 = vadd.f32 %v806, %v1017
      %v1060 = vadd.f32 %v811, %v1022
      %v1061 = vadd.f32 %v816, %v1027
      %v1062 = vadd.f32 %v821, %v1032
      %v1063 = vadd.f32 %v826, %v1037
      %v1064 = vadd.f32 %v831, %v1042
      %v1065 = vadd.f32 %v836, %v1047
      %v1066 = vld [vmem:[%s385] sm:$0xff]
      %v1067 = vld [vmem:[%s385 + $0x8] sm:$0xff]
      %v1068 = vld [vmem:[%s385 + $0x18] sm:$0xff]
      %v1069 = vld [vmem:[%s385 + $0x20] sm:$0xff]
      %v1070 = vld [vmem:[%s385 + $0x30] sm:$0xff]
      %v1071 = vld [vmem:[%s385 + $0x38] sm:$0xff]
      %v1072 = vld [vmem:[%s385 + $0x48] sm:$0xff]
      %v1073 = vld [vmem:[%s385 + $0x50] sm:$0xff]
      %v1074 = vld [vmem:[%s385 + $0x60] sm:$0xff]
      %v1075 = vld [vmem:[%s385 + $0x68] sm:$0xff]
      %v1076 = vld [vmem:[%s385 + $0x78] sm:$0xff]
      %v1077 = vld [vmem:[%s385 + $0x80] sm:$0xff]
      %v1078 = vld [vmem:[%s385 + $0x90] sm:$0xff]
      %v1079 = vld [vmem:[%s385 + $0x98] sm:$0xff]
      %v1080 = vld [vmem:[%s385 + $0xa8] sm:$0xff]
      %v1081 = vld [vmem:[%s385 + $0xb0] sm:$0xff]
      %s1082 = scalar_lea.vmem %s1, 24
      %v1083 = vld [vmem:[%s1082] sm:$0xff]
      %v1085 = vsel %vm277, %v1066, 0
      %v1088 = vsel %vm277, %v1067, 0
      %v1091 = vsel %vm277, %v1068, 0
      %v1094 = vsel %vm277, %v1069, 0
      %v1097 = vsel %vm277, %v1070, 0
      %v1100 = vsel %vm277, %v1071, 0
      %v1103 = vsel %vm277, %v1072, 0
      %v1106 = vsel %vm277, %v1073, 0
      %v1109 = vsel %vm277, %v1074, 0
      %v1112 = vsel %vm277, %v1075, 0
      %v1115 = vsel %vm277, %v1076, 0
      %v1118 = vsel %vm277, %v1077, 0
      %v1121 = vsel %vm277, %v1078, 0
      %v1124 = vsel %vm277, %v1079, 0
      %v1127 = vsel %vm277, %v1080, 0
      %v1130 = vsel %vm277, %v1081, 0
      %1132 = vmatprep.subr.mxu0 0.0
      %1133 = vmatpush1.msra.mxu0 0.0
      %1134 = vmatprep.subr.mxu0 0.0
      %1135 = vmatpush1.msra.mxu0 0.0
      %1136 = vmatprep.subr.mxu0 0.0
      %1137 = vmatpush1.msra.mxu0 0.0
      %1138 = vmatprep.subr.mxu0 0.0
      %1139 = vmatpush1.msra.mxu0 0.0
      %1140 = vmatprep.subr.mxu0 0.0
      %1141 = vmatpush1.msra.mxu0 0.0
      %1142 = vmatprep.subr.mxu0 0.0
      %1143 = vmatpush1.msra.mxu0 0.0
      %1144 = vmatprep.subr.mxu0 0.0
      %1145 = vmatpush1.msra.mxu0 0.0
      %1146 = vmatprep.subr.mxu0 0.0
      %1147 = vmatpush1.msra.mxu0 0.0
      %1148 = vmatprep.subr.mxu0 0.0
      %1149 = vmatpush1.msra.mxu0 0.0
      %1150 = vmatprep.subr.mxu0 0.0
      %1151 = vmatpush1.msra.mxu0 0.0
      %1152 = vmatprep.subr.mxu0 0.0
      %1153 = vmatpush1.msra.mxu0 0.0
      %1154 = vmatprep.subr.mxu0 0.0
      %1155 = vmatpush1.msra.mxu0 0.0
      %1156 = vmatprep.subr.mxu0 0.0
      %1157 = vmatpush1.msra.mxu0 0.0
      %1158 = vmatprep.subr.mxu0 0.0
      %1159 = vmatpush1.msra.mxu0 0.0
      %1160 = vmatprep.subr.mxu0 0.0
      %1161 = vmatpush1.msra.mxu0 0.0
      %1162 = vmatprep.subr.mxu0 0.0
      %1163 = vmatpush1.msra.mxu0 %v1083
      %1164 = vmatprep.subr.mxu0 0.0
      %1165 = vmatpush2.msra.mxu0 0.0
      %1166 = vmatprep.subr.mxu0 0.0
      %1167 = vmatpush2.msra.mxu0 0.0
      %1168 = vmatprep.subr.mxu0 0.0
      %1169 = vmatpush2.msra.mxu0 0.0
      %1170 = vmatprep.subr.mxu0 0.0
      %1171 = vmatpush2.msra.mxu0 0.0
      %1172 = vmatprep.subr.mxu0 0.0
      %1173 = vmatpush2.msra.mxu0 0.0
      %1174 = vmatprep.subr.mxu0 0.0
      %1175 = vmatpush2.msra.mxu0 0.0
      %1176 = vmatprep.subr.mxu0 0.0
      %1177 = vmatpush2.msra.mxu0 0.0
      %1178 = vmatprep.subr.mxu0 0.0
      %1179 = vmatpush2.msra.mxu0 0.0
      %1180 = vmatprep.subr.mxu0 0.0
      %1181 = vmatpush2.msra.mxu0 0.0
      %1182 = vmatprep.subr.mxu0 0.0
      %1183 = vmatpush2.msra.mxu0 0.0
      %1184 = vmatprep.subr.mxu0 0.0
      %1185 = vmatpush2.msra.mxu0 0.0
      %1186 = vmatprep.subr.mxu0 0.0
      %1187 = vmatpush2.msra.mxu0 0.0
      %1188 = vmatprep.subr.mxu0 0.0
      %1189 = vmatpush2.msra.mxu0 0.0
      %1190 = vmatprep.subr.mxu0 0.0
      %1191 = vmatpush2.msra.mxu0 0.0
      %1192 = vmatprep.subr.mxu0 0.0
      %1193 = vmatpush2.msra.mxu0 0.0
      %1194 = vmatprep.subr.mxu0 0.0
      %1195 = vmatpush2.msra.mxu0 0.0
      %1196 = vmatprep.mubr.f32.mxu0 0.0
      %1197 = vmatmul.mubr.f32.gmra.mxu0 %v1085
      %v1198 = vpop.f32.mrf.mxu0
      %v1199 = vadd.f32 0.0, %v1198
      %v1200 = vpop.f32.mrf.mxu0
      %1201 = vmatprep.mubr.f32.mxu0 0.0
      %1202 = vmatmul.mubr.f32.gmra.mxu0 %v1088
      %v1203 = vpop.f32.mrf.mxu0
      %v1204 = vadd.f32 0.0, %v1203
      %v1205 = vpop.f32.mrf.mxu0
      %1206 = vmatprep.mubr.f32.mxu0 0.0
      %1207 = vmatmul.mubr.f32.gmra.mxu0 %v1091
      %v1208 = vpop.f32.mrf.mxu0
      %v1209 = vadd.f32 0.0, %v1208
      %v1210 = vpop.f32.mrf.mxu0
      %1211 = vmatprep.mubr.f32.mxu0 0.0
      %1212 = vmatmul.mubr.f32.gmra.mxu0 %v1094
      %v1213 = vpop.f32.mrf.mxu0
      %v1214 = vadd.f32 0.0, %v1213
      %v1215 = vpop.f32.mrf.mxu0
      %1216 = vmatprep.mubr.f32.mxu0 0.0
      %1217 = vmatmul.mubr.f32.gmra.mxu0 %v1097
      %v1218 = vpop.f32.mrf.mxu0
      %v1219 = vadd.f32 0.0, %v1218
      %v1220 = vpop.f32.mrf.mxu0
      %1221 = vmatprep.mubr.f32.mxu0 0.0
      %1222 = vmatmul.mubr.f32.gmra.mxu0 %v1100
      %v1223 = vpop.f32.mrf.mxu0
      %v1224 = vadd.f32 0.0, %v1223
      %v1225 = vpop.f32.mrf.mxu0
      %1226 = vmatprep.mubr.f32.mxu0 0.0
      %1227 = vmatmul.mubr.f32.gmra.mxu0 %v1103
      %v1228 = vpop.f32.mrf.mxu0
      %v1229 = vadd.f32 0.0, %v1228
      %v1230 = vpop.f32.mrf.mxu0
      %1231 = vmatprep.mubr.f32.mxu0 0.0
      %1232 = vmatmul.mubr.f32.gmra.mxu0 %v1106
      %v1233 = vpop.f32.mrf.mxu0
      %v1234 = vadd.f32 0.0, %v1233
      %v1235 = vpop.f32.mrf.mxu0
      %1236 = vmatprep.mubr.f32.mxu0 0.0
      %1237 = vmatmul.mubr.f32.gmra.mxu0 %v1109
      %v1238 = vpop.f32.mrf.mxu0
      %v1239 = vadd.f32 0.0, %v1238
      %v1240 = vpop.f32.mrf.mxu0
      %1241 = vmatprep.mubr.f32.mxu0 0.0
      %1242 = vmatmul.mubr.f32.gmra.mxu0 %v1112
      %v1243 = vpop.f32.mrf.mxu0
      %v1244 = vadd.f32 0.0, %v1243
      %v1245 = vpop.f32.mrf.mxu0
      %1246 = vmatprep.mubr.f32.mxu0 0.0
      %1247 = vmatmul.mubr.f32.gmra.mxu0 %v1115
      %v1248 = vpop.f32.mrf.mxu0
      %v1249 = vadd.f32 0.0, %v1248
      %v1250 = vpop.f32.mrf.mxu0
      %1251 = vmatprep.mubr.f32.mxu0 0.0
      %1252 = vmatmul.mubr.f32.gmra.mxu0 %v1118
      %v1253 = vpop.f32.mrf.mxu0
      %v1254 = vadd.f32 0.0, %v1253
      %v1255 = vpop.f32.mrf.mxu0
      %1256 = vmatprep.mubr.f32.mxu0 0.0
      %1257 = vmatmul.mubr.f32.gmra.mxu0 %v1121
      %v1258 = vpop.f32.mrf.mxu0
      %v1259 = vadd.f32 0.0, %v1258
      %v1260 = vpop.f32.mrf.mxu0
      %1261 = vmatprep.mubr.f32.mxu0 0.0
      %1262 = vmatmul.mubr.f32.gmra.mxu0 %v1124
      %v1263 = vpop.f32.mrf.mxu0
      %v1264 = vadd.f32 0.0, %v1263
      %v1265 = vpop.f32.mrf.mxu0
      %1266 = vmatprep.mubr.f32.mxu0 0.0
      %1267 = vmatmul.mubr.f32.gmra.mxu0 %v1127
      %v1268 = vpop.f32.mrf.mxu0
      %v1269 = vadd.f32 0.0, %v1268
      %v1270 = vpop.f32.mrf.mxu0
      %1271 = vmatprep.mubr.f32.mxu0 0.0
      %1272 = vmatmul.mubr.f32.gmra.mxu0 %v1130
      %v1273 = vpop.f32.mrf.mxu0
      %v1274 = vadd.f32 0.0, %v1273
      %v1275 = vpop.f32.mrf.mxu0
      %1276 = vdwg.mxu0
      %v1277 = vadd.f32 %v1050, %v1199
      %v1278 = vadd.f32 %v1051, %v1204
      %v1279 = vadd.f32 %v1052, %v1209
      %v1280 = vadd.f32 %v1053, %v1214
      %v1281 = vadd.f32 %v1054, %v1219
      %v1282 = vadd.f32 %v1055, %v1224
      %v1283 = vadd.f32 %v1056, %v1229
      %v1284 = vadd.f32 %v1057, %v1234
      %v1285 = vadd.f32 %v1058, %v1239
      %v1286 = vadd.f32 %v1059, %v1244
      %v1287 = vadd.f32 %v1060, %v1249
      %v1288 = vadd.f32 %v1061, %v1254
      %v1289 = vadd.f32 %v1062, %v1259
      %v1290 = vadd.f32 %v1063, %v1264
      %v1291 = vadd.f32 %v1064, %v1269
      %v1292 = vadd.f32 %v1065, %v1274
      %v1293 = vld [vmem:[%s385 + $0x1] sm:$0xff]
      %v1294 = vld [vmem:[%s385 + $0x9] sm:$0xff]
      %v1295 = vld [vmem:[%s385 + $0x19] sm:$0xff]
      %v1296 = vld [vmem:[%s385 + $0x21] sm:$0xff]
      %v1297 = vld [vmem:[%s385 + $0x31] sm:$0xff]
      %v1298 = vld [vmem:[%s385 + $0x39] sm:$0xff]
      %v1299 = vld [vmem:[%s385 + $0x49] sm:$0xff]
      %v1300 = vld [vmem:[%s385 + $0x51] sm:$0xff]
      %v1301 = vld [vmem:[%s385 + $0x61] sm:$0xff]
      %v1302 = vld [vmem:[%s385 + $0x69] sm:$0xff]
      %v1303 = vld [vmem:[%s385 + $0x79] sm:$0xff]
      %v1304 = vld [vmem:[%s385 + $0x81] sm:$0xff]
      %v1305 = vld [vmem:[%s385 + $0x91] sm:$0xff]
      %v1306 = vld [vmem:[%s385 + $0x99] sm:$0xff]
      %v1307 = vld [vmem:[%s385 + $0xa9] sm:$0xff]
      %v1308 = vld [vmem:[%s385 + $0xb1] sm:$0xff]
      %s1309 = scalar_lea.vmem %s1, 32
      %v1310 = vld [vmem:[%s1309] sm:$0xff]
      %v1312 = vsel %vm277, %v1293, 0
      %v1315 = vsel %vm277, %v1294, 0
      %v1318 = vsel %vm277, %v1295, 0
      %v1321 = vsel %vm277, %v1296, 0
      %v1324 = vsel %vm277, %v1297, 0
      %v1327 = vsel %vm277, %v1298, 0
      %v1330 = vsel %vm277, %v1299, 0
      %v1333 = vsel %vm277, %v1300, 0
      %v1336 = vsel %vm277, %v1301, 0
      %v1339 = vsel %vm277, %v1302, 0
      %v1342 = vsel %vm277, %v1303, 0
      %v1345 = vsel %vm277, %v1304, 0
      %v1348 = vsel %vm277, %v1305, 0
      %v1351 = vsel %vm277, %v1306, 0
      %v1354 = vsel %vm277, %v1307, 0
      %v1357 = vsel %vm277, %v1308, 0
      %1359 = vmatprep.subr.mxu0 0.0
      %1360 = vmatpush1.msra.mxu0 0.0
      %1361 = vmatprep.subr.mxu0 0.0
      %1362 = vmatpush1.msra.mxu0 0.0
      %1363 = vmatprep.subr.mxu0 0.0
      %1364 = vmatpush1.msra.mxu0 0.0
      %1365 = vmatprep.subr.mxu0 0.0
      %1366 = vmatpush1.msra.mxu0 0.0
      %1367 = vmatprep.subr.mxu0 0.0
      %1368 = vmatpush1.msra.mxu0 0.0
      %1369 = vmatprep.subr.mxu0 0.0
      %1370 = vmatpush1.msra.mxu0 0.0
      %1371 = vmatprep.subr.mxu0 0.0
      %1372 = vmatpush1.msra.mxu0 0.0
      %1373 = vmatprep.subr.mxu0 0.0
      %1374 = vmatpush1.msra.mxu0 0.0
      %1375 = vmatprep.subr.mxu0 0.0
      %1376 = vmatpush1.msra.mxu0 0.0
      %1377 = vmatprep.subr.mxu0 0.0
      %1378 = vmatpush1.msra.mxu0 0.0
      %1379 = vmatprep.subr.mxu0 0.0
      %1380 = vmatpush1.msra.mxu0 0.0
      %1381 = vmatprep.subr.mxu0 0.0
      %1382 = vmatpush1.msra.mxu0 0.0
      %1383 = vmatprep.subr.mxu0 0.0
      %1384 = vmatpush1.msra.mxu0 0.0
      %1385 = vmatprep.subr.mxu0 0.0
      %1386 = vmatpush1.msra.mxu0 0.0
      %1387 = vmatprep.subr.mxu0 0.0
      %1388 = vmatpush1.msra.mxu0 0.0
      %1389 = vmatprep.subr.mxu0 0.0
      %1390 = vmatpush1.msra.mxu0 %v1310
      %1391 = vmatprep.subr.mxu0 0.0
      %1392 = vmatpush2.msra.mxu0 0.0
      %1393 = vmatprep.subr.mxu0 0.0
      %1394 = vmatpush2.msra.mxu0 0.0
      %1395 = vmatprep.subr.mxu0 0.0
      %1396 = vmatpush2.msra.mxu0 0.0
      %1397 = vmatprep.subr.mxu0 0.0
      %1398 = vmatpush2.msra.mxu0 0.0
      %1399 = vmatprep.subr.mxu0 0.0
      %1400 = vmatpush2.msra.mxu0 0.0
      %1401 = vmatprep.subr.mxu0 0.0
      %1402 = vmatpush2.msra.mxu0 0.0
      %1403 = vmatprep.subr.mxu0 0.0
      %1404 = vmatpush2.msra.mxu0 0.0
      %1405 = vmatprep.subr.mxu0 0.0
      %1406 = vmatpush2.msra.mxu0 0.0
      %1407 = vmatprep.subr.mxu0 0.0
      %1408 = vmatpush2.msra.mxu0 0.0
      %1409 = vmatprep.subr.mxu0 0.0
      %1410 = vmatpush2.msra.mxu0 0.0
      %1411 = vmatprep.subr.mxu0 0.0
      %1412 = vmatpush2.msra.mxu0 0.0
      %1413 = vmatprep.subr.mxu0 0.0
      %1414 = vmatpush2.msra.mxu0 0.0
      %1415 = vmatprep.subr.mxu0 0.0
      %1416 = vmatpush2.msra.mxu0 0.0
      %1417 = vmatprep.subr.mxu0 0.0
      %1418 = vmatpush2.msra.mxu0 0.0
      %1419 = vmatprep.subr.mxu0 0.0
      %1420 = vmatpush2.msra.mxu0 0.0
      %1421 = vmatprep.subr.mxu0 0.0
      %1422 = vmatpush2.msra.mxu0 0.0
      %1423 = vmatprep.mubr.f32.mxu0 0.0
      %1424 = vmatmul.mubr.f32.gmra.mxu0 %v1312
      %v1425 = vpop.f32.mrf.mxu0
      %v1426 = vadd.f32 0.0, %v1425
      %v1427 = vpop.f32.mrf.mxu0
      %1428 = vmatprep.mubr.f32.mxu0 0.0
      %1429 = vmatmul.mubr.f32.gmra.mxu0 %v1315
      %v1430 = vpop.f32.mrf.mxu0
      %v1431 = vadd.f32 0.0, %v1430
      %v1432 = vpop.f32.mrf.mxu0
      %1433 = vmatprep.mubr.f32.mxu0 0.0
      %1434 = vmatmul.mubr.f32.gmra.mxu0 %v1318
      %v1435 = vpop.f32.mrf.mxu0
      %v1436 = vadd.f32 0.0, %v1435
      %v1437 = vpop.f32.mrf.mxu0
      %1438 = vmatprep.mubr.f32.mxu0 0.0
      %1439 = vmatmul.mubr.f32.gmra.mxu0 %v1321
      %v1440 = vpop.f32.mrf.mxu0
      %v1441 = vadd.f32 0.0, %v1440
      %v1442 = vpop.f32.mrf.mxu0
      %1443 = vmatprep.mubr.f32.mxu0 0.0
      %1444 = vmatmul.mubr.f32.gmra.mxu0 %v1324
      %v1445 = vpop.f32.mrf.mxu0
      %v1446 = vadd.f32 0.0, %v1445
      %v1447 = vpop.f32.mrf.mxu0
      %1448 = vmatprep.mubr.f32.mxu0 0.0
      %1449 = vmatmul.mubr.f32.gmra.mxu0 %v1327
      %v1450 = vpop.f32.mrf.mxu0
      %v1451 = vadd.f32 0.0, %v1450
      %v1452 = vpop.f32.mrf.mxu0
      %1453 = vmatprep.mubr.f32.mxu0 0.0
      %1454 = vmatmul.mubr.f32.gmra.mxu0 %v1330
      %v1455 = vpop.f32.mrf.mxu0
      %v1456 = vadd.f32 0.0, %v1455
      %v1457 = vpop.f32.mrf.mxu0
      %1458 = vmatprep.mubr.f32.mxu0 0.0
      %1459 = vmatmul.mubr.f32.gmra.mxu0 %v1333
      %v1460 = vpop.f32.mrf.mxu0
      %v1461 = vadd.f32 0.0, %v1460
      %v1462 = vpop.f32.mrf.mxu0
      %1463 = vmatprep.mubr.f32.mxu0 0.0
      %1464 = vmatmul.mubr.f32.gmra.mxu0 %v1336
      %v1465 = vpop.f32.mrf.mxu0
      %v1466 = vadd.f32 0.0, %v1465
      %v1467 = vpop.f32.mrf.mxu0
      %1468 = vmatprep.mubr.f32.mxu0 0.0
      %1469 = vmatmul.mubr.f32.gmra.mxu0 %v1339
      %v1470 = vpop.f32.mrf.mxu0
      %v1471 = vadd.f32 0.0, %v1470
      %v1472 = vpop.f32.mrf.mxu0
      %1473 = vmatprep.mubr.f32.mxu0 0.0
      %1474 = vmatmul.mubr.f32.gmra.mxu0 %v1342
      %v1475 = vpop.f32.mrf.mxu0
      %v1476 = vadd.f32 0.0, %v1475
      %v1477 = vpop.f32.mrf.mxu0
      %1478 = vmatprep.mubr.f32.mxu0 0.0
      %1479 = vmatmul.mubr.f32.gmra.mxu0 %v1345
      %v1480 = vpop.f32.mrf.mxu0
      %v1481 = vadd.f32 0.0, %v1480
      %v1482 = vpop.f32.mrf.mxu0
      %1483 = vmatprep.mubr.f32.mxu0 0.0
      %1484 = vmatmul.mubr.f32.gmra.mxu0 %v1348
      %v1485 = vpop.f32.mrf.mxu0
      %v1486 = vadd.f32 0.0, %v1485
      %v1487 = vpop.f32.mrf.mxu0
      %1488 = vmatprep.mubr.f32.mxu0 0.0
      %1489 = vmatmul.mubr.f32.gmra.mxu0 %v1351
      %v1490 = vpop.f32.mrf.mxu0
      %v1491 = vadd.f32 0.0, %v1490
      %v1492 = vpop.f32.mrf.mxu0
      %1493 = vmatprep.mubr.f32.mxu0 0.0
      %1494 = vmatmul.mubr.f32.gmra.mxu0 %v1354
      %v1495 = vpop.f32.mrf.mxu0
      %v1496 = vadd.f32 0.0, %v1495
      %v1497 = vpop.f32.mrf.mxu0
      %1498 = vmatprep.mubr.f32.mxu0 0.0
      %1499 = vmatmul.mubr.f32.gmra.mxu0 %v1357
      %v1500 = vpop.f32.mrf.mxu0
      %v1501 = vadd.f32 0.0, %v1500
      %v1502 = vpop.f32.mrf.mxu0
      %1503 = vdwg.mxu0
      %v1504 = vadd.f32 %v1277, %v1426
      %v1505 = vadd.f32 %v1278, %v1431
      %v1506 = vadd.f32 %v1279, %v1436
      %v1507 = vadd.f32 %v1280, %v1441
      %v1508 = vadd.f32 %v1281, %v1446
      %v1509 = vadd.f32 %v1282, %v1451
      %v1510 = vadd.f32 %v1283, %v1456
      %v1511 = vadd.f32 %v1284, %v1461
      %v1512 = vadd.f32 %v1285, %v1466
      %v1513 = vadd.f32 %v1286, %v1471
      %v1514 = vadd.f32 %v1287, %v1476
      %v1515 = vadd.f32 %v1288, %v1481
      %v1516 = vadd.f32 %v1289, %v1486
      %v1517 = vadd.f32 %v1290, %v1491
      %v1518 = vadd.f32 %v1291, %v1496
      %v1519 = vadd.f32 %v1292, %v1501
      %v1520 = vld [vmem:[%s385 + $0x2] sm:$0xff]
      %v1521 = vld [vmem:[%s385 + $0xa] sm:$0xff]
      %v1522 = vld [vmem:[%s385 + $0x1a] sm:$0xff]
      %v1523 = vld [vmem:[%s385 + $0x22] sm:$0xff]
      %v1524 = vld [vmem:[%s385 + $0x32] sm:$0xff]
      %v1525 = vld [vmem:[%s385 + $0x3a] sm:$0xff]
      %v1526 = vld [vmem:[%s385 + $0x4a] sm:$0xff]
      %v1527 = vld [vmem:[%s385 + $0x52] sm:$0xff]
      %v1528 = vld [vmem:[%s385 + $0x62] sm:$0xff]
      %v1529 = vld [vmem:[%s385 + $0x6a] sm:$0xff]
      %v1530 = vld [vmem:[%s385 + $0x7a] sm:$0xff]
      %v1531 = vld [vmem:[%s385 + $0x82] sm:$0xff]
      %v1532 = vld [vmem:[%s385 + $0x92] sm:$0xff]
      %v1533 = vld [vmem:[%s385 + $0x9a] sm:$0xff]
      %v1534 = vld [vmem:[%s385 + $0xaa] sm:$0xff]
      %v1535 = vld [vmem:[%s385 + $0xb2] sm:$0xff]
      %s1536 = scalar_lea.vmem %s1, 40
      %v1537 = vld [vmem:[%s1536] sm:$0xff]
      %v1539 = vsel %vm277, %v1520, 0
      %v1542 = vsel %vm277, %v1521, 0
      %v1545 = vsel %vm277, %v1522, 0
      %v1548 = vsel %vm277, %v1523, 0
      %v1551 = vsel %vm277, %v1524, 0
      %v1554 = vsel %vm277, %v1525, 0
      %v1557 = vsel %vm277, %v1526, 0
      %v1560 = vsel %vm277, %v1527, 0
      %v1563 = vsel %vm277, %v1528, 0
      %v1566 = vsel %vm277, %v1529, 0
      %v1569 = vsel %vm277, %v1530, 0
      %v1572 = vsel %vm277, %v1531, 0
      %v1575 = vsel %vm277, %v1532, 0
      %v1578 = vsel %vm277, %v1533, 0
      %v1581 = vsel %vm277, %v1534, 0
      %v1584 = vsel %vm277, %v1535, 0
      %1586 = vmatprep.subr.mxu0 0.0
      %1587 = vmatpush1.msra.mxu0 0.0
      %1588 = vmatprep.subr.mxu0 0.0
      %1589 = vmatpush1.msra.mxu0 0.0
      %1590 = vmatprep.subr.mxu0 0.0
      %1591 = vmatpush1.msra.mxu0 0.0
      %1592 = vmatprep.subr.mxu0 0.0
      %1593 = vmatpush1.msra.mxu0 0.0
      %1594 = vmatprep.subr.mxu0 0.0
      %1595 = vmatpush1.msra.mxu0 0.0
      %1596 = vmatprep.subr.mxu0 0.0
      %1597 = vmatpush1.msra.mxu0 0.0
      %1598 = vmatprep.subr.mxu0 0.0
      %1599 = vmatpush1.msra.mxu0 0.0
      %1600 = vmatprep.subr.mxu0 0.0
      %1601 = vmatpush1.msra.mxu0 0.0
      %1602 = vmatprep.subr.mxu0 0.0
      %1603 = vmatpush1.msra.mxu0 0.0
      %1604 = vmatprep.subr.mxu0 0.0
      %1605 = vmatpush1.msra.mxu0 0.0
      %1606 = vmatprep.subr.mxu0 0.0
      %1607 = vmatpush1.msra.mxu0 0.0
      %1608 = vmatprep.subr.mxu0 0.0
      %1609 = vmatpush1.msra.mxu0 0.0
      %1610 = vmatprep.subr.mxu0 0.0
      %1611 = vmatpush1.msra.mxu0 0.0
      %1612 = vmatprep.subr.mxu0 0.0
      %1613 = vmatpush1.msra.mxu0 0.0
      %1614 = vmatprep.subr.mxu0 0.0
      %1615 = vmatpush1.msra.mxu0 0.0
      %1616 = vmatprep.subr.mxu0 0.0
      %1617 = vmatpush1.msra.mxu0 %v1537
      %1618 = vmatprep.subr.mxu0 0.0
      %1619 = vmatpush2.msra.mxu0 0.0
      %1620 = vmatprep.subr.mxu0 0.0
      %1621 = vmatpush2.msra.mxu0 0.0
      %1622 = vmatprep.subr.mxu0 0.0
      %1623 = vmatpush2.msra.mxu0 0.0
      %1624 = vmatprep.subr.mxu0 0.0
      %1625 = vmatpush2.msra.mxu0 0.0
      %1626 = vmatprep.subr.mxu0 0.0
      %1627 = vmatpush2.msra.mxu0 0.0
      %1628 = vmatprep.subr.mxu0 0.0
      %1629 = vmatpush2.msra.mxu0 0.0
      %1630 = vmatprep.subr.mxu0 0.0
      %1631 = vmatpush2.msra.mxu0 0.0
      %1632 = vmatprep.subr.mxu0 0.0
      %1633 = vmatpush2.msra.mxu0 0.0
      %1634 = vmatprep.subr.mxu0 0.0
      %1635 = vmatpush2.msra.mxu0 0.0
      %1636 = vmatprep.subr.mxu0 0.0
      %1637 = vmatpush2.msra.mxu0 0.0
      %1638 = vmatprep.subr.mxu0 0.0
      %1639 = vmatpush2.msra.mxu0 0.0
      %1640 = vmatprep.subr.mxu0 0.0
      %1641 = vmatpush2.msra.mxu0 0.0
      %1642 = vmatprep.subr.mxu0 0.0
      %1643 = vmatpush2.msra.mxu0 0.0
      %1644 = vmatprep.subr.mxu0 0.0
      %1645 = vmatpush2.msra.mxu0 0.0
      %1646 = vmatprep.subr.mxu0 0.0
      %1647 = vmatpush2.msra.mxu0 0.0
      %1648 = vmatprep.subr.mxu0 0.0
      %1649 = vmatpush2.msra.mxu0 0.0
      %1650 = vmatprep.mubr.f32.mxu0 0.0
      %1651 = vmatmul.mubr.f32.gmra.mxu0 %v1539
      %v1652 = vpop.f32.mrf.mxu0
      %v1653 = vadd.f32 0.0, %v1652
      %v1654 = vpop.f32.mrf.mxu0
      %1655 = vmatprep.mubr.f32.mxu0 0.0
      %1656 = vmatmul.mubr.f32.gmra.mxu0 %v1542
      %v1657 = vpop.f32.mrf.mxu0
      %v1658 = vadd.f32 0.0, %v1657
      %v1659 = vpop.f32.mrf.mxu0
      %1660 = vmatprep.mubr.f32.mxu0 0.0
      %1661 = vmatmul.mubr.f32.gmra.mxu0 %v1545
      %v1662 = vpop.f32.mrf.mxu0
      %v1663 = vadd.f32 0.0, %v1662
      %v1664 = vpop.f32.mrf.mxu0
      %1665 = vmatprep.mubr.f32.mxu0 0.0
      %1666 = vmatmul.mubr.f32.gmra.mxu0 %v1548
      %v1667 = vpop.f32.mrf.mxu0
      %v1668 = vadd.f32 0.0, %v1667
      %v1669 = vpop.f32.mrf.mxu0
      %1670 = vmatprep.mubr.f32.mxu0 0.0
      %1671 = vmatmul.mubr.f32.gmra.mxu0 %v1551
      %v1672 = vpop.f32.mrf.mxu0
      %v1673 = vadd.f32 0.0, %v1672
      %v1674 = vpop.f32.mrf.mxu0
      %1675 = vmatprep.mubr.f32.mxu0 0.0
      %1676 = vmatmul.mubr.f32.gmra.mxu0 %v1554
      %v1677 = vpop.f32.mrf.mxu0
      %v1678 = vadd.f32 0.0, %v1677
      %v1679 = vpop.f32.mrf.mxu0
      %1680 = vmatprep.mubr.f32.mxu0 0.0
      %1681 = vmatmul.mubr.f32.gmra.mxu0 %v1557
      %v1682 = vpop.f32.mrf.mxu0
      %v1683 = vadd.f32 0.0, %v1682
      %v1684 = vpop.f32.mrf.mxu0
      %1685 = vmatprep.mubr.f32.mxu0 0.0
      %1686 = vmatmul.mubr.f32.gmra.mxu0 %v1560
      %v1687 = vpop.f32.mrf.mxu0
      %v1688 = vadd.f32 0.0, %v1687
      %v1689 = vpop.f32.mrf.mxu0
      %1690 = vmatprep.mubr.f32.mxu0 0.0
      %1691 = vmatmul.mubr.f32.gmra.mxu0 %v1563
      %v1692 = vpop.f32.mrf.mxu0
      %v1693 = vadd.f32 0.0, %v1692
      %v1694 = vpop.f32.mrf.mxu0
      %1695 = vmatprep.mubr.f32.mxu0 0.0
      %1696 = vmatmul.mubr.f32.gmra.mxu0 %v1566
      %v1697 = vpop.f32.mrf.mxu0
      %v1698 = vadd.f32 0.0, %v1697
      %v1699 = vpop.f32.mrf.mxu0
      %1700 = vmatprep.mubr.f32.mxu0 0.0
      %1701 = vmatmul.mubr.f32.gmra.mxu0 %v1569
      %v1702 = vpop.f32.mrf.mxu0
      %v1703 = vadd.f32 0.0, %v1702
      %v1704 = vpop.f32.mrf.mxu0
      %1705 = vmatprep.mubr.f32.mxu0 0.0
      %1706 = vmatmul.mubr.f32.gmra.mxu0 %v1572
      %v1707 = vpop.f32.mrf.mxu0
      %v1708 = vadd.f32 0.0, %v1707
      %v1709 = vpop.f32.mrf.mxu0
      %1710 = vmatprep.mubr.f32.mxu0 0.0
      %1711 = vmatmul.mubr.f32.gmra.mxu0 %v1575
      %v1712 = vpop.f32.mrf.mxu0
      %v1713 = vadd.f32 0.0, %v1712
      %v1714 = vpop.f32.mrf.mxu0
      %1715 = vmatprep.mubr.f32.mxu0 0.0
      %1716 = vmatmul.mubr.f32.gmra.mxu0 %v1578
      %v1717 = vpop.f32.mrf.mxu0
      %v1718 = vadd.f32 0.0, %v1717
      %v1719 = vpop.f32.mrf.mxu0
      %1720 = vmatprep.mubr.f32.mxu0 0.0
      %1721 = vmatmul.mubr.f32.gmra.mxu0 %v1581
      %v1722 = vpop.f32.mrf.mxu0
      %v1723 = vadd.f32 0.0, %v1722
      %v1724 = vpop.f32.mrf.mxu0
      %1725 = vmatprep.mubr.f32.mxu0 0.0
      %1726 = vmatmul.mubr.f32.gmra.mxu0 %v1584
      %v1727 = vpop.f32.mrf.mxu0
      %v1728 = vadd.f32 0.0, %v1727
      %v1729 = vpop.f32.mrf.mxu0
      %1730 = vdwg.mxu0
      %v1731 = vadd.f32 %v1504, %v1653
      %v1732 = vadd.f32 %v1505, %v1658
      %v1733 = vadd.f32 %v1506, %v1663
      %v1734 = vadd.f32 %v1507, %v1668
      %v1735 = vadd.f32 %v1508, %v1673
      %v1736 = vadd.f32 %v1509, %v1678
      %v1737 = vadd.f32 %v1510, %v1683
      %v1738 = vadd.f32 %v1511, %v1688
      %v1739 = vadd.f32 %v1512, %v1693
      %v1740 = vadd.f32 %v1513, %v1698
      %v1741 = vadd.f32 %v1514, %v1703
      %v1742 = vadd.f32 %v1515, %v1708
      %v1743 = vadd.f32 %v1516, %v1713
      %v1744 = vadd.f32 %v1517, %v1718
      %v1745 = vadd.f32 %v1518, %v1723
      %v1746 = vadd.f32 %v1519, %v1728
      %s1747 = scalar_lea.vmem [#allocation2], 48
      %v1748 = vld [vmem:[%s1747] sm:$0xff]
      %v1749 = vld [vmem:[%s1747 + $0x8] sm:$0xff]
      %v1750 = vld [vmem:[%s1747 + $0x18] sm:$0xff]
      %v1751 = vld [vmem:[%s1747 + $0x20] sm:$0xff]
      %v1752 = vld [vmem:[%s1747 + $0x30] sm:$0xff]
      %v1753 = vld [vmem:[%s1747 + $0x38] sm:$0xff]
      %v1754 = vld [vmem:[%s1747 + $0x48] sm:$0xff]
      %v1755 = vld [vmem:[%s1747 + $0x50] sm:$0xff]
      %v1756 = vld [vmem:[%s1747 + $0x60] sm:$0xff]
      %v1757 = vld [vmem:[%s1747 + $0x68] sm:$0xff]
      %v1758 = vld [vmem:[%s1747 + $0x78] sm:$0xff]
      %v1759 = vld [vmem:[%s1747 + $0x80] sm:$0xff]
      %v1760 = vld [vmem:[%s1747 + $0x90] sm:$0xff]
      %v1761 = vld [vmem:[%s1747 + $0x98] sm:$0xff]
      %v1762 = vld [vmem:[%s1747 + $0xa8] sm:$0xff]
      %v1763 = vld [vmem:[%s1747 + $0xb0] sm:$0xff]
      %s1764 = scalar_lea.vmem %s1, 48
      %v1765 = vld [vmem:[%s1764] sm:$0xff]
      %v1767 = vsel %vm277, %v1748, 0
      %v1770 = vsel %vm277, %v1749, 0
      %v1773 = vsel %vm277, %v1750, 0
      %v1776 = vsel %vm277, %v1751, 0
      %v1779 = vsel %vm277, %v1752, 0
      %v1782 = vsel %vm277, %v1753, 0
      %v1785 = vsel %vm277, %v1754, 0
      %v1788 = vsel %vm277, %v1755, 0
      %v1791 = vsel %vm277, %v1756, 0
      %v1794 = vsel %vm277, %v1757, 0
      %v1797 = vsel %vm277, %v1758, 0
      %v1800 = vsel %vm277, %v1759, 0
      %v1803 = vsel %vm277, %v1760, 0
      %v1806 = vsel %vm277, %v1761, 0
      %v1809 = vsel %vm277, %v1762, 0
      %v1812 = vsel %vm277, %v1763, 0
      %1814 = vmatprep.subr.mxu0 0.0
      %1815 = vmatpush1.msra.mxu0 0.0
      %1816 = vmatprep.subr.mxu0 0.0
      %1817 = vmatpush1.msra.mxu0 0.0
      %1818 = vmatprep.subr.mxu0 0.0
      %1819 = vmatpush1.msra.mxu0 0.0
      %1820 = vmatprep.subr.mxu0 0.0
      %1821 = vmatpush1.msra.mxu0 0.0
      %1822 = vmatprep.subr.mxu0 0.0
      %1823 = vmatpush1.msra.mxu0 0.0
      %1824 = vmatprep.subr.mxu0 0.0
      %1825 = vmatpush1.msra.mxu0 0.0
      %1826 = vmatprep.subr.mxu0 0.0
      %1827 = vmatpush1.msra.mxu0 0.0
      %1828 = vmatprep.subr.mxu0 0.0
      %1829 = vmatpush1.msra.mxu0 0.0
      %1830 = vmatprep.subr.mxu0 0.0
      %1831 = vmatpush1.msra.mxu0 0.0
      %1832 = vmatprep.subr.mxu0 0.0
      %1833 = vmatpush1.msra.mxu0 0.0
      %1834 = vmatprep.subr.mxu0 0.0
      %1835 = vmatpush1.msra.mxu0 0.0
      %1836 = vmatprep.subr.mxu0 0.0
      %1837 = vmatpush1.msra.mxu0 0.0
      %1838 = vmatprep.subr.mxu0 0.0
      %1839 = vmatpush1.msra.mxu0 0.0
      %1840 = vmatprep.subr.mxu0 0.0
      %1841 = vmatpush1.msra.mxu0 0.0
      %1842 = vmatprep.subr.mxu0 0.0
      %1843 = vmatpush1.msra.mxu0 0.0
      %1844 = vmatprep.subr.mxu0 0.0
      %1845 = vmatpush1.msra.mxu0 %v1765
      %1846 = vmatprep.subr.mxu0 0.0
      %1847 = vmatpush2.msra.mxu0 0.0
      %1848 = vmatprep.subr.mxu0 0.0
      %1849 = vmatpush2.msra.mxu0 0.0
      %1850 = vmatprep.subr.mxu0 0.0
      %1851 = vmatpush2.msra.mxu0 0.0
      %1852 = vmatprep.subr.mxu0 0.0
      %1853 = vmatpush2.msra.mxu0 0.0
      %1854 = vmatprep.subr.mxu0 0.0
      %1855 = vmatpush2.msra.mxu0 0.0
      %1856 = vmatprep.subr.mxu0 0.0
      %1857 = vmatpush2.msra.mxu0 0.0
      %1858 = vmatprep.subr.mxu0 0.0
      %1859 = vmatpush2.msra.mxu0 0.0
      %1860 = vmatprep.subr.mxu0 0.0
      %1861 = vmatpush2.msra.mxu0 0.0
      %1862 = vmatprep.subr.mxu0 0.0
      %1863 = vmatpush2.msra.mxu0 0.0
      %1864 = vmatprep.subr.mxu0 0.0
      %1865 = vmatpush2.msra.mxu0 0.0
      %1866 = vmatprep.subr.mxu0 0.0
      %1867 = vmatpush2.msra.mxu0 0.0
      %1868 = vmatprep.subr.mxu0 0.0
      %1869 = vmatpush2.msra.mxu0 0.0
      %1870 = vmatprep.subr.mxu0 0.0
      %1871 = vmatpush2.msra.mxu0 0.0
      %1872 = vmatprep.subr.mxu0 0.0
      %1873 = vmatpush2.msra.mxu0 0.0
      %1874 = vmatprep.subr.mxu0 0.0
      %1875 = vmatpush2.msra.mxu0 0.0
      %1876 = vmatprep.subr.mxu0 0.0
      %1877 = vmatpush2.msra.mxu0 0.0
      %1878 = vmatprep.mubr.f32.mxu0 0.0
      %1879 = vmatmul.mubr.f32.gmra.mxu0 %v1767
      %v1880 = vpop.f32.mrf.mxu0
      %v1881 = vadd.f32 0.0, %v1880
      %v1882 = vpop.f32.mrf.mxu0
      %1883 = vmatprep.mubr.f32.mxu0 0.0
      %1884 = vmatmul.mubr.f32.gmra.mxu0 %v1770
      %v1885 = vpop.f32.mrf.mxu0
      %v1886 = vadd.f32 0.0, %v1885
      %v1887 = vpop.f32.mrf.mxu0
      %1888 = vmatprep.mubr.f32.mxu0 0.0
      %1889 = vmatmul.mubr.f32.gmra.mxu0 %v1773
      %v1890 = vpop.f32.mrf.mxu0
      %v1891 = vadd.f32 0.0, %v1890
      %v1892 = vpop.f32.mrf.mxu0
      %1893 = vmatprep.mubr.f32.mxu0 0.0
      %1894 = vmatmul.mubr.f32.gmra.mxu0 %v1776
      %v1895 = vpop.f32.mrf.mxu0
      %v1896 = vadd.f32 0.0, %v1895
      %v1897 = vpop.f32.mrf.mxu0
      %1898 = vmatprep.mubr.f32.mxu0 0.0
      %1899 = vmatmul.mubr.f32.gmra.mxu0 %v1779
      %v1900 = vpop.f32.mrf.mxu0
      %v1901 = vadd.f32 0.0, %v1900
      %v1902 = vpop.f32.mrf.mxu0
      %1903 = vmatprep.mubr.f32.mxu0 0.0
      %1904 = vmatmul.mubr.f32.gmra.mxu0 %v1782
      %v1905 = vpop.f32.mrf.mxu0
      %v1906 = vadd.f32 0.0, %v1905
      %v1907 = vpop.f32.mrf.mxu0
      %1908 = vmatprep.mubr.f32.mxu0 0.0
      %1909 = vmatmul.mubr.f32.gmra.mxu0 %v1785
      %v1910 = vpop.f32.mrf.mxu0
      %v1911 = vadd.f32 0.0, %v1910
      %v1912 = vpop.f32.mrf.mxu0
      %1913 = vmatprep.mubr.f32.mxu0 0.0
      %1914 = vmatmul.mubr.f32.gmra.mxu0 %v1788
      %v1915 = vpop.f32.mrf.mxu0
      %v1916 = vadd.f32 0.0, %v1915
      %v1917 = vpop.f32.mrf.mxu0
      %1918 = vmatprep.mubr.f32.mxu0 0.0
      %1919 = vmatmul.mubr.f32.gmra.mxu0 %v1791
      %v1920 = vpop.f32.mrf.mxu0
      %v1921 = vadd.f32 0.0, %v1920
      %v1922 = vpop.f32.mrf.mxu0
      %1923 = vmatprep.mubr.f32.mxu0 0.0
      %1924 = vmatmul.mubr.f32.gmra.mxu0 %v1794
      %v1925 = vpop.f32.mrf.mxu0
      %v1926 = vadd.f32 0.0, %v1925
      %v1927 = vpop.f32.mrf.mxu0
      %1928 = vmatprep.mubr.f32.mxu0 0.0
      %1929 = vmatmul.mubr.f32.gmra.mxu0 %v1797
      %v1930 = vpop.f32.mrf.mxu0
      %v1931 = vadd.f32 0.0, %v1930
      %v1932 = vpop.f32.mrf.mxu0
      %1933 = vmatprep.mubr.f32.mxu0 0.0
      %1934 = vmatmul.mubr.f32.gmra.mxu0 %v1800
      %v1935 = vpop.f32.mrf.mxu0
      %v1936 = vadd.f32 0.0, %v1935
      %v1937 = vpop.f32.mrf.mxu0
      %1938 = vmatprep.mubr.f32.mxu0 0.0
      %1939 = vmatmul.mubr.f32.gmra.mxu0 %v1803
      %v1940 = vpop.f32.mrf.mxu0
      %v1941 = vadd.f32 0.0, %v1940
      %v1942 = vpop.f32.mrf.mxu0
      %1943 = vmatprep.mubr.f32.mxu0 0.0
      %1944 = vmatmul.mubr.f32.gmra.mxu0 %v1806
      %v1945 = vpop.f32.mrf.mxu0
      %v1946 = vadd.f32 0.0, %v1945
      %v1947 = vpop.f32.mrf.mxu0
      %1948 = vmatprep.mubr.f32.mxu0 0.0
      %1949 = vmatmul.mubr.f32.gmra.mxu0 %v1809
      %v1950 = vpop.f32.mrf.mxu0
      %v1951 = vadd.f32 0.0, %v1950
      %v1952 = vpop.f32.mrf.mxu0
      %1953 = vmatprep.mubr.f32.mxu0 0.0
      %1954 = vmatmul.mubr.f32.gmra.mxu0 %v1812
      %v1955 = vpop.f32.mrf.mxu0
      %v1956 = vadd.f32 0.0, %v1955
      %v1957 = vpop.f32.mrf.mxu0
      %1958 = vdwg.mxu0
      %v1959 = vadd.f32 %v1731, %v1881
      %v1960 = vadd.f32 %v1732, %v1886
      %v1961 = vadd.f32 %v1733, %v1891
      %v1962 = vadd.f32 %v1734, %v1896
      %v1963 = vadd.f32 %v1735, %v1901
      %v1964 = vadd.f32 %v1736, %v1906
      %v1965 = vadd.f32 %v1737, %v1911
      %v1966 = vadd.f32 %v1738, %v1916
      %v1967 = vadd.f32 %v1739, %v1921
      %v1968 = vadd.f32 %v1740, %v1926
      %v1969 = vadd.f32 %v1741, %v1931
      %v1970 = vadd.f32 %v1742, %v1936
      %v1971 = vadd.f32 %v1743, %v1941
      %v1972 = vadd.f32 %v1744, %v1946
      %v1973 = vadd.f32 %v1745, %v1951
      %v1974 = vadd.f32 %v1746, %v1956
      %v1975 = vld [vmem:[%s1747 + $0x1] sm:$0xff]
      %v1976 = vld [vmem:[%s1747 + $0x9] sm:$0xff]
      %v1977 = vld [vmem:[%s1747 + $0x19] sm:$0xff]
      %v1978 = vld [vmem:[%s1747 + $0x21] sm:$0xff]
      %v1979 = vld [vmem:[%s1747 + $0x31] sm:$0xff]
      %v1980 = vld [vmem:[%s1747 + $0x39] sm:$0xff]
      %v1981 = vld [vmem:[%s1747 + $0x49] sm:$0xff]
      %v1982 = vld [vmem:[%s1747 + $0x51] sm:$0xff]
      %v1983 = vld [vmem:[%s1747 + $0x61] sm:$0xff]
      %v1984 = vld [vmem:[%s1747 + $0x69] sm:$0xff]
      %v1985 = vld [vmem:[%s1747 + $0x79] sm:$0xff]
      %v1986 = vld [vmem:[%s1747 + $0x81] sm:$0xff]
      %v1987 = vld [vmem:[%s1747 + $0x91] sm:$0xff]
      %v1988 = vld [vmem:[%s1747 + $0x99] sm:$0xff]
      %v1989 = vld [vmem:[%s1747 + $0xa9] sm:$0xff]
      %v1990 = vld [vmem:[%s1747 + $0xb1] sm:$0xff]
      %s1991 = scalar_lea.vmem %s1, 56
      %v1992 = vld [vmem:[%s1991] sm:$0xff]
      %v1994 = vsel %vm277, %v1975, 0
      %v1997 = vsel %vm277, %v1976, 0
      %v2000 = vsel %vm277, %v1977, 0
      %v2003 = vsel %vm277, %v1978, 0
      %v2006 = vsel %vm277, %v1979, 0
      %v2009 = vsel %vm277, %v1980, 0
      %v2012 = vsel %vm277, %v1981, 0
      %v2015 = vsel %vm277, %v1982, 0
      %v2018 = vsel %vm277, %v1983, 0
      %v2021 = vsel %vm277, %v1984, 0
      %v2024 = vsel %vm277, %v1985, 0
      %v2027 = vsel %vm277, %v1986, 0
      %v2030 = vsel %vm277, %v1987, 0
      %v2033 = vsel %vm277, %v1988, 0
      %v2036 = vsel %vm277, %v1989, 0
      %v2039 = vsel %vm277, %v1990, 0
      %2041 = vmatprep.subr.mxu0 0.0
      %2042 = vmatpush1.msra.mxu0 0.0
      %2043 = vmatprep.subr.mxu0 0.0
      %2044 = vmatpush1.msra.mxu0 0.0
      %2045 = vmatprep.subr.mxu0 0.0
      %2046 = vmatpush1.msra.mxu0 0.0
      %2047 = vmatprep.subr.mxu0 0.0
      %2048 = vmatpush1.msra.mxu0 0.0
      %2049 = vmatprep.subr.mxu0 0.0
      %2050 = vmatpush1.msra.mxu0 0.0
      %2051 = vmatprep.subr.mxu0 0.0
      %2052 = vmatpush1.msra.mxu0 0.0
      %2053 = vmatprep.subr.mxu0 0.0
      %2054 = vmatpush1.msra.mxu0 0.0
      %2055 = vmatprep.subr.mxu0 0.0
      %2056 = vmatpush1.msra.mxu0 0.0
      %2057 = vmatprep.subr.mxu0 0.0
      %2058 = vmatpush1.msra.mxu0 0.0
      %2059 = vmatprep.subr.mxu0 0.0
      %2060 = vmatpush1.msra.mxu0 0.0
      %2061 = vmatprep.subr.mxu0 0.0
      %2062 = vmatpush1.msra.mxu0 0.0
      %2063 = vmatprep.subr.mxu0 0.0
      %2064 = vmatpush1.msra.mxu0 0.0
      %2065 = vmatprep.subr.mxu0 0.0
      %2066 = vmatpush1.msra.mxu0 0.0
      %2067 = vmatprep.subr.mxu0 0.0
      %2068 = vmatpush1.msra.mxu0 0.0
      %2069 = vmatprep.subr.mxu0 0.0
      %2070 = vmatpush1.msra.mxu0 0.0
      %2071 = vmatprep.subr.mxu0 0.0
      %2072 = vmatpush1.msra.mxu0 %v1992
      %2073 = vmatprep.subr.mxu0 0.0
      %2074 = vmatpush2.msra.mxu0 0.0
      %2075 = vmatprep.subr.mxu0 0.0
      %2076 = vmatpush2.msra.mxu0 0.0
      %2077 = vmatprep.subr.mxu0 0.0
      %2078 = vmatpush2.msra.mxu0 0.0
      %2079 = vmatprep.subr.mxu0 0.0
      %2080 = vmatpush2.msra.mxu0 0.0
      %2081 = vmatprep.subr.mxu0 0.0
      %2082 = vmatpush2.msra.mxu0 0.0
      %2083 = vmatprep.subr.mxu0 0.0
      %2084 = vmatpush2.msra.mxu0 0.0
      %2085 = vmatprep.subr.mxu0 0.0
      %2086 = vmatpush2.msra.mxu0 0.0
      %2087 = vmatprep.subr.mxu0 0.0
      %2088 = vmatpush2.msra.mxu0 0.0
      %2089 = vmatprep.subr.mxu0 0.0
      %2090 = vmatpush2.msra.mxu0 0.0
      %2091 = vmatprep.subr.mxu0 0.0
      %2092 = vmatpush2.msra.mxu0 0.0
      %2093 = vmatprep.subr.mxu0 0.0
      %2094 = vmatpush2.msra.mxu0 0.0
      %2095 = vmatprep.subr.mxu0 0.0
      %2096 = vmatpush2.msra.mxu0 0.0
      %2097 = vmatprep.subr.mxu0 0.0
      %2098 = vmatpush2.msra.mxu0 0.0
      %2099 = vmatprep.subr.mxu0 0.0
      %2100 = vmatpush2.msra.mxu0 0.0
      %2101 = vmatprep.subr.mxu0 0.0
      %2102 = vmatpush2.msra.mxu0 0.0
      %2103 = vmatprep.subr.mxu0 0.0
      %2104 = vmatpush2.msra.mxu0 0.0
      %2105 = vmatprep.mubr.f32.mxu0 0.0
      %2106 = vmatmul.mubr.f32.gmra.mxu0 %v1994
      %v2107 = vpop.f32.mrf.mxu0
      %v2108 = vadd.f32 0.0, %v2107
      %v2109 = vpop.f32.mrf.mxu0
      %2110 = vmatprep.mubr.f32.mxu0 0.0
      %2111 = vmatmul.mubr.f32.gmra.mxu0 %v1997
      %v2112 = vpop.f32.mrf.mxu0
      %v2113 = vadd.f32 0.0, %v2112
      %v2114 = vpop.f32.mrf.mxu0
      %2115 = vmatprep.mubr.f32.mxu0 0.0
      %2116 = vmatmul.mubr.f32.gmra.mxu0 %v2000
      %v2117 = vpop.f32.mrf.mxu0
      %v2118 = vadd.f32 0.0, %v2117
      %v2119 = vpop.f32.mrf.mxu0
      %2120 = vmatprep.mubr.f32.mxu0 0.0
      %2121 = vmatmul.mubr.f32.gmra.mxu0 %v2003
      %v2122 = vpop.f32.mrf.mxu0
      %v2123 = vadd.f32 0.0, %v2122
      %v2124 = vpop.f32.mrf.mxu0
      %2125 = vmatprep.mubr.f32.mxu0 0.0
      %2126 = vmatmul.mubr.f32.gmra.mxu0 %v2006
      %v2127 = vpop.f32.mrf.mxu0
      %v2128 = vadd.f32 0.0, %v2127
      %v2129 = vpop.f32.mrf.mxu0
      %2130 = vmatprep.mubr.f32.mxu0 0.0
      %2131 = vmatmul.mubr.f32.gmra.mxu0 %v2009
      %v2132 = vpop.f32.mrf.mxu0
      %v2133 = vadd.f32 0.0, %v2132
      %v2134 = vpop.f32.mrf.mxu0
      %2135 = vmatprep.mubr.f32.mxu0 0.0
      %2136 = vmatmul.mubr.f32.gmra.mxu0 %v2012
      %v2137 = vpop.f32.mrf.mxu0
      %v2138 = vadd.f32 0.0, %v2137
      %v2139 = vpop.f32.mrf.mxu0
      %2140 = vmatprep.mubr.f32.mxu0 0.0
      %2141 = vmatmul.mubr.f32.gmra.mxu0 %v2015
      %v2142 = vpop.f32.mrf.mxu0
      %v2143 = vadd.f32 0.0, %v2142
      %v2144 = vpop.f32.mrf.mxu0
      %2145 = vmatprep.mubr.f32.mxu0 0.0
      %2146 = vmatmul.mubr.f32.gmra.mxu0 %v2018
      %v2147 = vpop.f32.mrf.mxu0
      %v2148 = vadd.f32 0.0, %v2147
      %v2149 = vpop.f32.mrf.mxu0
      %2150 = vmatprep.mubr.f32.mxu0 0.0
      %2151 = vmatmul.mubr.f32.gmra.mxu0 %v2021
      %v2152 = vpop.f32.mrf.mxu0
      %v2153 = vadd.f32 0.0, %v2152
      %v2154 = vpop.f32.mrf.mxu0
      %2155 = vmatprep.mubr.f32.mxu0 0.0
      %2156 = vmatmul.mubr.f32.gmra.mxu0 %v2024
      %v2157 = vpop.f32.mrf.mxu0
      %v2158 = vadd.f32 0.0, %v2157
      %v2159 = vpop.f32.mrf.mxu0
      %2160 = vmatprep.mubr.f32.mxu0 0.0
      %2161 = vmatmul.mubr.f32.gmra.mxu0 %v2027
      %v2162 = vpop.f32.mrf.mxu0
      %v2163 = vadd.f32 0.0, %v2162
      %v2164 = vpop.f32.mrf.mxu0
      %2165 = vmatprep.mubr.f32.mxu0 0.0
      %2166 = vmatmul.mubr.f32.gmra.mxu0 %v2030
      %v2167 = vpop.f32.mrf.mxu0
      %v2168 = vadd.f32 0.0, %v2167
      %v2169 = vpop.f32.mrf.mxu0
      %2170 = vmatprep.mubr.f32.mxu0 0.0
      %2171 = vmatmul.mubr.f32.gmra.mxu0 %v2033
      %v2172 = vpop.f32.mrf.mxu0
      %v2173 = vadd.f32 0.0, %v2172
      %v2174 = vpop.f32.mrf.mxu0
      %2175 = vmatprep.mubr.f32.mxu0 0.0
      %2176 = vmatmul.mubr.f32.gmra.mxu0 %v2036
      %v2177 = vpop.f32.mrf.mxu0
      %v2178 = vadd.f32 0.0, %v2177
      %v2179 = vpop.f32.mrf.mxu0
      %2180 = vmatprep.mubr.f32.mxu0 0.0
      %2181 = vmatmul.mubr.f32.gmra.mxu0 %v2039
      %v2182 = vpop.f32.mrf.mxu0
      %v2183 = vadd.f32 0.0, %v2182
      %v2184 = vpop.f32.mrf.mxu0
      %2185 = vdwg.mxu0
      %v2186 = vadd.f32 %v1959, %v2108
      %v2187 = vadd.f32 %v1960, %v2113
      %v2188 = vadd.f32 %v1961, %v2118
      %v2189 = vadd.f32 %v1962, %v2123
      %v2190 = vadd.f32 %v1963, %v2128
      %v2191 = vadd.f32 %v1964, %v2133
      %v2192 = vadd.f32 %v1965, %v2138
      %v2193 = vadd.f32 %v1966, %v2143
      %v2194 = vadd.f32 %v1967, %v2148
      %v2195 = vadd.f32 %v1968, %v2153
      %v2196 = vadd.f32 %v1969, %v2158
      %v2197 = vadd.f32 %v1970, %v2163
      %v2198 = vadd.f32 %v1971, %v2168
      %v2199 = vadd.f32 %v1972, %v2173
      %v2200 = vadd.f32 %v1973, %v2178
      %v2201 = vadd.f32 %v1974, %v2183
      %v2202 = vld [vmem:[%s1747 + $0x2] sm:$0xff]
      %v2203 = vld [vmem:[%s1747 + $0xa] sm:$0xff]
      %v2204 = vld [vmem:[%s1747 + $0x1a] sm:$0xff]
      %v2205 = vld [vmem:[%s1747 + $0x22] sm:$0xff]
      %v2206 = vld [vmem:[%s1747 + $0x32] sm:$0xff]
      %v2207 = vld [vmem:[%s1747 + $0x3a] sm:$0xff]
      %v2208 = vld [vmem:[%s1747 + $0x4a] sm:$0xff]
      %v2209 = vld [vmem:[%s1747 + $0x52] sm:$0xff]
      %v2210 = vld [vmem:[%s1747 + $0x62] sm:$0xff]
      %v2211 = vld [vmem:[%s1747 + $0x6a] sm:$0xff]
      %v2212 = vld [vmem:[%s1747 + $0x7a] sm:$0xff]
      %v2213 = vld [vmem:[%s1747 + $0x82] sm:$0xff]
      %v2214 = vld [vmem:[%s1747 + $0x92] sm:$0xff]
      %v2215 = vld [vmem:[%s1747 + $0x9a] sm:$0xff]
      %v2216 = vld [vmem:[%s1747 + $0xaa] sm:$0xff]
      %v2217 = vld [vmem:[%s1747 + $0xb2] sm:$0xff]
      %s2218 = scalar_lea.vmem %s1, 64
      %v2219 = vld [vmem:[%s2218] sm:$0xff]
      %v2221 = vsel %vm277, %v2202, 0
      %v2224 = vsel %vm277, %v2203, 0
      %v2227 = vsel %vm277, %v2204, 0
      %v2230 = vsel %vm277, %v2205, 0
      %v2233 = vsel %vm277, %v2206, 0
      %v2236 = vsel %vm277, %v2207, 0
      %v2239 = vsel %vm277, %v2208, 0
      %v2242 = vsel %vm277, %v2209, 0
      %v2245 = vsel %vm277, %v2210, 0
      %v2248 = vsel %vm277, %v2211, 0
      %v2251 = vsel %vm277, %v2212, 0
      %v2254 = vsel %vm277, %v2213, 0
      %v2257 = vsel %vm277, %v2214, 0
      %v2260 = vsel %vm277, %v2215, 0
      %v2263 = vsel %vm277, %v2216, 0
      %v2266 = vsel %vm277, %v2217, 0
      %2268 = vmatprep.subr.mxu0 0.0
      %2269 = vmatpush1.msra.mxu0 0.0
      %2270 = vmatprep.subr.mxu0 0.0
      %2271 = vmatpush1.msra.mxu0 0.0
      %2272 = vmatprep.subr.mxu0 0.0
      %2273 = vmatpush1.msra.mxu0 0.0
      %2274 = vmatprep.subr.mxu0 0.0
      %2275 = vmatpush1.msra.mxu0 0.0
      %2276 = vmatprep.subr.mxu0 0.0
      %2277 = vmatpush1.msra.mxu0 0.0
      %2278 = vmatprep.subr.mxu0 0.0
      %2279 = vmatpush1.msra.mxu0 0.0
      %2280 = vmatprep.subr.mxu0 0.0
      %2281 = vmatpush1.msra.mxu0 0.0
      %2282 = vmatprep.subr.mxu0 0.0
      %2283 = vmatpush1.msra.mxu0 0.0
      %2284 = vmatprep.subr.mxu0 0.0
      %2285 = vmatpush1.msra.mxu0 0.0
      %2286 = vmatprep.subr.mxu0 0.0
      %2287 = vmatpush1.msra.mxu0 0.0
      %2288 = vmatprep.subr.mxu0 0.0
      %2289 = vmatpush1.msra.mxu0 0.0
      %2290 = vmatprep.subr.mxu0 0.0
      %2291 = vmatpush1.msra.mxu0 0.0
      %2292 = vmatprep.subr.mxu0 0.0
      %2293 = vmatpush1.msra.mxu0 0.0
      %2294 = vmatprep.subr.mxu0 0.0
      %2295 = vmatpush1.msra.mxu0 0.0
      %2296 = vmatprep.subr.mxu0 0.0
      %2297 = vmatpush1.msra.mxu0 0.0
      %2298 = vmatprep.subr.mxu0 0.0
      %2299 = vmatpush1.msra.mxu0 %v2219
      %2300 = vmatprep.subr.mxu0 0.0
      %2301 = vmatpush2.msra.mxu0 0.0
      %2302 = vmatprep.subr.mxu0 0.0
      %2303 = vmatpush2.msra.mxu0 0.0
      %2304 = vmatprep.subr.mxu0 0.0
      %2305 = vmatpush2.msra.mxu0 0.0
      %2306 = vmatprep.subr.mxu0 0.0
      %2307 = vmatpush2.msra.mxu0 0.0
      %2308 = vmatprep.subr.mxu0 0.0
      %2309 = vmatpush2.msra.mxu0 0.0
      %2310 = vmatprep.subr.mxu0 0.0
      %2311 = vmatpush2.msra.mxu0 0.0
      %2312 = vmatprep.subr.mxu0 0.0
      %2313 = vmatpush2.msra.mxu0 0.0
      %2314 = vmatprep.subr.mxu0 0.0
      %2315 = vmatpush2.msra.mxu0 0.0
      %2316 = vmatprep.subr.mxu0 0.0
      %2317 = vmatpush2.msra.mxu0 0.0
      %2318 = vmatprep.subr.mxu0 0.0
      %2319 = vmatpush2.msra.mxu0 0.0
      %2320 = vmatprep.subr.mxu0 0.0
      %2321 = vmatpush2.msra.mxu0 0.0
      %2322 = vmatprep.subr.mxu0 0.0
      %2323 = vmatpush2.msra.mxu0 0.0
      %2324 = vmatprep.subr.mxu0 0.0
      %2325 = vmatpush2.msra.mxu0 0.0
      %2326 = vmatprep.subr.mxu0 0.0
      %2327 = vmatpush2.msra.mxu0 0.0
      %2328 = vmatprep.subr.mxu0 0.0
      %2329 = vmatpush2.msra.mxu0 0.0
      %2330 = vmatprep.subr.mxu0 0.0
      %2331 = vmatpush2.msra.mxu0 0.0
      %2332 = vmatprep.mubr.f32.mxu0 0.0
      %2333 = vmatmul.mubr.f32.gmra.mxu0 %v2221
      %v2334 = vpop.f32.mrf.mxu0
      %v2335 = vadd.f32 0.0, %v2334
      %v2336 = vpop.f32.mrf.mxu0
      %2337 = vmatprep.mubr.f32.mxu0 0.0
      %2338 = vmatmul.mubr.f32.gmra.mxu0 %v2224
      %v2339 = vpop.f32.mrf.mxu0
      %v2340 = vadd.f32 0.0, %v2339
      %v2341 = vpop.f32.mrf.mxu0
      %2342 = vmatprep.mubr.f32.mxu0 0.0
      %2343 = vmatmul.mubr.f32.gmra.mxu0 %v2227
      %v2344 = vpop.f32.mrf.mxu0
      %v2345 = vadd.f32 0.0, %v2344
      %v2346 = vpop.f32.mrf.mxu0
      %2347 = vmatprep.mubr.f32.mxu0 0.0
      %2348 = vmatmul.mubr.f32.gmra.mxu0 %v2230
      %v2349 = vpop.f32.mrf.mxu0
      %v2350 = vadd.f32 0.0, %v2349
      %v2351 = vpop.f32.mrf.mxu0
      %2352 = vmatprep.mubr.f32.mxu0 0.0
      %2353 = vmatmul.mubr.f32.gmra.mxu0 %v2233
      %v2354 = vpop.f32.mrf.mxu0
      %v2355 = vadd.f32 0.0, %v2354
      %v2356 = vpop.f32.mrf.mxu0
      %2357 = vmatprep.mubr.f32.mxu0 0.0
      %2358 = vmatmul.mubr.f32.gmra.mxu0 %v2236
      %v2359 = vpop.f32.mrf.mxu0
      %v2360 = vadd.f32 0.0, %v2359
      %v2361 = vpop.f32.mrf.mxu0
      %2362 = vmatprep.mubr.f32.mxu0 0.0
      %2363 = vmatmul.mubr.f32.gmra.mxu0 %v2239
      %v2364 = vpop.f32.mrf.mxu0
      %v2365 = vadd.f32 0.0, %v2364
      %v2366 = vpop.f32.mrf.mxu0
      %2367 = vmatprep.mubr.f32.mxu0 0.0
      %2368 = vmatmul.mubr.f32.gmra.mxu0 %v2242
      %v2369 = vpop.f32.mrf.mxu0
      %v2370 = vadd.f32 0.0, %v2369
      %v2371 = vpop.f32.mrf.mxu0
      %2372 = vmatprep.mubr.f32.mxu0 0.0
      %2373 = vmatmul.mubr.f32.gmra.mxu0 %v2245
      %v2374 = vpop.f32.mrf.mxu0
      %v2375 = vadd.f32 0.0, %v2374
      %v2376 = vpop.f32.mrf.mxu0
      %2377 = vmatprep.mubr.f32.mxu0 0.0
      %2378 = vmatmul.mubr.f32.gmra.mxu0 %v2248
      %v2379 = vpop.f32.mrf.mxu0
      %v2380 = vadd.f32 0.0, %v2379
      %v2381 = vpop.f32.mrf.mxu0
      %2382 = vmatprep.mubr.f32.mxu0 0.0
      %2383 = vmatmul.mubr.f32.gmra.mxu0 %v2251
      %v2384 = vpop.f32.mrf.mxu0
      %v2385 = vadd.f32 0.0, %v2384
      %v2386 = vpop.f32.mrf.mxu0
      %2387 = vmatprep.mubr.f32.mxu0 0.0
      %2388 = vmatmul.mubr.f32.gmra.mxu0 %v2254
      %v2389 = vpop.f32.mrf.mxu0
      %v2390 = vadd.f32 0.0, %v2389
      %v2391 = vpop.f32.mrf.mxu0
      %2392 = vmatprep.mubr.f32.mxu0 0.0
      %2393 = vmatmul.mubr.f32.gmra.mxu0 %v2257
      %v2394 = vpop.f32.mrf.mxu0
      %v2395 = vadd.f32 0.0, %v2394
      %v2396 = vpop.f32.mrf.mxu0
      %2397 = vmatprep.mubr.f32.mxu0 0.0
      %2398 = vmatmul.mubr.f32.gmra.mxu0 %v2260
      %v2399 = vpop.f32.mrf.mxu0
      %v2400 = vadd.f32 0.0, %v2399
      %v2401 = vpop.f32.mrf.mxu0
      %2402 = vmatprep.mubr.f32.mxu0 0.0
      %2403 = vmatmul.mubr.f32.gmra.mxu0 %v2263
      %v2404 = vpop.f32.mrf.mxu0
      %v2405 = vadd.f32 0.0, %v2404
      %v2406 = vpop.f32.mrf.mxu0
      %2407 = vmatprep.mubr.f32.mxu0 0.0
      %2408 = vmatmul.mubr.f32.gmra.mxu0 %v2266
      %v2409 = vpop.f32.mrf.mxu0
      %v2410 = vadd.f32 0.0, %v2409
      %v2411 = vpop.f32.mrf.mxu0
      %2412 = vdwg.mxu0
      %v2413 = vadd.f32 %v2186, %v2335
      %v2414 = vadd.f32 %v2187, %v2340
      %v2415 = vadd.f32 %v2188, %v2345
      %v2416 = vadd.f32 %v2189, %v2350
      %v2417 = vadd.f32 %v2190, %v2355
      %v2418 = vadd.f32 %v2191, %v2360
      %v2419 = vadd.f32 %v2192, %v2365
      %v2420 = vadd.f32 %v2193, %v2370
      %v2421 = vadd.f32 %v2194, %v2375
      %v2422 = vadd.f32 %v2195, %v2380
      %v2423 = vadd.f32 %v2196, %v2385
      %v2424 = vadd.f32 %v2197, %v2390
      %v2425 = vadd.f32 %v2198, %v2395
      %v2426 = vadd.f32 %v2199, %v2400
      %v2427 = vadd.f32 %v2200, %v2405
      %v2428 = vadd.f32 %v2201, %v2410
      %v2429 = vld [vmem:[%s2] sm:$0x1]
      %v2431 = vlaneseq
      %v2432 = vshrl.u32 %v2431, 7
      %v2433 = vsub.s32 0, %v2432
      %v2434 = vrot.slane %v2429, %v2433
      %v2436 = vadd.f32 %v2413, %v2434
      %v2437 = vadd.f32 %v2414, %v2434
      %v2438 = vadd.f32 %v2415, %v2434
      %v2439 = vadd.f32 %v2416, %v2434
      %v2440 = vadd.f32 %v2417, %v2434
      %v2441 = vadd.f32 %v2418, %v2434
      %v2442 = vadd.f32 %v2419, %v2434
      %v2443 = vadd.f32 %v2420, %v2434
      %v2444 = vadd.f32 %v2421, %v2434
      %v2445 = vadd.f32 %v2422, %v2434
      %v2446 = vadd.f32 %v2423, %v2434
      %v2447 = vadd.f32 %v2424, %v2434
      %v2448 = vadd.f32 %v2425, %v2434
      %v2449 = vadd.f32 %v2426, %v2434
      %v2450 = vadd.f32 %v2427, %v2434
      %v2451 = vadd.f32 %v2428, %v2434
      %v2452 = vmax.f32 %v2436, 0.0
      %v2453 = vmax.f32 %v2437, 0.0
      %v2454 = vmax.f32 %v2438, 0.0
      %v2455 = vmax.f32 %v2439, 0.0
      %v2456 = vmax.f32 %v2440, 0.0
      %v2457 = vmax.f32 %v2441, 0.0
      %v2458 = vmax.f32 %v2442, 0.0
      %v2459 = vmax.f32 %v2443, 0.0
      %v2460 = vmax.f32 %v2444, 0.0
      %v2461 = vmax.f32 %v2445, 0.0
      %v2462 = vmax.f32 %v2446, 0.0
      %v2463 = vmax.f32 %v2447, 0.0
      %v2464 = vmax.f32 %v2448, 0.0
      %v2465 = vmax.f32 %v2449, 0.0
      %v2466 = vmax.f32 %v2450, 0.0
      %v2467 = vmax.f32 %v2451, 0.0
      %v2468 = vsel %vm277, %v2452, -inf
      %v2469 = vsel %vm277, %v2454, -inf
      %v2470 = vmax.f32 %v2468, %v2469
      %v2471 = vsel %vm277, %v2453, -inf
      %v2472 = vsel %vm277, %v2455, -inf
      %v2473 = vmax.f32 %v2471, %v2472
      %v2474 = vsel %vm277, %v2456, -inf
      %v2475 = vsel %vm277, %v2458, -inf
      %v2476 = vmax.f32 %v2474, %v2475
      %v2477 = vsel %vm277, %v2457, -inf
      %v2478 = vsel %vm277, %v2459, -inf
      %v2479 = vmax.f32 %v2477, %v2478
      %v2480 = vsel %vm277, %v2460, -inf
      %v2481 = vsel %vm277, %v2462, -inf
      %v2482 = vmax.f32 %v2480, %v2481
      %v2483 = vsel %vm277, %v2461, -inf
      %v2484 = vsel %vm277, %v2463, -inf
      %v2485 = vmax.f32 %v2483, %v2484
      %v2486 = vsel %vm277, %v2464, -inf
      %v2487 = vsel %vm277, %v2466, -inf
      %v2488 = vmax.f32 %v2486, %v2487
      %v2489 = vsel %vm277, %v2465, -inf
      %v2490 = vsel %vm277, %v2467, -inf
      %v2491 = vmax.f32 %v2489, %v2490
      %v2500 = vcombine.high %v2470, %v2470
      %v2502 = vunpack.c.l.s4 1983009808
      %v2503 = vunpack.c.0.s8 %v2502
      %v2504 = vlaneseq
      %v2505 = vshrl.u32 %v2504, 7
      %v2506 = vsub.s32 %v2503, %v2505
      %v2507 = vrot.slane %v2470, %v2506
      %v2509 = vunpack.c.l.s4 1983009808
      %v2510 = vunpack.c.0.s8 %v2509
      %v2511 = vlaneseq
      %v2512 = vshrl.u32 %v2511, 7
      %v2513 = vsub.s32 %v2510, %v2512
      %v2514 = vrot.slane %v2500, %v2513
      %v2515 = vcombine.high %v2507, %v2507
      %v2516 = vcombine.high %v2514, %v2514
      %v2517 = vcombine.high %v2473, %v2473
      %v2519 = vunpack.c.l.s4 1983009808
      %v2520 = vunpack.c.0.s8 %v2519
      %v2521 = vlaneseq
      %v2522 = vshrl.u32 %v2521, 7
      %v2523 = vsub.s32 %v2520, %v2522
      %v2524 = vrot.slane %v2473, %v2523
      %v2526 = vunpack.c.l.s4 1983009808
      %v2527 = vunpack.c.0.s8 %v2526
      %v2528 = vlaneseq
      %v2529 = vshrl.u32 %v2528, 7
      %v2530 = vsub.s32 %v2527, %v2529
      %v2531 = vrot.slane %v2517, %v2530
      %v2532 = vcombine.high %v2524, %v2524
      %v2533 = vcombine.high %v2531, %v2531
      %v2534 = vcombine.high %v2476, %v2476
      %v2536 = vunpack.c.l.s4 1983009808
      %v2537 = vunpack.c.0.s8 %v2536
      %v2538 = vlaneseq
      %v2539 = vshrl.u32 %v2538, 7
      %v2540 = vsub.s32 %v2537, %v2539
      %v2541 = vrot.slane %v2476, %v2540
      %v2543 = vunpack.c.l.s4 1983009808
      %v2544 = vunpack.c.0.s8 %v2543
      %v2545 = vlaneseq
      %v2546 = vshrl.u32 %v2545, 7
      %v2547 = vsub.s32 %v2544, %v2546
      %v2548 = vrot.slane %v2534, %v2547
      %v2549 = vcombine.high %v2541, %v2541
      %v2550 = vcombine.high %v2548, %v2548
      %v2551 = vcombine.high %v2479, %v2479
      %v2553 = vunpack.c.l.s4 1983009808
      %v2554 = vunpack.c.0.s8 %v2553
      %v2555 = vlaneseq
      %v2556 = vshrl.u32 %v2555, 7
      %v2557 = vsub.s32 %v2554, %v2556
      %v2558 = vrot.slane %v2479, %v2557
      %v2560 = vunpack.c.l.s4 1983009808
      %v2561 = vunpack.c.0.s8 %v2560
      %v2562 = vlaneseq
      %v2563 = vshrl.u32 %v2562, 7
      %v2564 = vsub.s32 %v2561, %v2563
      %v2565 = vrot.slane %v2551, %v2564
      %v2566 = vcombine.high %v2558, %v2558
      %v2567 = vcombine.high %v2565, %v2565
      %v2568 = vcombine.high %v2482, %v2482
      %v2570 = vunpack.c.l.s4 1983009808
      %v2571 = vunpack.c.0.s8 %v2570
      %v2572 = vlaneseq
      %v2573 = vshrl.u32 %v2572, 7
      %v2574 = vsub.s32 %v2571, %v2573
      %v2575 = vrot.slane %v2482, %v2574
      %v2577 = vunpack.c.l.s4 1983009808
      %v2578 = vunpack.c.0.s8 %v2577
      %v2579 = vlaneseq
      %v2580 = vshrl.u32 %v2579, 7
      %v2581 = vsub.s32 %v2578, %v2580
      %v2582 = vrot.slane %v2568, %v2581
      %v2583 = vcombine.high %v2575, %v2575
      %v2584 = vcombine.high %v2582, %v2582
      %v2585 = vcombine.high %v2485, %v2485
      %v2587 = vunpack.c.l.s4 1983009808
      %v2588 = vunpack.c.0.s8 %v2587
      %v2589 = vlaneseq
      %v2590 = vshrl.u32 %v2589, 7
      %v2591 = vsub.s32 %v2588, %v2590
      %v2592 = vrot.slane %v2485, %v2591
      %v2594 = vunpack.c.l.s4 1983009808
      %v2595 = vunpack.c.0.s8 %v2594
      %v2596 = vlaneseq
      %v2597 = vshrl.u32 %v2596, 7
      %v2598 = vsub.s32 %v2595, %v2597
      %v2599 = vrot.slane %v2585, %v2598
      %v2600 = vcombine.high %v2592, %v2592
      %v2601 = vcombine.high %v2599, %v2599
      %v2602 = vcombine.high %v2488, %v2488
      %v2604 = vunpack.c.l.s4 1983009808
      %v2605 = vunpack.c.0.s8 %v2604
      %v2606 = vlaneseq
      %v2607 = vshrl.u32 %v2606, 7
      %v2608 = vsub.s32 %v2605, %v2607
      %v2609 = vrot.slane %v2488, %v2608
      %v2611 = vunpack.c.l.s4 1983009808
      %v2612 = vunpack.c.0.s8 %v2611
      %v2613 = vlaneseq
      %v2614 = vshrl.u32 %v2613, 7
      %v2615 = vsub.s32 %v2612, %v2614
      %v2616 = vrot.slane %v2602, %v2615
      %v2617 = vcombine.high %v2609, %v2609
      %v2618 = vcombine.high %v2616, %v2616
      %v2619 = vcombine.high %v2491, %v2491
      %v2621 = vunpack.c.l.s4 1983009808
      %v2622 = vunpack.c.0.s8 %v2621
      %v2623 = vlaneseq
      %v2624 = vshrl.u32 %v2623, 7
      %v2625 = vsub.s32 %v2622, %v2624
      %v2626 = vrot.slane %v2491, %v2625
      %v2628 = vunpack.c.l.s4 1983009808
      %v2629 = vunpack.c.0.s8 %v2628
      %v2630 = vlaneseq
      %v2631 = vshrl.u32 %v2630, 7
      %v2632 = vsub.s32 %v2629, %v2631
      %v2633 = vrot.slane %v2619, %v2632
      %v2634 = vcombine.high %v2626, %v2626
      %v2635 = vcombine.high %v2633, %v2633
      %v2668 = vsel %vm280, %v2507, -inf
      %v2669 = vrot.slane %v2668, 4
      %v2670 = vmax.f32 %v2668, %v2669
      %v2671 = vrot.slane %v2670, 2
      %v2672 = vmax.f32 %v2670, %v2671
      %v2673 = vrot.slane %v2672, 1
      %v2674 = vmax.f32 %v2672, %v2673
      %v2675 = vsel %vm280, %v2515, -inf
      %v2676 = vrot.slane %v2675, 4
      %v2677 = vmax.f32 %v2675, %v2676
      %v2678 = vrot.slane %v2677, 2
      %v2679 = vmax.f32 %v2677, %v2678
      %v2680 = vrot.slane %v2679, 1
      %v2681 = vmax.f32 %v2679, %v2680
      %v2682 = vsel %vm280, %v2514, -inf
      %v2683 = vrot.slane %v2682, 4
      %v2684 = vmax.f32 %v2682, %v2683
      %v2685 = vrot.slane %v2684, 2
      %v2686 = vmax.f32 %v2684, %v2685
      %v2687 = vrot.slane %v2686, 1
      %v2688 = vmax.f32 %v2686, %v2687
      %v2689 = vsel %vm280, %v2516, -inf
      %v2690 = vrot.slane %v2689, 4
      %v2691 = vmax.f32 %v2689, %v2690
      %v2692 = vrot.slane %v2691, 2
      %v2693 = vmax.f32 %v2691, %v2692
      %v2694 = vrot.slane %v2693, 1
      %v2695 = vmax.f32 %v2693, %v2694
      %v2696 = vsel %vm280, %v2524, -inf
      %v2697 = vrot.slane %v2696, 4
      %v2698 = vmax.f32 %v2696, %v2697
      %v2699 = vrot.slane %v2698, 2
      %v2700 = vmax.f32 %v2698, %v2699
      %v2701 = vrot.slane %v2700, 1
      %v2702 = vmax.f32 %v2700, %v2701
      %v2703 = vsel %vm280, %v2532, -inf
      %v2704 = vrot.slane %v2703, 4
      %v2705 = vmax.f32 %v2703, %v2704
      %v2706 = vrot.slane %v2705, 2
      %v2707 = vmax.f32 %v2705, %v2706
      %v2708 = vrot.slane %v2707, 1
      %v2709 = vmax.f32 %v2707, %v2708
      %v2710 = vsel %vm280, %v2531, -inf
      %v2711 = vrot.slane %v2710, 4
      %v2712 = vmax.f32 %v2710, %v2711
      %v2713 = vrot.slane %v2712, 2
      %v2714 = vmax.f32 %v2712, %v2713
      %v2715 = vrot.slane %v2714, 1
      %v2716 = vmax.f32 %v2714, %v2715
      %v2717 = vsel %vm280, %v2533, -inf
      %v2718 = vrot.slane %v2717, 4
      %v2719 = vmax.f32 %v2717, %v2718
      %v2720 = vrot.slane %v2719, 2
      %v2721 = vmax.f32 %v2719, %v2720
      %v2722 = vrot.slane %v2721, 1
      %v2723 = vmax.f32 %v2721, %v2722
      %v2724 = vsel %vm280, %v2541, -inf
      %v2725 = vrot.slane %v2724, 4
      %v2726 = vmax.f32 %v2724, %v2725
      %v2727 = vrot.slane %v2726, 2
      %v2728 = vmax.f32 %v2726, %v2727
      %v2729 = vrot.slane %v2728, 1
      %v2730 = vmax.f32 %v2728, %v2729
      %v2731 = vsel %vm280, %v2549, -inf
      %v2732 = vrot.slane %v2731, 4
      %v2733 = vmax.f32 %v2731, %v2732
      %v2734 = vrot.slane %v2733, 2
      %v2735 = vmax.f32 %v2733, %v2734
      %v2736 = vrot.slane %v2735, 1
      %v2737 = vmax.f32 %v2735, %v2736
      %v2738 = vsel %vm280, %v2548, -inf
      %v2739 = vrot.slane %v2738, 4
      %v2740 = vmax.f32 %v2738, %v2739
      %v2741 = vrot.slane %v2740, 2
      %v2742 = vmax.f32 %v2740, %v2741
      %v2743 = vrot.slane %v2742, 1
      %v2744 = vmax.f32 %v2742, %v2743
      %v2745 = vsel %vm280, %v2550, -inf
      %v2746 = vrot.slane %v2745, 4
      %v2747 = vmax.f32 %v2745, %v2746
      %v2748 = vrot.slane %v2747, 2
      %v2749 = vmax.f32 %v2747, %v2748
      %v2750 = vrot.slane %v2749, 1
      %v2751 = vmax.f32 %v2749, %v2750
      %v2752 = vsel %vm280, %v2558, -inf
      %v2753 = vrot.slane %v2752, 4
      %v2754 = vmax.f32 %v2752, %v2753
      %v2755 = vrot.slane %v2754, 2
      %v2756 = vmax.f32 %v2754, %v2755
      %v2757 = vrot.slane %v2756, 1
      %v2758 = vmax.f32 %v2756, %v2757
      %v2759 = vsel %vm280, %v2566, -inf
      %v2760 = vrot.slane %v2759, 4
      %v2761 = vmax.f32 %v2759, %v2760
      %v2762 = vrot.slane %v2761, 2
      %v2763 = vmax.f32 %v2761, %v2762
      %v2764 = vrot.slane %v2763, 1
      %v2765 = vmax.f32 %v2763, %v2764
      %v2766 = vsel %vm280, %v2565, -inf
      %v2767 = vrot.slane %v2766, 4
      %v2768 = vmax.f32 %v2766, %v2767
      %v2769 = vrot.slane %v2768, 2
      %v2770 = vmax.f32 %v2768, %v2769
      %v2771 = vrot.slane %v2770, 1
      %v2772 = vmax.f32 %v2770, %v2771
      %v2773 = vsel %vm280, %v2567, -inf
      %v2774 = vrot.slane %v2773, 4
      %v2775 = vmax.f32 %v2773, %v2774
      %v2776 = vrot.slane %v2775, 2
      %v2777 = vmax.f32 %v2775, %v2776
      %v2778 = vrot.slane %v2777, 1
      %v2779 = vmax.f32 %v2777, %v2778
      %v2780 = vsel %vm280, %v2575, -inf
      %v2781 = vrot.slane %v2780, 4
      %v2782 = vmax.f32 %v2780, %v2781
      %v2783 = vrot.slane %v2782, 2
      %v2784 = vmax.f32 %v2782, %v2783
      %v2785 = vrot.slane %v2784, 1
      %v2786 = vmax.f32 %v2784, %v2785
      %v2787 = vsel %vm280, %v2583, -inf
      %v2788 = vrot.slane %v2787, 4
      %v2789 = vmax.f32 %v2787, %v2788
      %v2790 = vrot.slane %v2789, 2
      %v2791 = vmax.f32 %v2789, %v2790
      %v2792 = vrot.slane %v2791, 1
      %v2793 = vmax.f32 %v2791, %v2792
      %v2794 = vsel %vm280, %v2582, -inf
      %v2795 = vrot.slane %v2794, 4
      %v2796 = vmax.f32 %v2794, %v2795
      %v2797 = vrot.slane %v2796, 2
      %v2798 = vmax.f32 %v2796, %v2797
      %v2799 = vrot.slane %v2798, 1
      %v2800 = vmax.f32 %v2798, %v2799
      %v2801 = vsel %vm280, %v2584, -inf
      %v2802 = vrot.slane %v2801, 4
      %v2803 = vmax.f32 %v2801, %v2802
      %v2804 = vrot.slane %v2803, 2
      %v2805 = vmax.f32 %v2803, %v2804
      %v2806 = vrot.slane %v2805, 1
      %v2807 = vmax.f32 %v2805, %v2806
      %v2808 = vsel %vm280, %v2592, -inf
      %v2809 = vrot.slane %v2808, 4
      %v2810 = vmax.f32 %v2808, %v2809
      %v2811 = vrot.slane %v2810, 2
      %v2812 = vmax.f32 %v2810, %v2811
      %v2813 = vrot.slane %v2812, 1
      %v2814 = vmax.f32 %v2812, %v2813
      %v2815 = vsel %vm280, %v2600, -inf
      %v2816 = vrot.slane %v2815, 4
      %v2817 = vmax.f32 %v2815, %v2816
      %v2818 = vrot.slane %v2817, 2
      %v2819 = vmax.f32 %v2817, %v2818
      %v2820 = vrot.slane %v2819, 1
      %v2821 = vmax.f32 %v2819, %v2820
      %v2822 = vsel %vm280, %v2599, -inf
      %v2823 = vrot.slane %v2822, 4
      %v2824 = vmax.f32 %v2822, %v2823
      %v2825 = vrot.slane %v2824, 2
      %v2826 = vmax.f32 %v2824, %v2825
      %v2827 = vrot.slane %v2826, 1
      %v2828 = vmax.f32 %v2826, %v2827
      %v2829 = vsel %vm280, %v2601, -inf
      %v2830 = vrot.slane %v2829, 4
      %v2831 = vmax.f32 %v2829, %v2830
      %v2832 = vrot.slane %v2831, 2
      %v2833 = vmax.f32 %v2831, %v2832
      %v2834 = vrot.slane %v2833, 1
      %v2835 = vmax.f32 %v2833, %v2834
      %v2836 = vsel %vm280, %v2609, -inf
      %v2837 = vrot.slane %v2836, 4
      %v2838 = vmax.f32 %v2836, %v2837
      %v2839 = vrot.slane %v2838, 2
      %v2840 = vmax.f32 %v2838, %v2839
      %v2841 = vrot.slane %v2840, 1
      %v2842 = vmax.f32 %v2840, %v2841
      %v2843 = vsel %vm280, %v2617, -inf
      %v2844 = vrot.slane %v2843, 4
      %v2845 = vmax.f32 %v2843, %v2844
      %v2846 = vrot.slane %v2845, 2
      %v2847 = vmax.f32 %v2845, %v2846
      %v2848 = vrot.slane %v2847, 1
      %v2849 = vmax.f32 %v2847, %v2848
      %v2850 = vsel %vm280, %v2616, -inf
      %v2851 = vrot.slane %v2850, 4
      %v2852 = vmax.f32 %v2850, %v2851
      %v2853 = vrot.slane %v2852, 2
      %v2854 = vmax.f32 %v2852, %v2853
      %v2855 = vrot.slane %v2854, 1
      %v2856 = vmax.f32 %v2854, %v2855
      %v2857 = vsel %vm280, %v2618, -inf
      %v2858 = vrot.slane %v2857, 4
      %v2859 = vmax.f32 %v2857, %v2858
      %v2860 = vrot.slane %v2859, 2
      %v2861 = vmax.f32 %v2859, %v2860
      %v2862 = vrot.slane %v2861, 1
      %v2863 = vmax.f32 %v2861, %v2862
      %v2864 = vsel %vm280, %v2626, -inf
      %v2865 = vrot.slane %v2864, 4
      %v2866 = vmax.f32 %v2864, %v2865
      %v2867 = vrot.slane %v2866, 2
      %v2868 = vmax.f32 %v2866, %v2867
      %v2869 = vrot.slane %v2868, 1
      %v2870 = vmax.f32 %v2868, %v2869
      %v2871 = vsel %vm280, %v2634, -inf
      %v2872 = vrot.slane %v2871, 4
      %v2873 = vmax.f32 %v2871, %v2872
      %v2874 = vrot.slane %v2873, 2
      %v2875 = vmax.f32 %v2873, %v2874
      %v2876 = vrot.slane %v2875, 1
      %v2877 = vmax.f32 %v2875, %v2876
      %v2878 = vsel %vm280, %v2633, -inf
      %v2879 = vrot.slane %v2878, 4
      %v2880 = vmax.f32 %v2878, %v2879
      %v2881 = vrot.slane %v2880, 2
      %v2882 = vmax.f32 %v2880, %v2881
      %v2883 = vrot.slane %v2882, 1
      %v2884 = vmax.f32 %v2882, %v2883
      %v2885 = vsel %vm280, %v2635, -inf
      %v2886 = vrot.slane %v2885, 4
      %v2887 = vmax.f32 %v2885, %v2886
      %v2888 = vrot.slane %v2887, 2
      %v2889 = vmax.f32 %v2887, %v2888
      %v2890 = vrot.slane %v2889, 1
      %v2891 = vmax.f32 %v2889, %v2890
      %vm2924 = vcmask 1041409
      %v2925 = vsel %vm2924, %v2681, %v2674
      %vm2926 = vcmask 1042434
      %v2927 = vsel %vm2926, %v2688, %v2925
      %vm2928 = vcmask 1043459
      %v2929 = vsel %vm2928, %v2695, %v2927
      %vm2930 = vcmask 1044484
      %v2931 = vsel %vm2930, %v2702, %v2929
      %vm2932 = vcmask 1045509
      %v2933 = vsel %vm2932, %v2709, %v2931
      %vm2934 = vcmask 1046534
      %v2935 = vsel %vm2934, %v2716, %v2933
      %vm2936 = vcmask 1047559
      %v2937 = vsel %vm2936, %v2723, %v2935
      %v2938 = vsel %vm2924, %v2737, %v2730
      %v2939 = vsel %vm2926, %v2744, %v2938
      %v2940 = vsel %vm2928, %v2751, %v2939
      %v2941 = vsel %vm2930, %v2758, %v2940
      %v2942 = vsel %vm2932, %v2765, %v2941
      %v2943 = vsel %vm2934, %v2772, %v2942
      %v2944 = vsel %vm2936, %v2779, %v2943
      %v2945 = vsel %vm2924, %v2793, %v2786
      %v2946 = vsel %vm2926, %v2800, %v2945
      %v2947 = vsel %vm2928, %v2807, %v2946
      %v2948 = vsel %vm2930, %v2814, %v2947
      %v2949 = vsel %vm2932, %v2821, %v2948
      %v2950 = vsel %vm2934, %v2828, %v2949
      %v2951 = vsel %vm2936, %v2835, %v2950
      %v2952 = vsel %vm2924, %v2849, %v2842
      %v2953 = vsel %vm2926, %v2856, %v2952
      %v2954 = vsel %vm2928, %v2863, %v2953
      %v2955 = vsel %vm2930, %v2870, %v2954
      %v2956 = vsel %vm2932, %v2877, %v2955
      %v2957 = vsel %vm2934, %v2884, %v2956
      %v2958 = vsel %vm2936, %v2891, %v2957
      %s2963 = scalar_lea.vmem [#allocation3], 16
      %2964 = vst.msk [vmem:[%s2963 + $0x1] sm:$0xff] %vm277, %v2937
      %2965 = vst.msk [vmem:[%s2963 + $0x11] sm:$0xff] %vm277, %v2944
      %2966 = vst.msk [vmem:[%s2963 + $0x21] sm:$0xff] %vm277, %v2951
      %2967 = vst.msk [vmem:[%s2963 + $0x31] sm:$0xff] %vm277, %v2958
      %s2968 = scalar_lea.vmem [#allocation2], 192
      %v2969 = vld [vmem:[%s2968] sm:$0xff]
      %v2970 = vld [vmem:[%s2968 + $0x8] sm:$0xff]
      %v2971 = vld [vmem:[%s2968 + $0x18] sm:$0xff]
      %v2972 = vld [vmem:[%s2968 + $0x20] sm:$0xff]
      %v2973 = vld [vmem:[%s2968 + $0x30] sm:$0xff]
      %v2974 = vld [vmem:[%s2968 + $0x38] sm:$0xff]
      %v2975 = vld [vmem:[%s2968 + $0x48] sm:$0xff]
      %v2976 = vld [vmem:[%s2968 + $0x50] sm:$0xff]
      %v2977 = vld [vmem:[%s2968 + $0x60] sm:$0xff]
      %v2978 = vld [vmem:[%s2968 + $0x68] sm:$0xff]
      %v2979 = vld [vmem:[%s2968 + $0x78] sm:$0xff]
      %v2980 = vld [vmem:[%s2968 + $0x80] sm:$0xff]
      %v2981 = vld [vmem:[%s2968 + $0x90] sm:$0xff]
      %v2982 = vld [vmem:[%s2968 + $0x98] sm:$0xff]
      %v2983 = vld [vmem:[%s2968 + $0xa8] sm:$0xff]
      %v2984 = vld [vmem:[%s2968 + $0xb0] sm:$0xff]
      %v2985 = vld [vmem:[%s1] sm:$0xff]
      %v2986 = vld [vmem:[%s2968 + $0x1] sm:$0xff]
      %v2987 = vld [vmem:[%s2968 + $0x9] sm:$0xff]
      %v2988 = vld [vmem:[%s2968 + $0x19] sm:$0xff]
      %v2989 = vld [vmem:[%s2968 + $0x21] sm:$0xff]
      %v2990 = vld [vmem:[%s2968 + $0x31] sm:$0xff]
      %v2991 = vld [vmem:[%s2968 + $0x39] sm:$0xff]
      %v2992 = vld [vmem:[%s2968 + $0x49] sm:$0xff]
      %v2993 = vld [vmem:[%s2968 + $0x51] sm:$0xff]
      %v2994 = vld [vmem:[%s2968 + $0x61] sm:$0xff]
      %v2995 = vld [vmem:[%s2968 + $0x69] sm:$0xff]
      %v2996 = vld [vmem:[%s2968 + $0x79] sm:$0xff]
      %v2997 = vld [vmem:[%s2968 + $0x81] sm:$0xff]
      %v2998 = vld [vmem:[%s2968 + $0x91] sm:$0xff]
      %v2999 = vld [vmem:[%s2968 + $0x99] sm:$0xff]
      %v3000 = vld [vmem:[%s2968 + $0xa9] sm:$0xff]
      %v3001 = vld [vmem:[%s2968 + $0xb1] sm:$0xff]
      %v3002 = vld [vmem:[%s451] sm:$0xff]
      %v3004 = vsel %vm277, %v2986, 0
      %v3007 = vsel %vm277, %v2987, 0
      %v3010 = vsel %vm277, %v2988, 0
      %v3013 = vsel %vm277, %v2989, 0
      %v3016 = vsel %vm277, %v2990, 0
      %v3019 = vsel %vm277, %v2991, 0
      %v3022 = vsel %vm277, %v2992, 0
      %v3025 = vsel %vm277, %v2993, 0
      %v3028 = vsel %vm277, %v2994, 0
      %v3031 = vsel %vm277, %v2995, 0
      %v3034 = vsel %vm277, %v2996, 0
      %v3037 = vsel %vm277, %v2997, 0
      %v3040 = vsel %vm277, %v2998, 0
      %v3043 = vsel %vm277, %v2999, 0
      %v3046 = vsel %vm277, %v3000, 0
      %v3049 = vsel %vm277, %v3001, 0
      %3051 = vmatprep.subr.mxu0 0.0
      %3052 = vmatpush1.msra.mxu0 0.0
      %3053 = vmatprep.subr.mxu0 0.0
      %3054 = vmatpush1.msra.mxu0 0.0
      %3055 = vmatprep.subr.mxu0 0.0
      %3056 = vmatpush1.msra.mxu0 0.0
      %3057 = vmatprep.subr.mxu0 0.0
      %3058 = vmatpush1.msra.mxu0 0.0
      %3059 = vmatprep.subr.mxu0 0.0
      %3060 = vmatpush1.msra.mxu0 0.0
      %3061 = vmatprep.subr.mxu0 0.0
      %3062 = vmatpush1.msra.mxu0 0.0
      %3063 = vmatprep.subr.mxu0 0.0
      %3064 = vmatpush1.msra.mxu0 0.0
      %3065 = vmatprep.subr.mxu0 0.0
      %3066 = vmatpush1.msra.mxu0 0.0
      %3067 = vmatprep.subr.mxu0 0.0
      %3068 = vmatpush1.msra.mxu0 0.0
      %3069 = vmatprep.subr.mxu0 0.0
      %3070 = vmatpush1.msra.mxu0 0.0
      %3071 = vmatprep.subr.mxu0 0.0
      %3072 = vmatpush1.msra.mxu0 0.0
      %3073 = vmatprep.subr.mxu0 0.0
      %3074 = vmatpush1.msra.mxu0 0.0
      %3075 = vmatprep.subr.mxu0 0.0
      %3076 = vmatpush1.msra.mxu0 0.0
      %3077 = vmatprep.subr.mxu0 0.0
      %3078 = vmatpush1.msra.mxu0 0.0
      %3079 = vmatprep.subr.mxu0 0.0
      %3080 = vmatpush1.msra.mxu0 0.0
      %3081 = vmatprep.subr.mxu0 0.0
      %3082 = vmatpush1.msra.mxu0 %v3002
      %3083 = vmatprep.subr.mxu0 0.0
      %3084 = vmatpush2.msra.mxu0 0.0
      %3085 = vmatprep.subr.mxu0 0.0
      %3086 = vmatpush2.msra.mxu0 0.0
      %3087 = vmatprep.subr.mxu0 0.0
      %3088 = vmatpush2.msra.mxu0 0.0
      %3089 = vmatprep.subr.mxu0 0.0
      %3090 = vmatpush2.msra.mxu0 0.0
      %3091 = vmatprep.subr.mxu0 0.0
      %3092 = vmatpush2.msra.mxu0 0.0
      %3093 = vmatprep.subr.mxu0 0.0
      %3094 = vmatpush2.msra.mxu0 0.0
      %3095 = vmatprep.subr.mxu0 0.0
      %3096 = vmatpush2.msra.mxu0 0.0
      %3097 = vmatprep.subr.mxu0 0.0
      %3098 = vmatpush2.msra.mxu0 0.0
      %3099 = vmatprep.subr.mxu0 0.0
      %3100 = vmatpush2.msra.mxu0 0.0
      %3101 = vmatprep.subr.mxu0 0.0
      %3102 = vmatpush2.msra.mxu0 0.0
      %3103 = vmatprep.subr.mxu0 0.0
      %3104 = vmatpush2.msra.mxu0 0.0
      %3105 = vmatprep.subr.mxu0 0.0
      %3106 = vmatpush2.msra.mxu0 0.0
      %3107 = vmatprep.subr.mxu0 0.0
      %3108 = vmatpush2.msra.mxu0 0.0
      %3109 = vmatprep.subr.mxu0 0.0
      %3110 = vmatpush2.msra.mxu0 0.0
      %3111 = vmatprep.subr.mxu0 0.0
      %3112 = vmatpush2.msra.mxu0 0.0
      %3113 = vmatprep.subr.mxu0 0.0
      %3114 = vmatpush2.msra.mxu0 0.0
      %3115 = vmatprep.mubr.f32.mxu0 0.0
      %3116 = vmatmul.mubr.f32.gmra.mxu0 %v3004
      %v3117 = vpop.f32.mrf.mxu0
      %v3118 = vadd.f32 0.0, %v3117
      %v3119 = vpop.f32.mrf.mxu0
      %3120 = vmatprep.mubr.f32.mxu0 0.0
      %3121 = vmatmul.mubr.f32.gmra.mxu0 %v3007
      %v3122 = vpop.f32.mrf.mxu0
      %v3123 = vadd.f32 0.0, %v3122
      %v3124 = vpop.f32.mrf.mxu0
      %3125 = vmatprep.mubr.f32.mxu0 0.0
      %3126 = vmatmul.mubr.f32.gmra.mxu0 %v3010
      %v3127 = vpop.f32.mrf.mxu0
      %v3128 = vadd.f32 0.0, %v3127
      %v3129 = vpop.f32.mrf.mxu0
      %3130 = vmatprep.mubr.f32.mxu0 0.0
      %3131 = vmatmul.mubr.f32.gmra.mxu0 %v3013
      %v3132 = vpop.f32.mrf.mxu0
      %v3133 = vadd.f32 0.0, %v3132
      %v3134 = vpop.f32.mrf.mxu0
      %3135 = vmatprep.mubr.f32.mxu0 0.0
      %3136 = vmatmul.mubr.f32.gmra.mxu0 %v3016
      %v3137 = vpop.f32.mrf.mxu0
      %v3138 = vadd.f32 0.0, %v3137
      %v3139 = vpop.f32.mrf.mxu0
      %3140 = vmatprep.mubr.f32.mxu0 0.0
      %3141 = vmatmul.mubr.f32.gmra.mxu0 %v3019
      %v3142 = vpop.f32.mrf.mxu0
      %v3143 = vadd.f32 0.0, %v3142
      %v3144 = vpop.f32.mrf.mxu0
      %3145 = vmatprep.mubr.f32.mxu0 0.0
      %3146 = vmatmul.mubr.f32.gmra.mxu0 %v3022
      %v3147 = vpop.f32.mrf.mxu0
      %v3148 = vadd.f32 0.0, %v3147
      %v3149 = vpop.f32.mrf.mxu0
      %3150 = vmatprep.mubr.f32.mxu0 0.0
      %3151 = vmatmul.mubr.f32.gmra.mxu0 %v3025
      %v3152 = vpop.f32.mrf.mxu0
      %v3153 = vadd.f32 0.0, %v3152
      %v3154 = vpop.f32.mrf.mxu0
      %3155 = vmatprep.mubr.f32.mxu0 0.0
      %3156 = vmatmul.mubr.f32.gmra.mxu0 %v3028
      %v3157 = vpop.f32.mrf.mxu0
      %v3158 = vadd.f32 0.0, %v3157
      %v3159 = vpop.f32.mrf.mxu0
      %3160 = vmatprep.mubr.f32.mxu0 0.0
      %3161 = vmatmul.mubr.f32.gmra.mxu0 %v3031
      %v3162 = vpop.f32.mrf.mxu0
      %v3163 = vadd.f32 0.0, %v3162
      %v3164 = vpop.f32.mrf.mxu0
      %3165 = vmatprep.mubr.f32.mxu0 0.0
      %3166 = vmatmul.mubr.f32.gmra.mxu0 %v3034
      %v3167 = vpop.f32.mrf.mxu0
      %v3168 = vadd.f32 0.0, %v3167
      %v3169 = vpop.f32.mrf.mxu0
      %3170 = vmatprep.mubr.f32.mxu0 0.0
      %3171 = vmatmul.mubr.f32.gmra.mxu0 %v3037
      %v3172 = vpop.f32.mrf.mxu0
      %v3173 = vadd.f32 0.0, %v3172
      %v3174 = vpop.f32.mrf.mxu0
      %3175 = vmatprep.mubr.f32.mxu0 0.0
      %3176 = vmatmul.mubr.f32.gmra.mxu0 %v3040
      %v3177 = vpop.f32.mrf.mxu0
      %v3178 = vadd.f32 0.0, %v3177
      %v3179 = vpop.f32.mrf.mxu0
      %3180 = vmatprep.mubr.f32.mxu0 0.0
      %3181 = vmatmul.mubr.f32.gmra.mxu0 %v3043
      %v3182 = vpop.f32.mrf.mxu0
      %v3183 = vadd.f32 0.0, %v3182
      %v3184 = vpop.f32.mrf.mxu0
      %3185 = vmatprep.mubr.f32.mxu0 0.0
      %3186 = vmatmul.mubr.f32.gmra.mxu0 %v3046
      %v3187 = vpop.f32.mrf.mxu0
      %v3188 = vadd.f32 0.0, %v3187
      %v3189 = vpop.f32.mrf.mxu0
      %3190 = vmatprep.mubr.f32.mxu0 0.0
      %3191 = vmatmul.mubr.f32.gmra.mxu0 %v3049
      %v3192 = vpop.f32.mrf.mxu0
      %v3193 = vadd.f32 0.0, %v3192
      %v3194 = vpop.f32.mrf.mxu0
      %3195 = vdwg.mxu0
      %v3197 = vsel %vm277, %v2969, 0
      %v3200 = vsel %vm277, %v2970, 0
      %v3203 = vsel %vm277, %v2971, 0
      %v3206 = vsel %vm277, %v2972, 0
      %v3209 = vsel %vm277, %v2973, 0
      %v3212 = vsel %vm277, %v2974, 0
      %v3215 = vsel %vm277, %v2975, 0
      %v3218 = vsel %vm277, %v2976, 0
      %v3221 = vsel %vm277, %v2977, 0
      %v3224 = vsel %vm277, %v2978, 0
      %v3227 = vsel %vm277, %v2979, 0
      %v3230 = vsel %vm277, %v2980, 0
      %v3233 = vsel %vm277, %v2981, 0
      %v3236 = vsel %vm277, %v2982, 0
      %v3239 = vsel %vm277, %v2983, 0
      %v3242 = vsel %vm277, %v2984, 0
      %3244 = vmatprep.subr.mxu0 0.0
      %3245 = vmatpush1.msra.mxu0 0.0
      %3246 = vmatprep.subr.mxu0 0.0
      %3247 = vmatpush1.msra.mxu0 0.0
      %3248 = vmatprep.subr.mxu0 0.0
      %3249 = vmatpush1.msra.mxu0 0.0
      %3250 = vmatprep.subr.mxu0 0.0
      %3251 = vmatpush1.msra.mxu0 0.0
      %3252 = vmatprep.subr.mxu0 0.0
      %3253 = vmatpush1.msra.mxu0 0.0
      %3254 = vmatprep.subr.mxu0 0.0
      %3255 = vmatpush1.msra.mxu0 0.0
      %3256 = vmatprep.subr.mxu0 0.0
      %3257 = vmatpush1.msra.mxu0 0.0
      %3258 = vmatprep.subr.mxu0 0.0
      %3259 = vmatpush1.msra.mxu0 0.0
      %3260 = vmatprep.subr.mxu0 0.0
      %3261 = vmatpush1.msra.mxu0 0.0
      %3262 = vmatprep.subr.mxu0 0.0
      %3263 = vmatpush1.msra.mxu0 0.0
      %3264 = vmatprep.subr.mxu0 0.0
      %3265 = vmatpush1.msra.mxu0 0.0
      %3266 = vmatprep.subr.mxu0 0.0
      %3267 = vmatpush1.msra.mxu0 0.0
      %3268 = vmatprep.subr.mxu0 0.0
      %3269 = vmatpush1.msra.mxu0 0.0
      %3270 = vmatprep.subr.mxu0 0.0
      %3271 = vmatpush1.msra.mxu0 0.0
      %3272 = vmatprep.subr.mxu0 0.0
      %3273 = vmatpush1.msra.mxu0 0.0
      %3274 = vmatprep.subr.mxu0 0.0
      %3275 = vmatpush1.msra.mxu0 %v2985
      %3276 = vmatprep.subr.mxu0 0.0
      %3277 = vmatpush2.msra.mxu0 0.0
      %3278 = vmatprep.subr.mxu0 0.0
      %3279 = vmatpush2.msra.mxu0 0.0
      %3280 = vmatprep.subr.mxu0 0.0
      %3281 = vmatpush2.msra.mxu0 0.0
      %3282 = vmatprep.subr.mxu0 0.0
      %3283 = vmatpush2.msra.mxu0 0.0
      %3284 = vmatprep.subr.mxu0 0.0
      %3285 = vmatpush2.msra.mxu0 0.0
      %3286 = vmatprep.subr.mxu0 0.0
      %3287 = vmatpush2.msra.mxu0 0.0
      %3288 = vmatprep.subr.mxu0 0.0
      %3289 = vmatpush2.msra.mxu0 0.0
      %3290 = vmatprep.subr.mxu0 0.0
      %3291 = vmatpush2.msra.mxu0 0.0
      %3292 = vmatprep.subr.mxu0 0.0
      %3293 = vmatpush2.msra.mxu0 0.0
      %3294 = vmatprep.subr.mxu0 0.0
      %3295 = vmatpush2.msra.mxu0 0.0
      %3296 = vmatprep.subr.mxu0 0.0
      %3297 = vmatpush2.msra.mxu0 0.0
      %3298 = vmatprep.subr.mxu0 0.0
      %3299 = vmatpush2.msra.mxu0 0.0
      %3300 = vmatprep.subr.mxu0 0.0
      %3301 = vmatpush2.msra.mxu0 0.0
      %3302 = vmatprep.subr.mxu0 0.0
      %3303 = vmatpush2.msra.mxu0 0.0
      %3304 = vmatprep.subr.mxu0 0.0
      %3305 = vmatpush2.msra.mxu0 0.0
      %3306 = vmatprep.subr.mxu0 0.0
      %3307 = vmatpush2.msra.mxu0 0.0
      %3308 = vmatprep.mubr.f32.mxu0 0.0
      %3309 = vmatmul.mubr.f32.gmra.mxu0 %v3197
      %v3310 = vpop.f32.mrf.mxu0
      %v3311 = vadd.f32 %v3118, %v3310
      %v3312 = vpop.f32.mrf.mxu0
      %3313 = vmatprep.mubr.f32.mxu0 0.0
      %3314 = vmatmul.mubr.f32.gmra.mxu0 %v3200
      %v3315 = vpop.f32.mrf.mxu0
      %v3316 = vadd.f32 %v3123, %v3315
      %v3317 = vpop.f32.mrf.mxu0
      %3318 = vmatprep.mubr.f32.mxu0 0.0
      %3319 = vmatmul.mubr.f32.gmra.mxu0 %v3203
      %v3320 = vpop.f32.mrf.mxu0
      %v3321 = vadd.f32 %v3128, %v3320
      %v3322 = vpop.f32.mrf.mxu0
      %3323 = vmatprep.mubr.f32.mxu0 0.0
      %3324 = vmatmul.mubr.f32.gmra.mxu0 %v3206
      %v3325 = vpop.f32.mrf.mxu0
      %v3326 = vadd.f32 %v3133, %v3325
      %v3327 = vpop.f32.mrf.mxu0
      %3328 = vmatprep.mubr.f32.mxu0 0.0
      %3329 = vmatmul.mubr.f32.gmra.mxu0 %v3209
      %v3330 = vpop.f32.mrf.mxu0
      %v3331 = vadd.f32 %v3138, %v3330
      %v3332 = vpop.f32.mrf.mxu0
      %3333 = vmatprep.mubr.f32.mxu0 0.0
      %3334 = vmatmul.mubr.f32.gmra.mxu0 %v3212
      %v3335 = vpop.f32.mrf.mxu0
      %v3336 = vadd.f32 %v3143, %v3335
      %v3337 = vpop.f32.mrf.mxu0
      %3338 = vmatprep.mubr.f32.mxu0 0.0
      %3339 = vmatmul.mubr.f32.gmra.mxu0 %v3215
      %v3340 = vpop.f32.mrf.mxu0
      %v3341 = vadd.f32 %v3148, %v3340
      %v3342 = vpop.f32.mrf.mxu0
      %3343 = vmatprep.mubr.f32.mxu0 0.0
      %3344 = vmatmul.mubr.f32.gmra.mxu0 %v3218
      %v3345 = vpop.f32.mrf.mxu0
      %v3346 = vadd.f32 %v3153, %v3345
      %v3347 = vpop.f32.mrf.mxu0
      %3348 = vmatprep.mubr.f32.mxu0 0.0
      %3349 = vmatmul.mubr.f32.gmra.mxu0 %v3221
      %v3350 = vpop.f32.mrf.mxu0
      %v3351 = vadd.f32 %v3158, %v3350
      %v3352 = vpop.f32.mrf.mxu0
      %3353 = vmatprep.mubr.f32.mxu0 0.0
      %3354 = vmatmul.mubr.f32.gmra.mxu0 %v3224
      %v3355 = vpop.f32.mrf.mxu0
      %v3356 = vadd.f32 %v3163, %v3355
      %v3357 = vpop.f32.mrf.mxu0
      %3358 = vmatprep.mubr.f32.mxu0 0.0
      %3359 = vmatmul.mubr.f32.gmra.mxu0 %v3227
      %v3360 = vpop.f32.mrf.mxu0
      %v3361 = vadd.f32 %v3168, %v3360
      %v3362 = vpop.f32.mrf.mxu0
      %3363 = vmatprep.mubr.f32.mxu0 0.0
      %3364 = vmatmul.mubr.f32.gmra.mxu0 %v3230
      %v3365 = vpop.f32.mrf.mxu0
      %v3366 = vadd.f32 %v3173, %v3365
      %v3367 = vpop.f32.mrf.mxu0
      %3368 = vmatprep.mubr.f32.mxu0 0.0
      %3369 = vmatmul.mubr.f32.gmra.mxu0 %v3233
      %v3370 = vpop.f32.mrf.mxu0
      %v3371 = vadd.f32 %v3178, %v3370
      %v3372 = vpop.f32.mrf.mxu0
      %3373 = vmatprep.mubr.f32.mxu0 0.0
      %3374 = vmatmul.mubr.f32.gmra.mxu0 %v3236
      %v3375 = vpop.f32.mrf.mxu0
      %v3376 = vadd.f32 %v3183, %v3375
      %v3377 = vpop.f32.mrf.mxu0
      %3378 = vmatprep.mubr.f32.mxu0 0.0
      %3379 = vmatmul.mubr.f32.gmra.mxu0 %v3239
      %v3380 = vpop.f32.mrf.mxu0
      %v3381 = vadd.f32 %v3188, %v3380
      %v3382 = vpop.f32.mrf.mxu0
      %3383 = vmatprep.mubr.f32.mxu0 0.0
      %3384 = vmatmul.mubr.f32.gmra.mxu0 %v3242
      %v3385 = vpop.f32.mrf.mxu0
      %v3386 = vadd.f32 %v3193, %v3385
      %v3387 = vpop.f32.mrf.mxu0
      %3388 = vdwg.mxu0
      %v3389 = vld [vmem:[%s2968 + $0x2] sm:$0xff]
      %v3390 = vld [vmem:[%s2968 + $0xa] sm:$0xff]
      %v3391 = vld [vmem:[%s2968 + $0x1a] sm:$0xff]
      %v3392 = vld [vmem:[%s2968 + $0x22] sm:$0xff]
      %v3393 = vld [vmem:[%s2968 + $0x32] sm:$0xff]
      %v3394 = vld [vmem:[%s2968 + $0x3a] sm:$0xff]
      %v3395 = vld [vmem:[%s2968 + $0x4a] sm:$0xff]
      %v3396 = vld [vmem:[%s2968 + $0x52] sm:$0xff]
      %v3397 = vld [vmem:[%s2968 + $0x62] sm:$0xff]
      %v3398 = vld [vmem:[%s2968 + $0x6a] sm:$0xff]
      %v3399 = vld [vmem:[%s2968 + $0x7a] sm:$0xff]
      %v3400 = vld [vmem:[%s2968 + $0x82] sm:$0xff]
      %v3401 = vld [vmem:[%s2968 + $0x92] sm:$0xff]
      %v3402 = vld [vmem:[%s2968 + $0x9a] sm:$0xff]
      %v3403 = vld [vmem:[%s2968 + $0xaa] sm:$0xff]
      %v3404 = vld [vmem:[%s2968 + $0xb2] sm:$0xff]
      %v3405 = vld [vmem:[%s855] sm:$0xff]
      %v3407 = vsel %vm277, %v3389, 0
      %v3410 = vsel %vm277, %v3390, 0
      %v3413 = vsel %vm277, %v3391, 0
      %v3416 = vsel %vm277, %v3392, 0
      %v3419 = vsel %vm277, %v3393, 0
      %v3422 = vsel %vm277, %v3394, 0
      %v3425 = vsel %vm277, %v3395, 0
      %v3428 = vsel %vm277, %v3396, 0
      %v3431 = vsel %vm277, %v3397, 0
      %v3434 = vsel %vm277, %v3398, 0
      %v3437 = vsel %vm277, %v3399, 0
      %v3440 = vsel %vm277, %v3400, 0
      %v3443 = vsel %vm277, %v3401, 0
      %v3446 = vsel %vm277, %v3402, 0
      %v3449 = vsel %vm277, %v3403, 0
      %v3452 = vsel %vm277, %v3404, 0
      %3454 = vmatprep.subr.mxu0 0.0
      %3455 = vmatpush1.msra.mxu0 0.0
      %3456 = vmatprep.subr.mxu0 0.0
      %3457 = vmatpush1.msra.mxu0 0.0
      %3458 = vmatprep.subr.mxu0 0.0
      %3459 = vmatpush1.msra.mxu0 0.0
      %3460 = vmatprep.subr.mxu0 0.0
      %3461 = vmatpush1.msra.mxu0 0.0
      %3462 = vmatprep.subr.mxu0 0.0
      %3463 = vmatpush1.msra.mxu0 0.0
      %3464 = vmatprep.subr.mxu0 0.0
      %3465 = vmatpush1.msra.mxu0 0.0
      %3466 = vmatprep.subr.mxu0 0.0
      %3467 = vmatpush1.msra.mxu0 0.0
      %3468 = vmatprep.subr.mxu0 0.0
      %3469 = vmatpush1.msra.mxu0 0.0
      %3470 = vmatprep.subr.mxu0 0.0
      %3471 = vmatpush1.msra.mxu0 0.0
      %3472 = vmatprep.subr.mxu0 0.0
      %3473 = vmatpush1.msra.mxu0 0.0
      %3474 = vmatprep.subr.mxu0 0.0
      %3475 = vmatpush1.msra.mxu0 0.0
      %3476 = vmatprep.subr.mxu0 0.0
      %3477 = vmatpush1.msra.mxu0 0.0
      %3478 = vmatprep.subr.mxu0 0.0
      %3479 = vmatpush1.msra.mxu0 0.0
      %3480 = vmatprep.subr.mxu0 0.0
      %3481 = vmatpush1.msra.mxu0 0.0
      %3482 = vmatprep.subr.mxu0 0.0
      %3483 = vmatpush1.msra.mxu0 0.0
      %3484 = vmatprep.subr.mxu0 0.0
      %3485 = vmatpush1.msra.mxu0 %v3405
      %3486 = vmatprep.subr.mxu0 0.0
      %3487 = vmatpush2.msra.mxu0 0.0
      %3488 = vmatprep.subr.mxu0 0.0
      %3489 = vmatpush2.msra.mxu0 0.0
      %3490 = vmatprep.subr.mxu0 0.0
      %3491 = vmatpush2.msra.mxu0 0.0
      %3492 = vmatprep.subr.mxu0 0.0
      %3493 = vmatpush2.msra.mxu0 0.0
      %3494 = vmatprep.subr.mxu0 0.0
      %3495 = vmatpush2.msra.mxu0 0.0
      %3496 = vmatprep.subr.mxu0 0.0
      %3497 = vmatpush2.msra.mxu0 0.0
      %3498 = vmatprep.subr.mxu0 0.0
      %3499 = vmatpush2.msra.mxu0 0.0
      %3500 = vmatprep.subr.mxu0 0.0
      %3501 = vmatpush2.msra.mxu0 0.0
      %3502 = vmatprep.subr.mxu0 0.0
      %3503 = vmatpush2.msra.mxu0 0.0
      %3504 = vmatprep.subr.mxu0 0.0
      %3505 = vmatpush2.msra.mxu0 0.0
      %3506 = vmatprep.subr.mxu0 0.0
      %3507 = vmatpush2.msra.mxu0 0.0
      %3508 = vmatprep.subr.mxu0 0.0
      %3509 = vmatpush2.msra.mxu0 0.0
      %3510 = vmatprep.subr.mxu0 0.0
      %3511 = vmatpush2.msra.mxu0 0.0
      %3512 = vmatprep.subr.mxu0 0.0
      %3513 = vmatpush2.msra.mxu0 0.0
      %3514 = vmatprep.subr.mxu0 0.0
      %3515 = vmatpush2.msra.mxu0 0.0
      %3516 = vmatprep.subr.mxu0 0.0
      %3517 = vmatpush2.msra.mxu0 0.0
      %3518 = vmatprep.mubr.f32.mxu0 0.0
      %3519 = vmatmul.mubr.f32.gmra.mxu0 %v3407
      %v3520 = vpop.f32.mrf.mxu0
      %v3521 = vadd.f32 0.0, %v3520
      %v3522 = vpop.f32.mrf.mxu0
      %3523 = vmatprep.mubr.f32.mxu0 0.0
      %3524 = vmatmul.mubr.f32.gmra.mxu0 %v3410
      %v3525 = vpop.f32.mrf.mxu0
      %v3526 = vadd.f32 0.0, %v3525
      %v3527 = vpop.f32.mrf.mxu0
      %3528 = vmatprep.mubr.f32.mxu0 0.0
      %3529 = vmatmul.mubr.f32.gmra.mxu0 %v3413
      %v3530 = vpop.f32.mrf.mxu0
      %v3531 = vadd.f32 0.0, %v3530
      %v3532 = vpop.f32.mrf.mxu0
      %3533 = vmatprep.mubr.f32.mxu0 0.0
      %3534 = vmatmul.mubr.f32.gmra.mxu0 %v3416
      %v3535 = vpop.f32.mrf.mxu0
      %v3536 = vadd.f32 0.0, %v3535
      %v3537 = vpop.f32.mrf.mxu0
      %3538 = vmatprep.mubr.f32.mxu0 0.0
      %3539 = vmatmul.mubr.f32.gmra.mxu0 %v3419
      %v3540 = vpop.f32.mrf.mxu0
      %v3541 = vadd.f32 0.0, %v3540
      %v3542 = vpop.f32.mrf.mxu0
      %3543 = vmatprep.mubr.f32.mxu0 0.0
      %3544 = vmatmul.mubr.f32.gmra.mxu0 %v3422
      %v3545 = vpop.f32.mrf.mxu0
      %v3546 = vadd.f32 0.0, %v3545
      %v3547 = vpop.f32.mrf.mxu0
      %3548 = vmatprep.mubr.f32.mxu0 0.0
      %3549 = vmatmul.mubr.f32.gmra.mxu0 %v3425
      %v3550 = vpop.f32.mrf.mxu0
      %v3551 = vadd.f32 0.0, %v3550
      %v3552 = vpop.f32.mrf.mxu0
      %3553 = vmatprep.mubr.f32.mxu0 0.0
      %3554 = vmatmul.mubr.f32.gmra.mxu0 %v3428
      %v3555 = vpop.f32.mrf.mxu0
      %v3556 = vadd.f32 0.0, %v3555
      %v3557 = vpop.f32.mrf.mxu0
      %3558 = vmatprep.mubr.f32.mxu0 0.0
      %3559 = vmatmul.mubr.f32.gmra.mxu0 %v3431
      %v3560 = vpop.f32.mrf.mxu0
      %v3561 = vadd.f32 0.0, %v3560
      %v3562 = vpop.f32.mrf.mxu0
      %3563 = vmatprep.mubr.f32.mxu0 0.0
      %3564 = vmatmul.mubr.f32.gmra.mxu0 %v3434
      %v3565 = vpop.f32.mrf.mxu0
      %v3566 = vadd.f32 0.0, %v3565
      %v3567 = vpop.f32.mrf.mxu0
      %3568 = vmatprep.mubr.f32.mxu0 0.0
      %3569 = vmatmul.mubr.f32.gmra.mxu0 %v3437
      %v3570 = vpop.f32.mrf.mxu0
      %v3571 = vadd.f32 0.0, %v3570
      %v3572 = vpop.f32.mrf.mxu0
      %3573 = vmatprep.mubr.f32.mxu0 0.0
      %3574 = vmatmul.mubr.f32.gmra.mxu0 %v3440
      %v3575 = vpop.f32.mrf.mxu0
      %v3576 = vadd.f32 0.0, %v3575
      %v3577 = vpop.f32.mrf.mxu0
      %3578 = vmatprep.mubr.f32.mxu0 0.0
      %3579 = vmatmul.mubr.f32.gmra.mxu0 %v3443
      %v3580 = vpop.f32.mrf.mxu0
      %v3581 = vadd.f32 0.0, %v3580
      %v3582 = vpop.f32.mrf.mxu0
      %3583 = vmatprep.mubr.f32.mxu0 0.0
      %3584 = vmatmul.mubr.f32.gmra.mxu0 %v3446
      %v3585 = vpop.f32.mrf.mxu0
      %v3586 = vadd.f32 0.0, %v3585
      %v3587 = vpop.f32.mrf.mxu0
      %3588 = vmatprep.mubr.f32.mxu0 0.0
      %3589 = vmatmul.mubr.f32.gmra.mxu0 %v3449
      %v3590 = vpop.f32.mrf.mxu0
      %v3591 = vadd.f32 0.0, %v3590
      %v3592 = vpop.f32.mrf.mxu0
      %3593 = vmatprep.mubr.f32.mxu0 0.0
      %3594 = vmatmul.mubr.f32.gmra.mxu0 %v3452
      %v3595 = vpop.f32.mrf.mxu0
      %v3596 = vadd.f32 0.0, %v3595
      %v3597 = vpop.f32.mrf.mxu0
      %3598 = vdwg.mxu0
      %v3599 = vadd.f32 %v3311, %v3521
      %v3600 = vadd.f32 %v3316, %v3526
      %v3601 = vadd.f32 %v3321, %v3531
      %v3602 = vadd.f32 %v3326, %v3536
      %v3603 = vadd.f32 %v3331, %v3541
      %v3604 = vadd.f32 %v3336, %v3546
      %v3605 = vadd.f32 %v3341, %v3551
      %v3606 = vadd.f32 %v3346, %v3556
      %v3607 = vadd.f32 %v3351, %v3561
      %v3608 = vadd.f32 %v3356, %v3566
      %v3609 = vadd.f32 %v3361, %v3571
      %v3610 = vadd.f32 %v3366, %v3576
      %v3611 = vadd.f32 %v3371, %v3581
      %v3612 = vadd.f32 %v3376, %v3586
      %v3613 = vadd.f32 %v3381, %v3591
      %v3614 = vadd.f32 %v3386, %v3596
      %s3615 = scalar_lea.vmem [#allocation2], 216
      %v3616 = vld [vmem:[%s3615] sm:$0xff]
      %v3617 = vld [vmem:[%s3615 + $0x8] sm:$0xff]
      %v3618 = vld [vmem:[%s3615 + $0x18] sm:$0xff]
      %v3619 = vld [vmem:[%s3615 + $0x20] sm:$0xff]
      %v3620 = vld [vmem:[%s3615 + $0x30] sm:$0xff]
      %v3621 = vld [vmem:[%s3615 + $0x38] sm:$0xff]
      %v3622 = vld [vmem:[%s3615 + $0x48] sm:$0xff]
      %v3623 = vld [vmem:[%s3615 + $0x50] sm:$0xff]
      %v3624 = vld [vmem:[%s3615 + $0x60] sm:$0xff]
      %v3625 = vld [vmem:[%s3615 + $0x68] sm:$0xff]
      %v3626 = vld [vmem:[%s3615 + $0x78] sm:$0xff]
      %v3627 = vld [vmem:[%s3615 + $0x80] sm:$0xff]
      %v3628 = vld [vmem:[%s3615 + $0x90] sm:$0xff]
      %v3629 = vld [vmem:[%s3615 + $0x98] sm:$0xff]
      %v3630 = vld [vmem:[%s3615 + $0xa8] sm:$0xff]
      %v3631 = vld [vmem:[%s3615 + $0xb0] sm:$0xff]
      %v3632 = vld [vmem:[%s1082] sm:$0xff]
      %v3634 = vsel %vm277, %v3616, 0
      %v3637 = vsel %vm277, %v3617, 0
      %v3640 = vsel %vm277, %v3618, 0
      %v3643 = vsel %vm277, %v3619, 0
      %v3646 = vsel %vm277, %v3620, 0
      %v3649 = vsel %vm277, %v3621, 0
      %v3652 = vsel %vm277, %v3622, 0
      %v3655 = vsel %vm277, %v3623, 0
      %v3658 = vsel %vm277, %v3624, 0
      %v3661 = vsel %vm277, %v3625, 0
      %v3664 = vsel %vm277, %v3626, 0
      %v3667 = vsel %vm277, %v3627, 0
      %v3670 = vsel %vm277, %v3628, 0
      %v3673 = vsel %vm277, %v3629, 0
      %v3676 = vsel %vm277, %v3630, 0
      %v3679 = vsel %vm277, %v3631, 0
      %3681 = vmatprep.subr.mxu0 0.0
      %3682 = vmatpush1.msra.mxu0 0.0
      %3683 = vmatprep.subr.mxu0 0.0
      %3684 = vmatpush1.msra.mxu0 0.0
      %3685 = vmatprep.subr.mxu0 0.0
      %3686 = vmatpush1.msra.mxu0 0.0
      %3687 = vmatprep.subr.mxu0 0.0
      %3688 = vmatpush1.msra.mxu0 0.0
      %3689 = vmatprep.subr.mxu0 0.0
      %3690 = vmatpush1.msra.mxu0 0.0
      %3691 = vmatprep.subr.mxu0 0.0
      %3692 = vmatpush1.msra.mxu0 0.0
      %3693 = vmatprep.subr.mxu0 0.0
      %3694 = vmatpush1.msra.mxu0 0.0
      %3695 = vmatprep.subr.mxu0 0.0
      %3696 = vmatpush1.msra.mxu0 0.0
      %3697 = vmatprep.subr.mxu0 0.0
      %3698 = vmatpush1.msra.mxu0 0.0
      %3699 = vmatprep.subr.mxu0 0.0
      %3700 = vmatpush1.msra.mxu0 0.0
      %3701 = vmatprep.subr.mxu0 0.0
      %3702 = vmatpush1.msra.mxu0 0.0
      %3703 = vmatprep.subr.mxu0 0.0
      %3704 = vmatpush1.msra.mxu0 0.0
      %3705 = vmatprep.subr.mxu0 0.0
      %3706 = vmatpush1.msra.mxu0 0.0
      %3707 = vmatprep.subr.mxu0 0.0
      %3708 = vmatpush1.msra.mxu0 0.0
      %3709 = vmatprep.subr.mxu0 0.0
      %3710 = vmatpush1.msra.mxu0 0.0
      %3711 = vmatprep.subr.mxu0 0.0
      %3712 = vmatpush1.msra.mxu0 %v3632
      %3713 = vmatprep.subr.mxu0 0.0
      %3714 = vmatpush2.msra.mxu0 0.0
      %3715 = vmatprep.subr.mxu0 0.0
      %3716 = vmatpush2.msra.mxu0 0.0
      %3717 = vmatprep.subr.mxu0 0.0
      %3718 = vmatpush2.msra.mxu0 0.0
      %3719 = vmatprep.subr.mxu0 0.0
      %3720 = vmatpush2.msra.mxu0 0.0
      %3721 = vmatprep.subr.mxu0 0.0
      %3722 = vmatpush2.msra.mxu0 0.0
      %3723 = vmatprep.subr.mxu0 0.0
      %3724 = vmatpush2.msra.mxu0 0.0
      %3725 = vmatprep.subr.mxu0 0.0
      %3726 = vmatpush2.msra.mxu0 0.0
      %3727 = vmatprep.subr.mxu0 0.0
      %3728 = vmatpush2.msra.mxu0 0.0
      %3729 = vmatprep.subr.mxu0 0.0
      %3730 = vmatpush2.msra.mxu0 0.0
      %3731 = vmatprep.subr.mxu0 0.0
      %3732 = vmatpush2.msra.mxu0 0.0
      %3733 = vmatprep.subr.mxu0 0.0
      %3734 = vmatpush2.msra.mxu0 0.0
      %3735 = vmatprep.subr.mxu0 0.0
      %3736 = vmatpush2.msra.mxu0 0.0
      %3737 = vmatprep.subr.mxu0 0.0
      %3738 = vmatpush2.msra.mxu0 0.0
      %3739 = vmatprep.subr.mxu0 0.0
      %3740 = vmatpush2.msra.mxu0 0.0
      %3741 = vmatprep.subr.mxu0 0.0
      %3742 = vmatpush2.msra.mxu0 0.0
      %3743 = vmatprep.subr.mxu0 0.0
      %3744 = vmatpush2.msra.mxu0 0.0
      %3745 = vmatprep.mubr.f32.mxu0 0.0
      %3746 = vmatmul.mubr.f32.gmra.mxu0 %v3634
      %v3747 = vpop.f32.mrf.mxu0
      %v3748 = vadd.f32 0.0, %v3747
      %v3749 = vpop.f32.mrf.mxu0
      %3750 = vmatprep.mubr.f32.mxu0 0.0
      %3751 = vmatmul.mubr.f32.gmra.mxu0 %v3637
      %v3752 = vpop.f32.mrf.mxu0
      %v3753 = vadd.f32 0.0, %v3752
      %v3754 = vpop.f32.mrf.mxu0
      %3755 = vmatprep.mubr.f32.mxu0 0.0
      %3756 = vmatmul.mubr.f32.gmra.mxu0 %v3640
      %v3757 = vpop.f32.mrf.mxu0
      %v3758 = vadd.f32 0.0, %v3757
      %v3759 = vpop.f32.mrf.mxu0
      %3760 = vmatprep.mubr.f32.mxu0 0.0
      %3761 = vmatmul.mubr.f32.gmra.mxu0 %v3643
      %v3762 = vpop.f32.mrf.mxu0
      %v3763 = vadd.f32 0.0, %v3762
      %v3764 = vpop.f32.mrf.mxu0
      %3765 = vmatprep.mubr.f32.mxu0 0.0
      %3766 = vmatmul.mubr.f32.gmra.mxu0 %v3646
      %v3767 = vpop.f32.mrf.mxu0
      %v3768 = vadd.f32 0.0, %v3767
      %v3769 = vpop.f32.mrf.mxu0
      %3770 = vmatprep.mubr.f32.mxu0 0.0
      %3771 = vmatmul.mubr.f32.gmra.mxu0 %v3649
      %v3772 = vpop.f32.mrf.mxu0
      %v3773 = vadd.f32 0.0, %v3772
      %v3774 = vpop.f32.mrf.mxu0
      %3775 = vmatprep.mubr.f32.mxu0 0.0
      %3776 = vmatmul.mubr.f32.gmra.mxu0 %v3652
      %v3777 = vpop.f32.mrf.mxu0
      %v3778 = vadd.f32 0.0, %v3777
      %v3779 = vpop.f32.mrf.mxu0
      %3780 = vmatprep.mubr.f32.mxu0 0.0
      %3781 = vmatmul.mubr.f32.gmra.mxu0 %v3655
      %v3782 = vpop.f32.mrf.mxu0
      %v3783 = vadd.f32 0.0, %v3782
      %v3784 = vpop.f32.mrf.mxu0
      %3785 = vmatprep.mubr.f32.mxu0 0.0
      %3786 = vmatmul.mubr.f32.gmra.mxu0 %v3658
      %v3787 = vpop.f32.mrf.mxu0
      %v3788 = vadd.f32 0.0, %v3787
      %v3789 = vpop.f32.mrf.mxu0
      %3790 = vmatprep.mubr.f32.mxu0 0.0
      %3791 = vmatmul.mubr.f32.gmra.mxu0 %v3661
      %v3792 = vpop.f32.mrf.mxu0
      %v3793 = vadd.f32 0.0, %v3792
      %v3794 = vpop.f32.mrf.mxu0
      %3795 = vmatprep.mubr.f32.mxu0 0.0
      %3796 = vmatmul.mubr.f32.gmra.mxu0 %v3664
      %v3797 = vpop.f32.mrf.mxu0
      %v3798 = vadd.f32 0.0, %v3797
      %v3799 = vpop.f32.mrf.mxu0
      %3800 = vmatprep.mubr.f32.mxu0 0.0
      %3801 = vmatmul.mubr.f32.gmra.mxu0 %v3667
      %v3802 = vpop.f32.mrf.mxu0
      %v3803 = vadd.f32 0.0, %v3802
      %v3804 = vpop.f32.mrf.mxu0
      %3805 = vmatprep.mubr.f32.mxu0 0.0
      %3806 = vmatmul.mubr.f32.gmra.mxu0 %v3670
      %v3807 = vpop.f32.mrf.mxu0
      %v3808 = vadd.f32 0.0, %v3807
      %v3809 = vpop.f32.mrf.mxu0
      %3810 = vmatprep.mubr.f32.mxu0 0.0
      %3811 = vmatmul.mubr.f32.gmra.mxu0 %v3673
      %v3812 = vpop.f32.mrf.mxu0
      %v3813 = vadd.f32 0.0, %v3812
      %v3814 = vpop.f32.mrf.mxu0
      %3815 = vmatprep.mubr.f32.mxu0 0.0
      %3816 = vmatmul.mubr.f32.gmra.mxu0 %v3676
      %v3817 = vpop.f32.mrf.mxu0
      %v3818 = vadd.f32 0.0, %v3817
      %v3819 = vpop.f32.mrf.mxu0
      %3820 = vmatprep.mubr.f32.mxu0 0.0
      %3821 = vmatmul.mubr.f32.gmra.mxu0 %v3679
      %v3822 = vpop.f32.mrf.mxu0
      %v3823 = vadd.f32 0.0, %v3822
      %v3824 = vpop.f32.mrf.mxu0
      %3825 = vdwg.mxu0
      %v3826 = vadd.f32 %v3599, %v3748
      %v3827 = vadd.f32 %v3600, %v3753
      %v3828 = vadd.f32 %v3601, %v3758
      %v3829 = vadd.f32 %v3602, %v3763
      %v3830 = vadd.f32 %v3603, %v3768
      %v3831 = vadd.f32 %v3604, %v3773
      %v3832 = vadd.f32 %v3605, %v3778
      %v3833 = vadd.f32 %v3606, %v3783
      %v3834 = vadd.f32 %v3607, %v3788
      %v3835 = vadd.f32 %v3608, %v3793
      %v3836 = vadd.f32 %v3609, %v3798
      %v3837 = vadd.f32 %v3610, %v3803
      %v3838 = vadd.f32 %v3611, %v3808
      %v3839 = vadd.f32 %v3612, %v3813
      %v3840 = vadd.f32 %v3613, %v3818
      %v3841 = vadd.f32 %v3614, %v3823
      %v3842 = vld [vmem:[%s3615 + $0x1] sm:$0xff]
      %v3843 = vld [vmem:[%s3615 + $0x9] sm:$0xff]
      %v3844 = vld [vmem:[%s3615 + $0x19] sm:$0xff]
      %v3845 = vld [vmem:[%s3615 + $0x21] sm:$0xff]
      %v3846 = vld [vmem:[%s3615 + $0x31] sm:$0xff]
      %v3847 = vld [vmem:[%s3615 + $0x39] sm:$0xff]
      %v3848 = vld [vmem:[%s3615 + $0x49] sm:$0xff]
      %v3849 = vld [vmem:[%s3615 + $0x51] sm:$0xff]
      %v3850 = vld [vmem:[%s3615 + $0x61] sm:$0xff]
      %v3851 = vld [vmem:[%s3615 + $0x69] sm:$0xff]
      %v3852 = vld [vmem:[%s3615 + $0x79] sm:$0xff]
      %v3853 = vld [vmem:[%s3615 + $0x81] sm:$0xff]
      %v3854 = vld [vmem:[%s3615 + $0x91] sm:$0xff]
      %v3855 = vld [vmem:[%s3615 + $0x99] sm:$0xff]
      %v3856 = vld [vmem:[%s3615 + $0xa9] sm:$0xff]
      %v3857 = vld [vmem:[%s3615 + $0xb1] sm:$0xff]
      %v3858 = vld [vmem:[%s1309] sm:$0xff]
      %v3860 = vsel %vm277, %v3842, 0
      %v3863 = vsel %vm277, %v3843, 0
      %v3866 = vsel %vm277, %v3844, 0
      %v3869 = vsel %vm277, %v3845, 0
      %v3872 = vsel %vm277, %v3846, 0
      %v3875 = vsel %vm277, %v3847, 0
      %v3878 = vsel %vm277, %v3848, 0
      %v3881 = vsel %vm277, %v3849, 0
      %v3884 = vsel %vm277, %v3850, 0
      %v3887 = vsel %vm277, %v3851, 0
      %v3890 = vsel %vm277, %v3852, 0
      %v3893 = vsel %vm277, %v3853, 0
      %v3896 = vsel %vm277, %v3854, 0
      %v3899 = vsel %vm277, %v3855, 0
      %v3902 = vsel %vm277, %v3856, 0
      %v3905 = vsel %vm277, %v3857, 0
      %3907 = vmatprep.subr.mxu0 0.0
      %3908 = vmatpush1.msra.mxu0 0.0
      %3909 = vmatprep.subr.mxu0 0.0
      %3910 = vmatpush1.msra.mxu0 0.0
      %3911 = vmatprep.subr.mxu0 0.0
      %3912 = vmatpush1.msra.mxu0 0.0
      %3913 = vmatprep.subr.mxu0 0.0
      %3914 = vmatpush1.msra.mxu0 0.0
      %3915 = vmatprep.subr.mxu0 0.0
      %3916 = vmatpush1.msra.mxu0 0.0
      %3917 = vmatprep.subr.mxu0 0.0
      %3918 = vmatpush1.msra.mxu0 0.0
      %3919 = vmatprep.subr.mxu0 0.0
      %3920 = vmatpush1.msra.mxu0 0.0
      %3921 = vmatprep.subr.mxu0 0.0
      %3922 = vmatpush1.msra.mxu0 0.0
      %3923 = vmatprep.subr.mxu0 0.0
      %3924 = vmatpush1.msra.mxu0 0.0
      %3925 = vmatprep.subr.mxu0 0.0
      %3926 = vmatpush1.msra.mxu0 0.0
      %3927 = vmatprep.subr.mxu0 0.0
      %3928 = vmatpush1.msra.mxu0 0.0
      %3929 = vmatprep.subr.mxu0 0.0
      %3930 = vmatpush1.msra.mxu0 0.0
      %3931 = vmatprep.subr.mxu0 0.0
      %3932 = vmatpush1.msra.mxu0 0.0
      %3933 = vmatprep.subr.mxu0 0.0
      %3934 = vmatpush1.msra.mxu0 0.0
      %3935 = vmatprep.subr.mxu0 0.0
      %3936 = vmatpush1.msra.mxu0 0.0
      %3937 = vmatprep.subr.mxu0 0.0
      %3938 = vmatpush1.msra.mxu0 %v3858
      %3939 = vmatprep.subr.mxu0 0.0
      %3940 = vmatpush2.msra.mxu0 0.0
      %3941 = vmatprep.subr.mxu0 0.0
      %3942 = vmatpush2.msra.mxu0 0.0
      %3943 = vmatprep.subr.mxu0 0.0
      %3944 = vmatpush2.msra.mxu0 0.0
      %3945 = vmatprep.subr.mxu0 0.0
      %3946 = vmatpush2.msra.mxu0 0.0
      %3947 = vmatprep.subr.mxu0 0.0
      %3948 = vmatpush2.msra.mxu0 0.0
      %3949 = vmatprep.subr.mxu0 0.0
      %3950 = vmatpush2.msra.mxu0 0.0
      %3951 = vmatprep.subr.mxu0 0.0
      %3952 = vmatpush2.msra.mxu0 0.0
      %3953 = vmatprep.subr.mxu0 0.0
      %3954 = vmatpush2.msra.mxu0 0.0
      %3955 = vmatprep.subr.mxu0 0.0
      %3956 = vmatpush2.msra.mxu0 0.0
      %3957 = vmatprep.subr.mxu0 0.0
      %3958 = vmatpush2.msra.mxu0 0.0
      %3959 = vmatprep.subr.mxu0 0.0
      %3960 = vmatpush2.msra.mxu0 0.0
      %3961 = vmatprep.subr.mxu0 0.0
      %3962 = vmatpush2.msra.mxu0 0.0
      %3963 = vmatprep.subr.mxu0 0.0
      %3964 = vmatpush2.msra.mxu0 0.0
      %3965 = vmatprep.subr.mxu0 0.0
      %3966 = vmatpush2.msra.mxu0 0.0
      %3967 = vmatprep.subr.mxu0 0.0
      %3968 = vmatpush2.msra.mxu0 0.0
      %3969 = vmatprep.subr.mxu0 0.0
      %3970 = vmatpush2.msra.mxu0 0.0
      %3971 = vmatprep.mubr.f32.mxu0 0.0
      %3972 = vmatmul.mubr.f32.gmra.mxu0 %v3860
      %v3973 = vpop.f32.mrf.mxu0
      %v3974 = vadd.f32 0.0, %v3973
      %v3975 = vpop.f32.mrf.mxu0
      %3976 = vmatprep.mubr.f32.mxu0 0.0
      %3977 = vmatmul.mubr.f32.gmra.mxu0 %v3863
      %v3978 = vpop.f32.mrf.mxu0
      %v3979 = vadd.f32 0.0, %v3978
      %v3980 = vpop.f32.mrf.mxu0
      %3981 = vmatprep.mubr.f32.mxu0 0.0
      %3982 = vmatmul.mubr.f32.gmra.mxu0 %v3866
      %v3983 = vpop.f32.mrf.mxu0
      %v3984 = vadd.f32 0.0, %v3983
      %v3985 = vpop.f32.mrf.mxu0
      %3986 = vmatprep.mubr.f32.mxu0 0.0
      %3987 = vmatmul.mubr.f32.gmra.mxu0 %v3869
      %v3988 = vpop.f32.mrf.mxu0
      %v3989 = vadd.f32 0.0, %v3988
      %v3990 = vpop.f32.mrf.mxu0
      %3991 = vmatprep.mubr.f32.mxu0 0.0
      %3992 = vmatmul.mubr.f32.gmra.mxu0 %v3872
      %v3993 = vpop.f32.mrf.mxu0
      %v3994 = vadd.f32 0.0, %v3993
      %v3995 = vpop.f32.mrf.mxu0
      %3996 = vmatprep.mubr.f32.mxu0 0.0
      %3997 = vmatmul.mubr.f32.gmra.mxu0 %v3875
      %v3998 = vpop.f32.mrf.mxu0
      %v3999 = vadd.f32 0.0, %v3998
      %v4000 = vpop.f32.mrf.mxu0
      %4001 = vmatprep.mubr.f32.mxu0 0.0
      %4002 = vmatmul.mubr.f32.gmra.mxu0 %v3878
      %v4003 = vpop.f32.mrf.mxu0
      %v4004 = vadd.f32 0.0, %v4003
      %v4005 = vpop.f32.mrf.mxu0
      %4006 = vmatprep.mubr.f32.mxu0 0.0
      %4007 = vmatmul.mubr.f32.gmra.mxu0 %v3881
      %v4008 = vpop.f32.mrf.mxu0
      %v4009 = vadd.f32 0.0, %v4008
      %v4010 = vpop.f32.mrf.mxu0
      %4011 = vmatprep.mubr.f32.mxu0 0.0
      %4012 = vmatmul.mubr.f32.gmra.mxu0 %v3884
      %v4013 = vpop.f32.mrf.mxu0
      %v4014 = vadd.f32 0.0, %v4013
      %v4015 = vpop.f32.mrf.mxu0
      %4016 = vmatprep.mubr.f32.mxu0 0.0
      %4017 = vmatmul.mubr.f32.gmra.mxu0 %v3887
      %v4018 = vpop.f32.mrf.mxu0
      %v4019 = vadd.f32 0.0, %v4018
      %v4020 = vpop.f32.mrf.mxu0
      %4021 = vmatprep.mubr.f32.mxu0 0.0
      %4022 = vmatmul.mubr.f32.gmra.mxu0 %v3890
      %v4023 = vpop.f32.mrf.mxu0
      %v4024 = vadd.f32 0.0, %v4023
      %v4025 = vpop.f32.mrf.mxu0
      %4026 = vmatprep.mubr.f32.mxu0 0.0
      %4027 = vmatmul.mubr.f32.gmra.mxu0 %v3893
      %v4028 = vpop.f32.mrf.mxu0
      %v4029 = vadd.f32 0.0, %v4028
      %v4030 = vpop.f32.mrf.mxu0
      %4031 = vmatprep.mubr.f32.mxu0 0.0
      %4032 = vmatmul.mubr.f32.gmra.mxu0 %v3896
      %v4033 = vpop.f32.mrf.mxu0
      %v4034 = vadd.f32 0.0, %v4033
      %v4035 = vpop.f32.mrf.mxu0
      %4036 = vmatprep.mubr.f32.mxu0 0.0
      %4037 = vmatmul.mubr.f32.gmra.mxu0 %v3899
      %v4038 = vpop.f32.mrf.mxu0
      %v4039 = vadd.f32 0.0, %v4038
      %v4040 = vpop.f32.mrf.mxu0
      %4041 = vmatprep.mubr.f32.mxu0 0.0
      %4042 = vmatmul.mubr.f32.gmra.mxu0 %v3902
      %v4043 = vpop.f32.mrf.mxu0
      %v4044 = vadd.f32 0.0, %v4043
      %v4045 = vpop.f32.mrf.mxu0
      %4046 = vmatprep.mubr.f32.mxu0 0.0
      %4047 = vmatmul.mubr.f32.gmra.mxu0 %v3905
      %v4048 = vpop.f32.mrf.mxu0
      %v4049 = vadd.f32 0.0, %v4048
      %v4050 = vpop.f32.mrf.mxu0
      %4051 = vdwg.mxu0
      %v4052 = vadd.f32 %v3826, %v3974
      %v4053 = vadd.f32 %v3827, %v3979
      %v4054 = vadd.f32 %v3828, %v3984
      %v4055 = vadd.f32 %v3829, %v3989
      %v4056 = vadd.f32 %v3830, %v3994
      %v4057 = vadd.f32 %v3831, %v3999
      %v4058 = vadd.f32 %v3832, %v4004
      %v4059 = vadd.f32 %v3833, %v4009
      %v4060 = vadd.f32 %v3834, %v4014
      %v4061 = vadd.f32 %v3835, %v4019
      %v4062 = vadd.f32 %v3836, %v4024
      %v4063 = vadd.f32 %v3837, %v4029
      %v4064 = vadd.f32 %v3838, %v4034
      %v4065 = vadd.f32 %v3839, %v4039
      %v4066 = vadd.f32 %v3840, %v4044
      %v4067 = vadd.f32 %v3841, %v4049
      %v4068 = vld [vmem:[%s3615 + $0x2] sm:$0xff]
      %v4069 = vld [vmem:[%s3615 + $0xa] sm:$0xff]
      %v4070 = vld [vmem:[%s3615 + $0x1a] sm:$0xff]
      %v4071 = vld [vmem:[%s3615 + $0x22] sm:$0xff]
      %v4072 = vld [vmem:[%s3615 + $0x32] sm:$0xff]
      %v4073 = vld [vmem:[%s3615 + $0x3a] sm:$0xff]
      %v4074 = vld [vmem:[%s3615 + $0x4a] sm:$0xff]
      %v4075 = vld [vmem:[%s3615 + $0x52] sm:$0xff]
      %v4076 = vld [vmem:[%s3615 + $0x62] sm:$0xff]
      %v4077 = vld [vmem:[%s3615 + $0x6a] sm:$0xff]
      %v4078 = vld [vmem:[%s3615 + $0x7a] sm:$0xff]
      %v4079 = vld [vmem:[%s3615 + $0x82] sm:$0xff]
      %v4080 = vld [vmem:[%s3615 + $0x92] sm:$0xff]
      %v4081 = vld [vmem:[%s3615 + $0x9a] sm:$0xff]
      %v4082 = vld [vmem:[%s3615 + $0xaa] sm:$0xff]
      %v4083 = vld [vmem:[%s3615 + $0xb2] sm:$0xff]
      %v4084 = vld [vmem:[%s1536] sm:$0xff]
      %v4086 = vsel %vm277, %v4068, 0
      %v4089 = vsel %vm277, %v4069, 0
      %v4092 = vsel %vm277, %v4070, 0
      %v4095 = vsel %vm277, %v4071, 0
      %v4098 = vsel %vm277, %v4072, 0
      %v4101 = vsel %vm277, %v4073, 0
      %v4104 = vsel %vm277, %v4074, 0
      %v4107 = vsel %vm277, %v4075, 0
      %v4110 = vsel %vm277, %v4076, 0
      %v4113 = vsel %vm277, %v4077, 0
      %v4116 = vsel %vm277, %v4078, 0
      %v4119 = vsel %vm277, %v4079, 0
      %v4122 = vsel %vm277, %v4080, 0
      %v4125 = vsel %vm277, %v4081, 0
      %v4128 = vsel %vm277, %v4082, 0
      %v4131 = vsel %vm277, %v4083, 0
      %4133 = vmatprep.subr.mxu0 0.0
      %4134 = vmatpush1.msra.mxu0 0.0
      %4135 = vmatprep.subr.mxu0 0.0
      %4136 = vmatpush1.msra.mxu0 0.0
      %4137 = vmatprep.subr.mxu0 0.0
      %4138 = vmatpush1.msra.mxu0 0.0
      %4139 = vmatprep.subr.mxu0 0.0
      %4140 = vmatpush1.msra.mxu0 0.0
      %4141 = vmatprep.subr.mxu0 0.0
      %4142 = vmatpush1.msra.mxu0 0.0
      %4143 = vmatprep.subr.mxu0 0.0
      %4144 = vmatpush1.msra.mxu0 0.0
      %4145 = vmatprep.subr.mxu0 0.0
      %4146 = vmatpush1.msra.mxu0 0.0
      %4147 = vmatprep.subr.mxu0 0.0
      %4148 = vmatpush1.msra.mxu0 0.0
      %4149 = vmatprep.subr.mxu0 0.0
      %4150 = vmatpush1.msra.mxu0 0.0
      %4151 = vmatprep.subr.mxu0 0.0
      %4152 = vmatpush1.msra.mxu0 0.0
      %4153 = vmatprep.subr.mxu0 0.0
      %4154 = vmatpush1.msra.mxu0 0.0
      %4155 = vmatprep.subr.mxu0 0.0
      %4156 = vmatpush1.msra.mxu0 0.0
      %4157 = vmatprep.subr.mxu0 0.0
      %4158 = vmatpush1.msra.mxu0 0.0
      %4159 = vmatprep.subr.mxu0 0.0
      %4160 = vmatpush1.msra.mxu0 0.0
      %4161 = vmatprep.subr.mxu0 0.0
      %4162 = vmatpush1.msra.mxu0 0.0
      %4163 = vmatprep.subr.mxu0 0.0
      %4164 = vmatpush1.msra.mxu0 %v4084
      %4165 = vmatprep.subr.mxu0 0.0
      %4166 = vmatpush2.msra.mxu0 0.0
      %4167 = vmatprep.subr.mxu0 0.0
      %4168 = vmatpush2.msra.mxu0 0.0
      %4169 = vmatprep.subr.mxu0 0.0
      %4170 = vmatpush2.msra.mxu0 0.0
      %4171 = vmatprep.subr.mxu0 0.0
      %4172 = vmatpush2.msra.mxu0 0.0
      %4173 = vmatprep.subr.mxu0 0.0
      %4174 = vmatpush2.msra.mxu0 0.0
      %4175 = vmatprep.subr.mxu0 0.0
      %4176 = vmatpush2.msra.mxu0 0.0
      %4177 = vmatprep.subr.mxu0 0.0
      %4178 = vmatpush2.msra.mxu0 0.0
      %4179 = vmatprep.subr.mxu0 0.0
      %4180 = vmatpush2.msra.mxu0 0.0
      %4181 = vmatprep.subr.mxu0 0.0
      %4182 = vmatpush2.msra.mxu0 0.0
      %4183 = vmatprep.subr.mxu0 0.0
      %4184 = vmatpush2.msra.mxu0 0.0
      %4185 = vmatprep.subr.mxu0 0.0
      %4186 = vmatpush2.msra.mxu0 0.0
      %4187 = vmatprep.subr.mxu0 0.0
      %4188 = vmatpush2.msra.mxu0 0.0
      %4189 = vmatprep.subr.mxu0 0.0
      %4190 = vmatpush2.msra.mxu0 0.0
      %4191 = vmatprep.subr.mxu0 0.0
      %4192 = vmatpush2.msra.mxu0 0.0
      %4193 = vmatprep.subr.mxu0 0.0
      %4194 = vmatpush2.msra.mxu0 0.0
      %4195 = vmatprep.subr.mxu0 0.0
      %4196 = vmatpush2.msra.mxu0 0.0
      %4197 = vmatprep.mubr.f32.mxu0 0.0
      %4198 = vmatmul.mubr.f32.gmra.mxu0 %v4086
      %v4199 = vpop.f32.mrf.mxu0
      %v4200 = vadd.f32 0.0, %v4199
      %v4201 = vpop.f32.mrf.mxu0
      %4202 = vmatprep.mubr.f32.mxu0 0.0
      %4203 = vmatmul.mubr.f32.gmra.mxu0 %v4089
      %v4204 = vpop.f32.mrf.mxu0
      %v4205 = vadd.f32 0.0, %v4204
      %v4206 = vpop.f32.mrf.mxu0
      %4207 = vmatprep.mubr.f32.mxu0 0.0
      %4208 = vmatmul.mubr.f32.gmra.mxu0 %v4092
      %v4209 = vpop.f32.mrf.mxu0
      %v4210 = vadd.f32 0.0, %v4209
      %v4211 = vpop.f32.mrf.mxu0
      %4212 = vmatprep.mubr.f32.mxu0 0.0
      %4213 = vmatmul.mubr.f32.gmra.mxu0 %v4095
      %v4214 = vpop.f32.mrf.mxu0
      %v4215 = vadd.f32 0.0, %v4214
      %v4216 = vpop.f32.mrf.mxu0
      %4217 = vmatprep.mubr.f32.mxu0 0.0
      %4218 = vmatmul.mubr.f32.gmra.mxu0 %v4098
      %v4219 = vpop.f32.mrf.mxu0
      %v4220 = vadd.f32 0.0, %v4219
      %v4221 = vpop.f32.mrf.mxu0
      %4222 = vmatprep.mubr.f32.mxu0 0.0
      %4223 = vmatmul.mubr.f32.gmra.mxu0 %v4101
      %v4224 = vpop.f32.mrf.mxu0
      %v4225 = vadd.f32 0.0, %v4224
      %v4226 = vpop.f32.mrf.mxu0
      %4227 = vmatprep.mubr.f32.mxu0 0.0
      %4228 = vmatmul.mubr.f32.gmra.mxu0 %v4104
      %v4229 = vpop.f32.mrf.mxu0
      %v4230 = vadd.f32 0.0, %v4229
      %v4231 = vpop.f32.mrf.mxu0
      %4232 = vmatprep.mubr.f32.mxu0 0.0
      %4233 = vmatmul.mubr.f32.gmra.mxu0 %v4107
      %v4234 = vpop.f32.mrf.mxu0
      %v4235 = vadd.f32 0.0, %v4234
      %v4236 = vpop.f32.mrf.mxu0
      %4237 = vmatprep.mubr.f32.mxu0 0.0
      %4238 = vmatmul.mubr.f32.gmra.mxu0 %v4110
      %v4239 = vpop.f32.mrf.mxu0
      %v4240 = vadd.f32 0.0, %v4239
      %v4241 = vpop.f32.mrf.mxu0
      %4242 = vmatprep.mubr.f32.mxu0 0.0
      %4243 = vmatmul.mubr.f32.gmra.mxu0 %v4113
      %v4244 = vpop.f32.mrf.mxu0
      %v4245 = vadd.f32 0.0, %v4244
      %v4246 = vpop.f32.mrf.mxu0
      %4247 = vmatprep.mubr.f32.mxu0 0.0
      %4248 = vmatmul.mubr.f32.gmra.mxu0 %v4116
      %v4249 = vpop.f32.mrf.mxu0
      %v4250 = vadd.f32 0.0, %v4249
      %v4251 = vpop.f32.mrf.mxu0
      %4252 = vmatprep.mubr.f32.mxu0 0.0
      %4253 = vmatmul.mubr.f32.gmra.mxu0 %v4119
      %v4254 = vpop.f32.mrf.mxu0
      %v4255 = vadd.f32 0.0, %v4254
      %v4256 = vpop.f32.mrf.mxu0
      %4257 = vmatprep.mubr.f32.mxu0 0.0
      %4258 = vmatmul.mubr.f32.gmra.mxu0 %v4122
      %v4259 = vpop.f32.mrf.mxu0
      %v4260 = vadd.f32 0.0, %v4259
      %v4261 = vpop.f32.mrf.mxu0
      %4262 = vmatprep.mubr.f32.mxu0 0.0
      %4263 = vmatmul.mubr.f32.gmra.mxu0 %v4125
      %v4264 = vpop.f32.mrf.mxu0
      %v4265 = vadd.f32 0.0, %v4264
      %v4266 = vpop.f32.mrf.mxu0
      %4267 = vmatprep.mubr.f32.mxu0 0.0
      %4268 = vmatmul.mubr.f32.gmra.mxu0 %v4128
      %v4269 = vpop.f32.mrf.mxu0
      %v4270 = vadd.f32 0.0, %v4269
      %v4271 = vpop.f32.mrf.mxu0
      %4272 = vmatprep.mubr.f32.mxu0 0.0
      %4273 = vmatmul.mubr.f32.gmra.mxu0 %v4131
      %v4274 = vpop.f32.mrf.mxu0
      %v4275 = vadd.f32 0.0, %v4274
      %v4276 = vpop.f32.mrf.mxu0
      %4277 = vdwg.mxu0
      %v4278 = vadd.f32 %v4052, %v4200
      %v4279 = vadd.f32 %v4053, %v4205
      %v4280 = vadd.f32 %v4054, %v4210
      %v4281 = vadd.f32 %v4055, %v4215
      %v4282 = vadd.f32 %v4056, %v4220
      %v4283 = vadd.f32 %v4057, %v4225
      %v4284 = vadd.f32 %v4058, %v4230
      %v4285 = vadd.f32 %v4059, %v4235
      %v4286 = vadd.f32 %v4060, %v4240
      %v4287 = vadd.f32 %v4061, %v4245
      %v4288 = vadd.f32 %v4062, %v4250
      %v4289 = vadd.f32 %v4063, %v4255
      %v4290 = vadd.f32 %v4064, %v4260
      %v4291 = vadd.f32 %v4065, %v4265
      %v4292 = vadd.f32 %v4066, %v4270
      %v4293 = vadd.f32 %v4067, %v4275
      %s4294 = scalar_lea.vmem [#allocation2], 240
      %v4295 = vld [vmem:[%s4294] sm:$0xff]
      %v4296 = vld [vmem:[%s4294 + $0x8] sm:$0xff]
      %v4297 = vld [vmem:[%s4294 + $0x18] sm:$0xff]
      %v4298 = vld [vmem:[%s4294 + $0x20] sm:$0xff]
      %v4299 = vld [vmem:[%s4294 + $0x30] sm:$0xff]
      %v4300 = vld [vmem:[%s4294 + $0x38] sm:$0xff]
      %v4301 = vld [vmem:[%s4294 + $0x48] sm:$0xff]
      %v4302 = vld [vmem:[%s4294 + $0x50] sm:$0xff]
      %v4303 = vld [vmem:[%s4294 + $0x60] sm:$0xff]
      %v4304 = vld [vmem:[%s4294 + $0x68] sm:$0xff]
      %v4305 = vld [vmem:[%s4294 + $0x78] sm:$0xff]
      %v4306 = vld [vmem:[%s4294 + $0x80] sm:$0xff]
      %v4307 = vld [vmem:[%s4294 + $0x90] sm:$0xff]
      %v4308 = vld [vmem:[%s4294 + $0x98] sm:$0xff]
      %v4309 = vld [vmem:[%s4294 + $0xa8] sm:$0xff]
      %v4310 = vld [vmem:[%s4294 + $0xb0] sm:$0xff]
      %v4311 = vld [vmem:[%s1764] sm:$0xff]
      %v4313 = vsel %vm277, %v4295, 0
      %v4316 = vsel %vm277, %v4296, 0
      %v4319 = vsel %vm277, %v4297, 0
      %v4322 = vsel %vm277, %v4298, 0
      %v4325 = vsel %vm277, %v4299, 0
      %v4328 = vsel %vm277, %v4300, 0
      %v4331 = vsel %vm277, %v4301, 0
      %v4334 = vsel %vm277, %v4302, 0
      %v4337 = vsel %vm277, %v4303, 0
      %v4340 = vsel %vm277, %v4304, 0
      %v4343 = vsel %vm277, %v4305, 0
      %v4346 = vsel %vm277, %v4306, 0
      %v4349 = vsel %vm277, %v4307, 0
      %v4352 = vsel %vm277, %v4308, 0
      %v4355 = vsel %vm277, %v4309, 0
      %v4358 = vsel %vm277, %v4310, 0
      %4360 = vmatprep.subr.mxu0 0.0
      %4361 = vmatpush1.msra.mxu0 0.0
      %4362 = vmatprep.subr.mxu0 0.0
      %4363 = vmatpush1.msra.mxu0 0.0
      %4364 = vmatprep.subr.mxu0 0.0
      %4365 = vmatpush1.msra.mxu0 0.0
      %4366 = vmatprep.subr.mxu0 0.0
      %4367 = vmatpush1.msra.mxu0 0.0
      %4368 = vmatprep.subr.mxu0 0.0
      %4369 = vmatpush1.msra.mxu0 0.0
      %4370 = vmatprep.subr.mxu0 0.0
      %4371 = vmatpush1.msra.mxu0 0.0
      %4372 = vmatprep.subr.mxu0 0.0
      %4373 = vmatpush1.msra.mxu0 0.0
      %4374 = vmatprep.subr.mxu0 0.0
      %4375 = vmatpush1.msra.mxu0 0.0
      %4376 = vmatprep.subr.mxu0 0.0
      %4377 = vmatpush1.msra.mxu0 0.0
      %4378 = vmatprep.subr.mxu0 0.0
      %4379 = vmatpush1.msra.mxu0 0.0
      %4380 = vmatprep.subr.mxu0 0.0
      %4381 = vmatpush1.msra.mxu0 0.0
      %4382 = vmatprep.subr.mxu0 0.0
      %4383 = vmatpush1.msra.mxu0 0.0
      %4384 = vmatprep.subr.mxu0 0.0
      %4385 = vmatpush1.msra.mxu0 0.0
      %4386 = vmatprep.subr.mxu0 0.0
      %4387 = vmatpush1.msra.mxu0 0.0
      %4388 = vmatprep.subr.mxu0 0.0
      %4389 = vmatpush1.msra.mxu0 0.0
      %4390 = vmatprep.subr.mxu0 0.0
      %4391 = vmatpush1.msra.mxu0 %v4311
      %4392 = vmatprep.subr.mxu0 0.0
      %4393 = vmatpush2.msra.mxu0 0.0
      %4394 = vmatprep.subr.mxu0 0.0
      %4395 = vmatpush2.msra.mxu0 0.0
      %4396 = vmatprep.subr.mxu0 0.0
      %4397 = vmatpush2.msra.mxu0 0.0
      %4398 = vmatprep.subr.mxu0 0.0
      %4399 = vmatpush2.msra.mxu0 0.0
      %4400 = vmatprep.subr.mxu0 0.0
      %4401 = vmatpush2.msra.mxu0 0.0
      %4402 = vmatprep.subr.mxu0 0.0
      %4403 = vmatpush2.msra.mxu0 0.0
      %4404 = vmatprep.subr.mxu0 0.0
      %4405 = vmatpush2.msra.mxu0 0.0
      %4406 = vmatprep.subr.mxu0 0.0
      %4407 = vmatpush2.msra.mxu0 0.0
      %4408 = vmatprep.subr.mxu0 0.0
      %4409 = vmatpush2.msra.mxu0 0.0
      %4410 = vmatprep.subr.mxu0 0.0
      %4411 = vmatpush2.msra.mxu0 0.0
      %4412 = vmatprep.subr.mxu0 0.0
      %4413 = vmatpush2.msra.mxu0 0.0
      %4414 = vmatprep.subr.mxu0 0.0
      %4415 = vmatpush2.msra.mxu0 0.0
      %4416 = vmatprep.subr.mxu0 0.0
      %4417 = vmatpush2.msra.mxu0 0.0
      %4418 = vmatprep.subr.mxu0 0.0
      %4419 = vmatpush2.msra.mxu0 0.0
      %4420 = vmatprep.subr.mxu0 0.0
      %4421 = vmatpush2.msra.mxu0 0.0
      %4422 = vmatprep.subr.mxu0 0.0
      %4423 = vmatpush2.msra.mxu0 0.0
      %4424 = vmatprep.mubr.f32.mxu0 0.0
      %4425 = vmatmul.mubr.f32.gmra.mxu0 %v4313
      %v4426 = vpop.f32.mrf.mxu0
      %v4427 = vadd.f32 0.0, %v4426
      %v4428 = vpop.f32.mrf.mxu0
      %4429 = vmatprep.mubr.f32.mxu0 0.0
      %4430 = vmatmul.mubr.f32.gmra.mxu0 %v4316
      %v4431 = vpop.f32.mrf.mxu0
      %v4432 = vadd.f32 0.0, %v4431
      %v4433 = vpop.f32.mrf.mxu0
      %4434 = vmatprep.mubr.f32.mxu0 0.0
      %4435 = vmatmul.mubr.f32.gmra.mxu0 %v4319
      %v4436 = vpop.f32.mrf.mxu0
      %v4437 = vadd.f32 0.0, %v4436
      %v4438 = vpop.f32.mrf.mxu0
      %4439 = vmatprep.mubr.f32.mxu0 0.0
      %4440 = vmatmul.mubr.f32.gmra.mxu0 %v4322
      %v4441 = vpop.f32.mrf.mxu0
      %v4442 = vadd.f32 0.0, %v4441
      %v4443 = vpop.f32.mrf.mxu0
      %4444 = vmatprep.mubr.f32.mxu0 0.0
      %4445 = vmatmul.mubr.f32.gmra.mxu0 %v4325
      %v4446 = vpop.f32.mrf.mxu0
      %v4447 = vadd.f32 0.0, %v4446
      %v4448 = vpop.f32.mrf.mxu0
      %4449 = vmatprep.mubr.f32.mxu0 0.0
      %4450 = vmatmul.mubr.f32.gmra.mxu0 %v4328
      %v4451 = vpop.f32.mrf.mxu0
      %v4452 = vadd.f32 0.0, %v4451
      %v4453 = vpop.f32.mrf.mxu0
      %4454 = vmatprep.mubr.f32.mxu0 0.0
      %4455 = vmatmul.mubr.f32.gmra.mxu0 %v4331
      %v4456 = vpop.f32.mrf.mxu0
      %v4457 = vadd.f32 0.0, %v4456
      %v4458 = vpop.f32.mrf.mxu0
      %4459 = vmatprep.mubr.f32.mxu0 0.0
      %4460 = vmatmul.mubr.f32.gmra.mxu0 %v4334
      %v4461 = vpop.f32.mrf.mxu0
      %v4462 = vadd.f32 0.0, %v4461
      %v4463 = vpop.f32.mrf.mxu0
      %4464 = vmatprep.mubr.f32.mxu0 0.0
      %4465 = vmatmul.mubr.f32.gmra.mxu0 %v4337
      %v4466 = vpop.f32.mrf.mxu0
      %v4467 = vadd.f32 0.0, %v4466
      %v4468 = vpop.f32.mrf.mxu0
      %4469 = vmatprep.mubr.f32.mxu0 0.0
      %4470 = vmatmul.mubr.f32.gmra.mxu0 %v4340
      %v4471 = vpop.f32.mrf.mxu0
      %v4472 = vadd.f32 0.0, %v4471
      %v4473 = vpop.f32.mrf.mxu0
      %4474 = vmatprep.mubr.f32.mxu0 0.0
      %4475 = vmatmul.mubr.f32.gmra.mxu0 %v4343
      %v4476 = vpop.f32.mrf.mxu0
      %v4477 = vadd.f32 0.0, %v4476
      %v4478 = vpop.f32.mrf.mxu0
      %4479 = vmatprep.mubr.f32.mxu0 0.0
      %4480 = vmatmul.mubr.f32.gmra.mxu0 %v4346
      %v4481 = vpop.f32.mrf.mxu0
      %v4482 = vadd.f32 0.0, %v4481
      %v4483 = vpop.f32.mrf.mxu0
      %4484 = vmatprep.mubr.f32.mxu0 0.0
      %4485 = vmatmul.mubr.f32.gmra.mxu0 %v4349
      %v4486 = vpop.f32.mrf.mxu0
      %v4487 = vadd.f32 0.0, %v4486
      %v4488 = vpop.f32.mrf.mxu0
      %4489 = vmatprep.mubr.f32.mxu0 0.0
      %4490 = vmatmul.mubr.f32.gmra.mxu0 %v4352
      %v4491 = vpop.f32.mrf.mxu0
      %v4492 = vadd.f32 0.0, %v4491
      %v4493 = vpop.f32.mrf.mxu0
      %4494 = vmatprep.mubr.f32.mxu0 0.0
      %4495 = vmatmul.mubr.f32.gmra.mxu0 %v4355
      %v4496 = vpop.f32.mrf.mxu0
      %v4497 = vadd.f32 0.0, %v4496
      %v4498 = vpop.f32.mrf.mxu0
      %4499 = vmatprep.mubr.f32.mxu0 0.0
      %4500 = vmatmul.mubr.f32.gmra.mxu0 %v4358
      %v4501 = vpop.f32.mrf.mxu0
      %v4502 = vadd.f32 0.0, %v4501
      %v4503 = vpop.f32.mrf.mxu0
      %4504 = vdwg.mxu0
      %v4505 = vadd.f32 %v4278, %v4427
      %v4506 = vadd.f32 %v4279, %v4432
      %v4507 = vadd.f32 %v4280, %v4437
      %v4508 = vadd.f32 %v4281, %v4442
      %v4509 = vadd.f32 %v4282, %v4447
      %v4510 = vadd.f32 %v4283, %v4452
      %v4511 = vadd.f32 %v4284, %v4457
      %v4512 = vadd.f32 %v4285, %v4462
      %v4513 = vadd.f32 %v4286, %v4467
      %v4514 = vadd.f32 %v4287, %v4472
      %v4515 = vadd.f32 %v4288, %v4477
      %v4516 = vadd.f32 %v4289, %v4482
      %v4517 = vadd.f32 %v4290, %v4487
      %v4518 = vadd.f32 %v4291, %v4492
      %v4519 = vadd.f32 %v4292, %v4497
      %v4520 = vadd.f32 %v4293, %v4502
      %v4521 = vld [vmem:[%s4294 + $0x1] sm:$0xff]
      %v4522 = vld [vmem:[%s4294 + $0x9] sm:$0xff]
      %v4523 = vld [vmem:[%s4294 + $0x19] sm:$0xff]
      %v4524 = vld [vmem:[%s4294 + $0x21] sm:$0xff]
      %v4525 = vld [vmem:[%s4294 + $0x31] sm:$0xff]
      %v4526 = vld [vmem:[%s4294 + $0x39] sm:$0xff]
      %v4527 = vld [vmem:[%s4294 + $0x49] sm:$0xff]
      %v4528 = vld [vmem:[%s4294 + $0x51] sm:$0xff]
      %v4529 = vld [vmem:[%s4294 + $0x61] sm:$0xff]
      %v4530 = vld [vmem:[%s4294 + $0x69] sm:$0xff]
      %v4531 = vld [vmem:[%s4294 + $0x79] sm:$0xff]
      %v4532 = vld [vmem:[%s4294 + $0x81] sm:$0xff]
      %v4533 = vld [vmem:[%s4294 + $0x91] sm:$0xff]
      %v4534 = vld [vmem:[%s4294 + $0x99] sm:$0xff]
      %v4535 = vld [vmem:[%s4294 + $0xa9] sm:$0xff]
      %v4536 = vld [vmem:[%s4294 + $0xb1] sm:$0xff]
      %v4537 = vld [vmem:[%s1991] sm:$0xff]
      %v4539 = vsel %vm277, %v4521, 0
      %v4542 = vsel %vm277, %v4522, 0
      %v4545 = vsel %vm277, %v4523, 0
      %v4548 = vsel %vm277, %v4524, 0
      %v4551 = vsel %vm277, %v4525, 0
      %v4554 = vsel %vm277, %v4526, 0
      %v4557 = vsel %vm277, %v4527, 0
      %v4560 = vsel %vm277, %v4528, 0
      %v4563 = vsel %vm277, %v4529, 0
      %v4566 = vsel %vm277, %v4530, 0
      %v4569 = vsel %vm277, %v4531, 0
      %v4572 = vsel %vm277, %v4532, 0
      %v4575 = vsel %vm277, %v4533, 0
      %v4578 = vsel %vm277, %v4534, 0
      %v4581 = vsel %vm277, %v4535, 0
      %v4584 = vsel %vm277, %v4536, 0
      %4586 = vmatprep.subr.mxu0 0.0
      %4587 = vmatpush1.msra.mxu0 0.0
      %4588 = vmatprep.subr.mxu0 0.0
      %4589 = vmatpush1.msra.mxu0 0.0
      %4590 = vmatprep.subr.mxu0 0.0
      %4591 = vmatpush1.msra.mxu0 0.0
      %4592 = vmatprep.subr.mxu0 0.0
      %4593 = vmatpush1.msra.mxu0 0.0
      %4594 = vmatprep.subr.mxu0 0.0
      %4595 = vmatpush1.msra.mxu0 0.0
      %4596 = vmatprep.subr.mxu0 0.0
      %4597 = vmatpush1.msra.mxu0 0.0
      %4598 = vmatprep.subr.mxu0 0.0
      %4599 = vmatpush1.msra.mxu0 0.0
      %4600 = vmatprep.subr.mxu0 0.0
      %4601 = vmatpush1.msra.mxu0 0.0
      %4602 = vmatprep.subr.mxu0 0.0
      %4603 = vmatpush1.msra.mxu0 0.0
      %4604 = vmatprep.subr.mxu0 0.0
      %4605 = vmatpush1.msra.mxu0 0.0
      %4606 = vmatprep.subr.mxu0 0.0
      %4607 = vmatpush1.msra.mxu0 0.0
      %4608 = vmatprep.subr.mxu0 0.0
      %4609 = vmatpush1.msra.mxu0 0.0
      %4610 = vmatprep.subr.mxu0 0.0
      %4611 = vmatpush1.msra.mxu0 0.0
      %4612 = vmatprep.subr.mxu0 0.0
      %4613 = vmatpush1.msra.mxu0 0.0
      %4614 = vmatprep.subr.mxu0 0.0
      %4615 = vmatpush1.msra.mxu0 0.0
      %4616 = vmatprep.subr.mxu0 0.0
      %4617 = vmatpush1.msra.mxu0 %v4537
      %4618 = vmatprep.subr.mxu0 0.0
      %4619 = vmatpush2.msra.mxu0 0.0
      %4620 = vmatprep.subr.mxu0 0.0
      %4621 = vmatpush2.msra.mxu0 0.0
      %4622 = vmatprep.subr.mxu0 0.0
      %4623 = vmatpush2.msra.mxu0 0.0
      %4624 = vmatprep.subr.mxu0 0.0
      %4625 = vmatpush2.msra.mxu0 0.0
      %4626 = vmatprep.subr.mxu0 0.0
      %4627 = vmatpush2.msra.mxu0 0.0
      %4628 = vmatprep.subr.mxu0 0.0
      %4629 = vmatpush2.msra.mxu0 0.0
      %4630 = vmatprep.subr.mxu0 0.0
      %4631 = vmatpush2.msra.mxu0 0.0
      %4632 = vmatprep.subr.mxu0 0.0
      %4633 = vmatpush2.msra.mxu0 0.0
      %4634 = vmatprep.subr.mxu0 0.0
      %4635 = vmatpush2.msra.mxu0 0.0
      %4636 = vmatprep.subr.mxu0 0.0
      %4637 = vmatpush2.msra.mxu0 0.0
      %4638 = vmatprep.subr.mxu0 0.0
      %4639 = vmatpush2.msra.mxu0 0.0
      %4640 = vmatprep.subr.mxu0 0.0
      %4641 = vmatpush2.msra.mxu0 0.0
      %4642 = vmatprep.subr.mxu0 0.0
      %4643 = vmatpush2.msra.mxu0 0.0
      %4644 = vmatprep.subr.mxu0 0.0
      %4645 = vmatpush2.msra.mxu0 0.0
      %4646 = vmatprep.subr.mxu0 0.0
      %4647 = vmatpush2.msra.mxu0 0.0
      %4648 = vmatprep.subr.mxu0 0.0
      %4649 = vmatpush2.msra.mxu0 0.0
      %4650 = vmatprep.mubr.f32.mxu0 0.0
      %4651 = vmatmul.mubr.f32.gmra.mxu0 %v4539
      %v4652 = vpop.f32.mrf.mxu0
      %v4653 = vadd.f32 0.0, %v4652
      %v4654 = vpop.f32.mrf.mxu0
      %4655 = vmatprep.mubr.f32.mxu0 0.0
      %4656 = vmatmul.mubr.f32.gmra.mxu0 %v4542
      %v4657 = vpop.f32.mrf.mxu0
      %v4658 = vadd.f32 0.0, %v4657
      %v4659 = vpop.f32.mrf.mxu0
      %4660 = vmatprep.mubr.f32.mxu0 0.0
      %4661 = vmatmul.mubr.f32.gmra.mxu0 %v4545
      %v4662 = vpop.f32.mrf.mxu0
      %v4663 = vadd.f32 0.0, %v4662
      %v4664 = vpop.f32.mrf.mxu0
      %4665 = vmatprep.mubr.f32.mxu0 0.0
      %4666 = vmatmul.mubr.f32.gmra.mxu0 %v4548
      %v4667 = vpop.f32.mrf.mxu0
      %v4668 = vadd.f32 0.0, %v4667
      %v4669 = vpop.f32.mrf.mxu0
      %4670 = vmatprep.mubr.f32.mxu0 0.0
      %4671 = vmatmul.mubr.f32.gmra.mxu0 %v4551
      %v4672 = vpop.f32.mrf.mxu0
      %v4673 = vadd.f32 0.0, %v4672
      %v4674 = vpop.f32.mrf.mxu0
      %4675 = vmatprep.mubr.f32.mxu0 0.0
      %4676 = vmatmul.mubr.f32.gmra.mxu0 %v4554
      %v4677 = vpop.f32.mrf.mxu0
      %v4678 = vadd.f32 0.0, %v4677
      %v4679 = vpop.f32.mrf.mxu0
      %4680 = vmatprep.mubr.f32.mxu0 0.0
      %4681 = vmatmul.mubr.f32.gmra.mxu0 %v4557
      %v4682 = vpop.f32.mrf.mxu0
      %v4683 = vadd.f32 0.0, %v4682
      %v4684 = vpop.f32.mrf.mxu0
      %4685 = vmatprep.mubr.f32.mxu0 0.0
      %4686 = vmatmul.mubr.f32.gmra.mxu0 %v4560
      %v4687 = vpop.f32.mrf.mxu0
      %v4688 = vadd.f32 0.0, %v4687
      %v4689 = vpop.f32.mrf.mxu0
      %4690 = vmatprep.mubr.f32.mxu0 0.0
      %4691 = vmatmul.mubr.f32.gmra.mxu0 %v4563
      %v4692 = vpop.f32.mrf.mxu0
      %v4693 = vadd.f32 0.0, %v4692
      %v4694 = vpop.f32.mrf.mxu0
      %4695 = vmatprep.mubr.f32.mxu0 0.0
      %4696 = vmatmul.mubr.f32.gmra.mxu0 %v4566
      %v4697 = vpop.f32.mrf.mxu0
      %v4698 = vadd.f32 0.0, %v4697
      %v4699 = vpop.f32.mrf.mxu0
      %4700 = vmatprep.mubr.f32.mxu0 0.0
      %4701 = vmatmul.mubr.f32.gmra.mxu0 %v4569
      %v4702 = vpop.f32.mrf.mxu0
      %v4703 = vadd.f32 0.0, %v4702
      %v4704 = vpop.f32.mrf.mxu0
      %4705 = vmatprep.mubr.f32.mxu0 0.0
      %4706 = vmatmul.mubr.f32.gmra.mxu0 %v4572
      %v4707 = vpop.f32.mrf.mxu0
      %v4708 = vadd.f32 0.0, %v4707
      %v4709 = vpop.f32.mrf.mxu0
      %4710 = vmatprep.mubr.f32.mxu0 0.0
      %4711 = vmatmul.mubr.f32.gmra.mxu0 %v4575
      %v4712 = vpop.f32.mrf.mxu0
      %v4713 = vadd.f32 0.0, %v4712
      %v4714 = vpop.f32.mrf.mxu0
      %4715 = vmatprep.mubr.f32.mxu0 0.0
      %4716 = vmatmul.mubr.f32.gmra.mxu0 %v4578
      %v4717 = vpop.f32.mrf.mxu0
      %v4718 = vadd.f32 0.0, %v4717
      %v4719 = vpop.f32.mrf.mxu0
      %4720 = vmatprep.mubr.f32.mxu0 0.0
      %4721 = vmatmul.mubr.f32.gmra.mxu0 %v4581
      %v4722 = vpop.f32.mrf.mxu0
      %v4723 = vadd.f32 0.0, %v4722
      %v4724 = vpop.f32.mrf.mxu0
      %4725 = vmatprep.mubr.f32.mxu0 0.0
      %4726 = vmatmul.mubr.f32.gmra.mxu0 %v4584
      %v4727 = vpop.f32.mrf.mxu0
      %v4728 = vadd.f32 0.0, %v4727
      %v4729 = vpop.f32.mrf.mxu0
      %4730 = vdwg.mxu0
      %v4731 = vadd.f32 %v4505, %v4653
      %v4732 = vadd.f32 %v4506, %v4658
      %v4733 = vadd.f32 %v4507, %v4663
      %v4734 = vadd.f32 %v4508, %v4668
      %v4735 = vadd.f32 %v4509, %v4673
      %v4736 = vadd.f32 %v4510, %v4678
      %v4737 = vadd.f32 %v4511, %v4683
      %v4738 = vadd.f32 %v4512, %v4688
      %v4739 = vadd.f32 %v4513, %v4693
      %v4740 = vadd.f32 %v4514, %v4698
      %v4741 = vadd.f32 %v4515, %v4703
      %v4742 = vadd.f32 %v4516, %v4708
      %v4743 = vadd.f32 %v4517, %v4713
      %v4744 = vadd.f32 %v4518, %v4718
      %v4745 = vadd.f32 %v4519, %v4723
      %v4746 = vadd.f32 %v4520, %v4728
      %v4747 = vld [vmem:[%s4294 + $0x2] sm:$0xff]
      %v4748 = vld [vmem:[%s4294 + $0xa] sm:$0xff]
      %v4749 = vld [vmem:[%s4294 + $0x1a] sm:$0xff]
      %v4750 = vld [vmem:[%s4294 + $0x22] sm:$0xff]
      %v4751 = vld [vmem:[%s4294 + $0x32] sm:$0xff]
      %v4752 = vld [vmem:[%s4294 + $0x3a] sm:$0xff]
      %v4753 = vld [vmem:[%s4294 + $0x4a] sm:$0xff]
      %v4754 = vld [vmem:[%s4294 + $0x52] sm:$0xff]
      %v4755 = vld [vmem:[%s4294 + $0x62] sm:$0xff]
      %v4756 = vld [vmem:[%s4294 + $0x6a] sm:$0xff]
      %v4757 = vld [vmem:[%s4294 + $0x7a] sm:$0xff]
      %v4758 = vld [vmem:[%s4294 + $0x82] sm:$0xff]
      %v4759 = vld [vmem:[%s4294 + $0x92] sm:$0xff]
      %v4760 = vld [vmem:[%s4294 + $0x9a] sm:$0xff]
      %v4761 = vld [vmem:[%s4294 + $0xaa] sm:$0xff]
      %v4762 = vld [vmem:[%s4294 + $0xb2] sm:$0xff]
      %v4763 = vld [vmem:[%s2218] sm:$0xff]
      %v4765 = vsel %vm277, %v4747, 0
      %v4768 = vsel %vm277, %v4748, 0
      %v4771 = vsel %vm277, %v4749, 0
      %v4774 = vsel %vm277, %v4750, 0
      %v4777 = vsel %vm277, %v4751, 0
      %v4780 = vsel %vm277, %v4752, 0
      %v4783 = vsel %vm277, %v4753, 0
      %v4786 = vsel %vm277, %v4754, 0
      %v4789 = vsel %vm277, %v4755, 0
      %v4792 = vsel %vm277, %v4756, 0
      %v4795 = vsel %vm277, %v4757, 0
      %v4798 = vsel %vm277, %v4758, 0
      %v4801 = vsel %vm277, %v4759, 0
      %v4804 = vsel %vm277, %v4760, 0
      %v4807 = vsel %vm277, %v4761, 0
      %v4810 = vsel %vm277, %v4762, 0
      %4812 = vmatprep.subr.mxu0 0.0
      %4813 = vmatpush1.msra.mxu0 0.0
      %4814 = vmatprep.subr.mxu0 0.0
      %4815 = vmatpush1.msra.mxu0 0.0
      %4816 = vmatprep.subr.mxu0 0.0
      %4817 = vmatpush1.msra.mxu0 0.0
      %4818 = vmatprep.subr.mxu0 0.0
      %4819 = vmatpush1.msra.mxu0 0.0
      %4820 = vmatprep.subr.mxu0 0.0
      %4821 = vmatpush1.msra.mxu0 0.0
      %4822 = vmatprep.subr.mxu0 0.0
      %4823 = vmatpush1.msra.mxu0 0.0
      %4824 = vmatprep.subr.mxu0 0.0
      %4825 = vmatpush1.msra.mxu0 0.0
      %4826 = vmatprep.subr.mxu0 0.0
      %4827 = vmatpush1.msra.mxu0 0.0
      %4828 = vmatprep.subr.mxu0 0.0
      %4829 = vmatpush1.msra.mxu0 0.0
      %4830 = vmatprep.subr.mxu0 0.0
      %4831 = vmatpush1.msra.mxu0 0.0
      %4832 = vmatprep.subr.mxu0 0.0
      %4833 = vmatpush1.msra.mxu0 0.0
      %4834 = vmatprep.subr.mxu0 0.0
      %4835 = vmatpush1.msra.mxu0 0.0
      %4836 = vmatprep.subr.mxu0 0.0
      %4837 = vmatpush1.msra.mxu0 0.0
      %4838 = vmatprep.subr.mxu0 0.0
      %4839 = vmatpush1.msra.mxu0 0.0
      %4840 = vmatprep.subr.mxu0 0.0
      %4841 = vmatpush1.msra.mxu0 0.0
      %4842 = vmatprep.subr.mxu0 0.0
      %4843 = vmatpush1.msra.mxu0 %v4763
      %4844 = vmatprep.subr.mxu0 0.0
      %4845 = vmatpush2.msra.mxu0 0.0
      %4846 = vmatprep.subr.mxu0 0.0
      %4847 = vmatpush2.msra.mxu0 0.0
      %4848 = vmatprep.subr.mxu0 0.0
      %4849 = vmatpush2.msra.mxu0 0.0
      %4850 = vmatprep.subr.mxu0 0.0
      %4851 = vmatpush2.msra.mxu0 0.0
      %4852 = vmatprep.subr.mxu0 0.0
      %4853 = vmatpush2.msra.mxu0 0.0
      %4854 = vmatprep.subr.mxu0 0.0
      %4855 = vmatpush2.msra.mxu0 0.0
      %4856 = vmatprep.subr.mxu0 0.0
      %4857 = vmatpush2.msra.mxu0 0.0
      %4858 = vmatprep.subr.mxu0 0.0
      %4859 = vmatpush2.msra.mxu0 0.0
      %4860 = vmatprep.subr.mxu0 0.0
      %4861 = vmatpush2.msra.mxu0 0.0
      %4862 = vmatprep.subr.mxu0 0.0
      %4863 = vmatpush2.msra.mxu0 0.0
      %4864 = vmatprep.subr.mxu0 0.0
      %4865 = vmatpush2.msra.mxu0 0.0
      %4866 = vmatprep.subr.mxu0 0.0
      %4867 = vmatpush2.msra.mxu0 0.0
      %4868 = vmatprep.subr.mxu0 0.0
      %4869 = vmatpush2.msra.mxu0 0.0
      %4870 = vmatprep.subr.mxu0 0.0
      %4871 = vmatpush2.msra.mxu0 0.0
      %4872 = vmatprep.subr.mxu0 0.0
      %4873 = vmatpush2.msra.mxu0 0.0
      %4874 = vmatprep.subr.mxu0 0.0
      %4875 = vmatpush2.msra.mxu0 0.0
      %4876 = vmatprep.mubr.f32.mxu0 0.0
      %4877 = vmatmul.mubr.f32.gmra.mxu0 %v4765
      %v4878 = vpop.f32.mrf.mxu0
      %v4879 = vadd.f32 0.0, %v4878
      %v4880 = vpop.f32.mrf.mxu0
      %4881 = vmatprep.mubr.f32.mxu0 0.0
      %4882 = vmatmul.mubr.f32.gmra.mxu0 %v4768
      %v4883 = vpop.f32.mrf.mxu0
      %v4884 = vadd.f32 0.0, %v4883
      %v4885 = vpop.f32.mrf.mxu0
      %4886 = vmatprep.mubr.f32.mxu0 0.0
      %4887 = vmatmul.mubr.f32.gmra.mxu0 %v4771
      %v4888 = vpop.f32.mrf.mxu0
      %v4889 = vadd.f32 0.0, %v4888
      %v4890 = vpop.f32.mrf.mxu0
      %4891 = vmatprep.mubr.f32.mxu0 0.0
      %4892 = vmatmul.mubr.f32.gmra.mxu0 %v4774
      %v4893 = vpop.f32.mrf.mxu0
      %v4894 = vadd.f32 0.0, %v4893
      %v4895 = vpop.f32.mrf.mxu0
      %4896 = vmatprep.mubr.f32.mxu0 0.0
      %4897 = vmatmul.mubr.f32.gmra.mxu0 %v4777
      %v4898 = vpop.f32.mrf.mxu0
      %v4899 = vadd.f32 0.0, %v4898
      %v4900 = vpop.f32.mrf.mxu0
      %4901 = vmatprep.mubr.f32.mxu0 0.0
      %4902 = vmatmul.mubr.f32.gmra.mxu0 %v4780
      %v4903 = vpop.f32.mrf.mxu0
      %v4904 = vadd.f32 0.0, %v4903
      %v4905 = vpop.f32.mrf.mxu0
      %4906 = vmatprep.mubr.f32.mxu0 0.0
      %4907 = vmatmul.mubr.f32.gmra.mxu0 %v4783
      %v4908 = vpop.f32.mrf.mxu0
      %v4909 = vadd.f32 0.0, %v4908
      %v4910 = vpop.f32.mrf.mxu0
      %4911 = vmatprep.mubr.f32.mxu0 0.0
      %4912 = vmatmul.mubr.f32.gmra.mxu0 %v4786
      %v4913 = vpop.f32.mrf.mxu0
      %v4914 = vadd.f32 0.0, %v4913
      %v4915 = vpop.f32.mrf.mxu0
      %4916 = vmatprep.mubr.f32.mxu0 0.0
      %4917 = vmatmul.mubr.f32.gmra.mxu0 %v4789
      %v4918 = vpop.f32.mrf.mxu0
      %v4919 = vadd.f32 0.0, %v4918
      %v4920 = vpop.f32.mrf.mxu0
      %4921 = vmatprep.mubr.f32.mxu0 0.0
      %4922 = vmatmul.mubr.f32.gmra.mxu0 %v4792
      %v4923 = vpop.f32.mrf.mxu0
      %v4924 = vadd.f32 0.0, %v4923
      %v4925 = vpop.f32.mrf.mxu0
      %4926 = vmatprep.mubr.f32.mxu0 0.0
      %4927 = vmatmul.mubr.f32.gmra.mxu0 %v4795
      %v4928 = vpop.f32.mrf.mxu0
      %v4929 = vadd.f32 0.0, %v4928
      %v4930 = vpop.f32.mrf.mxu0
      %4931 = vmatprep.mubr.f32.mxu0 0.0
      %4932 = vmatmul.mubr.f32.gmra.mxu0 %v4798
      %v4933 = vpop.f32.mrf.mxu0
      %v4934 = vadd.f32 0.0, %v4933
      %v4935 = vpop.f32.mrf.mxu0
      %4936 = vmatprep.mubr.f32.mxu0 0.0
      %4937 = vmatmul.mubr.f32.gmra.mxu0 %v4801
      %v4938 = vpop.f32.mrf.mxu0
      %v4939 = vadd.f32 0.0, %v4938
      %v4940 = vpop.f32.mrf.mxu0
      %4941 = vmatprep.mubr.f32.mxu0 0.0
      %4942 = vmatmul.mubr.f32.gmra.mxu0 %v4804
      %v4943 = vpop.f32.mrf.mxu0
      %v4944 = vadd.f32 0.0, %v4943
      %v4945 = vpop.f32.mrf.mxu0
      %4946 = vmatprep.mubr.f32.mxu0 0.0
      %4947 = vmatmul.mubr.f32.gmra.mxu0 %v4807
      %v4948 = vpop.f32.mrf.mxu0
      %v4949 = vadd.f32 0.0, %v4948
      %v4950 = vpop.f32.mrf.mxu0
      %4951 = vmatprep.mubr.f32.mxu0 0.0
      %4952 = vmatmul.mubr.f32.gmra.mxu0 %v4810
      %v4953 = vpop.f32.mrf.mxu0
      %v4954 = vadd.f32 0.0, %v4953
      %v4955 = vpop.f32.mrf.mxu0
      %4956 = vdwg.mxu0
      %v4957 = vadd.f32 %v4731, %v4879
      %v4958 = vadd.f32 %v4732, %v4884
      %v4959 = vadd.f32 %v4733, %v4889
      %v4960 = vadd.f32 %v4734, %v4894
      %v4961 = vadd.f32 %v4735, %v4899
      %v4962 = vadd.f32 %v4736, %v4904
      %v4963 = vadd.f32 %v4737, %v4909
      %v4964 = vadd.f32 %v4738, %v4914
      %v4965 = vadd.f32 %v4739, %v4919
      %v4966 = vadd.f32 %v4740, %v4924
      %v4967 = vadd.f32 %v4741, %v4929
      %v4968 = vadd.f32 %v4742, %v4934
      %v4969 = vadd.f32 %v4743, %v4939
      %v4970 = vadd.f32 %v4744, %v4944
      %v4971 = vadd.f32 %v4745, %v4949
      %v4972 = vadd.f32 %v4746, %v4954
      %v4973 = vld [vmem:[%s2] sm:$0x1]
      %v4975 = vlaneseq
      %v4976 = vshrl.u32 %v4975, 7
      %v4977 = vsub.s32 0, %v4976
      %v4978 = vrot.slane %v4973, %v4977
      %v4980 = vadd.f32 %v4957, %v4978
      %v4981 = vadd.f32 %v4958, %v4978
      %v4982 = vadd.f32 %v4959, %v4978
      %v4983 = vadd.f32 %v4960, %v4978
      %v4984 = vadd.f32 %v4961, %v4978
      %v4985 = vadd.f32 %v4962, %v4978
      %v4986 = vadd.f32 %v4963, %v4978
      %v4987 = vadd.f32 %v4964, %v4978
      %v4988 = vadd.f32 %v4965, %v4978
      %v4989 = vadd.f32 %v4966, %v4978
      %v4990 = vadd.f32 %v4967, %v4978
      %v4991 = vadd.f32 %v4968, %v4978
      %v4992 = vadd.f32 %v4969, %v4978
      %v4993 = vadd.f32 %v4970, %v4978
      %v4994 = vadd.f32 %v4971, %v4978
      %v4995 = vadd.f32 %v4972, %v4978
      %v4996 = vmax.f32 %v4980, 0.0
      %v4997 = vmax.f32 %v4981, 0.0
      %v4998 = vmax.f32 %v4982, 0.0
      %v4999 = vmax.f32 %v4983, 0.0
      %v5000 = vmax.f32 %v4984, 0.0
      %v5001 = vmax.f32 %v4985, 0.0
      %v5002 = vmax.f32 %v4986, 0.0
      %v5003 = vmax.f32 %v4987, 0.0
      %v5004 = vmax.f32 %v4988, 0.0
      %v5005 = vmax.f32 %v4989, 0.0
      %v5006 = vmax.f32 %v4990, 0.0
      %v5007 = vmax.f32 %v4991, 0.0
      %v5008 = vmax.f32 %v4992, 0.0
      %v5009 = vmax.f32 %v4993, 0.0
      %v5010 = vmax.f32 %v4994, 0.0
      %v5011 = vmax.f32 %v4995, 0.0
      %v5012 = vsel %vm277, %v4996, -inf
      %v5013 = vsel %vm277, %v4998, -inf
      %v5014 = vmax.f32 %v5012, %v5013
      %v5015 = vsel %vm277, %v4997, -inf
      %v5016 = vsel %vm277, %v4999, -inf
      %v5017 = vmax.f32 %v5015, %v5016
      %v5018 = vsel %vm277, %v5000, -inf
      %v5019 = vsel %vm277, %v5002, -inf
      %v5020 = vmax.f32 %v5018, %v5019
      %v5021 = vsel %vm277, %v5001, -inf
      %v5022 = vsel %vm277, %v5003, -inf
      %v5023 = vmax.f32 %v5021, %v5022
      %v5024 = vsel %vm277, %v5004, -inf
      %v5025 = vsel %vm277, %v5006, -inf
      %v5026 = vmax.f32 %v5024, %v5025
      %v5027 = vsel %vm277, %v5005, -inf
      %v5028 = vsel %vm277, %v5007, -inf
      %v5029 = vmax.f32 %v5027, %v5028
      %v5030 = vsel %vm277, %v5008, -inf
      %v5031 = vsel %vm277, %v5010, -inf
      %v5032 = vmax.f32 %v5030, %v5031
      %v5033 = vsel %vm277, %v5009, -inf
      %v5034 = vsel %vm277, %v5011, -inf
      %v5035 = vmax.f32 %v5033, %v5034
      %v5044 = vcombine.high %v5014, %v5014
      %v5046 = vunpack.c.l.s4 1983009808
      %v5047 = vunpack.c.0.s8 %v5046
      %v5048 = vlaneseq
      %v5049 = vshrl.u32 %v5048, 7
      %v5050 = vsub.s32 %v5047, %v5049
      %v5051 = vrot.slane %v5014, %v5050
      %v5053 = vunpack.c.l.s4 1983009808
      %v5054 = vunpack.c.0.s8 %v5053
      %v5055 = vlaneseq
      %v5056 = vshrl.u32 %v5055, 7
      %v5057 = vsub.s32 %v5054, %v5056
      %v5058 = vrot.slane %v5044, %v5057
      %v5059 = vcombine.high %v5051, %v5051
      %v5060 = vcombine.high %v5058, %v5058
      %v5061 = vcombine.high %v5017, %v5017
      %v5063 = vunpack.c.l.s4 1983009808
      %v5064 = vunpack.c.0.s8 %v5063
      %v5065 = vlaneseq
      %v5066 = vshrl.u32 %v5065, 7
      %v5067 = vsub.s32 %v5064, %v5066
      %v5068 = vrot.slane %v5017, %v5067
      %v5070 = vunpack.c.l.s4 1983009808
      %v5071 = vunpack.c.0.s8 %v5070
      %v5072 = vlaneseq
      %v5073 = vshrl.u32 %v5072, 7
      %v5074 = vsub.s32 %v5071, %v5073
      %v5075 = vrot.slane %v5061, %v5074
      %v5076 = vcombine.high %v5068, %v5068
      %v5077 = vcombine.high %v5075, %v5075
      %v5078 = vcombine.high %v5020, %v5020
      %v5080 = vunpack.c.l.s4 1983009808
      %v5081 = vunpack.c.0.s8 %v5080
      %v5082 = vlaneseq
      %v5083 = vshrl.u32 %v5082, 7
      %v5084 = vsub.s32 %v5081, %v5083
      %v5085 = vrot.slane %v5020, %v5084
      %v5087 = vunpack.c.l.s4 1983009808
      %v5088 = vunpack.c.0.s8 %v5087
      %v5089 = vlaneseq
      %v5090 = vshrl.u32 %v5089, 7
      %v5091 = vsub.s32 %v5088, %v5090
      %v5092 = vrot.slane %v5078, %v5091
      %v5093 = vcombine.high %v5085, %v5085
      %v5094 = vcombine.high %v5092, %v5092
      %v5095 = vcombine.high %v5023, %v5023
      %v5097 = vunpack.c.l.s4 1983009808
      %v5098 = vunpack.c.0.s8 %v5097
      %v5099 = vlaneseq
      %v5100 = vshrl.u32 %v5099, 7
      %v5101 = vsub.s32 %v5098, %v5100
      %v5102 = vrot.slane %v5023, %v5101
      %v5104 = vunpack.c.l.s4 1983009808
      %v5105 = vunpack.c.0.s8 %v5104
      %v5106 = vlaneseq
      %v5107 = vshrl.u32 %v5106, 7
      %v5108 = vsub.s32 %v5105, %v5107
      %v5109 = vrot.slane %v5095, %v5108
      %v5110 = vcombine.high %v5102, %v5102
      %v5111 = vcombine.high %v5109, %v5109
      %v5112 = vcombine.high %v5026, %v5026
      %v5114 = vunpack.c.l.s4 1983009808
      %v5115 = vunpack.c.0.s8 %v5114
      %v5116 = vlaneseq
      %v5117 = vshrl.u32 %v5116, 7
      %v5118 = vsub.s32 %v5115, %v5117
      %v5119 = vrot.slane %v5026, %v5118
      %v5121 = vunpack.c.l.s4 1983009808
      %v5122 = vunpack.c.0.s8 %v5121
      %v5123 = vlaneseq
      %v5124 = vshrl.u32 %v5123, 7
      %v5125 = vsub.s32 %v5122, %v5124
      %v5126 = vrot.slane %v5112, %v5125
      %v5127 = vcombine.high %v5119, %v5119
      %v5128 = vcombine.high %v5126, %v5126
      %v5129 = vcombine.high %v5029, %v5029
      %v5131 = vunpack.c.l.s4 1983009808
      %v5132 = vunpack.c.0.s8 %v5131
      %v5133 = vlaneseq
      %v5134 = vshrl.u32 %v5133, 7
      %v5135 = vsub.s32 %v5132, %v5134
      %v5136 = vrot.slane %v5029, %v5135
      %v5138 = vunpack.c.l.s4 1983009808
      %v5139 = vunpack.c.0.s8 %v5138
      %v5140 = vlaneseq
      %v5141 = vshrl.u32 %v5140, 7
      %v5142 = vsub.s32 %v5139, %v5141
      %v5143 = vrot.slane %v5129, %v5142
      %v5144 = vcombine.high %v5136, %v5136
      %v5145 = vcombine.high %v5143, %v5143
      %v5146 = vcombine.high %v5032, %v5032
      %v5148 = vunpack.c.l.s4 1983009808
      %v5149 = vunpack.c.0.s8 %v5148
      %v5150 = vlaneseq
      %v5151 = vshrl.u32 %v5150, 7
      %v5152 = vsub.s32 %v5149, %v5151
      %v5153 = vrot.slane %v5032, %v5152
      %v5155 = vunpack.c.l.s4 1983009808
      %v5156 = vunpack.c.0.s8 %v5155
      %v5157 = vlaneseq
      %v5158 = vshrl.u32 %v5157, 7
      %v5159 = vsub.s32 %v5156, %v5158
      %v5160 = vrot.slane %v5146, %v5159
      %v5161 = vcombine.high %v5153, %v5153
      %v5162 = vcombine.high %v5160, %v5160
      %v5163 = vcombine.high %v5035, %v5035
      %v5165 = vunpack.c.l.s4 1983009808
      %v5166 = vunpack.c.0.s8 %v5165
      %v5167 = vlaneseq
      %v5168 = vshrl.u32 %v5167, 7
      %v5169 = vsub.s32 %v5166, %v5168
      %v5170 = vrot.slane %v5035, %v5169
      %v5172 = vunpack.c.l.s4 1983009808
      %v5173 = vunpack.c.0.s8 %v5172
      %v5174 = vlaneseq
      %v5175 = vshrl.u32 %v5174, 7
      %v5176 = vsub.s32 %v5173, %v5175
      %v5177 = vrot.slane %v5163, %v5176
      %v5178 = vcombine.high %v5170, %v5170
      %v5179 = vcombine.high %v5177, %v5177
      %v5212 = vsel %vm280, %v5051, -inf
      %v5213 = vrot.slane %v5212, 4
      %v5214 = vmax.f32 %v5212, %v5213
      %v5215 = vrot.slane %v5214, 2
      %v5216 = vmax.f32 %v5214, %v5215
      %v5217 = vrot.slane %v5216, 1
      %v5218 = vmax.f32 %v5216, %v5217
      %v5219 = vsel %vm280, %v5059, -inf
      %v5220 = vrot.slane %v5219, 4
      %v5221 = vmax.f32 %v5219, %v5220
      %v5222 = vrot.slane %v5221, 2
      %v5223 = vmax.f32 %v5221, %v5222
      %v5224 = vrot.slane %v5223, 1
      %v5225 = vmax.f32 %v5223, %v5224
      %v5226 = vsel %vm280, %v5058, -inf
      %v5227 = vrot.slane %v5226, 4
      %v5228 = vmax.f32 %v5226, %v5227
      %v5229 = vrot.slane %v5228, 2
      %v5230 = vmax.f32 %v5228, %v5229
      %v5231 = vrot.slane %v5230, 1
      %v5232 = vmax.f32 %v5230, %v5231
      %v5233 = vsel %vm280, %v5060, -inf
      %v5234 = vrot.slane %v5233, 4
      %v5235 = vmax.f32 %v5233, %v5234
      %v5236 = vrot.slane %v5235, 2
      %v5237 = vmax.f32 %v5235, %v5236
      %v5238 = vrot.slane %v5237, 1
      %v5239 = vmax.f32 %v5237, %v5238
      %v5240 = vsel %vm280, %v5068, -inf
      %v5241 = vrot.slane %v5240, 4
      %v5242 = vmax.f32 %v5240, %v5241
      %v5243 = vrot.slane %v5242, 2
      %v5244 = vmax.f32 %v5242, %v5243
      %v5245 = vrot.slane %v5244, 1
      %v5246 = vmax.f32 %v5244, %v5245
      %v5247 = vsel %vm280, %v5076, -inf
      %v5248 = vrot.slane %v5247, 4
      %v5249 = vmax.f32 %v5247, %v5248
      %v5250 = vrot.slane %v5249, 2
      %v5251 = vmax.f32 %v5249, %v5250
      %v5252 = vrot.slane %v5251, 1
      %v5253 = vmax.f32 %v5251, %v5252
      %v5254 = vsel %vm280, %v5075, -inf
      %v5255 = vrot.slane %v5254, 4
      %v5256 = vmax.f32 %v5254, %v5255
      %v5257 = vrot.slane %v5256, 2
      %v5258 = vmax.f32 %v5256, %v5257
      %v5259 = vrot.slane %v5258, 1
      %v5260 = vmax.f32 %v5258, %v5259
      %v5261 = vsel %vm280, %v5077, -inf
      %v5262 = vrot.slane %v5261, 4
      %v5263 = vmax.f32 %v5261, %v5262
      %v5264 = vrot.slane %v5263, 2
      %v5265 = vmax.f32 %v5263, %v5264
      %v5266 = vrot.slane %v5265, 1
      %v5267 = vmax.f32 %v5265, %v5266
      %v5268 = vsel %vm280, %v5085, -inf
      %v5269 = vrot.slane %v5268, 4
      %v5270 = vmax.f32 %v5268, %v5269
      %v5271 = vrot.slane %v5270, 2
      %v5272 = vmax.f32 %v5270, %v5271
      %v5273 = vrot.slane %v5272, 1
      %v5274 = vmax.f32 %v5272, %v5273
      %v5275 = vsel %vm280, %v5093, -inf
      %v5276 = vrot.slane %v5275, 4
      %v5277 = vmax.f32 %v5275, %v5276
      %v5278 = vrot.slane %v5277, 2
      %v5279 = vmax.f32 %v5277, %v5278
      %v5280 = vrot.slane %v5279, 1
      %v5281 = vmax.f32 %v5279, %v5280
      %v5282 = vsel %vm280, %v5092, -inf
      %v5283 = vrot.slane %v5282, 4
      %v5284 = vmax.f32 %v5282, %v5283
      %v5285 = vrot.slane %v5284, 2
      %v5286 = vmax.f32 %v5284, %v5285
      %v5287 = vrot.slane %v5286, 1
      %v5288 = vmax.f32 %v5286, %v5287
      %v5289 = vsel %vm280, %v5094, -inf
      %v5290 = vrot.slane %v5289, 4
      %v5291 = vmax.f32 %v5289, %v5290
      %v5292 = vrot.slane %v5291, 2
      %v5293 = vmax.f32 %v5291, %v5292
      %v5294 = vrot.slane %v5293, 1
      %v5295 = vmax.f32 %v5293, %v5294
      %v5296 = vsel %vm280, %v5102, -inf
      %v5297 = vrot.slane %v5296, 4
      %v5298 = vmax.f32 %v5296, %v5297
      %v5299 = vrot.slane %v5298, 2
      %v5300 = vmax.f32 %v5298, %v5299
      %v5301 = vrot.slane %v5300, 1
      %v5302 = vmax.f32 %v5300, %v5301
      %v5303 = vsel %vm280, %v5110, -inf
      %v5304 = vrot.slane %v5303, 4
      %v5305 = vmax.f32 %v5303, %v5304
      %v5306 = vrot.slane %v5305, 2
      %v5307 = vmax.f32 %v5305, %v5306
      %v5308 = vrot.slane %v5307, 1
      %v5309 = vmax.f32 %v5307, %v5308
      %v5310 = vsel %vm280, %v5109, -inf
      %v5311 = vrot.slane %v5310, 4
      %v5312 = vmax.f32 %v5310, %v5311
      %v5313 = vrot.slane %v5312, 2
      %v5314 = vmax.f32 %v5312, %v5313
      %v5315 = vrot.slane %v5314, 1
      %v5316 = vmax.f32 %v5314, %v5315
      %v5317 = vsel %vm280, %v5111, -inf
      %v5318 = vrot.slane %v5317, 4
      %v5319 = vmax.f32 %v5317, %v5318
      %v5320 = vrot.slane %v5319, 2
      %v5321 = vmax.f32 %v5319, %v5320
      %v5322 = vrot.slane %v5321, 1
      %v5323 = vmax.f32 %v5321, %v5322
      %v5324 = vsel %vm280, %v5119, -inf
      %v5325 = vrot.slane %v5324, 4
      %v5326 = vmax.f32 %v5324, %v5325
      %v5327 = vrot.slane %v5326, 2
      %v5328 = vmax.f32 %v5326, %v5327
      %v5329 = vrot.slane %v5328, 1
      %v5330 = vmax.f32 %v5328, %v5329
      %v5331 = vsel %vm280, %v5127, -inf
      %v5332 = vrot.slane %v5331, 4
      %v5333 = vmax.f32 %v5331, %v5332
      %v5334 = vrot.slane %v5333, 2
      %v5335 = vmax.f32 %v5333, %v5334
      %v5336 = vrot.slane %v5335, 1
      %v5337 = vmax.f32 %v5335, %v5336
      %v5338 = vsel %vm280, %v5126, -inf
      %v5339 = vrot.slane %v5338, 4
      %v5340 = vmax.f32 %v5338, %v5339
      %v5341 = vrot.slane %v5340, 2
      %v5342 = vmax.f32 %v5340, %v5341
      %v5343 = vrot.slane %v5342, 1
      %v5344 = vmax.f32 %v5342, %v5343
      %v5345 = vsel %vm280, %v5128, -inf
      %v5346 = vrot.slane %v5345, 4
      %v5347 = vmax.f32 %v5345, %v5346
      %v5348 = vrot.slane %v5347, 2
      %v5349 = vmax.f32 %v5347, %v5348
      %v5350 = vrot.slane %v5349, 1
      %v5351 = vmax.f32 %v5349, %v5350
      %v5352 = vsel %vm280, %v5136, -inf
      %v5353 = vrot.slane %v5352, 4
      %v5354 = vmax.f32 %v5352, %v5353
      %v5355 = vrot.slane %v5354, 2
      %v5356 = vmax.f32 %v5354, %v5355
      %v5357 = vrot.slane %v5356, 1
      %v5358 = vmax.f32 %v5356, %v5357
      %v5359 = vsel %vm280, %v5144, -inf
      %v5360 = vrot.slane %v5359, 4
      %v5361 = vmax.f32 %v5359, %v5360
      %v5362 = vrot.slane %v5361, 2
      %v5363 = vmax.f32 %v5361, %v5362
      %v5364 = vrot.slane %v5363, 1
      %v5365 = vmax.f32 %v5363, %v5364
      %v5366 = vsel %vm280, %v5143, -inf
      %v5367 = vrot.slane %v5366, 4
      %v5368 = vmax.f32 %v5366, %v5367
      %v5369 = vrot.slane %v5368, 2
      %v5370 = vmax.f32 %v5368, %v5369
      %v5371 = vrot.slane %v5370, 1
      %v5372 = vmax.f32 %v5370, %v5371
      %v5373 = vsel %vm280, %v5145, -inf
      %v5374 = vrot.slane %v5373, 4
      %v5375 = vmax.f32 %v5373, %v5374
      %v5376 = vrot.slane %v5375, 2
      %v5377 = vmax.f32 %v5375, %v5376
      %v5378 = vrot.slane %v5377, 1
      %v5379 = vmax.f32 %v5377, %v5378
      %v5380 = vsel %vm280, %v5153, -inf
      %v5381 = vrot.slane %v5380, 4
      %v5382 = vmax.f32 %v5380, %v5381
      %v5383 = vrot.slane %v5382, 2
      %v5384 = vmax.f32 %v5382, %v5383
      %v5385 = vrot.slane %v5384, 1
      %v5386 = vmax.f32 %v5384, %v5385
      %v5387 = vsel %vm280, %v5161, -inf
      %v5388 = vrot.slane %v5387, 4
      %v5389 = vmax.f32 %v5387, %v5388
      %v5390 = vrot.slane %v5389, 2
      %v5391 = vmax.f32 %v5389, %v5390
      %v5392 = vrot.slane %v5391, 1
      %v5393 = vmax.f32 %v5391, %v5392
      %v5394 = vsel %vm280, %v5160, -inf
      %v5395 = vrot.slane %v5394, 4
      %v5396 = vmax.f32 %v5394, %v5395
      %v5397 = vrot.slane %v5396, 2
      %v5398 = vmax.f32 %v5396, %v5397
      %v5399 = vrot.slane %v5398, 1
      %v5400 = vmax.f32 %v5398, %v5399
      %v5401 = vsel %vm280, %v5162, -inf
      %v5402 = vrot.slane %v5401, 4
      %v5403 = vmax.f32 %v5401, %v5402
      %v5404 = vrot.slane %v5403, 2
      %v5405 = vmax.f32 %v5403, %v5404
      %v5406 = vrot.slane %v5405, 1
      %v5407 = vmax.f32 %v5405, %v5406
      %v5408 = vsel %vm280, %v5170, -inf
      %v5409 = vrot.slane %v5408, 4
      %v5410 = vmax.f32 %v5408, %v5409
      %v5411 = vrot.slane %v5410, 2
      %v5412 = vmax.f32 %v5410, %v5411
      %v5413 = vrot.slane %v5412, 1
      %v5414 = vmax.f32 %v5412, %v5413
      %v5415 = vsel %vm280, %v5178, -inf
      %v5416 = vrot.slane %v5415, 4
      %v5417 = vmax.f32 %v5415, %v5416
      %v5418 = vrot.slane %v5417, 2
      %v5419 = vmax.f32 %v5417, %v5418
      %v5420 = vrot.slane %v5419, 1
      %v5421 = vmax.f32 %v5419, %v5420
      %v5422 = vsel %vm280, %v5177, -inf
      %v5423 = vrot.slane %v5422, 4
      %v5424 = vmax.f32 %v5422, %v5423
      %v5425 = vrot.slane %v5424, 2
      %v5426 = vmax.f32 %v5424, %v5425
      %v5427 = vrot.slane %v5426, 1
      %v5428 = vmax.f32 %v5426, %v5427
      %v5429 = vsel %vm280, %v5179, -inf
      %v5430 = vrot.slane %v5429, 4
      %v5431 = vmax.f32 %v5429, %v5430
      %v5432 = vrot.slane %v5431, 2
      %v5433 = vmax.f32 %v5431, %v5432
      %v5434 = vrot.slane %v5433, 1
      %v5435 = vmax.f32 %v5433, %v5434
      %v5468 = vsel %vm2924, %v5225, %v5218
      %v5469 = vsel %vm2926, %v5232, %v5468
      %v5470 = vsel %vm2928, %v5239, %v5469
      %v5471 = vsel %vm2930, %v5246, %v5470
      %v5472 = vsel %vm2932, %v5253, %v5471
      %v5473 = vsel %vm2934, %v5260, %v5472
      %v5474 = vsel %vm2936, %v5267, %v5473
      %v5475 = vsel %vm2924, %v5281, %v5274
      %v5476 = vsel %vm2926, %v5288, %v5475
      %v5477 = vsel %vm2928, %v5295, %v5476
      %v5478 = vsel %vm2930, %v5302, %v5477
      %v5479 = vsel %vm2932, %v5309, %v5478
      %v5480 = vsel %vm2934, %v5316, %v5479
      %v5481 = vsel %vm2936, %v5323, %v5480
      %v5482 = vsel %vm2924, %v5337, %v5330
      %v5483 = vsel %vm2926, %v5344, %v5482
      %v5484 = vsel %vm2928, %v5351, %v5483
      %v5485 = vsel %vm2930, %v5358, %v5484
      %v5486 = vsel %vm2932, %v5365, %v5485
      %v5487 = vsel %vm2934, %v5372, %v5486
      %v5488 = vsel %vm2936, %v5379, %v5487
      %v5489 = vsel %vm2924, %v5393, %v5386
      %v5490 = vsel %vm2926, %v5400, %v5489
      %v5491 = vsel %vm2928, %v5407, %v5490
      %v5492 = vsel %vm2930, %v5414, %v5491
      %v5493 = vsel %vm2932, %v5421, %v5492
      %v5494 = vsel %vm2934, %v5428, %v5493
      %v5495 = vsel %vm2936, %v5435, %v5494
      %s5500 = scalar_lea.vmem [#allocation3], 80
      %5501 = vst.msk [vmem:[%s5500 + $0x1] sm:$0xff] %vm277, %v5474
      %5502 = vst.msk [vmem:[%s5500 + $0x11] sm:$0xff] %vm277, %v5481
      %5503 = vst.msk [vmem:[%s5500 + $0x21] sm:$0xff] %vm277, %v5488
      %5504 = vst.msk [vmem:[%s5500 + $0x31] sm:$0xff] %vm277, %v5495
      %v5505 = vld [vmem:[#allocation3] sm:$0xff]
      %v5506 = vld [vmem:[#allocation3 + $0x10] sm:$0xff]
      %v5507 = vld [vmem:[#allocation3 + $0x20] sm:$0xff]
      %v5508 = vld [vmem:[#allocation3 + $0x30] sm:$0xff]
      %v5509 = vld [vmem:[#allocation3 + $0x40] sm:$0xff]
      %v5510 = vld [vmem:[#allocation3 + $0x50] sm:$0xff]
      %v5511 = vld [vmem:[#allocation3 + $0x60] sm:$0xff]
      %v5512 = vld [vmem:[#allocation3 + $0x70] sm:$0xff]
      %v5513 = vld [vmem:[%s3] sm:$0xff]
      %v5514 = vld [vmem:[#allocation3 + $0x1] sm:$0xff]
      %v5515 = vld [vmem:[#allocation3 + $0x11] sm:$0xff]
      %v5516 = vld [vmem:[#allocation3 + $0x21] sm:$0xff]
      %v5517 = vld [vmem:[#allocation3 + $0x31] sm:$0xff]
      %v5518 = vld [vmem:[#allocation3 + $0x41] sm:$0xff]
      %v5519 = vld [vmem:[#allocation3 + $0x51] sm:$0xff]
      %v5520 = vld [vmem:[#allocation3 + $0x61] sm:$0xff]
      %v5521 = vld [vmem:[#allocation3 + $0x71] sm:$0xff]
      %s5522 = scalar_lea.vmem %s3, 8
      %v5523 = vld [vmem:[%s5522] sm:$0xff]
      %v5525 = vsel %vm277, %v5514, 0
      %v5528 = vsel %vm277, %v5515, 0
      %v5531 = vsel %vm277, %v5516, 0
      %v5534 = vsel %vm277, %v5517, 0
      %v5537 = vsel %vm277, %v5518, 0
      %v5540 = vsel %vm277, %v5519, 0
      %v5543 = vsel %vm277, %v5520, 0
      %v5546 = vsel %vm277, %v5521, 0
      %5548 = vmatprep.subr.mxu0 0.0
      %5549 = vmatpush1.msra.mxu0 0.0
      %5550 = vmatprep.subr.mxu0 0.0
      %5551 = vmatpush1.msra.mxu0 0.0
      %5552 = vmatprep.subr.mxu0 0.0
      %5553 = vmatpush1.msra.mxu0 0.0
      %5554 = vmatprep.subr.mxu0 0.0
      %5555 = vmatpush1.msra.mxu0 0.0
      %5556 = vmatprep.subr.mxu0 0.0
      %5557 = vmatpush1.msra.mxu0 0.0
      %5558 = vmatprep.subr.mxu0 0.0
      %5559 = vmatpush1.msra.mxu0 0.0
      %5560 = vmatprep.subr.mxu0 0.0
      %5561 = vmatpush1.msra.mxu0 0.0
      %5562 = vmatprep.subr.mxu0 0.0
      %5563 = vmatpush1.msra.mxu0 0.0
      %5564 = vmatprep.subr.mxu0 0.0
      %5565 = vmatpush1.msra.mxu0 0.0
      %5566 = vmatprep.subr.mxu0 0.0
      %5567 = vmatpush1.msra.mxu0 0.0
      %5568 = vmatprep.subr.mxu0 0.0
      %5569 = vmatpush1.msra.mxu0 0.0
      %5570 = vmatprep.subr.mxu0 0.0
      %5571 = vmatpush1.msra.mxu0 0.0
      %5572 = vmatprep.subr.mxu0 0.0
      %5573 = vmatpush1.msra.mxu0 0.0
      %5574 = vmatprep.subr.mxu0 0.0
      %5575 = vmatpush1.msra.mxu0 0.0
      %5576 = vmatprep.subr.mxu0 0.0
      %5577 = vmatpush1.msra.mxu0 0.0
      %5578 = vmatprep.subr.mxu0 0.0
      %5579 = vmatpush1.msra.mxu0 %v5523
      %5580 = vmatprep.subr.mxu0 0.0
      %5581 = vmatpush2.msra.mxu0 0.0
      %5582 = vmatprep.subr.mxu0 0.0
      %5583 = vmatpush2.msra.mxu0 0.0
      %5584 = vmatprep.subr.mxu0 0.0
      %5585 = vmatpush2.msra.mxu0 0.0
      %5586 = vmatprep.subr.mxu0 0.0
      %5587 = vmatpush2.msra.mxu0 0.0
      %5588 = vmatprep.subr.mxu0 0.0
      %5589 = vmatpush2.msra.mxu0 0.0
      %5590 = vmatprep.subr.mxu0 0.0
      %5591 = vmatpush2.msra.mxu0 0.0
      %5592 = vmatprep.subr.mxu0 0.0
      %5593 = vmatpush2.msra.mxu0 0.0
      %5594 = vmatprep.subr.mxu0 0.0
      %5595 = vmatpush2.msra.mxu0 0.0
      %5596 = vmatprep.subr.mxu0 0.0
      %5597 = vmatpush2.msra.mxu0 0.0
      %5598 = vmatprep.subr.mxu0 0.0
      %5599 = vmatpush2.msra.mxu0 0.0
      %5600 = vmatprep.subr.mxu0 0.0
      %5601 = vmatpush2.msra.mxu0 0.0
      %5602 = vmatprep.subr.mxu0 0.0
      %5603 = vmatpush2.msra.mxu0 0.0
      %5604 = vmatprep.subr.mxu0 0.0
      %5605 = vmatpush2.msra.mxu0 0.0
      %5606 = vmatprep.subr.mxu0 0.0
      %5607 = vmatpush2.msra.mxu0 0.0
      %5608 = vmatprep.subr.mxu0 0.0
      %5609 = vmatpush2.msra.mxu0 0.0
      %5610 = vmatprep.subr.mxu0 0.0
      %5611 = vmatpush2.msra.mxu0 0.0
      %5612 = vmatprep.mubr.f32.mxu0 0.0
      %5613 = vmatmul.mubr.f32.gmra.mxu0 %v5525
      %v5614 = vpop.f32.mrf.mxu0
      %v5615 = vadd.f32 0.0, %v5614
      %v5616 = vpop.f32.mrf.mxu0
      %5617 = vmatprep.mubr.f32.mxu0 0.0
      %5618 = vmatmul.mubr.f32.gmra.mxu0 %v5528
      %v5619 = vpop.f32.mrf.mxu0
      %v5620 = vadd.f32 0.0, %v5619
      %v5621 = vpop.f32.mrf.mxu0
      %5622 = vmatprep.mubr.f32.mxu0 0.0
      %5623 = vmatmul.mubr.f32.gmra.mxu0 %v5531
      %v5624 = vpop.f32.mrf.mxu0
      %v5625 = vadd.f32 0.0, %v5624
      %v5626 = vpop.f32.mrf.mxu0
      %5627 = vmatprep.mubr.f32.mxu0 0.0
      %5628 = vmatmul.mubr.f32.gmra.mxu0 %v5534
      %v5629 = vpop.f32.mrf.mxu0
      %v5630 = vadd.f32 0.0, %v5629
      %v5631 = vpop.f32.mrf.mxu0
      %5632 = vmatprep.mubr.f32.mxu0 0.0
      %5633 = vmatmul.mubr.f32.gmra.mxu0 %v5537
      %v5634 = vpop.f32.mrf.mxu0
      %v5635 = vadd.f32 0.0, %v5634
      %v5636 = vpop.f32.mrf.mxu0
      %5637 = vmatprep.mubr.f32.mxu0 0.0
      %5638 = vmatmul.mubr.f32.gmra.mxu0 %v5540
      %v5639 = vpop.f32.mrf.mxu0
      %v5640 = vadd.f32 0.0, %v5639
      %v5641 = vpop.f32.mrf.mxu0
      %5642 = vmatprep.mubr.f32.mxu0 0.0
      %5643 = vmatmul.mubr.f32.gmra.mxu0 %v5543
      %v5644 = vpop.f32.mrf.mxu0
      %v5645 = vadd.f32 0.0, %v5644
      %v5646 = vpop.f32.mrf.mxu0
      %5647 = vmatprep.mubr.f32.mxu0 0.0
      %5648 = vmatmul.mubr.f32.gmra.mxu0 %v5546
      %v5649 = vpop.f32.mrf.mxu0
      %v5650 = vadd.f32 0.0, %v5649
      %v5651 = vpop.f32.mrf.mxu0
      %5652 = vdwg.mxu0
      %v5654 = vsel %vm277, %v5505, 0
      %v5657 = vsel %vm277, %v5506, 0
      %v5660 = vsel %vm277, %v5507, 0
      %v5663 = vsel %vm277, %v5508, 0
      %v5666 = vsel %vm277, %v5509, 0
      %v5669 = vsel %vm277, %v5510, 0
      %v5672 = vsel %vm277, %v5511, 0
      %v5675 = vsel %vm277, %v5512, 0
      %5677 = vmatprep.subr.mxu0 0.0
      %5678 = vmatpush1.msra.mxu0 0.0
      %5679 = vmatprep.subr.mxu0 0.0
      %5680 = vmatpush1.msra.mxu0 0.0
      %5681 = vmatprep.subr.mxu0 0.0
      %5682 = vmatpush1.msra.mxu0 0.0
      %5683 = vmatprep.subr.mxu0 0.0
      %5684 = vmatpush1.msra.mxu0 0.0
      %5685 = vmatprep.subr.mxu0 0.0
      %5686 = vmatpush1.msra.mxu0 0.0
      %5687 = vmatprep.subr.mxu0 0.0
      %5688 = vmatpush1.msra.mxu0 0.0
      %5689 = vmatprep.subr.mxu0 0.0
      %5690 = vmatpush1.msra.mxu0 0.0
      %5691 = vmatprep.subr.mxu0 0.0
      %5692 = vmatpush1.msra.mxu0 0.0
      %5693 = vmatprep.subr.mxu0 0.0
      %5694 = vmatpush1.msra.mxu0 0.0
      %5695 = vmatprep.subr.mxu0 0.0
      %5696 = vmatpush1.msra.mxu0 0.0
      %5697 = vmatprep.subr.mxu0 0.0
      %5698 = vmatpush1.msra.mxu0 0.0
      %5699 = vmatprep.subr.mxu0 0.0
      %5700 = vmatpush1.msra.mxu0 0.0
      %5701 = vmatprep.subr.mxu0 0.0
      %5702 = vmatpush1.msra.mxu0 0.0
      %5703 = vmatprep.subr.mxu0 0.0
      %5704 = vmatpush1.msra.mxu0 0.0
      %5705 = vmatprep.subr.mxu0 0.0
      %5706 = vmatpush1.msra.mxu0 0.0
      %5707 = vmatprep.subr.mxu0 0.0
      %5708 = vmatpush1.msra.mxu0 %v5513
      %5709 = vmatprep.subr.mxu0 0.0
      %5710 = vmatpush2.msra.mxu0 0.0
      %5711 = vmatprep.subr.mxu0 0.0
      %5712 = vmatpush2.msra.mxu0 0.0
      %5713 = vmatprep.subr.mxu0 0.0
      %5714 = vmatpush2.msra.mxu0 0.0
      %5715 = vmatprep.subr.mxu0 0.0
      %5716 = vmatpush2.msra.mxu0 0.0
      %5717 = vmatprep.subr.mxu0 0.0
      %5718 = vmatpush2.msra.mxu0 0.0
      %5719 = vmatprep.subr.mxu0 0.0
      %5720 = vmatpush2.msra.mxu0 0.0
      %5721 = vmatprep.subr.mxu0 0.0
      %5722 = vmatpush2.msra.mxu0 0.0
      %5723 = vmatprep.subr.mxu0 0.0
      %5724 = vmatpush2.msra.mxu0 0.0
      %5725 = vmatprep.subr.mxu0 0.0
      %5726 = vmatpush2.msra.mxu0 0.0
      %5727 = vmatprep.subr.mxu0 0.0
      %5728 = vmatpush2.msra.mxu0 0.0
      %5729 = vmatprep.subr.mxu0 0.0
      %5730 = vmatpush2.msra.mxu0 0.0
      %5731 = vmatprep.subr.mxu0 0.0
      %5732 = vmatpush2.msra.mxu0 0.0
      %5733 = vmatprep.subr.mxu0 0.0
      %5734 = vmatpush2.msra.mxu0 0.0
      %5735 = vmatprep.subr.mxu0 0.0
      %5736 = vmatpush2.msra.mxu0 0.0
      %5737 = vmatprep.subr.mxu0 0.0
      %5738 = vmatpush2.msra.mxu0 0.0
      %5739 = vmatprep.subr.mxu0 0.0
      %5740 = vmatpush2.msra.mxu0 0.0
      %5741 = vmatprep.mubr.f32.mxu0 0.0
      %5742 = vmatmul.mubr.f32.gmra.mxu0 %v5654
      %v5743 = vpop.f32.mrf.mxu0
      %v5744 = vadd.f32 %v5615, %v5743
      %v5745 = vpop.f32.mrf.mxu0
      %5746 = vmatprep.mubr.f32.mxu0 0.0
      %5747 = vmatmul.mubr.f32.gmra.mxu0 %v5657
      %v5748 = vpop.f32.mrf.mxu0
      %v5749 = vadd.f32 %v5620, %v5748
      %v5750 = vpop.f32.mrf.mxu0
      %5751 = vmatprep.mubr.f32.mxu0 0.0
      %5752 = vmatmul.mubr.f32.gmra.mxu0 %v5660
      %v5753 = vpop.f32.mrf.mxu0
      %v5754 = vadd.f32 %v5625, %v5753
      %v5755 = vpop.f32.mrf.mxu0
      %5756 = vmatprep.mubr.f32.mxu0 0.0
      %5757 = vmatmul.mubr.f32.gmra.mxu0 %v5663
      %v5758 = vpop.f32.mrf.mxu0
      %v5759 = vadd.f32 %v5630, %v5758
      %v5760 = vpop.f32.mrf.mxu0
      %5761 = vmatprep.mubr.f32.mxu0 0.0
      %5762 = vmatmul.mubr.f32.gmra.mxu0 %v5666
      %v5763 = vpop.f32.mrf.mxu0
      %v5764 = vadd.f32 %v5635, %v5763
      %v5765 = vpop.f32.mrf.mxu0
      %5766 = vmatprep.mubr.f32.mxu0 0.0
      %5767 = vmatmul.mubr.f32.gmra.mxu0 %v5669
      %v5768 = vpop.f32.mrf.mxu0
      %v5769 = vadd.f32 %v5640, %v5768
      %v5770 = vpop.f32.mrf.mxu0
      %5771 = vmatprep.mubr.f32.mxu0 0.0
      %5772 = vmatmul.mubr.f32.gmra.mxu0 %v5672
      %v5773 = vpop.f32.mrf.mxu0
      %v5774 = vadd.f32 %v5645, %v5773
      %v5775 = vpop.f32.mrf.mxu0
      %5776 = vmatprep.mubr.f32.mxu0 0.0
      %5777 = vmatmul.mubr.f32.gmra.mxu0 %v5675
      %v5778 = vpop.f32.mrf.mxu0
      %v5779 = vadd.f32 %v5650, %v5778
      %v5780 = vpop.f32.mrf.mxu0
      %5781 = vdwg.mxu0
      %v5782 = vld [vmem:[#allocation3 + $0x2] sm:$0xff]
      %v5783 = vld [vmem:[#allocation3 + $0x12] sm:$0xff]
      %v5784 = vld [vmem:[#allocation3 + $0x22] sm:$0xff]
      %v5785 = vld [vmem:[#allocation3 + $0x32] sm:$0xff]
      %v5786 = vld [vmem:[#allocation3 + $0x42] sm:$0xff]
      %v5787 = vld [vmem:[#allocation3 + $0x52] sm:$0xff]
      %v5788 = vld [vmem:[#allocation3 + $0x62] sm:$0xff]
      %v5789 = vld [vmem:[#allocation3 + $0x72] sm:$0xff]
      %s5790 = scalar_lea.vmem %s3, 16
      %v5791 = vld [vmem:[%s5790] sm:$0xff]
      %v5793 = vsel %vm277, %v5782, 0
      %v5796 = vsel %vm277, %v5783, 0
      %v5799 = vsel %vm277, %v5784, 0
      %v5802 = vsel %vm277, %v5785, 0
      %v5805 = vsel %vm277, %v5786, 0
      %v5808 = vsel %vm277, %v5787, 0
      %v5811 = vsel %vm277, %v5788, 0
      %v5814 = vsel %vm277, %v5789, 0
      %5816 = vmatprep.subr.mxu0 0.0
      %5817 = vmatpush1.msra.mxu0 0.0
      %5818 = vmatprep.subr.mxu0 0.0
      %5819 = vmatpush1.msra.mxu0 0.0
      %5820 = vmatprep.subr.mxu0 0.0
      %5821 = vmatpush1.msra.mxu0 0.0
      %5822 = vmatprep.subr.mxu0 0.0
      %5823 = vmatpush1.msra.mxu0 0.0
      %5824 = vmatprep.subr.mxu0 0.0
      %5825 = vmatpush1.msra.mxu0 0.0
      %5826 = vmatprep.subr.mxu0 0.0
      %5827 = vmatpush1.msra.mxu0 0.0
      %5828 = vmatprep.subr.mxu0 0.0
      %5829 = vmatpush1.msra.mxu0 0.0
      %5830 = vmatprep.subr.mxu0 0.0
      %5831 = vmatpush1.msra.mxu0 0.0
      %5832 = vmatprep.subr.mxu0 0.0
      %5833 = vmatpush1.msra.mxu0 0.0
      %5834 = vmatprep.subr.mxu0 0.0
      %5835 = vmatpush1.msra.mxu0 0.0
      %5836 = vmatprep.subr.mxu0 0.0
      %5837 = vmatpush1.msra.mxu0 0.0
      %5838 = vmatprep.subr.mxu0 0.0
      %5839 = vmatpush1.msra.mxu0 0.0
      %5840 = vmatprep.subr.mxu0 0.0
      %5841 = vmatpush1.msra.mxu0 0.0
      %5842 = vmatprep.subr.mxu0 0.0
      %5843 = vmatpush1.msra.mxu0 0.0
      %5844 = vmatprep.subr.mxu0 0.0
      %5845 = vmatpush1.msra.mxu0 0.0
      %5846 = vmatprep.subr.mxu0 0.0
      %5847 = vmatpush1.msra.mxu0 %v5791
      %5848 = vmatprep.subr.mxu0 0.0
      %5849 = vmatpush2.msra.mxu0 0.0
      %5850 = vmatprep.subr.mxu0 0.0
      %5851 = vmatpush2.msra.mxu0 0.0
      %5852 = vmatprep.subr.mxu0 0.0
      %5853 = vmatpush2.msra.mxu0 0.0
      %5854 = vmatprep.subr.mxu0 0.0
      %5855 = vmatpush2.msra.mxu0 0.0
      %5856 = vmatprep.subr.mxu0 0.0
      %5857 = vmatpush2.msra.mxu0 0.0
      %5858 = vmatprep.subr.mxu0 0.0
      %5859 = vmatpush2.msra.mxu0 0.0
      %5860 = vmatprep.subr.mxu0 0.0
      %5861 = vmatpush2.msra.mxu0 0.0
      %5862 = vmatprep.subr.mxu0 0.0
      %5863 = vmatpush2.msra.mxu0 0.0
      %5864 = vmatprep.subr.mxu0 0.0
      %5865 = vmatpush2.msra.mxu0 0.0
      %5866 = vmatprep.subr.mxu0 0.0
      %5867 = vmatpush2.msra.mxu0 0.0
      %5868 = vmatprep.subr.mxu0 0.0
      %5869 = vmatpush2.msra.mxu0 0.0
      %5870 = vmatprep.subr.mxu0 0.0
      %5871 = vmatpush2.msra.mxu0 0.0
      %5872 = vmatprep.subr.mxu0 0.0
      %5873 = vmatpush2.msra.mxu0 0.0
      %5874 = vmatprep.subr.mxu0 0.0
      %5875 = vmatpush2.msra.mxu0 0.0
      %5876 = vmatprep.subr.mxu0 0.0
      %5877 = vmatpush2.msra.mxu0 0.0
      %5878 = vmatprep.subr.mxu0 0.0
      %5879 = vmatpush2.msra.mxu0 0.0
      %5880 = vmatprep.mubr.f32.mxu0 0.0
      %5881 = vmatmul.mubr.f32.gmra.mxu0 %v5793
      %v5882 = vpop.f32.mrf.mxu0
      %v5883 = vadd.f32 0.0, %v5882
      %v5884 = vpop.f32.mrf.mxu0
      %5885 = vmatprep.mubr.f32.mxu0 0.0
      %5886 = vmatmul.mubr.f32.gmra.mxu0 %v5796
      %v5887 = vpop.f32.mrf.mxu0
      %v5888 = vadd.f32 0.0, %v5887
      %v5889 = vpop.f32.mrf.mxu0
      %5890 = vmatprep.mubr.f32.mxu0 0.0
      %5891 = vmatmul.mubr.f32.gmra.mxu0 %v5799
      %v5892 = vpop.f32.mrf.mxu0
      %v5893 = vadd.f32 0.0, %v5892
      %v5894 = vpop.f32.mrf.mxu0
      %5895 = vmatprep.mubr.f32.mxu0 0.0
      %5896 = vmatmul.mubr.f32.gmra.mxu0 %v5802
      %v5897 = vpop.f32.mrf.mxu0
      %v5898 = vadd.f32 0.0, %v5897
      %v5899 = vpop.f32.mrf.mxu0
      %5900 = vmatprep.mubr.f32.mxu0 0.0
      %5901 = vmatmul.mubr.f32.gmra.mxu0 %v5805
      %v5902 = vpop.f32.mrf.mxu0
      %v5903 = vadd.f32 0.0, %v5902
      %v5904 = vpop.f32.mrf.mxu0
      %5905 = vmatprep.mubr.f32.mxu0 0.0
      %5906 = vmatmul.mubr.f32.gmra.mxu0 %v5808
      %v5907 = vpop.f32.mrf.mxu0
      %v5908 = vadd.f32 0.0, %v5907
      %v5909 = vpop.f32.mrf.mxu0
      %5910 = vmatprep.mubr.f32.mxu0 0.0
      %5911 = vmatmul.mubr.f32.gmra.mxu0 %v5811
      %v5912 = vpop.f32.mrf.mxu0
      %v5913 = vadd.f32 0.0, %v5912
      %v5914 = vpop.f32.mrf.mxu0
      %5915 = vmatprep.mubr.f32.mxu0 0.0
      %5916 = vmatmul.mubr.f32.gmra.mxu0 %v5814
      %v5917 = vpop.f32.mrf.mxu0
      %v5918 = vadd.f32 0.0, %v5917
      %v5919 = vpop.f32.mrf.mxu0
      %5920 = vdwg.mxu0
      %v5921 = vadd.f32 %v5744, %v5883
      %v5922 = vadd.f32 %v5749, %v5888
      %v5923 = vadd.f32 %v5754, %v5893
      %v5924 = vadd.f32 %v5759, %v5898
      %v5925 = vadd.f32 %v5764, %v5903
      %v5926 = vadd.f32 %v5769, %v5908
      %v5927 = vadd.f32 %v5774, %v5913
      %v5928 = vadd.f32 %v5779, %v5918
      %v5929 = vld [vmem:[%s2963] sm:$0xff]
      %v5930 = vld [vmem:[%s2963 + $0x10] sm:$0xff]
      %v5931 = vld [vmem:[%s2963 + $0x20] sm:$0xff]
      %v5932 = vld [vmem:[%s2963 + $0x30] sm:$0xff]
      %v5933 = vld [vmem:[%s2963 + $0x40] sm:$0xff]
      %v5934 = vld [vmem:[%s2963 + $0x50] sm:$0xff]
      %v5935 = vld [vmem:[%s2963 + $0x60] sm:$0xff]
      %v5936 = vld [vmem:[%s2963 + $0x70] sm:$0xff]
      %s5937 = scalar_lea.vmem %s3, 24
      %v5938 = vld [vmem:[%s5937] sm:$0xff]
      %v5940 = vsel %vm277, %v5929, 0
      %v5943 = vsel %vm277, %v5930, 0
      %v5946 = vsel %vm277, %v5931, 0
      %v5949 = vsel %vm277, %v5932, 0
      %v5952 = vsel %vm277, %v5933, 0
      %v5955 = vsel %vm277, %v5934, 0
      %v5958 = vsel %vm277, %v5935, 0
      %v5961 = vsel %vm277, %v5936, 0
      %5963 = vmatprep.subr.mxu0 0.0
      %5964 = vmatpush1.msra.mxu0 0.0
      %5965 = vmatprep.subr.mxu0 0.0
      %5966 = vmatpush1.msra.mxu0 0.0
      %5967 = vmatprep.subr.mxu0 0.0
      %5968 = vmatpush1.msra.mxu0 0.0
      %5969 = vmatprep.subr.mxu0 0.0
      %5970 = vmatpush1.msra.mxu0 0.0
      %5971 = vmatprep.subr.mxu0 0.0
      %5972 = vmatpush1.msra.mxu0 0.0
      %5973 = vmatprep.subr.mxu0 0.0
      %5974 = vmatpush1.msra.mxu0 0.0
      %5975 = vmatprep.subr.mxu0 0.0
      %5976 = vmatpush1.msra.mxu0 0.0
      %5977 = vmatprep.subr.mxu0 0.0
      %5978 = vmatpush1.msra.mxu0 0.0
      %5979 = vmatprep.subr.mxu0 0.0
      %5980 = vmatpush1.msra.mxu0 0.0
      %5981 = vmatprep.subr.mxu0 0.0
      %5982 = vmatpush1.msra.mxu0 0.0
      %5983 = vmatprep.subr.mxu0 0.0
      %5984 = vmatpush1.msra.mxu0 0.0
      %5985 = vmatprep.subr.mxu0 0.0
      %5986 = vmatpush1.msra.mxu0 0.0
      %5987 = vmatprep.subr.mxu0 0.0
      %5988 = vmatpush1.msra.mxu0 0.0
      %5989 = vmatprep.subr.mxu0 0.0
      %5990 = vmatpush1.msra.mxu0 0.0
      %5991 = vmatprep.subr.mxu0 0.0
      %5992 = vmatpush1.msra.mxu0 0.0
      %5993 = vmatprep.subr.mxu0 0.0
      %5994 = vmatpush1.msra.mxu0 %v5938
      %5995 = vmatprep.subr.mxu0 0.0
      %5996 = vmatpush2.msra.mxu0 0.0
      %5997 = vmatprep.subr.mxu0 0.0
      %5998 = vmatpush2.msra.mxu0 0.0
      %5999 = vmatprep.subr.mxu0 0.0
      %6000 = vmatpush2.msra.mxu0 0.0
      %6001 = vmatprep.subr.mxu0 0.0
      %6002 = vmatpush2.msra.mxu0 0.0
      %6003 = vmatprep.subr.mxu0 0.0
      %6004 = vmatpush2.msra.mxu0 0.0
      %6005 = vmatprep.subr.mxu0 0.0
      %6006 = vmatpush2.msra.mxu0 0.0
      %6007 = vmatprep.subr.mxu0 0.0
      %6008 = vmatpush2.msra.mxu0 0.0
      %6009 = vmatprep.subr.mxu0 0.0
      %6010 = vmatpush2.msra.mxu0 0.0
      %6011 = vmatprep.subr.mxu0 0.0
      %6012 = vmatpush2.msra.mxu0 0.0
      %6013 = vmatprep.subr.mxu0 0.0
      %6014 = vmatpush2.msra.mxu0 0.0
      %6015 = vmatprep.subr.mxu0 0.0
      %6016 = vmatpush2.msra.mxu0 0.0
      %6017 = vmatprep.subr.mxu0 0.0
      %6018 = vmatpush2.msra.mxu0 0.0
      %6019 = vmatprep.subr.mxu0 0.0
      %6020 = vmatpush2.msra.mxu0 0.0
      %6021 = vmatprep.subr.mxu0 0.0
      %6022 = vmatpush2.msra.mxu0 0.0
      %6023 = vmatprep.subr.mxu0 0.0
      %6024 = vmatpush2.msra.mxu0 0.0
      %6025 = vmatprep.subr.mxu0 0.0
      %6026 = vmatpush2.msra.mxu0 0.0
      %6027 = vmatprep.mubr.f32.mxu0 0.0
      %6028 = vmatmul.mubr.f32.gmra.mxu0 %v5940
      %v6029 = vpop.f32.mrf.mxu0
      %v6030 = vadd.f32 0.0, %v6029
      %v6031 = vpop.f32.mrf.mxu0
      %6032 = vmatprep.mubr.f32.mxu0 0.0
      %6033 = vmatmul.mubr.f32.gmra.mxu0 %v5943
      %v6034 = vpop.f32.mrf.mxu0
      %v6035 = vadd.f32 0.0, %v6034
      %v6036 = vpop.f32.mrf.mxu0
      %6037 = vmatprep.mubr.f32.mxu0 0.0
      %6038 = vmatmul.mubr.f32.gmra.mxu0 %v5946
      %v6039 = vpop.f32.mrf.mxu0
      %v6040 = vadd.f32 0.0, %v6039
      %v6041 = vpop.f32.mrf.mxu0
      %6042 = vmatprep.mubr.f32.mxu0 0.0
      %6043 = vmatmul.mubr.f32.gmra.mxu0 %v5949
      %v6044 = vpop.f32.mrf.mxu0
      %v6045 = vadd.f32 0.0, %v6044
      %v6046 = vpop.f32.mrf.mxu0
      %6047 = vmatprep.mubr.f32.mxu0 0.0
      %6048 = vmatmul.mubr.f32.gmra.mxu0 %v5952
      %v6049 = vpop.f32.mrf.mxu0
      %v6050 = vadd.f32 0.0, %v6049
      %v6051 = vpop.f32.mrf.mxu0
      %6052 = vmatprep.mubr.f32.mxu0 0.0
      %6053 = vmatmul.mubr.f32.gmra.mxu0 %v5955
      %v6054 = vpop.f32.mrf.mxu0
      %v6055 = vadd.f32 0.0, %v6054
      %v6056 = vpop.f32.mrf.mxu0
      %6057 = vmatprep.mubr.f32.mxu0 0.0
      %6058 = vmatmul.mubr.f32.gmra.mxu0 %v5958
      %v6059 = vpop.f32.mrf.mxu0
      %v6060 = vadd.f32 0.0, %v6059
      %v6061 = vpop.f32.mrf.mxu0
      %6062 = vmatprep.mubr.f32.mxu0 0.0
      %6063 = vmatmul.mubr.f32.gmra.mxu0 %v5961
      %v6064 = vpop.f32.mrf.mxu0
      %v6065 = vadd.f32 0.0, %v6064
      %v6066 = vpop.f32.mrf.mxu0
      %6067 = vdwg.mxu0
      %v6068 = vadd.f32 %v5921, %v6030
      %v6069 = vadd.f32 %v5922, %v6035
      %v6070 = vadd.f32 %v5923, %v6040
      %v6071 = vadd.f32 %v5924, %v6045
      %v6072 = vadd.f32 %v5925, %v6050
      %v6073 = vadd.f32 %v5926, %v6055
      %v6074 = vadd.f32 %v5927, %v6060
      %v6075 = vadd.f32 %v5928, %v6065
      %v6076 = vld [vmem:[%s2963 + $0x1] sm:$0xff]
      %v6077 = vld [vmem:[%s2963 + $0x11] sm:$0xff]
      %v6078 = vld [vmem:[%s2963 + $0x21] sm:$0xff]
      %v6079 = vld [vmem:[%s2963 + $0x31] sm:$0xff]
      %v6080 = vld [vmem:[%s2963 + $0x41] sm:$0xff]
      %v6081 = vld [vmem:[%s2963 + $0x51] sm:$0xff]
      %v6082 = vld [vmem:[%s2963 + $0x61] sm:$0xff]
      %v6083 = vld [vmem:[%s2963 + $0x71] sm:$0xff]
      %s6084 = scalar_lea.vmem %s3, 32
      %v6085 = vld [vmem:[%s6084] sm:$0xff]
      %v6087 = vsel %vm277, %v6076, 0
      %v6090 = vsel %vm277, %v6077, 0
      %v6093 = vsel %vm277, %v6078, 0
      %v6096 = vsel %vm277, %v6079, 0
      %v6099 = vsel %vm277, %v6080, 0
      %v6102 = vsel %vm277, %v6081, 0
      %v6105 = vsel %vm277, %v6082, 0
      %v6108 = vsel %vm277, %v6083, 0
      %6110 = vmatprep.subr.mxu0 0.0
      %6111 = vmatpush1.msra.mxu0 0.0
      %6112 = vmatprep.subr.mxu0 0.0
      %6113 = vmatpush1.msra.mxu0 0.0
      %6114 = vmatprep.subr.mxu0 0.0
      %6115 = vmatpush1.msra.mxu0 0.0
      %6116 = vmatprep.subr.mxu0 0.0
      %6117 = vmatpush1.msra.mxu0 0.0
      %6118 = vmatprep.subr.mxu0 0.0
      %6119 = vmatpush1.msra.mxu0 0.0
      %6120 = vmatprep.subr.mxu0 0.0
      %6121 = vmatpush1.msra.mxu0 0.0
      %6122 = vmatprep.subr.mxu0 0.0
      %6123 = vmatpush1.msra.mxu0 0.0
      %6124 = vmatprep.subr.mxu0 0.0
      %6125 = vmatpush1.msra.mxu0 0.0
      %6126 = vmatprep.subr.mxu0 0.0
      %6127 = vmatpush1.msra.mxu0 0.0
      %6128 = vmatprep.subr.mxu0 0.0
      %6129 = vmatpush1.msra.mxu0 0.0
      %6130 = vmatprep.subr.mxu0 0.0
      %6131 = vmatpush1.msra.mxu0 0.0
      %6132 = vmatprep.subr.mxu0 0.0
      %6133 = vmatpush1.msra.mxu0 0.0
      %6134 = vmatprep.subr.mxu0 0.0
      %6135 = vmatpush1.msra.mxu0 0.0
      %6136 = vmatprep.subr.mxu0 0.0
      %6137 = vmatpush1.msra.mxu0 0.0
      %6138 = vmatprep.subr.mxu0 0.0
      %6139 = vmatpush1.msra.mxu0 0.0
      %6140 = vmatprep.subr.mxu0 0.0
      %6141 = vmatpush1.msra.mxu0 %v6085
      %6142 = vmatprep.subr.mxu0 0.0
      %6143 = vmatpush2.msra.mxu0 0.0
      %6144 = vmatprep.subr.mxu0 0.0
      %6145 = vmatpush2.msra.mxu0 0.0
      %6146 = vmatprep.subr.mxu0 0.0
      %6147 = vmatpush2.msra.mxu0 0.0
      %6148 = vmatprep.subr.mxu0 0.0
      %6149 = vmatpush2.msra.mxu0 0.0
      %6150 = vmatprep.subr.mxu0 0.0
      %6151 = vmatpush2.msra.mxu0 0.0
      %6152 = vmatprep.subr.mxu0 0.0
      %6153 = vmatpush2.msra.mxu0 0.0
      %6154 = vmatprep.subr.mxu0 0.0
      %6155 = vmatpush2.msra.mxu0 0.0
      %6156 = vmatprep.subr.mxu0 0.0
      %6157 = vmatpush2.msra.mxu0 0.0
      %6158 = vmatprep.subr.mxu0 0.0
      %6159 = vmatpush2.msra.mxu0 0.0
      %6160 = vmatprep.subr.mxu0 0.0
      %6161 = vmatpush2.msra.mxu0 0.0
      %6162 = vmatprep.subr.mxu0 0.0
      %6163 = vmatpush2.msra.mxu0 0.0
      %6164 = vmatprep.subr.mxu0 0.0
      %6165 = vmatpush2.msra.mxu0 0.0
      %6166 = vmatprep.subr.mxu0 0.0
      %6167 = vmatpush2.msra.mxu0 0.0
      %6168 = vmatprep.subr.mxu0 0.0
      %6169 = vmatpush2.msra.mxu0 0.0
      %6170 = vmatprep.subr.mxu0 0.0
      %6171 = vmatpush2.msra.mxu0 0.0
      %6172 = vmatprep.subr.mxu0 0.0
      %6173 = vmatpush2.msra.mxu0 0.0
      %6174 = vmatprep.mubr.f32.mxu0 0.0
      %6175 = vmatmul.mubr.f32.gmra.mxu0 %v6087
      %v6176 = vpop.f32.mrf.mxu0
      %v6177 = vadd.f32 0.0, %v6176
      %v6178 = vpop.f32.mrf.mxu0
      %6179 = vmatprep.mubr.f32.mxu0 0.0
      %6180 = vmatmul.mubr.f32.gmra.mxu0 %v6090
      %v6181 = vpop.f32.mrf.mxu0
      %v6182 = vadd.f32 0.0, %v6181
      %v6183 = vpop.f32.mrf.mxu0
      %6184 = vmatprep.mubr.f32.mxu0 0.0
      %6185 = vmatmul.mubr.f32.gmra.mxu0 %v6093
      %v6186 = vpop.f32.mrf.mxu0
      %v6187 = vadd.f32 0.0, %v6186
      %v6188 = vpop.f32.mrf.mxu0
      %6189 = vmatprep.mubr.f32.mxu0 0.0
      %6190 = vmatmul.mubr.f32.gmra.mxu0 %v6096
      %v6191 = vpop.f32.mrf.mxu0
      %v6192 = vadd.f32 0.0, %v6191
      %v6193 = vpop.f32.mrf.mxu0
      %6194 = vmatprep.mubr.f32.mxu0 0.0
      %6195 = vmatmul.mubr.f32.gmra.mxu0 %v6099
      %v6196 = vpop.f32.mrf.mxu0
      %v6197 = vadd.f32 0.0, %v6196
      %v6198 = vpop.f32.mrf.mxu0
      %6199 = vmatprep.mubr.f32.mxu0 0.0
      %6200 = vmatmul.mubr.f32.gmra.mxu0 %v6102
      %v6201 = vpop.f32.mrf.mxu0
      %v6202 = vadd.f32 0.0, %v6201
      %v6203 = vpop.f32.mrf.mxu0
      %6204 = vmatprep.mubr.f32.mxu0 0.0
      %6205 = vmatmul.mubr.f32.gmra.mxu0 %v6105
      %v6206 = vpop.f32.mrf.mxu0
      %v6207 = vadd.f32 0.0, %v6206
      %v6208 = vpop.f32.mrf.mxu0
      %6209 = vmatprep.mubr.f32.mxu0 0.0
      %6210 = vmatmul.mubr.f32.gmra.mxu0 %v6108
      %v6211 = vpop.f32.mrf.mxu0
      %v6212 = vadd.f32 0.0, %v6211
      %v6213 = vpop.f32.mrf.mxu0
      %6214 = vdwg.mxu0
      %v6215 = vadd.f32 %v6068, %v6177
      %v6216 = vadd.f32 %v6069, %v6182
      %v6217 = vadd.f32 %v6070, %v6187
      %v6218 = vadd.f32 %v6071, %v6192
      %v6219 = vadd.f32 %v6072, %v6197
      %v6220 = vadd.f32 %v6073, %v6202
      %v6221 = vadd.f32 %v6074, %v6207
      %v6222 = vadd.f32 %v6075, %v6212
      %v6223 = vld [vmem:[%s2963 + $0x2] sm:$0xff]
      %v6224 = vld [vmem:[%s2963 + $0x12] sm:$0xff]
      %v6225 = vld [vmem:[%s2963 + $0x22] sm:$0xff]
      %v6226 = vld [vmem:[%s2963 + $0x32] sm:$0xff]
      %v6227 = vld [vmem:[%s2963 + $0x42] sm:$0xff]
      %v6228 = vld [vmem:[%s2963 + $0x52] sm:$0xff]
      %v6229 = vld [vmem:[%s2963 + $0x62] sm:$0xff]
      %v6230 = vld [vmem:[%s2963 + $0x72] sm:$0xff]
      %s6231 = scalar_lea.vmem %s3, 40
      %v6232 = vld [vmem:[%s6231] sm:$0xff]
      %v6234 = vsel %vm277, %v6223, 0
      %v6237 = vsel %vm277, %v6224, 0
      %v6240 = vsel %vm277, %v6225, 0
      %v6243 = vsel %vm277, %v6226, 0
      %v6246 = vsel %vm277, %v6227, 0
      %v6249 = vsel %vm277, %v6228, 0
      %v6252 = vsel %vm277, %v6229, 0
      %v6255 = vsel %vm277, %v6230, 0
      %6257 = vmatprep.subr.mxu0 0.0
      %6258 = vmatpush1.msra.mxu0 0.0
      %6259 = vmatprep.subr.mxu0 0.0
      %6260 = vmatpush1.msra.mxu0 0.0
      %6261 = vmatprep.subr.mxu0 0.0
      %6262 = vmatpush1.msra.mxu0 0.0
      %6263 = vmatprep.subr.mxu0 0.0
      %6264 = vmatpush1.msra.mxu0 0.0
      %6265 = vmatprep.subr.mxu0 0.0
      %6266 = vmatpush1.msra.mxu0 0.0
      %6267 = vmatprep.subr.mxu0 0.0
      %6268 = vmatpush1.msra.mxu0 0.0
      %6269 = vmatprep.subr.mxu0 0.0
      %6270 = vmatpush1.msra.mxu0 0.0
      %6271 = vmatprep.subr.mxu0 0.0
      %6272 = vmatpush1.msra.mxu0 0.0
      %6273 = vmatprep.subr.mxu0 0.0
      %6274 = vmatpush1.msra.mxu0 0.0
      %6275 = vmatprep.subr.mxu0 0.0
      %6276 = vmatpush1.msra.mxu0 0.0
      %6277 = vmatprep.subr.mxu0 0.0
      %6278 = vmatpush1.msra.mxu0 0.0
      %6279 = vmatprep.subr.mxu0 0.0
      %6280 = vmatpush1.msra.mxu0 0.0
      %6281 = vmatprep.subr.mxu0 0.0
      %6282 = vmatpush1.msra.mxu0 0.0
      %6283 = vmatprep.subr.mxu0 0.0
      %6284 = vmatpush1.msra.mxu0 0.0
      %6285 = vmatprep.subr.mxu0 0.0
      %6286 = vmatpush1.msra.mxu0 0.0
      %6287 = vmatprep.subr.mxu0 0.0
      %6288 = vmatpush1.msra.mxu0 %v6232
      %6289 = vmatprep.subr.mxu0 0.0
      %6290 = vmatpush2.msra.mxu0 0.0
      %6291 = vmatprep.subr.mxu0 0.0
      %6292 = vmatpush2.msra.mxu0 0.0
      %6293 = vmatprep.subr.mxu0 0.0
      %6294 = vmatpush2.msra.mxu0 0.0
      %6295 = vmatprep.subr.mxu0 0.0
      %6296 = vmatpush2.msra.mxu0 0.0
      %6297 = vmatprep.subr.mxu0 0.0
      %6298 = vmatpush2.msra.mxu0 0.0
      %6299 = vmatprep.subr.mxu0 0.0
      %6300 = vmatpush2.msra.mxu0 0.0
      %6301 = vmatprep.subr.mxu0 0.0
      %6302 = vmatpush2.msra.mxu0 0.0
      %6303 = vmatprep.subr.mxu0 0.0
      %6304 = vmatpush2.msra.mxu0 0.0
      %6305 = vmatprep.subr.mxu0 0.0
      %6306 = vmatpush2.msra.mxu0 0.0
      %6307 = vmatprep.subr.mxu0 0.0
      %6308 = vmatpush2.msra.mxu0 0.0
      %6309 = vmatprep.subr.mxu0 0.0
      %6310 = vmatpush2.msra.mxu0 0.0
      %6311 = vmatprep.subr.mxu0 0.0
      %6312 = vmatpush2.msra.mxu0 0.0
      %6313 = vmatprep.subr.mxu0 0.0
      %6314 = vmatpush2.msra.mxu0 0.0
      %6315 = vmatprep.subr.mxu0 0.0
      %6316 = vmatpush2.msra.mxu0 0.0
      %6317 = vmatprep.subr.mxu0 0.0
      %6318 = vmatpush2.msra.mxu0 0.0
      %6319 = vmatprep.subr.mxu0 0.0
      %6320 = vmatpush2.msra.mxu0 0.0
      %6321 = vmatprep.mubr.f32.mxu0 0.0
      %6322 = vmatmul.mubr.f32.gmra.mxu0 %v6234
      %v6323 = vpop.f32.mrf.mxu0
      %v6324 = vadd.f32 0.0, %v6323
      %v6325 = vpop.f32.mrf.mxu0
      %6326 = vmatprep.mubr.f32.mxu0 0.0
      %6327 = vmatmul.mubr.f32.gmra.mxu0 %v6237
      %v6328 = vpop.f32.mrf.mxu0
      %v6329 = vadd.f32 0.0, %v6328
      %v6330 = vpop.f32.mrf.mxu0
      %6331 = vmatprep.mubr.f32.mxu0 0.0
      %6332 = vmatmul.mubr.f32.gmra.mxu0 %v6240
      %v6333 = vpop.f32.mrf.mxu0
      %v6334 = vadd.f32 0.0, %v6333
      %v6335 = vpop.f32.mrf.mxu0
      %6336 = vmatprep.mubr.f32.mxu0 0.0
      %6337 = vmatmul.mubr.f32.gmra.mxu0 %v6243
      %v6338 = vpop.f32.mrf.mxu0
      %v6339 = vadd.f32 0.0, %v6338
      %v6340 = vpop.f32.mrf.mxu0
      %6341 = vmatprep.mubr.f32.mxu0 0.0
      %6342 = vmatmul.mubr.f32.gmra.mxu0 %v6246
      %v6343 = vpop.f32.mrf.mxu0
      %v6344 = vadd.f32 0.0, %v6343
      %v6345 = vpop.f32.mrf.mxu0
      %6346 = vmatprep.mubr.f32.mxu0 0.0
      %6347 = vmatmul.mubr.f32.gmra.mxu0 %v6249
      %v6348 = vpop.f32.mrf.mxu0
      %v6349 = vadd.f32 0.0, %v6348
      %v6350 = vpop.f32.mrf.mxu0
      %6351 = vmatprep.mubr.f32.mxu0 0.0
      %6352 = vmatmul.mubr.f32.gmra.mxu0 %v6252
      %v6353 = vpop.f32.mrf.mxu0
      %v6354 = vadd.f32 0.0, %v6353
      %v6355 = vpop.f32.mrf.mxu0
      %6356 = vmatprep.mubr.f32.mxu0 0.0
      %6357 = vmatmul.mubr.f32.gmra.mxu0 %v6255
      %v6358 = vpop.f32.mrf.mxu0
      %v6359 = vadd.f32 0.0, %v6358
      %v6360 = vpop.f32.mrf.mxu0
      %6361 = vdwg.mxu0
      %v6362 = vadd.f32 %v6215, %v6324
      %v6363 = vadd.f32 %v6216, %v6329
      %v6364 = vadd.f32 %v6217, %v6334
      %v6365 = vadd.f32 %v6218, %v6339
      %v6366 = vadd.f32 %v6219, %v6344
      %v6367 = vadd.f32 %v6220, %v6349
      %v6368 = vadd.f32 %v6221, %v6354
      %v6369 = vadd.f32 %v6222, %v6359
      %s6370 = scalar_lea.vmem [#allocation3], 32
      %v6371 = vld [vmem:[%s6370] sm:$0xff]
      %v6372 = vld [vmem:[%s6370 + $0x10] sm:$0xff]
      %v6373 = vld [vmem:[%s6370 + $0x20] sm:$0xff]
      %v6374 = vld [vmem:[%s6370 + $0x30] sm:$0xff]
      %v6375 = vld [vmem:[%s6370 + $0x40] sm:$0xff]
      %v6376 = vld [vmem:[%s6370 + $0x50] sm:$0xff]
      %v6377 = vld [vmem:[%s6370 + $0x60] sm:$0xff]
      %v6378 = vld [vmem:[%s6370 + $0x70] sm:$0xff]
      %s6379 = scalar_lea.vmem %s3, 48
      %v6380 = vld [vmem:[%s6379] sm:$0xff]
      %v6382 = vsel %vm277, %v6371, 0
      %v6385 = vsel %vm277, %v6372, 0
      %v6388 = vsel %vm277, %v6373, 0
      %v6391 = vsel %vm277, %v6374, 0
      %v6394 = vsel %vm277, %v6375, 0
      %v6397 = vsel %vm277, %v6376, 0
      %v6400 = vsel %vm277, %v6377, 0
      %v6403 = vsel %vm277, %v6378, 0
      %6405 = vmatprep.subr.mxu0 0.0
      %6406 = vmatpush1.msra.mxu0 0.0
      %6407 = vmatprep.subr.mxu0 0.0
      %6408 = vmatpush1.msra.mxu0 0.0
      %6409 = vmatprep.subr.mxu0 0.0
      %6410 = vmatpush1.msra.mxu0 0.0
      %6411 = vmatprep.subr.mxu0 0.0
      %6412 = vmatpush1.msra.mxu0 0.0
      %6413 = vmatprep.subr.mxu0 0.0
      %6414 = vmatpush1.msra.mxu0 0.0
      %6415 = vmatprep.subr.mxu0 0.0
      %6416 = vmatpush1.msra.mxu0 0.0
      %6417 = vmatprep.subr.mxu0 0.0
      %6418 = vmatpush1.msra.mxu0 0.0
      %6419 = vmatprep.subr.mxu0 0.0
      %6420 = vmatpush1.msra.mxu0 0.0
      %6421 = vmatprep.subr.mxu0 0.0
      %6422 = vmatpush1.msra.mxu0 0.0
      %6423 = vmatprep.subr.mxu0 0.0
      %6424 = vmatpush1.msra.mxu0 0.0
      %6425 = vmatprep.subr.mxu0 0.0
      %6426 = vmatpush1.msra.mxu0 0.0
      %6427 = vmatprep.subr.mxu0 0.0
      %6428 = vmatpush1.msra.mxu0 0.0
      %6429 = vmatprep.subr.mxu0 0.0
      %6430 = vmatpush1.msra.mxu0 0.0
      %6431 = vmatprep.subr.mxu0 0.0
      %6432 = vmatpush1.msra.mxu0 0.0
      %6433 = vmatprep.subr.mxu0 0.0
      %6434 = vmatpush1.msra.mxu0 0.0
      %6435 = vmatprep.subr.mxu0 0.0
      %6436 = vmatpush1.msra.mxu0 %v6380
      %6437 = vmatprep.subr.mxu0 0.0
      %6438 = vmatpush2.msra.mxu0 0.0
      %6439 = vmatprep.subr.mxu0 0.0
      %6440 = vmatpush2.msra.mxu0 0.0
      %6441 = vmatprep.subr.mxu0 0.0
      %6442 = vmatpush2.msra.mxu0 0.0
      %6443 = vmatprep.subr.mxu0 0.0
      %6444 = vmatpush2.msra.mxu0 0.0
      %6445 = vmatprep.subr.mxu0 0.0
      %6446 = vmatpush2.msra.mxu0 0.0
      %6447 = vmatprep.subr.mxu0 0.0
      %6448 = vmatpush2.msra.mxu0 0.0
      %6449 = vmatprep.subr.mxu0 0.0
      %6450 = vmatpush2.msra.mxu0 0.0
      %6451 = vmatprep.subr.mxu0 0.0
      %6452 = vmatpush2.msra.mxu0 0.0
      %6453 = vmatprep.subr.mxu0 0.0
      %6454 = vmatpush2.msra.mxu0 0.0
      %6455 = vmatprep.subr.mxu0 0.0
      %6456 = vmatpush2.msra.mxu0 0.0
      %6457 = vmatprep.subr.mxu0 0.0
      %6458 = vmatpush2.msra.mxu0 0.0
      %6459 = vmatprep.subr.mxu0 0.0
      %6460 = vmatpush2.msra.mxu0 0.0
      %6461 = vmatprep.subr.mxu0 0.0
      %6462 = vmatpush2.msra.mxu0 0.0
      %6463 = vmatprep.subr.mxu0 0.0
      %6464 = vmatpush2.msra.mxu0 0.0
      %6465 = vmatprep.subr.mxu0 0.0
      %6466 = vmatpush2.msra.mxu0 0.0
      %6467 = vmatprep.subr.mxu0 0.0
      %6468 = vmatpush2.msra.mxu0 0.0
      %6469 = vmatprep.mubr.f32.mxu0 0.0
      %6470 = vmatmul.mubr.f32.gmra.mxu0 %v6382
      %v6471 = vpop.f32.mrf.mxu0
      %v6472 = vadd.f32 0.0, %v6471
      %v6473 = vpop.f32.mrf.mxu0
      %6474 = vmatprep.mubr.f32.mxu0 0.0
      %6475 = vmatmul.mubr.f32.gmra.mxu0 %v6385
      %v6476 = vpop.f32.mrf.mxu0
      %v6477 = vadd.f32 0.0, %v6476
      %v6478 = vpop.f32.mrf.mxu0
      %6479 = vmatprep.mubr.f32.mxu0 0.0
      %6480 = vmatmul.mubr.f32.gmra.mxu0 %v6388
      %v6481 = vpop.f32.mrf.mxu0
      %v6482 = vadd.f32 0.0, %v6481
      %v6483 = vpop.f32.mrf.mxu0
      %6484 = vmatprep.mubr.f32.mxu0 0.0
      %6485 = vmatmul.mubr.f32.gmra.mxu0 %v6391
      %v6486 = vpop.f32.mrf.mxu0
      %v6487 = vadd.f32 0.0, %v6486
      %v6488 = vpop.f32.mrf.mxu0
      %6489 = vmatprep.mubr.f32.mxu0 0.0
      %6490 = vmatmul.mubr.f32.gmra.mxu0 %v6394
      %v6491 = vpop.f32.mrf.mxu0
      %v6492 = vadd.f32 0.0, %v6491
      %v6493 = vpop.f32.mrf.mxu0
      %6494 = vmatprep.mubr.f32.mxu0 0.0
      %6495 = vmatmul.mubr.f32.gmra.mxu0 %v6397
      %v6496 = vpop.f32.mrf.mxu0
      %v6497 = vadd.f32 0.0, %v6496
      %v6498 = vpop.f32.mrf.mxu0
      %6499 = vmatprep.mubr.f32.mxu0 0.0
      %6500 = vmatmul.mubr.f32.gmra.mxu0 %v6400
      %v6501 = vpop.f32.mrf.mxu0
      %v6502 = vadd.f32 0.0, %v6501
      %v6503 = vpop.f32.mrf.mxu0
      %6504 = vmatprep.mubr.f32.mxu0 0.0
      %6505 = vmatmul.mubr.f32.gmra.mxu0 %v6403
      %v6506 = vpop.f32.mrf.mxu0
      %v6507 = vadd.f32 0.0, %v6506
      %v6508 = vpop.f32.mrf.mxu0
      %6509 = vdwg.mxu0
      %v6510 = vadd.f32 %v6362, %v6472
      %v6511 = vadd.f32 %v6363, %v6477
      %v6512 = vadd.f32 %v6364, %v6482
      %v6513 = vadd.f32 %v6365, %v6487
      %v6514 = vadd.f32 %v6366, %v6492
      %v6515 = vadd.f32 %v6367, %v6497
      %v6516 = vadd.f32 %v6368, %v6502
      %v6517 = vadd.f32 %v6369, %v6507
      %v6518 = vld [vmem:[%s6370 + $0x1] sm:$0xff]
      %v6519 = vld [vmem:[%s6370 + $0x11] sm:$0xff]
      %v6520 = vld [vmem:[%s6370 + $0x21] sm:$0xff]
      %v6521 = vld [vmem:[%s6370 + $0x31] sm:$0xff]
      %v6522 = vld [vmem:[%s6370 + $0x41] sm:$0xff]
      %v6523 = vld [vmem:[%s6370 + $0x51] sm:$0xff]
      %v6524 = vld [vmem:[%s6370 + $0x61] sm:$0xff]
      %v6525 = vld [vmem:[%s6370 + $0x71] sm:$0xff]
      %s6526 = scalar_lea.vmem %s3, 56
      %v6527 = vld [vmem:[%s6526] sm:$0xff]
      %v6529 = vsel %vm277, %v6518, 0
      %v6532 = vsel %vm277, %v6519, 0
      %v6535 = vsel %vm277, %v6520, 0
      %v6538 = vsel %vm277, %v6521, 0
      %v6541 = vsel %vm277, %v6522, 0
      %v6544 = vsel %vm277, %v6523, 0
      %v6547 = vsel %vm277, %v6524, 0
      %v6550 = vsel %vm277, %v6525, 0
      %6552 = vmatprep.subr.mxu0 0.0
      %6553 = vmatpush1.msra.mxu0 0.0
      %6554 = vmatprep.subr.mxu0 0.0
      %6555 = vmatpush1.msra.mxu0 0.0
      %6556 = vmatprep.subr.mxu0 0.0
      %6557 = vmatpush1.msra.mxu0 0.0
      %6558 = vmatprep.subr.mxu0 0.0
      %6559 = vmatpush1.msra.mxu0 0.0
      %6560 = vmatprep.subr.mxu0 0.0
      %6561 = vmatpush1.msra.mxu0 0.0
      %6562 = vmatprep.subr.mxu0 0.0
      %6563 = vmatpush1.msra.mxu0 0.0
      %6564 = vmatprep.subr.mxu0 0.0
      %6565 = vmatpush1.msra.mxu0 0.0
      %6566 = vmatprep.subr.mxu0 0.0
      %6567 = vmatpush1.msra.mxu0 0.0
      %6568 = vmatprep.subr.mxu0 0.0
      %6569 = vmatpush1.msra.mxu0 0.0
      %6570 = vmatprep.subr.mxu0 0.0
      %6571 = vmatpush1.msra.mxu0 0.0
      %6572 = vmatprep.subr.mxu0 0.0
      %6573 = vmatpush1.msra.mxu0 0.0
      %6574 = vmatprep.subr.mxu0 0.0
      %6575 = vmatpush1.msra.mxu0 0.0
      %6576 = vmatprep.subr.mxu0 0.0
      %6577 = vmatpush1.msra.mxu0 0.0
      %6578 = vmatprep.subr.mxu0 0.0
      %6579 = vmatpush1.msra.mxu0 0.0
      %6580 = vmatprep.subr.mxu0 0.0
      %6581 = vmatpush1.msra.mxu0 0.0
      %6582 = vmatprep.subr.mxu0 0.0
      %6583 = vmatpush1.msra.mxu0 %v6527
      %6584 = vmatprep.subr.mxu0 0.0
      %6585 = vmatpush2.msra.mxu0 0.0
      %6586 = vmatprep.subr.mxu0 0.0
      %6587 = vmatpush2.msra.mxu0 0.0
      %6588 = vmatprep.subr.mxu0 0.0
      %6589 = vmatpush2.msra.mxu0 0.0
      %6590 = vmatprep.subr.mxu0 0.0
      %6591 = vmatpush2.msra.mxu0 0.0
      %6592 = vmatprep.subr.mxu0 0.0
      %6593 = vmatpush2.msra.mxu0 0.0
      %6594 = vmatprep.subr.mxu0 0.0
      %6595 = vmatpush2.msra.mxu0 0.0
      %6596 = vmatprep.subr.mxu0 0.0
      %6597 = vmatpush2.msra.mxu0 0.0
      %6598 = vmatprep.subr.mxu0 0.0
      %6599 = vmatpush2.msra.mxu0 0.0
      %6600 = vmatprep.subr.mxu0 0.0
      %6601 = vmatpush2.msra.mxu0 0.0
      %6602 = vmatprep.subr.mxu0 0.0
      %6603 = vmatpush2.msra.mxu0 0.0
      %6604 = vmatprep.subr.mxu0 0.0
      %6605 = vmatpush2.msra.mxu0 0.0
      %6606 = vmatprep.subr.mxu0 0.0
      %6607 = vmatpush2.msra.mxu0 0.0
      %6608 = vmatprep.subr.mxu0 0.0
      %6609 = vmatpush2.msra.mxu0 0.0
      %6610 = vmatprep.subr.mxu0 0.0
      %6611 = vmatpush2.msra.mxu0 0.0
      %6612 = vmatprep.subr.mxu0 0.0
      %6613 = vmatpush2.msra.mxu0 0.0
      %6614 = vmatprep.subr.mxu0 0.0
      %6615 = vmatpush2.msra.mxu0 0.0
      %6616 = vmatprep.mubr.f32.mxu0 0.0
      %6617 = vmatmul.mubr.f32.gmra.mxu0 %v6529
      %v6618 = vpop.f32.mrf.mxu0
      %v6619 = vadd.f32 0.0, %v6618
      %v6620 = vpop.f32.mrf.mxu0
      %6621 = vmatprep.mubr.f32.mxu0 0.0
      %6622 = vmatmul.mubr.f32.gmra.mxu0 %v6532
      %v6623 = vpop.f32.mrf.mxu0
      %v6624 = vadd.f32 0.0, %v6623
      %v6625 = vpop.f32.mrf.mxu0
      %6626 = vmatprep.mubr.f32.mxu0 0.0
      %6627 = vmatmul.mubr.f32.gmra.mxu0 %v6535
      %v6628 = vpop.f32.mrf.mxu0
      %v6629 = vadd.f32 0.0, %v6628
      %v6630 = vpop.f32.mrf.mxu0
      %6631 = vmatprep.mubr.f32.mxu0 0.0
      %6632 = vmatmul.mubr.f32.gmra.mxu0 %v6538
      %v6633 = vpop.f32.mrf.mxu0
      %v6634 = vadd.f32 0.0, %v6633
      %v6635 = vpop.f32.mrf.mxu0
      %6636 = vmatprep.mubr.f32.mxu0 0.0
      %6637 = vmatmul.mubr.f32.gmra.mxu0 %v6541
      %v6638 = vpop.f32.mrf.mxu0
      %v6639 = vadd.f32 0.0, %v6638
      %v6640 = vpop.f32.mrf.mxu0
      %6641 = vmatprep.mubr.f32.mxu0 0.0
      %6642 = vmatmul.mubr.f32.gmra.mxu0 %v6544
      %v6643 = vpop.f32.mrf.mxu0
      %v6644 = vadd.f32 0.0, %v6643
      %v6645 = vpop.f32.mrf.mxu0
      %6646 = vmatprep.mubr.f32.mxu0 0.0
      %6647 = vmatmul.mubr.f32.gmra.mxu0 %v6547
      %v6648 = vpop.f32.mrf.mxu0
      %v6649 = vadd.f32 0.0, %v6648
      %v6650 = vpop.f32.mrf.mxu0
      %6651 = vmatprep.mubr.f32.mxu0 0.0
      %6652 = vmatmul.mubr.f32.gmra.mxu0 %v6550
      %v6653 = vpop.f32.mrf.mxu0
      %v6654 = vadd.f32 0.0, %v6653
      %v6655 = vpop.f32.mrf.mxu0
      %6656 = vdwg.mxu0
      %v6657 = vadd.f32 %v6510, %v6619
      %v6658 = vadd.f32 %v6511, %v6624
      %v6659 = vadd.f32 %v6512, %v6629
      %v6660 = vadd.f32 %v6513, %v6634
      %v6661 = vadd.f32 %v6514, %v6639
      %v6662 = vadd.f32 %v6515, %v6644
      %v6663 = vadd.f32 %v6516, %v6649
      %v6664 = vadd.f32 %v6517, %v6654
      %v6665 = vld [vmem:[%s6370 + $0x2] sm:$0xff]
      %v6666 = vld [vmem:[%s6370 + $0x12] sm:$0xff]
      %v6667 = vld [vmem:[%s6370 + $0x22] sm:$0xff]
      %v6668 = vld [vmem:[%s6370 + $0x32] sm:$0xff]
      %v6669 = vld [vmem:[%s6370 + $0x42] sm:$0xff]
      %v6670 = vld [vmem:[%s6370 + $0x52] sm:$0xff]
      %v6671 = vld [vmem:[%s6370 + $0x62] sm:$0xff]
      %v6672 = vld [vmem:[%s6370 + $0x72] sm:$0xff]
      %s6673 = scalar_lea.vmem %s3, 64
      %v6674 = vld [vmem:[%s6673] sm:$0xff]
      %v6676 = vsel %vm277, %v6665, 0
      %v6679 = vsel %vm277, %v6666, 0
      %v6682 = vsel %vm277, %v6667, 0
      %v6685 = vsel %vm277, %v6668, 0
      %v6688 = vsel %vm277, %v6669, 0
      %v6691 = vsel %vm277, %v6670, 0
      %v6694 = vsel %vm277, %v6671, 0
      %v6697 = vsel %vm277, %v6672, 0
      %6699 = vmatprep.subr.mxu0 0.0
      %6700 = vmatpush1.msra.mxu0 0.0
      %6701 = vmatprep.subr.mxu0 0.0
      %6702 = vmatpush1.msra.mxu0 0.0
      %6703 = vmatprep.subr.mxu0 0.0
      %6704 = vmatpush1.msra.mxu0 0.0
      %6705 = vmatprep.subr.mxu0 0.0
      %6706 = vmatpush1.msra.mxu0 0.0
      %6707 = vmatprep.subr.mxu0 0.0
      %6708 = vmatpush1.msra.mxu0 0.0
      %6709 = vmatprep.subr.mxu0 0.0
      %6710 = vmatpush1.msra.mxu0 0.0
      %6711 = vmatprep.subr.mxu0 0.0
      %6712 = vmatpush1.msra.mxu0 0.0
      %6713 = vmatprep.subr.mxu0 0.0
      %6714 = vmatpush1.msra.mxu0 0.0
      %6715 = vmatprep.subr.mxu0 0.0
      %6716 = vmatpush1.msra.mxu0 0.0
      %6717 = vmatprep.subr.mxu0 0.0
      %6718 = vmatpush1.msra.mxu0 0.0
      %6719 = vmatprep.subr.mxu0 0.0
      %6720 = vmatpush1.msra.mxu0 0.0
      %6721 = vmatprep.subr.mxu0 0.0
      %6722 = vmatpush1.msra.mxu0 0.0
      %6723 = vmatprep.subr.mxu0 0.0
      %6724 = vmatpush1.msra.mxu0 0.0
      %6725 = vmatprep.subr.mxu0 0.0
      %6726 = vmatpush1.msra.mxu0 0.0
      %6727 = vmatprep.subr.mxu0 0.0
      %6728 = vmatpush1.msra.mxu0 0.0
      %6729 = vmatprep.subr.mxu0 0.0
      %6730 = vmatpush1.msra.mxu0 %v6674
      %6731 = vmatprep.subr.mxu0 0.0
      %6732 = vmatpush2.msra.mxu0 0.0
      %6733 = vmatprep.subr.mxu0 0.0
      %6734 = vmatpush2.msra.mxu0 0.0
      %6735 = vmatprep.subr.mxu0 0.0
      %6736 = vmatpush2.msra.mxu0 0.0
      %6737 = vmatprep.subr.mxu0 0.0
      %6738 = vmatpush2.msra.mxu0 0.0
      %6739 = vmatprep.subr.mxu0 0.0
      %6740 = vmatpush2.msra.mxu0 0.0
      %6741 = vmatprep.subr.mxu0 0.0
      %6742 = vmatpush2.msra.mxu0 0.0
      %6743 = vmatprep.subr.mxu0 0.0
      %6744 = vmatpush2.msra.mxu0 0.0
      %6745 = vmatprep.subr.mxu0 0.0
      %6746 = vmatpush2.msra.mxu0 0.0
      %6747 = vmatprep.subr.mxu0 0.0
      %6748 = vmatpush2.msra.mxu0 0.0
      %6749 = vmatprep.subr.mxu0 0.0
      %6750 = vmatpush2.msra.mxu0 0.0
      %6751 = vmatprep.subr.mxu0 0.0
      %6752 = vmatpush2.msra.mxu0 0.0
      %6753 = vmatprep.subr.mxu0 0.0
      %6754 = vmatpush2.msra.mxu0 0.0
      %6755 = vmatprep.subr.mxu0 0.0
      %6756 = vmatpush2.msra.mxu0 0.0
      %6757 = vmatprep.subr.mxu0 0.0
      %6758 = vmatpush2.msra.mxu0 0.0
      %6759 = vmatprep.subr.mxu0 0.0
      %6760 = vmatpush2.msra.mxu0 0.0
      %6761 = vmatprep.subr.mxu0 0.0
      %6762 = vmatpush2.msra.mxu0 0.0
      %6763 = vmatprep.mubr.f32.mxu0 0.0
      %6764 = vmatmul.mubr.f32.gmra.mxu0 %v6676
      %v6765 = vpop.f32.mrf.mxu0
      %v6766 = vadd.f32 0.0, %v6765
      %v6767 = vpop.f32.mrf.mxu0
      %6768 = vmatprep.mubr.f32.mxu0 0.0
      %6769 = vmatmul.mubr.f32.gmra.mxu0 %v6679
      %v6770 = vpop.f32.mrf.mxu0
      %v6771 = vadd.f32 0.0, %v6770
      %v6772 = vpop.f32.mrf.mxu0
      %6773 = vmatprep.mubr.f32.mxu0 0.0
      %6774 = vmatmul.mubr.f32.gmra.mxu0 %v6682
      %v6775 = vpop.f32.mrf.mxu0
      %v6776 = vadd.f32 0.0, %v6775
      %v6777 = vpop.f32.mrf.mxu0
      %6778 = vmatprep.mubr.f32.mxu0 0.0
      %6779 = vmatmul.mubr.f32.gmra.mxu0 %v6685
      %v6780 = vpop.f32.mrf.mxu0
      %v6781 = vadd.f32 0.0, %v6780
      %v6782 = vpop.f32.mrf.mxu0
      %6783 = vmatprep.mubr.f32.mxu0 0.0
      %6784 = vmatmul.mubr.f32.gmra.mxu0 %v6688
      %v6785 = vpop.f32.mrf.mxu0
      %v6786 = vadd.f32 0.0, %v6785
      %v6787 = vpop.f32.mrf.mxu0
      %6788 = vmatprep.mubr.f32.mxu0 0.0
      %6789 = vmatmul.mubr.f32.gmra.mxu0 %v6691
      %v6790 = vpop.f32.mrf.mxu0
      %v6791 = vadd.f32 0.0, %v6790
      %v6792 = vpop.f32.mrf.mxu0
      %6793 = vmatprep.mubr.f32.mxu0 0.0
      %6794 = vmatmul.mubr.f32.gmra.mxu0 %v6694
      %v6795 = vpop.f32.mrf.mxu0
      %v6796 = vadd.f32 0.0, %v6795
      %v6797 = vpop.f32.mrf.mxu0
      %6798 = vmatprep.mubr.f32.mxu0 0.0
      %6799 = vmatmul.mubr.f32.gmra.mxu0 %v6697
      %v6800 = vpop.f32.mrf.mxu0
      %v6801 = vadd.f32 0.0, %v6800
      %v6802 = vpop.f32.mrf.mxu0
      %6803 = vdwg.mxu0
      %v6804 = vadd.f32 %v6657, %v6766
      %v6805 = vadd.f32 %v6658, %v6771
      %v6806 = vadd.f32 %v6659, %v6776
      %v6807 = vadd.f32 %v6660, %v6781
      %v6808 = vadd.f32 %v6661, %v6786
      %v6809 = vadd.f32 %v6662, %v6791
      %v6810 = vadd.f32 %v6663, %v6796
      %v6811 = vadd.f32 %v6664, %v6801
      %v6812 = vld [vmem:[%s4] sm:$0x1]
      %v6814 = vlaneseq
      %v6815 = vshrl.u32 %v6814, 7
      %v6816 = vsub.s32 0, %v6815
      %v6817 = vrot.slane %v6812, %v6816
      %v6819 = vadd.f32 %v6804, %v6817
      %v6820 = vadd.f32 %v6805, %v6817
      %v6821 = vadd.f32 %v6806, %v6817
      %v6822 = vadd.f32 %v6807, %v6817
      %v6823 = vadd.f32 %v6808, %v6817
      %v6824 = vadd.f32 %v6809, %v6817
      %v6825 = vadd.f32 %v6810, %v6817
      %v6826 = vadd.f32 %v6811, %v6817
      %v6827 = vmax.f32 %v6819, 0.0
      %v6828 = vmax.f32 %v6820, 0.0
      %v6829 = vmax.f32 %v6821, 0.0
      %v6830 = vmax.f32 %v6822, 0.0
      %v6831 = vmax.f32 %v6823, 0.0
      %v6832 = vmax.f32 %v6824, 0.0
      %v6833 = vmax.f32 %v6825, 0.0
      %v6834 = vmax.f32 %v6826, 0.0
      %vm6835 = vcmask 130048
      %v6836 = vsel %vm6835, %v6827, -inf
      %v6837 = vsel %vm6835, %v6828, -inf
      %v6838 = vmax.f32 %v6836, %v6837
      %v6839 = vsel %vm6835, %v6829, -inf
      %v6840 = vsel %vm6835, %v6830, -inf
      %v6841 = vmax.f32 %v6839, %v6840
      %v6842 = vsel %vm6835, %v6831, -inf
      %v6843 = vsel %vm6835, %v6832, -inf
      %v6844 = vmax.f32 %v6842, %v6843
      %v6845 = vsel %vm6835, %v6833, -inf
      %v6846 = vsel %vm6835, %v6834, -inf
      %v6847 = vmax.f32 %v6845, %v6846
      %v6852 = vcombine.high %v6838, %v6838
      %v6854 = vunpack.c.l.s4 1983009808
      %v6855 = vunpack.c.0.s8 %v6854
      %v6856 = vlaneseq
      %v6857 = vshrl.u32 %v6856, 7
      %v6858 = vsub.s32 %v6855, %v6857
      %v6859 = vrot.slane %v6838, %v6858
      %v6861 = vunpack.c.l.s4 1983009808
      %v6862 = vunpack.c.0.s8 %v6861
      %v6863 = vlaneseq
      %v6864 = vshrl.u32 %v6863, 7
      %v6865 = vsub.s32 %v6862, %v6864
      %v6866 = vrot.slane %v6852, %v6865
      %v6867 = vcombine.high %v6859, %v6859
      %v6868 = vcombine.high %v6866, %v6866
      %v6869 = vcombine.high %v6841, %v6841
      %v6871 = vunpack.c.l.s4 1983009808
      %v6872 = vunpack.c.0.s8 %v6871
      %v6873 = vlaneseq
      %v6874 = vshrl.u32 %v6873, 7
      %v6875 = vsub.s32 %v6872, %v6874
      %v6876 = vrot.slane %v6841, %v6875
      %v6878 = vunpack.c.l.s4 1983009808
      %v6879 = vunpack.c.0.s8 %v6878
      %v6880 = vlaneseq
      %v6881 = vshrl.u32 %v6880, 7
      %v6882 = vsub.s32 %v6879, %v6881
      %v6883 = vrot.slane %v6869, %v6882
      %v6884 = vcombine.high %v6876, %v6876
      %v6885 = vcombine.high %v6883, %v6883
      %v6886 = vcombine.high %v6844, %v6844
      %v6888 = vunpack.c.l.s4 1983009808
      %v6889 = vunpack.c.0.s8 %v6888
      %v6890 = vlaneseq
      %v6891 = vshrl.u32 %v6890, 7
      %v6892 = vsub.s32 %v6889, %v6891
      %v6893 = vrot.slane %v6844, %v6892
      %v6895 = vunpack.c.l.s4 1983009808
      %v6896 = vunpack.c.0.s8 %v6895
      %v6897 = vlaneseq
      %v6898 = vshrl.u32 %v6897, 7
      %v6899 = vsub.s32 %v6896, %v6898
      %v6900 = vrot.slane %v6886, %v6899
      %v6901 = vcombine.high %v6893, %v6893
      %v6902 = vcombine.high %v6900, %v6900
      %v6903 = vcombine.high %v6847, %v6847
      %v6905 = vunpack.c.l.s4 1983009808
      %v6906 = vunpack.c.0.s8 %v6905
      %v6907 = vlaneseq
      %v6908 = vshrl.u32 %v6907, 7
      %v6909 = vsub.s32 %v6906, %v6908
      %v6910 = vrot.slane %v6847, %v6909
      %v6912 = vunpack.c.l.s4 1983009808
      %v6913 = vunpack.c.0.s8 %v6912
      %v6914 = vlaneseq
      %v6915 = vshrl.u32 %v6914, 7
      %v6916 = vsub.s32 %v6913, %v6915
      %v6917 = vrot.slane %v6903, %v6916
      %v6918 = vcombine.high %v6910, %v6910
      %v6919 = vcombine.high %v6917, %v6917
      %vm6936 = vcmask 123904
      %v6937 = vsel %vm6936, %v6859, -inf
      %v6938 = vrot.slane %v6937, 4
      %v6939 = vmax.f32 %v6937, %v6938
      %v6940 = vrot.slane %v6939, 2
      %v6941 = vmax.f32 %v6939, %v6940
      %v6942 = vrot.slane %v6941, 1
      %v6943 = vmax.f32 %v6941, %v6942
      %v6944 = vsel %vm6936, %v6867, -inf
      %v6945 = vrot.slane %v6944, 4
      %v6946 = vmax.f32 %v6944, %v6945
      %v6947 = vrot.slane %v6946, 2
      %v6948 = vmax.f32 %v6946, %v6947
      %v6949 = vrot.slane %v6948, 1
      %v6950 = vmax.f32 %v6948, %v6949
      %v6951 = vsel %vm6936, %v6866, -inf
      %v6952 = vrot.slane %v6951, 4
      %v6953 = vmax.f32 %v6951, %v6952
      %v6954 = vrot.slane %v6953, 2
      %v6955 = vmax.f32 %v6953, %v6954
      %v6956 = vrot.slane %v6955, 1
      %v6957 = vmax.f32 %v6955, %v6956
      %v6958 = vsel %vm6936, %v6868, -inf
      %v6959 = vrot.slane %v6958, 4
      %v6960 = vmax.f32 %v6958, %v6959
      %v6961 = vrot.slane %v6960, 2
      %v6962 = vmax.f32 %v6960, %v6961
      %v6963 = vrot.slane %v6962, 1
      %v6964 = vmax.f32 %v6962, %v6963
      %v6965 = vsel %vm6936, %v6876, -inf
      %v6966 = vrot.slane %v6965, 4
      %v6967 = vmax.f32 %v6965, %v6966
      %v6968 = vrot.slane %v6967, 2
      %v6969 = vmax.f32 %v6967, %v6968
      %v6970 = vrot.slane %v6969, 1
      %v6971 = vmax.f32 %v6969, %v6970
      %v6972 = vsel %vm6936, %v6884, -inf
      %v6973 = vrot.slane %v6972, 4
      %v6974 = vmax.f32 %v6972, %v6973
      %v6975 = vrot.slane %v6974, 2
      %v6976 = vmax.f32 %v6974, %v6975
      %v6977 = vrot.slane %v6976, 1
      %v6978 = vmax.f32 %v6976, %v6977
      %v6979 = vsel %vm6936, %v6883, -inf
      %v6980 = vrot.slane %v6979, 4
      %v6981 = vmax.f32 %v6979, %v6980
      %v6982 = vrot.slane %v6981, 2
      %v6983 = vmax.f32 %v6981, %v6982
      %v6984 = vrot.slane %v6983, 1
      %v6985 = vmax.f32 %v6983, %v6984
      %v6986 = vsel %vm6936, %v6885, -inf
      %v6987 = vrot.slane %v6986, 4
      %v6988 = vmax.f32 %v6986, %v6987
      %v6989 = vrot.slane %v6988, 2
      %v6990 = vmax.f32 %v6988, %v6989
      %v6991 = vrot.slane %v6990, 1
      %v6992 = vmax.f32 %v6990, %v6991
      %v6993 = vsel %vm6936, %v6893, -inf
      %v6994 = vrot.slane %v6993, 4
      %v6995 = vmax.f32 %v6993, %v6994
      %v6996 = vrot.slane %v6995, 2
      %v6997 = vmax.f32 %v6995, %v6996
      %v6998 = vrot.slane %v6997, 1
      %v6999 = vmax.f32 %v6997, %v6998
      %v7000 = vsel %vm6936, %v6901, -inf
      %v7001 = vrot.slane %v7000, 4
      %v7002 = vmax.f32 %v7000, %v7001
      %v7003 = vrot.slane %v7002, 2
      %v7004 = vmax.f32 %v7002, %v7003
      %v7005 = vrot.slane %v7004, 1
      %v7006 = vmax.f32 %v7004, %v7005
      %v7007 = vsel %vm6936, %v6900, -inf
      %v7008 = vrot.slane %v7007, 4
      %v7009 = vmax.f32 %v7007, %v7008
      %v7010 = vrot.slane %v7009, 2
      %v7011 = vmax.f32 %v7009, %v7010
      %v7012 = vrot.slane %v7011, 1
      %v7013 = vmax.f32 %v7011, %v7012
      %v7014 = vsel %vm6936, %v6902, -inf
      %v7015 = vrot.slane %v7014, 4
      %v7016 = vmax.f32 %v7014, %v7015
      %v7017 = vrot.slane %v7016, 2
      %v7018 = vmax.f32 %v7016, %v7017
      %v7019 = vrot.slane %v7018, 1
      %v7020 = vmax.f32 %v7018, %v7019
      %v7021 = vsel %vm6936, %v6910, -inf
      %v7022 = vrot.slane %v7021, 4
      %v7023 = vmax.f32 %v7021, %v7022
      %v7024 = vrot.slane %v7023, 2
      %v7025 = vmax.f32 %v7023, %v7024
      %v7026 = vrot.slane %v7025, 1
      %v7027 = vmax.f32 %v7025, %v7026
      %v7028 = vsel %vm6936, %v6918, -inf
      %v7029 = vrot.slane %v7028, 4
      %v7030 = vmax.f32 %v7028, %v7029
      %v7031 = vrot.slane %v7030, 2
      %v7032 = vmax.f32 %v7030, %v7031
      %v7033 = vrot.slane %v7032, 1
      %v7034 = vmax.f32 %v7032, %v7033
      %v7035 = vsel %vm6936, %v6917, -inf
      %v7036 = vrot.slane %v7035, 4
      %v7037 = vmax.f32 %v7035, %v7036
      %v7038 = vrot.slane %v7037, 2
      %v7039 = vmax.f32 %v7037, %v7038
      %v7040 = vrot.slane %v7039, 1
      %v7041 = vmax.f32 %v7039, %v7040
      %v7042 = vsel %vm6936, %v6919, -inf
      %v7043 = vrot.slane %v7042, 4
      %v7044 = vmax.f32 %v7042, %v7043
      %v7045 = vrot.slane %v7044, 2
      %v7046 = vmax.f32 %v7044, %v7045
      %v7047 = vrot.slane %v7046, 1
      %v7048 = vmax.f32 %v7046, %v7047
      %v7053 = vsel %vm2924, %v6950, %v6943
      %v7054 = vsel %vm2926, %v6957, %v7053
      %v7055 = vsel %vm2928, %v6964, %v7054
      %vm7057 = vcmask 125952
      %7058 = vst.msk [vmem:[#allocation4] sm:$0xf] %vm7057, %v7055
      %v7063 = vsel %vm2924, %v6978, %v6971
      %v7064 = vsel %vm2926, %v6985, %v7063
      %v7065 = vsel %vm2928, %v6992, %v7064
      %7067 = vst.msk [vmem:[#allocation4 + $0x4] sm:$0xf] %vm7057, %v7065
      %v7072 = vsel %vm2924, %v7006, %v6999
      %v7073 = vsel %vm2926, %v7013, %v7072
      %v7074 = vsel %vm2928, %v7020, %v7073
      %7076 = vst.msk [vmem:[#allocation4 + $0x8] sm:$0xf] %vm7057, %v7074
      %v7081 = vsel %vm2924, %v7034, %v7027
      %v7082 = vsel %vm2926, %v7041, %v7081
      %v7083 = vsel %vm2928, %v7048, %v7082
      %7085 = vst.msk [vmem:[#allocation4 + $0xc] sm:$0xf] %vm7057, %v7083
      %v7086 = vld [vmem:[#allocation4] sm:$0xff]
      %v7087 = vld [vmem:[#allocation4 + $0x8] sm:$0xff]
      %v7088 = vld [vmem:[%s5] sm:$0xff]
      %v7089 = vld [vmem:[%s5 + $0x8] sm:$0xff]
      %v7090 = vld [vmem:[%s5 + $0x10] sm:$0xff]
      %v7091 = vld [vmem:[%s5 + $0x18] sm:$0xff]
      %v7093 = vsel %vm6835, %v7086, 0
      %v7096 = vsel %vm6835, %v7087, 0
      %7098 = vmatprep.subr.mxu0 0.0
      %7099 = vmatpush1.msra.mxu0 0.0
      %7100 = vmatprep.subr.mxu0 0.0
      %7101 = vmatpush1.msra.mxu0 0.0
      %7102 = vmatprep.subr.mxu0 0.0
      %7103 = vmatpush1.msra.mxu0 0.0
      %7104 = vmatprep.subr.mxu0 0.0
      %7105 = vmatpush1.msra.mxu0 0.0
      %7106 = vmatprep.subr.mxu0 0.0
      %7107 = vmatpush1.msra.mxu0 0.0
      %7108 = vmatprep.subr.mxu0 0.0
      %7109 = vmatpush1.msra.mxu0 0.0
      %7110 = vmatprep.subr.mxu0 0.0
      %7111 = vmatpush1.msra.mxu0 0.0
      %7112 = vmatprep.subr.mxu0 0.0
      %7113 = vmatpush1.msra.mxu0 0.0
      %7114 = vmatprep.subr.mxu0 0.0
      %7115 = vmatpush1.msra.mxu0 0.0
      %7116 = vmatprep.subr.mxu0 0.0
      %7117 = vmatpush1.msra.mxu0 0.0
      %7118 = vmatprep.subr.mxu0 0.0
      %7119 = vmatpush1.msra.mxu0 0.0
      %7120 = vmatprep.subr.mxu0 0.0
      %7121 = vmatpush1.msra.mxu0 0.0
      %7122 = vmatprep.subr.mxu0 0.0
      %7123 = vmatpush1.msra.mxu0 0.0
      %7124 = vmatprep.subr.mxu0 0.0
      %7125 = vmatpush1.msra.mxu0 0.0
      %7126 = vmatprep.subr.mxu0 %v7091
      %7127 = vmatpush1.msra.mxu0 %v7090
      %7128 = vmatprep.subr.mxu0 %v7089
      %7129 = vmatpush1.msra.mxu0 %v7088
      %7130 = vmatprep.subr.mxu0 0.0
      %7131 = vmatpush2.msra.mxu0 0.0
      %7132 = vmatprep.subr.mxu0 0.0
      %7133 = vmatpush2.msra.mxu0 0.0
      %7134 = vmatprep.subr.mxu0 0.0
      %7135 = vmatpush2.msra.mxu0 0.0
      %7136 = vmatprep.subr.mxu0 0.0
      %7137 = vmatpush2.msra.mxu0 0.0
      %7138 = vmatprep.subr.mxu0 0.0
      %7139 = vmatpush2.msra.mxu0 0.0
      %7140 = vmatprep.subr.mxu0 0.0
      %7141 = vmatpush2.msra.mxu0 0.0
      %7142 = vmatprep.subr.mxu0 0.0
      %7143 = vmatpush2.msra.mxu0 0.0
      %7144 = vmatprep.subr.mxu0 0.0
      %7145 = vmatpush2.msra.mxu0 0.0
      %7146 = vmatprep.subr.mxu0 0.0
      %7147 = vmatpush2.msra.mxu0 0.0
      %7148 = vmatprep.subr.mxu0 0.0
      %7149 = vmatpush2.msra.mxu0 0.0
      %7150 = vmatprep.subr.mxu0 0.0
      %7151 = vmatpush2.msra.mxu0 0.0
      %7152 = vmatprep.subr.mxu0 0.0
      %7153 = vmatpush2.msra.mxu0 0.0
      %7154 = vmatprep.subr.mxu0 0.0
      %7155 = vmatpush2.msra.mxu0 0.0
      %7156 = vmatprep.subr.mxu0 0.0
      %7157 = vmatpush2.msra.mxu0 0.0
      %7158 = vmatprep.subr.mxu0 0.0
      %7159 = vmatpush2.msra.mxu0 0.0
      %7160 = vmatprep.subr.mxu0 0.0
      %7161 = vmatpush2.msra.mxu0 0.0
      %7162 = vmatprep.mubr.f32.mxu0 0.0
      %7163 = vmatmul.mubr.f32.gmra.mxu0 %v7093
      %v7164 = vpop.f32.mrf.mxu0
      %v7165 = vadd.f32 0.0, %v7164
      %v7166 = vpop.f32.mrf.mxu0
      %v7167 = vadd.f32 0.0, %v7166
      %7168 = vmatprep.mubr.f32.mxu0 0.0
      %7169 = vmatmul.mubr.f32.gmra.mxu0 %v7096
      %v7170 = vpop.f32.mrf.mxu0
      %v7171 = vadd.f32 0.0, %v7170
      %v7172 = vpop.f32.mrf.mxu0
      %v7173 = vadd.f32 0.0, %v7172
      %7174 = vdwg.mxu0
      %v7175 = vld [vmem:[%s6] sm:$0xff]
      %v7176 = vld [vmem:[%s6 + $0x8] sm:$0xff]
      %v7177 = vld [vmem:[%s6 + $0x10] sm:$0xff]
      %v7178 = vld [vmem:[%s6 + $0x18] sm:$0xff]
      %v7179 = vmul.f32 %v7165, %v7175
      %v7180 = vmul.f32 %v7167, %v7176
      %v7181 = vmul.f32 %v7171, %v7177
      %v7182 = vmul.f32 %v7173, %v7178
      %v7183 = vadd.f32 %v7179, %v7181
      %v7184 = vrot.slane %v7183, 4
      %v7185 = vadd.f32 %v7183, %v7184
      %v7186 = vrot.slane %v7185, 2
      %v7187 = vadd.f32 %v7185, %v7186
      %v7188 = vrot.slane %v7187, 1
      %v7189 = vadd.f32 %v7187, %v7188
      %v7190 = vadd.f32 %v7180, %v7182
      %v7191 = vrot.slane %v7190, 4
      %v7192 = vadd.f32 %v7190, %v7191
      %v7193 = vrot.slane %v7192, 2
      %v7194 = vadd.f32 %v7192, %v7193
      %v7195 = vrot.slane %v7194, 1
      %v7196 = vadd.f32 %v7194, %v7195
      %v7199 = vcombine.low %v7189, %v7196
      %v7201 = vunpack.c.l.s4 1966171168
      %v7202 = vunpack.c.0.s8 %v7201
      %v7203 = vlaneseq
      %v7204 = vshrl.u32 %v7203, 7
      %v7205 = vsub.s32 %v7202, %v7204
      %v7206 = vrot.slane %v7199, %v7205
      %v7208 = vunpack.c.l.s4 1966171168
      %v7209 = vunpack.c.0.s8 %v7208
      %v7210 = vlaneseq
      %v7211 = vshrl.u32 %v7210, 7
      %v7212 = vsub.s32 %v7209, %v7211
      %v7213 = vrot.slane %v7206, %v7212
      %v7215 = vlaneseq
      %vm7216 = vcmp.ge.s32.totalorder %v7215, 0
      %vm7217 = vcmp.lt.s32.totalorder %v7215, 256
      %vm7218 = vmand %vm7216, %vm7217
      %7219 = vst.msk [vmem:[%s276] sm:$0x3] %vm7218, %v7213
      %p7220 = scmp.lt.s32.totalorder %s18, 1
      %s7221 = scalar_select %p7220, %s18, 1
      %s7222 = smul.addr %s7221, 2
      %s7223 = scalar_lea.vmem %s7, %s7222
      // Predicated region
      $region49: #{base_net_forward.1} parent=47 // pred_check
        %p7224 = pneg %p188
      $region50: #{base_net_forward.1} parent=47 // pred_check_branch
        %7226 = sbr.rel (%p7224) target = $region52
      $region51: #{base_net_forward.1} parent=47 // pred_region
        _
      $region52: #{base_net_forward.1} parent=47 // pred_fallthru
        _
    $region48: #{base_net_forward.1} parent=5 // pred_fallthru
      _
    %p7227 = scmp.le.s32.totalorder 2, %s13
    // Predicated region
    $region53: #{base_net_forward.1} parent=5 // pred_check
      %p7228 = pneg %p7227
    $region54: #{base_net_forward.1} parent=5 // pred_check_branch
      %7230 = sbr.rel (%p7228) target = $region56
    $region55: #{base_net_forward.1} parent=5 // pred_region
      %s7231 = ssub.s32 %s13, 2
      // Predicated region
      $region57: #{base_net_forward.1} parent=55 // pred_check
        %p7232 = pneg %p194
      $region58: #{base_net_forward.1} parent=55 // pred_check_branch
        %7234 = sbr.rel (%p7232) target = $region60
      $region59: #{base_net_forward.1} parent=55 // pred_region
        %p7235 = scmp.lt.s32.totalorder %s19, 1
        %s7236 = scalar_select %p7235, %s19, 1
        %s7237 = smul.addr %s7236, 2
        %s7238 = scalar_lea.vmem %s7, %s7237
      $region60: #{base_net_forward.1} parent=55 // pred_fallthru
        _
    $region56: #{base_net_forward.1} parent=5 // pred_fallthru
      _
  $region6: #{base_net_forward.1} parent=0 // loop_footer
    %s17 = sadd.s32 1, %s13
  $region7: #{base_net_forward.1} parent=0 // loop_footer_branch
    %12 = sbr.rel target = $region3
  $region8: #{base_net_forward.1} parent=0 // loop_exit
    _

</llo_original>
